<compile_context>
chip_gen: v6e
topology: v6e:2x2x1
jax: 0.10.0
libtpu: 0.0.40
codegen_flags: <defaults>
</compile_context>

<pallas_src>
import numpy as np
import jax
import jax.numpy as jnp
from jax.experimental import pallas as pl
from jax.experimental.pallas import tpu as pltpu


# ----------------------------- static config --------------------------------
B_REAL      = 2
B_PAD       = 8                     # pad batch to the f32 sublane tile
IN_CH       = 3
C1          = 4
C2          = 3 * C1                # 12
H = W       = 16
P           = H * W                 # 256 lanes = full 16x16 grid (2 x 128)
P_PAD       = P + 128               # 384: zero lane tail so 3x3 taps are plain slices
HO2         = H - 4                 # 12 (conv2 valid output)
NUM_CLASSES = 10
HIDDEN      = 32
OUT_PAD     = 128                   # lane-dense final store
GRID_SIZE   = 5
SPLINE_ORD  = 3
N_COEF      = GRID_SIZE + SPLINE_ORD            # 8 spline coefficient functions
GRID_RANGE  = (-1.0, 1.0)
_STEP       = (GRID_RANGE[1] - GRID_RANGE[0]) / GRID_SIZE
KNOTS       = tuple(GRID_RANGE[0] + (j - SPLINE_ORD) * _STEP
                    for j in range(GRID_SIZE + 2 * SPLINE_ORD + 1))  # 12 scalar knots
KAN_IN      = C2 * HO2 * HO2        # 1728 (torch flatten size)
TAP_OFFS    = tuple(kh * W + kw for kh in range(3) for kw in range(3))


# ----------------------------- kernel helpers --------------------------------
def _silu(x):
    # EUP exp + EUP approx reciprocal: keeps the VALU slot free for the splines.
    return x * pl.reciprocal(1.0 + jnp.exp(-x), approx=True)


def _spline_pieces(x):
    """[SiLU(x), B_0(x), ..., B_{N_COEF-1}(x)] via Cox-de Boor (uniform knots).

    VPU-trimmed: degree-0 bases come from 12 shared '>=' compares, and the
    uniform grid lets every degree share a single u = x * (1/(k*step)).
    """
    t = KNOTS
    ge = [(x >= t[j]).astype(jnp.float32) for j in range(len(t))]
    bases = [ge[j] - ge[j + 1] for j in range(len(t) - 1)]        # 11 indicators
    for k in range(1, SPLINE_ORD + 1):
        inv = 1.0 / (k * _STEP)                                    # uniform knots
        u = x * inv
        new_bases = []
        for j in range(len(bases) - 1):
            cl = t[j] * inv                                        # trace-time consts
            cr = t[j + k + 1] * inv
            new_bases.append((u - cl) * bases[j] + (cr - u) * bases[j + 1])
        bases = new_bases
    return [_silu(x)] + bases          # 1 + N_COEF arrays, same shape as x


# ------------------------------- fused kernel --------------------------------
def _fused_kernel(x_ref, w1_ref, b1_ref, w2_ref, b2_ref, wk1_ref, wk2_ref,
                  o_ref, a1p_ref, a2_ref, y1_ref):
    c = pl.program_id(0)

    # ---- step 0: conv1+ReLU, conv2+ReLU -> a2 scratch; zero the y1 acc -----
    @pl.when(c == 0)
    def _():
        def conv_relu(tap, w_ref, b_ref):
            acc = jnp.dot(w_ref[0], tap(TAP_OFFS[0]),
                          preferred_element_type=jnp.float32)
            for k in range(1, 9):                     # 9 accumulating MXU dots
                acc = acc + jnp.dot(w_ref[k], tap(TAP_OFFS[k]),
                                    preferred_element_type=jnp.float32)
            return jnp.maximum(acc + b_ref[...], 0.0)

        a1 = conv_relu(lambda d: x_ref[:, d:d + P], w1_ref, b1_ref)   # (C1*Bp,256)
        a1p_ref[:, :P] = a1
        a1p_ref[:, P:] = jnp.zeros((C1 * B_PAD, P_PAD - P), jnp.float32)
        a2 = conv_relu(lambda d: a1p_ref[:, d:d + P], w2_ref, b2_ref)  # (C2*Bp,256)
        for ch in range(C2):                          # static, aligned stores
            a2_ref[ch] = a2[ch * B_PAD:(ch + 1) * B_PAD, :]
        y1_ref[...] = jnp.zeros_like(y1_ref)

    # ---- every step: KAN layer-1 contribution of conv2-channel c -----------
    # wk1_ref block is (HIDDEN, 9*256) bf16; lane positions outside the valid
    # 12x12 conv2 region carry zero weights, so garbage lanes never contribute.
    xc = a2_ref[c]                                            # (Bp, 256) f32
    pieces = _spline_pieces(xc)                               # 9 x (Bp, 256)
    acc = jnp.zeros((B_PAD, HIDDEN), jnp.float32)
    for k, piece in enumerate(pieces):
        wt = wk1_ref[:, k * P:(k + 1) * P]                    # (HIDDEN, 256) bf16
        acc = acc + jax.lax.dot_general(
            piece.astype(jnp.bfloat16), wt,
            dimension_numbers=(((1,), (1,)), ((), ())),       # contract both minors
            preferred_element_type=jnp.float32)
    y1_ref[...] = y1_ref[...] + acc

    # ---- last step: KAN layer-2 + masked softmax (lane-dense store) --------
    @pl.when(c == C2 - 1)
    def _():
        y1 = y1_ref[...]                                      # (Bp, HIDDEN)
        logits = jnp.zeros((B_PAD, OUT_PAD), jnp.float32)
        for k, piece in enumerate(_spline_pieces(y1)):        # 9 x (Bp, 32)
            logits = logits + jnp.dot(piece, wk2_ref[k],
                                      preferred_element_type=jnp.float32)
        lane = jax.lax.broadcasted_iota(jnp.int32, (B_PAD, OUT_PAD), 1)
        logits = jnp.where(lane < NUM_CLASSES, logits, -1e30)
        m = jnp.max(logits, axis=1, keepdims=True)
        e = jnp.exp(logits - m)
        o_ref[...] = e / jnp.sum(e, axis=1, keepdims=True)    # exact division


# --------------------------- host-side weight prep ---------------------------
def prep_conv_weights(w, b):
    """(Cout,Cin,3,3)+(Cout,) -> 9 tap matrices for (channel-major,batch-minor) rows."""
    w = np.asarray(w, np.float32)
    b = np.asarray(b, np.float32)
    eye = np.eye(B_PAD, dtype=np.float32)
    taps = np.stack([np.kron(w[:, :, kh, kw], eye)     # (Cout*Bp, Cin*Bp)
                     for kh in range(3) for kw in range(3)], axis=0)
    bcol = np.repeat(b, B_PAD)[:, None]                # (Cout*Bp, 1)
    return jnp.asarray(taps), jnp.asarray(bcol)


def prep_kan1_weights(base_w, spline_w):
    """Permute torch NCHW-flatten features onto the 256-lane grid; lane-transposed bf16."""
    base_w = np.asarray(base_w, np.float32)            # (1728, HIDDEN)
    spline_w = np.asarray(spline_w, np.float32)        # (N_COEF, 1728, HIDDEN)
    hh, ww = np.meshgrid(np.arange(HO2), np.arange(HO2), indexing="ij")
    p_idx = (hh * W + ww).reshape(-1)                  # lane index on 16x16 grid
    wk1 = np.zeros((C2, HIDDEN, (1 + N_COEF) * P), np.float32)
    for c in range(C2):
        feats = c * HO2 * HO2 + np.arange(HO2 * HO2)   # torch (h,w) row-major flatten
        for k in range(1 + N_COEF):
            w_piece = np.zeros((P, HIDDEN), np.float32)
            src = base_w[feats] if k == 0 else spline_w[k - 1, feats]
            w_piece[p_idx, :] = src                    # invalid positions stay zero
            wk1[c, :, k * P:(k + 1) * P] = w_piece.T
    return jnp.asarray(wk1, dtype=jnp.bfloat16)        # (C2, HIDDEN, 2304) bf16


def prep_kan2_weights(base_w, spline_w):
    base_w = np.asarray(base_w, np.float32)            # (HIDDEN, NUM_CLASSES)
    spline_w = np.asarray(spline_w, np.float32)        # (N_COEF, HIDDEN, NUM_CLASSES)
    wk2 = np.zeros((1 + N_COEF, HIDDEN, OUT_PAD), np.float32)
    wk2[0, :, :NUM_CLASSES] = base_w
    wk2[1:, :, :NUM_CLASSES] = spline_w
    return jnp.asarray(wk2)                            # (9, HIDDEN, 128) f32 (tiny)


def prep_input(x):
    """(B, Cin, 16, 16) NCHW -> (Cin*B_PAD, 384), rows (channel-major, batch-minor)."""
    xcb = jnp.transpose(x, (1, 0, 2, 3)).reshape(IN_CH, B_REAL, P)
    xcb = jnp.pad(xcb, ((0, 0), (0, B_PAD - B_REAL), (0, P_PAD - P)))
    return xcb.reshape(IN_CH * B_PAD, P_PAD).astype(jnp.float32)


# ------------------------------ pallas wrapper --------------------------------
def cnn_kan_forward(x, prepped):
    (w1t, b1c, w2t, b2c, wk1, wk2) = prepped
    xp = prep_input(x)
    out = pl.pallas_call(
        _fused_kernel,
        out_shape=jax.ShapeDtypeStruct((B_PAD, OUT_PAD), jnp.float32),
        grid=(C2,),
        in_specs=[
            pl.BlockSpec((IN_CH * B_PAD, P_PAD), lambda c: (0, 0)),            # x
            pl.BlockSpec((9, C1 * B_PAD, IN_CH * B_PAD), lambda c: (0, 0, 0)),  # conv1 taps
            pl.BlockSpec((C1 * B_PAD, 1), lambda c: (0, 0)),                    # conv1 bias
            pl.BlockSpec((9, C2 * B_PAD, C1 * B_PAD), lambda c: (0, 0, 0)),     # conv2 taps
            pl.BlockSpec((C2 * B_PAD, 1), lambda c: (0, 0)),                    # conv2 bias
            pl.BlockSpec((None, HIDDEN, (1 + N_COEF) * P), lambda c: (c, 0, 0)),  # wk1 (bf16, pipelined)
            pl.BlockSpec((1 + N_COEF, HIDDEN, OUT_PAD), lambda c: (0, 0, 0)),   # wk2
        ],
        out_specs=pl.BlockSpec((B_PAD, OUT_PAD), lambda c: (0, 0)),
        scratch_shapes=[
            pltpu.VMEM((C1 * B_PAD, P_PAD), jnp.float32),   # conv1 output (zero tail)
            pltpu.VMEM((C2, B_PAD, P), jnp.float32),        # conv2 output (per channel)
            pltpu.VMEM((B_PAD, HIDDEN), jnp.float32),       # KAN-1 accumulator
        ],
        compiler_params=pltpu.CompilerParams(
            dimension_semantics=("arbitrary",)),
    )(xp, w1t, b1c, w2t, b2c, wk1, wk2)
    return out[:B_REAL, :NUM_CLASSES]


# ------------------------- pure-JAX reference (no Pallas) ---------------------
def _kan_layer_ref(x, base_w, spline_w):
    hp = jax.lax.Precision.HIGHEST
    t = jnp.asarray(KNOTS, jnp.float32)
    sx = x * (1.0 / (1.0 + jnp.exp(-x)))
    base = jnp.dot(sx, base_w, precision=hp)
    xe = x[..., None]                                                  # (B, In, 1)
    b = ((xe >= t[:-1]) & (xe < t[1:])).astype(jnp.float32)            # (B, In, 11)
    for k in range(1, SPLINE_ORD + 1):
        b = ((xe - t[:-(k + 1)]) / (t[k:-1] - t[:-(k + 1)]) * b[..., :-1]
             + (t[k + 1:] - xe) / (t[k + 1:] - t[1:-k]) * b[..., 1:])
    spline = jnp.einsum("bik,kio->bo", b, spline_w, precision=hp)
    return base + spline


def reference_forward(x, raw_params):
    (w1, b1, w2, b2, kan1, kan2) = raw_params
    hp = jax.lax.Precision.HIGHEST
    dn = ("NCHW", "OIHW", "NCHW")
    y = jax.lax.conv_general_dilated(x, w1, (1, 1), "VALID",
                                     dimension_numbers=dn, precision=hp)
    y = jnp.maximum(y + b1[None, :, None, None], 0.0)
    y = jax.lax.conv_general_dilated(y, w2, (1, 1), "VALID",
                                     dimension_numbers=dn, precision=hp)
    y = jnp.maximum(y + b2[None, :, None, None], 0.0)
    h = y.reshape(y.shape[0], -1)                      # torch Flatten (NCHW order)
    h = _kan_layer_ref(h, *kan1)
    h = _kan_layer_ref(h, *kan2)
    m = jnp.max(h, axis=1, keepdims=True)
    e = jnp.exp(h - m)
    return e / jnp.sum(e, axis=1, keepdims=True)


# ------------------------------------ main ------------------------------------
if __name__ == "__main__":
    key = jax.random.PRNGKey(0)
    key, kx, k1, k2, k3, k4 = jax.random.split(key, 6)
    x = jax.random.normal(kx, (B_REAL, IN_CH, H, W), jnp.float32)

    conv1_w = 0.1 * jax.random.normal(k1, (C1, IN_CH, 3, 3), jnp.float32)
    conv1_b = 0.1 * jax.random.normal(k2, (C1,), jnp.float32)
    conv2_w = 0.1 * jax.random.normal(k3, (C2, C1, 3, 3), jnp.float32)
    conv2_b = 0.1 * jax.random.normal(k4, (C2,), jnp.float32)

    # efficient-KAN KANLinear params (standalone spline scaler folded in).
    kan_list = [KAN_IN, HIDDEN, NUM_CLASSES]
    kan_layers = []
    for in_f, out_f in zip(kan_list[:-1], kan_list[1:]):
        key, ka, kb, kc = jax.random.split(key, 4)
        base_w = 0.1 * jax.random.normal(ka, (in_f, out_f), jnp.float32)
        spline_w = 0.1 * jax.random.normal(kb, (N_COEF, in_f, out_f), jnp.float32)
        scaler = 1.0 + 0.01 * jax.random.normal(kc, (in_f, out_f), jnp.float32)
        kan_layers.append((base_w, spline_w * scaler[None]))

    raw_params = (conv1_w, conv1_b, conv2_w, conv2_b, kan_layers[0], kan_layers[1])

    # offline weight prep for the fused kernel
    w1taps, b1col = prep_conv_weights(conv1_w, conv1_b)
    w2taps, b2col = prep_conv_weights(conv2_w, conv2_b)
    wk1 = prep_kan1_weights(*kan_layers[0])            # bf16, lane-transposed
    wk2 = prep_kan2_weights(*kan_layers[1])
    prepped = (w1taps, b1col, w2taps, b2col, wk1, wk2)

    out = jax.block_until_ready(cnn_kan_forward(x, prepped))
    ref = jax.block_until_ready(reference_forward(x, raw_params))

    assert out.shape == (B_REAL, NUM_CLASSES)
    assert np.allclose(np.asarray(out).sum(axis=1), 1.0, atol=1e-4)
    # Tolerance covers the bf16 KAN-1 weights/operands (f32 accumulate) and the
    # EUP approx reciprocal in SiLU; conv weights and KAN-2 stay f32.
    assert np.allclose(np.asarray(out), np.asarray(ref), atol=1e-2), (
        "Pallas fused kernel output mismatch vs JAX reference")

    print("KERNEL_OK")
</pallas_src>

<mosaic_0001>
module attributes {stable_mosaic.version = 11 : i64} {
  func.func @_fused_kernel(%arg0: i32, %arg1: memref<24x384xf32, #tpu.memory_space<vmem>>, %arg2: memref<9x32x24xf32, #tpu.memory_space<vmem>>, %arg3: memref<32x1xf32, #tpu.memory_space<vmem>>, %arg4: memref<9x96x32xf32, #tpu.memory_space<vmem>>, %arg5: memref<96x1xf32, #tpu.memory_space<vmem>>, %arg6: memref<1x32x2304xbf16, #tpu.memory_space<vmem>>, %arg7: memref<9x32x128xf32, #tpu.memory_space<vmem>>, %arg8: memref<8x128xf32, #tpu.memory_space<vmem>>, %arg9: memref<32x384xf32, #tpu.memory_space<vmem>>, %arg10: memref<12x8x256xf32, #tpu.memory_space<vmem>>, %arg11: memref<8x32xf32, #tpu.memory_space<vmem>>) attributes {dimension_semantics = [#tpu.dimension_semantics<arbitrary>], iteration_bounds = array<i64: 12>, scalar_prefetch = 0 : i64, scratch_operands = 3 : i64, tpu.core_type = #tpu.core_type<tc>, window_params = [{pipeline_mode = #tpu.pipeline_mode<synchronous>, transform_indices = @transform_0, window_bounds = array<i64: 24, 384>}, {pipeline_mode = #tpu.pipeline_mode<synchronous>, transform_indices = @transform_1, window_bounds = array<i64: 9, 32, 24>}, {pipeline_mode = #tpu.pipeline_mode<synchronous>, transform_indices = @transform_2, window_bounds = array<i64: 32, 1>}, {pipeline_mode = #tpu.pipeline_mode<synchronous>, transform_indices = @transform_3, window_bounds = array<i64: 9, 96, 32>}, {pipeline_mode = #tpu.pipeline_mode<synchronous>, transform_indices = @transform_4, window_bounds = array<i64: 96, 1>}, {transform_indices = @transform_5, window_bounds = array<i64: 1, 32, 2304>}, {pipeline_mode = #tpu.pipeline_mode<synchronous>, transform_indices = @transform_6, window_bounds = array<i64: 9, 32, 128>}, {pipeline_mode = #tpu.pipeline_mode<synchronous>, transform_indices = @transform_7, window_bounds = array<i64: 8, 128>}]} {
    %c0_i32 = arith.constant 0 : i32
    %0 = arith.cmpi eq, %arg0, %c0_i32 : i32
    %1 = arith.extui %0 : i1 to i32
    %c0_i32_0 = arith.constant 0 : i32
    %2 = arith.cmpi ne, %1, %c0_i32_0 : i32
    scf.if %2 {
      %c0_106 = arith.constant 0 : index
      %c0_107 = arith.constant 0 : index
      %c0_108 = arith.constant 0 : index
      %319 = vector.load %arg2[%c0_106, %c0_107, %c0_108] : memref<9x32x24xf32, #tpu.memory_space<vmem>>, vector<1x32x24xf32>
      %320 = vector.shape_cast %319 : vector<1x32x24xf32> to vector<32x24xf32>
      %c0_109 = arith.constant 0 : index
      %c0_110 = arith.constant 0 : index
      %321 = vector.load %arg1[%c0_109, %c0_110] : memref<24x384xf32, #tpu.memory_space<vmem>>, vector<24x256xf32>
      %cst_111 = arith.constant dense<0.000000e+00> : vector<32x256xf32>
      %322 = tpu.matmul %320, %321, %cst_111 {dimension_numbers = #tpu.dot_dimension_numbers<[1], [0], [0], [1], [0, 0, 1, 1], [], []>} : vector<32x24xf32>, vector<24x256xf32>, vector<32x256xf32> -> vector<32x256xf32>
      %c1 = arith.constant 1 : index
      %c0_112 = arith.constant 0 : index
      %c0_113 = arith.constant 0 : index
      %323 = vector.load %arg2[%c1, %c0_112, %c0_113] : memref<9x32x24xf32, #tpu.memory_space<vmem>>, vector<1x32x24xf32>
      %324 = vector.shape_cast %323 : vector<1x32x24xf32> to vector<32x24xf32>
      %c0_114 = arith.constant 0 : index
      %c1_115 = arith.constant 1 : index
      %325 = vector.load %arg1[%c0_114, %c1_115] : memref<24x384xf32, #tpu.memory_space<vmem>>, vector<24x256xf32>
      %cst_116 = arith.constant dense<0.000000e+00> : vector<32x256xf32>
      %326 = tpu.matmul %324, %325, %cst_116 {dimension_numbers = #tpu.dot_dimension_numbers<[1], [0], [0], [1], [0, 0, 1, 1], [], []>} : vector<32x24xf32>, vector<24x256xf32>, vector<32x256xf32> -> vector<32x256xf32>
      %327 = arith.addf %322, %326 : vector<32x256xf32>
      %c2 = arith.constant 2 : index
      %c0_117 = arith.constant 0 : index
      %c0_118 = arith.constant 0 : index
      %328 = vector.load %arg2[%c2, %c0_117, %c0_118] : memref<9x32x24xf32, #tpu.memory_space<vmem>>, vector<1x32x24xf32>
      %329 = vector.shape_cast %328 : vector<1x32x24xf32> to vector<32x24xf32>
      %c0_119 = arith.constant 0 : index
      %c2_120 = arith.constant 2 : index
      %330 = vector.load %arg1[%c0_119, %c2_120] : memref<24x384xf32, #tpu.memory_space<vmem>>, vector<24x256xf32>
      %cst_121 = arith.constant dense<0.000000e+00> : vector<32x256xf32>
      %331 = tpu.matmul %329, %330, %cst_121 {dimension_numbers = #tpu.dot_dimension_numbers<[1], [0], [0], [1], [0, 0, 1, 1], [], []>} : vector<32x24xf32>, vector<24x256xf32>, vector<32x256xf32> -> vector<32x256xf32>
      %332 = arith.addf %327, %331 : vector<32x256xf32>
      %c3 = arith.constant 3 : index
      %c0_122 = arith.constant 0 : index
      %c0_123 = arith.constant 0 : index
      %333 = vector.load %arg2[%c3, %c0_122, %c0_123] : memref<9x32x24xf32, #tpu.memory_space<vmem>>, vector<1x32x24xf32>
      %334 = vector.shape_cast %333 : vector<1x32x24xf32> to vector<32x24xf32>
      %c0_124 = arith.constant 0 : index
      %c16 = arith.constant 16 : index
      %335 = vector.load %arg1[%c0_124, %c16] : memref<24x384xf32, #tpu.memory_space<vmem>>, vector<24x256xf32>
      %cst_125 = arith.constant dense<0.000000e+00> : vector<32x256xf32>
      %336 = tpu.matmul %334, %335, %cst_125 {dimension_numbers = #tpu.dot_dimension_numbers<[1], [0], [0], [1], [0, 0, 1, 1], [], []>} : vector<32x24xf32>, vector<24x256xf32>, vector<32x256xf32> -> vector<32x256xf32>
      %337 = arith.addf %332, %336 : vector<32x256xf32>
      %c4 = arith.constant 4 : index
      %c0_126 = arith.constant 0 : index
      %c0_127 = arith.constant 0 : index
      %338 = vector.load %arg2[%c4, %c0_126, %c0_127] : memref<9x32x24xf32, #tpu.memory_space<vmem>>, vector<1x32x24xf32>
      %339 = vector.shape_cast %338 : vector<1x32x24xf32> to vector<32x24xf32>
      %c0_128 = arith.constant 0 : index
      %c17 = arith.constant 17 : index
      %340 = vector.load %arg1[%c0_128, %c17] : memref<24x384xf32, #tpu.memory_space<vmem>>, vector<24x256xf32>
      %cst_129 = arith.constant dense<0.000000e+00> : vector<32x256xf32>
      %341 = tpu.matmul %339, %340, %cst_129 {dimension_numbers = #tpu.dot_dimension_numbers<[1], [0], [0], [1], [0, 0, 1, 1], [], []>} : vector<32x24xf32>, vector<24x256xf32>, vector<32x256xf32> -> vector<32x256xf32>
      %342 = arith.addf %337, %341 : vector<32x256xf32>
      %c5 = arith.constant 5 : index
      %c0_130 = arith.constant 0 : index
      %c0_131 = arith.constant 0 : index
      %343 = vector.load %arg2[%c5, %c0_130, %c0_131] : memref<9x32x24xf32, #tpu.memory_space<vmem>>, vector<1x32x24xf32>
      %344 = vector.shape_cast %343 : vector<1x32x24xf32> to vector<32x24xf32>
      %c0_132 = arith.constant 0 : index
      %c18 = arith.constant 18 : index
      %345 = vector.load %arg1[%c0_132, %c18] : memref<24x384xf32, #tpu.memory_space<vmem>>, vector<24x256xf32>
      %cst_133 = arith.constant dense<0.000000e+00> : vector<32x256xf32>
      %346 = tpu.matmul %344, %345, %cst_133 {dimension_numbers = #tpu.dot_dimension_numbers<[1], [0], [0], [1], [0, 0, 1, 1], [], []>} : vector<32x24xf32>, vector<24x256xf32>, vector<32x256xf32> -> vector<32x256xf32>
      %347 = arith.addf %342, %346 : vector<32x256xf32>
      %c6 = arith.constant 6 : index
      %c0_134 = arith.constant 0 : index
      %c0_135 = arith.constant 0 : index
      %348 = vector.load %arg2[%c6, %c0_134, %c0_135] : memref<9x32x24xf32, #tpu.memory_space<vmem>>, vector<1x32x24xf32>
      %349 = vector.shape_cast %348 : vector<1x32x24xf32> to vector<32x24xf32>
      %c0_136 = arith.constant 0 : index
      %c32 = arith.constant 32 : index
      %350 = vector.load %arg1[%c0_136, %c32] : memref<24x384xf32, #tpu.memory_space<vmem>>, vector<24x256xf32>
      %cst_137 = arith.constant dense<0.000000e+00> : vector<32x256xf32>
      %351 = tpu.matmul %349, %350, %cst_137 {dimension_numbers = #tpu.dot_dimension_numbers<[1], [0], [0], [1], [0, 0, 1, 1], [], []>} : vector<32x24xf32>, vector<24x256xf32>, vector<32x256xf32> -> vector<32x256xf32>
      %352 = arith.addf %347, %351 : vector<32x256xf32>
      %c7 = arith.constant 7 : index
      %c0_138 = arith.constant 0 : index
      %c0_139 = arith.constant 0 : index
      %353 = vector.load %arg2[%c7, %c0_138, %c0_139] : memref<9x32x24xf32, #tpu.memory_space<vmem>>, vector<1x32x24xf32>
      %354 = vector.shape_cast %353 : vector<1x32x24xf32> to vector<32x24xf32>
      %c0_140 = arith.constant 0 : index
      %c33 = arith.constant 33 : index
      %355 = vector.load %arg1[%c0_140, %c33] : memref<24x384xf32, #tpu.memory_space<vmem>>, vector<24x256xf32>
      %cst_141 = arith.constant dense<0.000000e+00> : vector<32x256xf32>
      %356 = tpu.matmul %354, %355, %cst_141 {dimension_numbers = #tpu.dot_dimension_numbers<[1], [0], [0], [1], [0, 0, 1, 1], [], []>} : vector<32x24xf32>, vector<24x256xf32>, vector<32x256xf32> -> vector<32x256xf32>
      %357 = arith.addf %352, %356 : vector<32x256xf32>
      %c8 = arith.constant 8 : index
      %c0_142 = arith.constant 0 : index
      %c0_143 = arith.constant 0 : index
      %358 = vector.load %arg2[%c8, %c0_142, %c0_143] : memref<9x32x24xf32, #tpu.memory_space<vmem>>, vector<1x32x24xf32>
      %359 = vector.shape_cast %358 : vector<1x32x24xf32> to vector<32x24xf32>
      %c0_144 = arith.constant 0 : index
      %c34 = arith.constant 34 : index
      %360 = vector.load %arg1[%c0_144, %c34] : memref<24x384xf32, #tpu.memory_space<vmem>>, vector<24x256xf32>
      %cst_145 = arith.constant dense<0.000000e+00> : vector<32x256xf32>
      %361 = tpu.matmul %359, %360, %cst_145 {dimension_numbers = #tpu.dot_dimension_numbers<[1], [0], [0], [1], [0, 0, 1, 1], [], []>} : vector<32x24xf32>, vector<24x256xf32>, vector<32x256xf32> -> vector<32x256xf32>
      %362 = arith.addf %357, %361 : vector<32x256xf32>
      %c0_146 = arith.constant 0 : index
      %c0_147 = arith.constant 0 : index
      %363 = vector.load %arg3[%c0_146, %c0_147] : memref<32x1xf32, #tpu.memory_space<vmem>>, vector<32x1xf32>
      %364 = vector.broadcast %363 : vector<32x1xf32> to vector<32x256xf32>
      %365 = arith.addf %362, %364 : vector<32x256xf32>
      %cst_148 = arith.constant 0.000000e+00 : f32
      %366 = vector.broadcast %cst_148 : f32 to vector<32x256xf32>
      %367 = arith.maximumf %365, %366 : vector<32x256xf32>
      %c0_149 = arith.constant 0 : index
      %c0_150 = arith.constant 0 : index
      %368 = vector.load %arg9[%c0_149, %c0_150] : memref<32x384xf32, #tpu.memory_space<vmem>>, vector<32x256xf32>
      tpu.vector_store %arg9[%c0_149, %c0_150], %367 {strides = array<i32>} : memref<32x384xf32, #tpu.memory_space<vmem>>, vector<32x256xf32>,
      %cst_151 = arith.constant 0.000000e+00 : f32
      %369 = vector.broadcast %cst_151 : f32 to vector<32x128xf32>
      %c0_152 = arith.constant 0 : index
      %c256_153 = arith.constant 256 : index
      %370 = vector.load %arg9[%c0_152, %c256_153] : memref<32x384xf32, #tpu.memory_space<vmem>>, vector<32x128xf32>
      tpu.vector_store %arg9[%c0_152, %c256_153], %369 {strides = array<i32>} : memref<32x384xf32, #tpu.memory_space<vmem>>, vector<32x128xf32>,
      %c0_154 = arith.constant 0 : index
      %c0_155 = arith.constant 0 : index
      %c0_156 = arith.constant 0 : index
      %371 = vector.load %arg4[%c0_154, %c0_155, %c0_156] : memref<9x96x32xf32, #tpu.memory_space<vmem>>, vector<1x96x32xf32>
      %372 = vector.shape_cast %371 : vector<1x96x32xf32> to vector<96x32xf32>
      %c0_157 = arith.constant 0 : index
      %c0_158 = arith.constant 0 : index
      %373 = vector.load %arg9[%c0_157, %c0_158] : memref<32x384xf32, #tpu.memory_space<vmem>>, vector<32x256xf32>
      %cst_159 = arith.constant dense<0.000000e+00> : vector<96x256xf32>
      %374 = tpu.matmul %372, %373, %cst_159 {dimension_numbers = #tpu.dot_dimension_numbers<[1], [0], [0], [1], [0, 0, 1, 1], [], []>} : vector<96x32xf32>, vector<32x256xf32>, vector<96x256xf32> -> vector<96x256xf32>
      %c1_160 = arith.constant 1 : index
      %c0_161 = arith.constant 0 : index
      %c0_162 = arith.constant 0 : index
      %375 = vector.load %arg4[%c1_160, %c0_161, %c0_162] : memref<9x96x32xf32, #tpu.memory_space<vmem>>, vector<1x96x32xf32>
      %376 = vector.shape_cast %375 : vector<1x96x32xf32> to vector<96x32xf32>
      %c0_163 = arith.constant 0 : index
      %c1_164 = arith.constant 1 : index
      %377 = vector.load %arg9[%c0_163, %c1_164] : memref<32x384xf32, #tpu.memory_space<vmem>>, vector<32x256xf32>
      %cst_165 = arith.constant dense<0.000000e+00> : vector<96x256xf32>
      %378 = tpu.matmul %376, %377, %cst_165 {dimension_numbers = #tpu.dot_dimension_numbers<[1], [0], [0], [1], [0, 0, 1, 1], [], []>} : vector<96x32xf32>, vector<32x256xf32>, vector<96x256xf32> -> vector<96x256xf32>
      %379 = arith.addf %374, %378 : vector<96x256xf32>
      %c2_166 = arith.constant 2 : index
      %c0_167 = arith.constant 0 : index
      %c0_168 = arith.constant 0 : index
      %380 = vector.load %arg4[%c2_166, %c0_167, %c0_168] : memref<9x96x32xf32, #tpu.memory_space<vmem>>, vector<1x96x32xf32>
      %381 = vector.shape_cast %380 : vector<1x96x32xf32> to vector<96x32xf32>
      %c0_169 = arith.constant 0 : index
      %c2_170 = arith.constant 2 : index
      %382 = vector.load %arg9[%c0_169, %c2_170] : memref<32x384xf32, #tpu.memory_space<vmem>>, vector<32x256xf32>
      %cst_171 = arith.constant dense<0.000000e+00> : vector<96x256xf32>
      %383 = tpu.matmul %381, %382, %cst_171 {dimension_numbers = #tpu.dot_dimension_numbers<[1], [0], [0], [1], [0, 0, 1, 1], [], []>} : vector<96x32xf32>, vector<32x256xf32>, vector<96x256xf32> -> vector<96x256xf32>
      %384 = arith.addf %379, %383 : vector<96x256xf32>
      %c3_172 = arith.constant 3 : index
      %c0_173 = arith.constant 0 : index
      %c0_174 = arith.constant 0 : index
      %385 = vector.load %arg4[%c3_172, %c0_173, %c0_174] : memref<9x96x32xf32, #tpu.memory_space<vmem>>, vector<1x96x32xf32>
      %386 = vector.shape_cast %385 : vector<1x96x32xf32> to vector<96x32xf32>
      %c0_175 = arith.constant 0 : index
      %c16_176 = arith.constant 16 : index
      %387 = vector.load %arg9[%c0_175, %c16_176] : memref<32x384xf32, #tpu.memory_space<vmem>>, vector<32x256xf32>
      %cst_177 = arith.constant dense<0.000000e+00> : vector<96x256xf32>
      %388 = tpu.matmul %386, %387, %cst_177 {dimension_numbers = #tpu.dot_dimension_numbers<[1], [0], [0], [1], [0, 0, 1, 1], [], []>} : vector<96x32xf32>, vector<32x256xf32>, vector<96x256xf32> -> vector<96x256xf32>
      %389 = arith.addf %384, %388 : vector<96x256xf32>
      %c4_178 = arith.constant 4 : index
      %c0_179 = arith.constant 0 : index
      %c0_180 = arith.constant 0 : index
      %390 = vector.load %arg4[%c4_178, %c0_179, %c0_180] : memref<9x96x32xf32, #tpu.memory_space<vmem>>, vector<1x96x32xf32>
      %391 = vector.shape_cast %390 : vector<1x96x32xf32> to vector<96x32xf32>
      %c0_181 = arith.constant 0 : index
      %c17_182 = arith.constant 17 : index
      %392 = vector.load %arg9[%c0_181, %c17_182] : memref<32x384xf32, #tpu.memory_space<vmem>>, vector<32x256xf32>
      %cst_183 = arith.constant dense<0.000000e+00> : vector<96x256xf32>
      %393 = tpu.matmul %391, %392, %cst_183 {dimension_numbers = #tpu.dot_dimension_numbers<[1], [0], [0], [1], [0, 0, 1, 1], [], []>} : vector<96x32xf32>, vector<32x256xf32>, vector<96x256xf32> -> vector<96x256xf32>
      %394 = arith.addf %389, %393 : vector<96x256xf32>
      %c5_184 = arith.constant 5 : index
      %c0_185 = arith.constant 0 : index
      %c0_186 = arith.constant 0 : index
      %395 = vector.load %arg4[%c5_184, %c0_185, %c0_186] : memref<9x96x32xf32, #tpu.memory_space<vmem>>, vector<1x96x32xf32>
      %396 = vector.shape_cast %395 : vector<1x96x32xf32> to vector<96x32xf32>
      %c0_187 = arith.constant 0 : index
      %c18_188 = arith.constant 18 : index
      %397 = vector.load %arg9[%c0_187, %c18_188] : memref<32x384xf32, #tpu.memory_space<vmem>>, vector<32x256xf32>
      %cst_189 = arith.constant dense<0.000000e+00> : vector<96x256xf32>
      %398 = tpu.matmul %396, %397, %cst_189 {dimension_numbers = #tpu.dot_dimension_numbers<[1], [0], [0], [1], [0, 0, 1, 1], [], []>} : vector<96x32xf32>, vector<32x256xf32>, vector<96x256xf32> -> vector<96x256xf32>
      %399 = arith.addf %394, %398 : vector<96x256xf32>
      %c6_190 = arith.constant 6 : index
      %c0_191 = arith.constant 0 : index
      %c0_192 = arith.constant 0 : index
      %400 = vector.load %arg4[%c6_190, %c0_191, %c0_192] : memref<9x96x32xf32, #tpu.memory_space<vmem>>, vector<1x96x32xf32>
      %401 = vector.shape_cast %400 : vector<1x96x32xf32> to vector<96x32xf32>
      %c0_193 = arith.constant 0 : index
      %c32_194 = arith.constant 32 : index
      %402 = vector.load %arg9[%c0_193, %c32_194] : memref<32x384xf32, #tpu.memory_space<vmem>>, vector<32x256xf32>
      %cst_195 = arith.constant dense<0.000000e+00> : vector<96x256xf32>
      %403 = tpu.matmul %401, %402, %cst_195 {dimension_numbers = #tpu.dot_dimension_numbers<[1], [0], [0], [1], [0, 0, 1, 1], [], []>} : vector<96x32xf32>, vector<32x256xf32>, vector<96x256xf32> -> vector<96x256xf32>
      %404 = arith.addf %399, %403 : vector<96x256xf32>
      %c7_196 = arith.constant 7 : index
      %c0_197 = arith.constant 0 : index
      %c0_198 = arith.constant 0 : index
      %405 = vector.load %arg4[%c7_196, %c0_197, %c0_198] : memref<9x96x32xf32, #tpu.memory_space<vmem>>, vector<1x96x32xf32>
      %406 = vector.shape_cast %405 : vector<1x96x32xf32> to vector<96x32xf32>
      %c0_199 = arith.constant 0 : index
      %c33_200 = arith.constant 33 : index
      %407 = vector.load %arg9[%c0_199, %c33_200] : memref<32x384xf32, #tpu.memory_space<vmem>>, vector<32x256xf32>
      %cst_201 = arith.constant dense<0.000000e+00> : vector<96x256xf32>
      %408 = tpu.matmul %406, %407, %cst_201 {dimension_numbers = #tpu.dot_dimension_numbers<[1], [0], [0], [1], [0, 0, 1, 1], [], []>} : vector<96x32xf32>, vector<32x256xf32>, vector<96x256xf32> -> vector<96x256xf32>
      %409 = arith.addf %404, %408 : vector<96x256xf32>
      %c8_202 = arith.constant 8 : index
      %c0_203 = arith.constant 0 : index
      %c0_204 = arith.constant 0 : index
      %410 = vector.load %arg4[%c8_202, %c0_203, %c0_204] : memref<9x96x32xf32, #tpu.memory_space<vmem>>, vector<1x96x32xf32>
      %411 = vector.shape_cast %410 : vector<1x96x32xf32> to vector<96x32xf32>
      %c0_205 = arith.constant 0 : index
      %c34_206 = arith.constant 34 : index
      %412 = vector.load %arg9[%c0_205, %c34_206] : memref<32x384xf32, #tpu.memory_space<vmem>>, vector<32x256xf32>
      %cst_207 = arith.constant dense<0.000000e+00> : vector<96x256xf32>
      %413 = tpu.matmul %411, %412, %cst_207 {dimension_numbers = #tpu.dot_dimension_numbers<[1], [0], [0], [1], [0, 0, 1, 1], [], []>} : vector<96x32xf32>, vector<32x256xf32>, vector<96x256xf32> -> vector<96x256xf32>
      %414 = arith.addf %409, %413 : vector<96x256xf32>
      %c0_208 = arith.constant 0 : index
      %c0_209 = arith.constant 0 : index
      %415 = vector.load %arg5[%c0_208, %c0_209] : memref<96x1xf32, #tpu.memory_space<vmem>>, vector<96x1xf32>
      %416 = vector.broadcast %415 : vector<96x1xf32> to vector<96x256xf32>
      %417 = arith.addf %414, %416 : vector<96x256xf32>
      %cst_210 = arith.constant 0.000000e+00 : f32
      %418 = vector.broadcast %cst_210 : f32 to vector<96x256xf32>
      %419 = arith.maximumf %417, %418 : vector<96x256xf32>
      %420 = vector.extract_strided_slice %419 {offsets = [0, 0], sizes = [8, 256], strides = [1, 1]} : vector<96x256xf32> to vector<8x256xf32>
      %c0_211 = arith.constant 0 : index
      %c0_212 = arith.constant 0 : index
      %c0_213 = arith.constant 0 : index
      %421 = vector.load %arg10[%c0_211, %c0_212, %c0_213] : memref<12x8x256xf32, #tpu.memory_space<vmem>>, vector<1x8x256xf32>
      %422 = vector.shape_cast %421 : vector<1x8x256xf32> to vector<8x256xf32>
      %423 = vector.shape_cast %420 : vector<8x256xf32> to vector<1x8x256xf32>
      tpu.vector_store %arg10[%c0_211, %c0_212, %c0_213], %423 {strides = array<i32>} : memref<12x8x256xf32, #tpu.memory_space<vmem>>, vector<1x8x256xf32>,
      %424 = vector.extract_strided_slice %419 {offsets = [8, 0], sizes = [8, 256], strides = [1, 1]} : vector<96x256xf32> to vector<8x256xf32>
      %c1_214 = arith.constant 1 : index
      %c0_215 = arith.constant 0 : index
      %c0_216 = arith.constant 0 : index
      %425 = vector.load %arg10[%c1_214, %c0_215, %c0_216] : memref<12x8x256xf32, #tpu.memory_space<vmem>>, vector<1x8x256xf32>
      %426 = vector.shape_cast %425 : vector<1x8x256xf32> to vector<8x256xf32>
      %427 = vector.shape_cast %424 : vector<8x256xf32> to vector<1x8x256xf32>
      tpu.vector_store %arg10[%c1_214, %c0_215, %c0_216], %427 {strides = array<i32>} : memref<12x8x256xf32, #tpu.memory_space<vmem>>, vector<1x8x256xf32>,
      %428 = vector.extract_strided_slice %419 {offsets = [16, 0], sizes = [8, 256], strides = [1, 1]} : vector<96x256xf32> to vector<8x256xf32>
      %c2_217 = arith.constant 2 : index
      %c0_218 = arith.constant 0 : index
      %c0_219 = arith.constant 0 : index
      %429 = vector.load %arg10[%c2_217, %c0_218, %c0_219] : memref<12x8x256xf32, #tpu.memory_space<vmem>>, vector<1x8x256xf32>
      %430 = vector.shape_cast %429 : vector<1x8x256xf32> to vector<8x256xf32>
      %431 = vector.shape_cast %428 : vector<8x256xf32> to vector<1x8x256xf32>
      tpu.vector_store %arg10[%c2_217, %c0_218, %c0_219], %431 {strides = array<i32>} : memref<12x8x256xf32, #tpu.memory_space<vmem>>, vector<1x8x256xf32>,
      %432 = vector.extract_strided_slice %419 {offsets = [24, 0], sizes = [8, 256], strides = [1, 1]} : vector<96x256xf32> to vector<8x256xf32>
      %c3_220 = arith.constant 3 : index
      %c0_221 = arith.constant 0 : index
      %c0_222 = arith.constant 0 : index
      %433 = vector.load %arg10[%c3_220, %c0_221, %c0_222] : memref<12x8x256xf32, #tpu.memory_space<vmem>>, vector<1x8x256xf32>
      %434 = vector.shape_cast %433 : vector<1x8x256xf32> to vector<8x256xf32>
      %435 = vector.shape_cast %432 : vector<8x256xf32> to vector<1x8x256xf32>
      tpu.vector_store %arg10[%c3_220, %c0_221, %c0_222], %435 {strides = array<i32>} : memref<12x8x256xf32, #tpu.memory_space<vmem>>, vector<1x8x256xf32>,
      %436 = vector.extract_strided_slice %419 {offsets = [32, 0], sizes = [8, 256], strides = [1, 1]} : vector<96x256xf32> to vector<8x256xf32>
      %c4_223 = arith.constant 4 : index
      %c0_224 = arith.constant 0 : index
      %c0_225 = arith.constant 0 : index
      %437 = vector.load %arg10[%c4_223, %c0_224, %c0_225] : memref<12x8x256xf32, #tpu.memory_space<vmem>>, vector<1x8x256xf32>
      %438 = vector.shape_cast %437 : vector<1x8x256xf32> to vector<8x256xf32>
      %439 = vector.shape_cast %436 : vector<8x256xf32> to vector<1x8x256xf32>
      tpu.vector_store %arg10[%c4_223, %c0_224, %c0_225], %439 {strides = array<i32>} : memref<12x8x256xf32, #tpu.memory_space<vmem>>, vector<1x8x256xf32>,
      %440 = vector.extract_strided_slice %419 {offsets = [40, 0], sizes = [8, 256], strides = [1, 1]} : vector<96x256xf32> to vector<8x256xf32>
      %c5_226 = arith.constant 5 : index
      %c0_227 = arith.constant 0 : index
      %c0_228 = arith.constant 0 : index
      %441 = vector.load %arg10[%c5_226, %c0_227, %c0_228] : memref<12x8x256xf32, #tpu.memory_space<vmem>>, vector<1x8x256xf32>
      %442 = vector.shape_cast %441 : vector<1x8x256xf32> to vector<8x256xf32>
      %443 = vector.shape_cast %440 : vector<8x256xf32> to vector<1x8x256xf32>
      tpu.vector_store %arg10[%c5_226, %c0_227, %c0_228], %443 {strides = array<i32>} : memref<12x8x256xf32, #tpu.memory_space<vmem>>, vector<1x8x256xf32>,
      %444 = vector.extract_strided_slice %419 {offsets = [48, 0], sizes = [8, 256], strides = [1, 1]} : vector<96x256xf32> to vector<8x256xf32>
      %c6_229 = arith.constant 6 : index
      %c0_230 = arith.constant 0 : index
      %c0_231 = arith.constant 0 : index
      %445 = vector.load %arg10[%c6_229, %c0_230, %c0_231] : memref<12x8x256xf32, #tpu.memory_space<vmem>>, vector<1x8x256xf32>
      %446 = vector.shape_cast %445 : vector<1x8x256xf32> to vector<8x256xf32>
      %447 = vector.shape_cast %444 : vector<8x256xf32> to vector<1x8x256xf32>
      tpu.vector_store %arg10[%c6_229, %c0_230, %c0_231], %447 {strides = array<i32>} : memref<12x8x256xf32, #tpu.memory_space<vmem>>, vector<1x8x256xf32>,
      %448 = vector.extract_strided_slice %419 {offsets = [56, 0], sizes = [8, 256], strides = [1, 1]} : vector<96x256xf32> to vector<8x256xf32>
      %c7_232 = arith.constant 7 : index
      %c0_233 = arith.constant 0 : index
      %c0_234 = arith.constant 0 : index
      %449 = vector.load %arg10[%c7_232, %c0_233, %c0_234] : memref<12x8x256xf32, #tpu.memory_space<vmem>>, vector<1x8x256xf32>
      %450 = vector.shape_cast %449 : vector<1x8x256xf32> to vector<8x256xf32>
      %451 = vector.shape_cast %448 : vector<8x256xf32> to vector<1x8x256xf32>
      tpu.vector_store %arg10[%c7_232, %c0_233, %c0_234], %451 {strides = array<i32>} : memref<12x8x256xf32, #tpu.memory_space<vmem>>, vector<1x8x256xf32>,
      %452 = vector.extract_strided_slice %419 {offsets = [64, 0], sizes = [8, 256], strides = [1, 1]} : vector<96x256xf32> to vector<8x256xf32>
      %c8_235 = arith.constant 8 : index
      %c0_236 = arith.constant 0 : index
      %c0_237 = arith.constant 0 : index
      %453 = vector.load %arg10[%c8_235, %c0_236, %c0_237] : memref<12x8x256xf32, #tpu.memory_space<vmem>>, vector<1x8x256xf32>
      %454 = vector.shape_cast %453 : vector<1x8x256xf32> to vector<8x256xf32>
      %455 = vector.shape_cast %452 : vector<8x256xf32> to vector<1x8x256xf32>
      tpu.vector_store %arg10[%c8_235, %c0_236, %c0_237], %455 {strides = array<i32>} : memref<12x8x256xf32, #tpu.memory_space<vmem>>, vector<1x8x256xf32>,
      %456 = vector.extract_strided_slice %419 {offsets = [72, 0], sizes = [8, 256], strides = [1, 1]} : vector<96x256xf32> to vector<8x256xf32>
      %c9 = arith.constant 9 : index
      %c0_238 = arith.constant 0 : index
      %c0_239 = arith.constant 0 : index
      %457 = vector.load %arg10[%c9, %c0_238, %c0_239] : memref<12x8x256xf32, #tpu.memory_space<vmem>>, vector<1x8x256xf32>
      %458 = vector.shape_cast %457 : vector<1x8x256xf32> to vector<8x256xf32>
      %459 = vector.shape_cast %456 : vector<8x256xf32> to vector<1x8x256xf32>
      tpu.vector_store %arg10[%c9, %c0_238, %c0_239], %459 {strides = array<i32>} : memref<12x8x256xf32, #tpu.memory_space<vmem>>, vector<1x8x256xf32>,
      %460 = vector.extract_strided_slice %419 {offsets = [80, 0], sizes = [8, 256], strides = [1, 1]} : vector<96x256xf32> to vector<8x256xf32>
      %c10 = arith.constant 10 : index
      %c0_240 = arith.constant 0 : index
      %c0_241 = arith.constant 0 : index
      %461 = vector.load %arg10[%c10, %c0_240, %c0_241] : memref<12x8x256xf32, #tpu.memory_space<vmem>>, vector<1x8x256xf32>
      %462 = vector.shape_cast %461 : vector<1x8x256xf32> to vector<8x256xf32>
      %463 = vector.shape_cast %460 : vector<8x256xf32> to vector<1x8x256xf32>
      tpu.vector_store %arg10[%c10, %c0_240, %c0_241], %463 {strides = array<i32>} : memref<12x8x256xf32, #tpu.memory_space<vmem>>, vector<1x8x256xf32>,
      %464 = vector.extract_strided_slice %419 {offsets = [88, 0], sizes = [8, 256], strides = [1, 1]} : vector<96x256xf32> to vector<8x256xf32>
      %c11 = arith.constant 11 : index
      %c0_242 = arith.constant 0 : index
      %c0_243 = arith.constant 0 : index
      %465 = vector.load %arg10[%c11, %c0_242, %c0_243] : memref<12x8x256xf32, #tpu.memory_space<vmem>>, vector<1x8x256xf32>
      %466 = vector.shape_cast %465 : vector<1x8x256xf32> to vector<8x256xf32>
      %467 = vector.shape_cast %464 : vector<8x256xf32> to vector<1x8x256xf32>
      tpu.vector_store %arg10[%c11, %c0_242, %c0_243], %467 {strides = array<i32>} : memref<12x8x256xf32, #tpu.memory_space<vmem>>, vector<1x8x256xf32>,
      %cst_244 = arith.constant 0.000000e+00 : f32
      %468 = vector.broadcast %cst_244 : f32 to vector<8x32xf32>
      %c0_245 = arith.constant 0 : index
      %c0_246 = arith.constant 0 : index
      %469 = vector.load %arg11[%c0_245, %c0_246] : memref<8x32xf32, #tpu.memory_space<vmem>>, vector<8x32xf32>
      tpu.vector_store %arg11[%c0_245, %c0_246], %468 {strides = array<i32>} : memref<8x32xf32, #tpu.memory_space<vmem>>, vector<8x32xf32>,
    } else {
    }
    %3 = arith.index_cast %arg0 : i32 to index
    %c0 = arith.constant 0 : index
    %c0_1 = arith.constant 0 : index
    %4 = vector.load %arg10[%3, %c0, %c0_1] : memref<12x8x256xf32, #tpu.memory_space<vmem>>, vector<1x8x256xf32>
    %5 = vector.shape_cast %4 : vector<1x8x256xf32> to vector<8x256xf32>
    %cst = arith.constant -2.200000e+00 : f32
    %6 = vector.broadcast %cst : f32 to vector<8x256xf32>
    %7 = arith.cmpf oge, %5, %6 : vector<8x256xf32>
    %8 = arith.extui %7 : vector<8x256xi1> to vector<8x256xi32>
    %9 = arith.sitofp %8 : vector<8x256xi32> to vector<8x256xf32>
    %cst_2 = arith.constant -1.800000e+00 : f32
    %10 = vector.broadcast %cst_2 : f32 to vector<8x256xf32>
    %11 = arith.cmpf oge, %5, %10 : vector<8x256xf32>
    %12 = arith.extui %11 : vector<8x256xi1> to vector<8x256xi32>
    %13 = arith.sitofp %12 : vector<8x256xi32> to vector<8x256xf32>
    %cst_3 = arith.constant -1.400000e+00 : f32
    %14 = vector.broadcast %cst_3 : f32 to vector<8x256xf32>
    %15 = arith.cmpf oge, %5, %14 : vector<8x256xf32>
    %16 = arith.extui %15 : vector<8x256xi1> to vector<8x256xi32>
    %17 = arith.sitofp %16 : vector<8x256xi32> to vector<8x256xf32>
    %cst_4 = arith.constant -1.000000e+00 : f32
    %18 = vector.broadcast %cst_4 : f32 to vector<8x256xf32>
    %19 = arith.cmpf oge, %5, %18 : vector<8x256xf32>
    %20 = arith.extui %19 : vector<8x256xi1> to vector<8x256xi32>
    %21 = arith.sitofp %20 : vector<8x256xi32> to vector<8x256xf32>
    %cst_5 = arith.constant -6.000000e-01 : f32
    %22 = vector.broadcast %cst_5 : f32 to vector<8x256xf32>
    %23 = arith.cmpf oge, %5, %22 : vector<8x256xf32>
    %24 = arith.extui %23 : vector<8x256xi1> to vector<8x256xi32>
    %25 = arith.sitofp %24 : vector<8x256xi32> to vector<8x256xf32>
    %cst_6 = arith.constant -2.000000e-01 : f32
    %26 = vector.broadcast %cst_6 : f32 to vector<8x256xf32>
    %27 = arith.cmpf oge, %5, %26 : vector<8x256xf32>
    %28 = arith.extui %27 : vector<8x256xi1> to vector<8x256xi32>
    %29 = arith.sitofp %28 : vector<8x256xi32> to vector<8x256xf32>
    %cst_7 = arith.constant 2.000000e-01 : f32
    %30 = vector.broadcast %cst_7 : f32 to vector<8x256xf32>
    %31 = arith.cmpf oge, %5, %30 : vector<8x256xf32>
    %32 = arith.extui %31 : vector<8x256xi1> to vector<8x256xi32>
    %33 = arith.sitofp %32 : vector<8x256xi32> to vector<8x256xf32>
    %cst_8 = arith.constant 6.000000e-01 : f32
    %34 = vector.broadcast %cst_8 : f32 to vector<8x256xf32>
    %35 = arith.cmpf oge, %5, %34 : vector<8x256xf32>
    %36 = arith.extui %35 : vector<8x256xi1> to vector<8x256xi32>
    %37 = arith.sitofp %36 : vector<8x256xi32> to vector<8x256xf32>
    %cst_9 = arith.constant 1.000000e+00 : f32
    %38 = vector.broadcast %cst_9 : f32 to vector<8x256xf32>
    %39 = arith.cmpf oge, %5, %38 : vector<8x256xf32>
    %40 = arith.extui %39 : vector<8x256xi1> to vector<8x256xi32>
    %41 = arith.sitofp %40 : vector<8x256xi32> to vector<8x256xf32>
    %cst_10 = arith.constant 1.400000e+00 : f32
    %42 = vector.broadcast %cst_10 : f32 to vector<8x256xf32>
    %43 = arith.cmpf oge, %5, %42 : vector<8x256xf32>
    %44 = arith.extui %43 : vector<8x256xi1> to vector<8x256xi32>
    %45 = arith.sitofp %44 : vector<8x256xi32> to vector<8x256xf32>
    %cst_11 = arith.constant 1.800000e+00 : f32
    %46 = vector.broadcast %cst_11 : f32 to vector<8x256xf32>
    %47 = arith.cmpf oge, %5, %46 : vector<8x256xf32>
    %48 = arith.extui %47 : vector<8x256xi1> to vector<8x256xi32>
    %49 = arith.sitofp %48 : vector<8x256xi32> to vector<8x256xf32>
    %cst_12 = arith.constant 2.200000e+00 : f32
    %50 = vector.broadcast %cst_12 : f32 to vector<8x256xf32>
    %51 = arith.cmpf oge, %5, %50 : vector<8x256xf32>
    %52 = arith.extui %51 : vector<8x256xi1> to vector<8x256xi32>
    %53 = arith.sitofp %52 : vector<8x256xi32> to vector<8x256xf32>
    %54 = arith.subf %9, %13 : vector<8x256xf32>
    %55 = arith.subf %13, %17 : vector<8x256xf32>
    %56 = arith.subf %17, %21 : vector<8x256xf32>
    %57 = arith.subf %21, %25 : vector<8x256xf32>
    %58 = arith.subf %25, %29 : vector<8x256xf32>
    %59 = arith.subf %29, %33 : vector<8x256xf32>
    %60 = arith.subf %33, %37 : vector<8x256xf32>
    %61 = arith.subf %37, %41 : vector<8x256xf32>
    %62 = arith.subf %41, %45 : vector<8x256xf32>
    %63 = arith.subf %45, %49 : vector<8x256xf32>
    %64 = arith.subf %49, %53 : vector<8x256xf32>
    %cst_13 = arith.constant 2.500000e+00 : f32
    %65 = vector.broadcast %cst_13 : f32 to vector<8x256xf32>
    %66 = arith.mulf %5, %65 : vector<8x256xf32>
    %cst_14 = arith.constant -5.500000e+00 : f32
    %67 = vector.broadcast %cst_14 : f32 to vector<8x256xf32>
    %68 = arith.subf %66, %67 : vector<8x256xf32>
    %69 = arith.mulf %68, %54 : vector<8x256xf32>
    %cst_15 = arith.constant -3.500000e+00 : f32
    %70 = vector.broadcast %cst_15 : f32 to vector<8x256xf32>
    %71 = arith.subf %70, %66 : vector<8x256xf32>
    %72 = arith.mulf %71, %55 : vector<8x256xf32>
    %73 = arith.addf %69, %72 : vector<8x256xf32>
    %cst_16 = arith.constant -4.500000e+00 : f32
    %74 = vector.broadcast %cst_16 : f32 to vector<8x256xf32>
    %75 = arith.subf %66, %74 : vector<8x256xf32>
    %76 = arith.mulf %75, %55 : vector<8x256xf32>
    %cst_17 = arith.constant -2.500000e+00 : f32
    %77 = vector.broadcast %cst_17 : f32 to vector<8x256xf32>
    %78 = arith.subf %77, %66 : vector<8x256xf32>
    %79 = arith.mulf %78, %56 : vector<8x256xf32>
    %80 = arith.addf %76, %79 : vector<8x256xf32>
    %cst_18 = arith.constant -3.500000e+00 : f32
    %81 = vector.broadcast %cst_18 : f32 to vector<8x256xf32>
    %82 = arith.subf %66, %81 : vector<8x256xf32>
    %83 = arith.mulf %82, %56 : vector<8x256xf32>
    %cst_19 = arith.constant -1.500000e+00 : f32
    %84 = vector.broadcast %cst_19 : f32 to vector<8x256xf32>
    %85 = arith.subf %84, %66 : vector<8x256xf32>
    %86 = arith.mulf %85, %57 : vector<8x256xf32>
    %87 = arith.addf %83, %86 : vector<8x256xf32>
    %cst_20 = arith.constant -2.500000e+00 : f32
    %88 = vector.broadcast %cst_20 : f32 to vector<8x256xf32>
    %89 = arith.subf %66, %88 : vector<8x256xf32>
    %90 = arith.mulf %89, %57 : vector<8x256xf32>
    %cst_21 = arith.constant -5.000000e-01 : f32
    %91 = vector.broadcast %cst_21 : f32 to vector<8x256xf32>
    %92 = arith.subf %91, %66 : vector<8x256xf32>
    %93 = arith.mulf %92, %58 : vector<8x256xf32>
    %94 = arith.addf %90, %93 : vector<8x256xf32>
    %cst_22 = arith.constant -1.500000e+00 : f32
    %95 = vector.broadcast %cst_22 : f32 to vector<8x256xf32>
    %96 = arith.subf %66, %95 : vector<8x256xf32>
    %97 = arith.mulf %96, %58 : vector<8x256xf32>
    %cst_23 = arith.constant 5.000000e-01 : f32
    %98 = vector.broadcast %cst_23 : f32 to vector<8x256xf32>
    %99 = arith.subf %98, %66 : vector<8x256xf32>
    %100 = arith.mulf %99, %59 : vector<8x256xf32>
    %101 = arith.addf %97, %100 : vector<8x256xf32>
    %cst_24 = arith.constant -5.000000e-01 : f32
    %102 = vector.broadcast %cst_24 : f32 to vector<8x256xf32>
    %103 = arith.subf %66, %102 : vector<8x256xf32>
    %104 = arith.mulf %103, %59 : vector<8x256xf32>
    %cst_25 = arith.constant 1.500000e+00 : f32
    %105 = vector.broadcast %cst_25 : f32 to vector<8x256xf32>
    %106 = arith.subf %105, %66 : vector<8x256xf32>
    %107 = arith.mulf %106, %60 : vector<8x256xf32>
    %108 = arith.addf %104, %107 : vector<8x256xf32>
    %cst_26 = arith.constant 5.000000e-01 : f32
    %109 = vector.broadcast %cst_26 : f32 to vector<8x256xf32>
    %110 = arith.subf %66, %109 : vector<8x256xf32>
    %111 = arith.mulf %110, %60 : vector<8x256xf32>
    %cst_27 = arith.constant 2.500000e+00 : f32
    %112 = vector.broadcast %cst_27 : f32 to vector<8x256xf32>
    %113 = arith.subf %112, %66 : vector<8x256xf32>
    %114 = arith.mulf %113, %61 : vector<8x256xf32>
    %115 = arith.addf %111, %114 : vector<8x256xf32>
    %cst_28 = arith.constant 1.500000e+00 : f32
    %116 = vector.broadcast %cst_28 : f32 to vector<8x256xf32>
    %117 = arith.subf %66, %116 : vector<8x256xf32>
    %118 = arith.mulf %117, %61 : vector<8x256xf32>
    %cst_29 = arith.constant 3.500000e+00 : f32
    %119 = vector.broadcast %cst_29 : f32 to vector<8x256xf32>
    %120 = arith.subf %119, %66 : vector<8x256xf32>
    %121 = arith.mulf %120, %62 : vector<8x256xf32>
    %122 = arith.addf %118, %121 : vector<8x256xf32>
    %cst_30 = arith.constant 2.500000e+00 : f32
    %123 = vector.broadcast %cst_30 : f32 to vector<8x256xf32>
    %124 = arith.subf %66, %123 : vector<8x256xf32>
    %125 = arith.mulf %124, %62 : vector<8x256xf32>
    %cst_31 = arith.constant 4.500000e+00 : f32
    %126 = vector.broadcast %cst_31 : f32 to vector<8x256xf32>
    %127 = arith.subf %126, %66 : vector<8x256xf32>
    %128 = arith.mulf %127, %63 : vector<8x256xf32>
    %129 = arith.addf %125, %128 : vector<8x256xf32>
    %cst_32 = arith.constant 3.500000e+00 : f32
    %130 = vector.broadcast %cst_32 : f32 to vector<8x256xf32>
    %131 = arith.subf %66, %130 : vector<8x256xf32>
    %132 = arith.mulf %131, %63 : vector<8x256xf32>
    %cst_33 = arith.constant 5.500000e+00 : f32
    %133 = vector.broadcast %cst_33 : f32 to vector<8x256xf32>
    %134 = arith.subf %133, %66 : vector<8x256xf32>
    %135 = arith.mulf %134, %64 : vector<8x256xf32>
    %136 = arith.addf %132, %135 : vector<8x256xf32>
    %cst_34 = arith.constant 1.250000e+00 : f32
    %137 = vector.broadcast %cst_34 : f32 to vector<8x256xf32>
    %138 = arith.mulf %5, %137 : vector<8x256xf32>
    %cst_35 = arith.constant -2.750000e+00 : f32
    %139 = vector.broadcast %cst_35 : f32 to vector<8x256xf32>
    %140 = arith.subf %138, %139 : vector<8x256xf32>
    %141 = arith.mulf %140, %73 : vector<8x256xf32>
    %cst_36 = arith.constant -1.250000e+00 : f32
    %142 = vector.broadcast %cst_36 : f32 to vector<8x256xf32>
    %143 = arith.subf %142, %138 : vector<8x256xf32>
    %144 = arith.mulf %143, %80 : vector<8x256xf32>
    %145 = arith.addf %141, %144 : vector<8x256xf32>
    %cst_37 = arith.constant -2.250000e+00 : f32
    %146 = vector.broadcast %cst_37 : f32 to vector<8x256xf32>
    %147 = arith.subf %138, %146 : vector<8x256xf32>
    %148 = arith.mulf %147, %80 : vector<8x256xf32>
    %cst_38 = arith.constant -7.500000e-01 : f32
    %149 = vector.broadcast %cst_38 : f32 to vector<8x256xf32>
    %150 = arith.subf %149, %138 : vector<8x256xf32>
    %151 = arith.mulf %150, %87 : vector<8x256xf32>
    %152 = arith.addf %148, %151 : vector<8x256xf32>
    %cst_39 = arith.constant -1.750000e+00 : f32
    %153 = vector.broadcast %cst_39 : f32 to vector<8x256xf32>
    %154 = arith.subf %138, %153 : vector<8x256xf32>
    %155 = arith.mulf %154, %87 : vector<8x256xf32>
    %cst_40 = arith.constant -2.500000e-01 : f32
    %156 = vector.broadcast %cst_40 : f32 to vector<8x256xf32>
    %157 = arith.subf %156, %138 : vector<8x256xf32>
    %158 = arith.mulf %157, %94 : vector<8x256xf32>
    %159 = arith.addf %155, %158 : vector<8x256xf32>
    %cst_41 = arith.constant -1.250000e+00 : f32
    %160 = vector.broadcast %cst_41 : f32 to vector<8x256xf32>
    %161 = arith.subf %138, %160 : vector<8x256xf32>
    %162 = arith.mulf %161, %94 : vector<8x256xf32>
    %cst_42 = arith.constant 2.500000e-01 : f32
    %163 = vector.broadcast %cst_42 : f32 to vector<8x256xf32>
    %164 = arith.subf %163, %138 : vector<8x256xf32>
    %165 = arith.mulf %164, %101 : vector<8x256xf32>
    %166 = arith.addf %162, %165 : vector<8x256xf32>
    %cst_43 = arith.constant -7.500000e-01 : f32
    %167 = vector.broadcast %cst_43 : f32 to vector<8x256xf32>
    %168 = arith.subf %138, %167 : vector<8x256xf32>
    %169 = arith.mulf %168, %101 : vector<8x256xf32>
    %cst_44 = arith.constant 7.500000e-01 : f32
    %170 = vector.broadcast %cst_44 : f32 to vector<8x256xf32>
    %171 = arith.subf %170, %138 : vector<8x256xf32>
    %172 = arith.mulf %171, %108 : vector<8x256xf32>
    %173 = arith.addf %169, %172 : vector<8x256xf32>
    %cst_45 = arith.constant -2.500000e-01 : f32
    %174 = vector.broadcast %cst_45 : f32 to vector<8x256xf32>
    %175 = arith.subf %138, %174 : vector<8x256xf32>
    %176 = arith.mulf %175, %108 : vector<8x256xf32>
    %cst_46 = arith.constant 1.250000e+00 : f32
    %177 = vector.broadcast %cst_46 : f32 to vector<8x256xf32>
    %178 = arith.subf %177, %138 : vector<8x256xf32>
    %179 = arith.mulf %178, %115 : vector<8x256xf32>
    %180 = arith.addf %176, %179 : vector<8x256xf32>
    %cst_47 = arith.constant 2.500000e-01 : f32
    %181 = vector.broadcast %cst_47 : f32 to vector<8x256xf32>
    %182 = arith.subf %138, %181 : vector<8x256xf32>
    %183 = arith.mulf %182, %115 : vector<8x256xf32>
    %cst_48 = arith.constant 1.750000e+00 : f32
    %184 = vector.broadcast %cst_48 : f32 to vector<8x256xf32>
    %185 = arith.subf %184, %138 : vector<8x256xf32>
    %186 = arith.mulf %185, %122 : vector<8x256xf32>
    %187 = arith.addf %183, %186 : vector<8x256xf32>
    %cst_49 = arith.constant 7.500000e-01 : f32
    %188 = vector.broadcast %cst_49 : f32 to vector<8x256xf32>
    %189 = arith.subf %138, %188 : vector<8x256xf32>
    %190 = arith.mulf %189, %122 : vector<8x256xf32>
    %cst_50 = arith.constant 2.250000e+00 : f32
    %191 = vector.broadcast %cst_50 : f32 to vector<8x256xf32>
    %192 = arith.subf %191, %138 : vector<8x256xf32>
    %193 = arith.mulf %192, %129 : vector<8x256xf32>
    %194 = arith.addf %190, %193 : vector<8x256xf32>
    %cst_51 = arith.constant 1.250000e+00 : f32
    %195 = vector.broadcast %cst_51 : f32 to vector<8x256xf32>
    %196 = arith.subf %138, %195 : vector<8x256xf32>
    %197 = arith.mulf %196, %129 : vector<8x256xf32>
    %cst_52 = arith.constant 2.750000e+00 : f32
    %198 = vector.broadcast %cst_52 : f32 to vector<8x256xf32>
    %199 = arith.subf %198, %138 : vector<8x256xf32>
    %200 = arith.mulf %199, %136 : vector<8x256xf32>
    %201 = arith.addf %197, %200 : vector<8x256xf32>
    %cst_53 = arith.constant 0.833333313 : f32
    %202 = vector.broadcast %cst_53 : f32 to vector<8x256xf32>
    %203 = arith.mulf %5, %202 : vector<8x256xf32>
    %cst_54 = arith.constant -1.83333337 : f32
    %204 = vector.broadcast %cst_54 : f32 to vector<8x256xf32>
    %205 = arith.subf %203, %204 : vector<8x256xf32>
    %206 = arith.mulf %205, %145 : vector<8x256xf32>
    %cst_55 = arith.constant -5.000000e-01 : f32
    %207 = vector.broadcast %cst_55 : f32 to vector<8x256xf32>
    %208 = arith.subf %207, %203 : vector<8x256xf32>
    %209 = arith.mulf %208, %152 : vector<8x256xf32>
    %210 = arith.addf %206, %209 : vector<8x256xf32>
    %cst_56 = arith.constant -1.500000e+00 : f32
    %211 = vector.broadcast %cst_56 : f32 to vector<8x256xf32>
    %212 = arith.subf %203, %211 : vector<8x256xf32>
    %213 = arith.mulf %212, %152 : vector<8x256xf32>
    %cst_57 = arith.constant -0.166666672 : f32
    %214 = vector.broadcast %cst_57 : f32 to vector<8x256xf32>
    %215 = arith.subf %214, %203 : vector<8x256xf32>
    %216 = arith.mulf %215, %159 : vector<8x256xf32>
    %217 = arith.addf %213, %216 : vector<8x256xf32>
    %cst_58 = arith.constant -1.16666663 : f32
    %218 = vector.broadcast %cst_58 : f32 to vector<8x256xf32>
    %219 = arith.subf %203, %218 : vector<8x256xf32>
    %220 = arith.mulf %219, %159 : vector<8x256xf32>
    %cst_59 = arith.constant 0.166666672 : f32
    %221 = vector.broadcast %cst_59 : f32 to vector<8x256xf32>
    %222 = arith.subf %221, %203 : vector<8x256xf32>
    %223 = arith.mulf %222, %166 : vector<8x256xf32>
    %224 = arith.addf %220, %223 : vector<8x256xf32>
    %cst_60 = arith.constant -0.833333313 : f32
    %225 = vector.broadcast %cst_60 : f32 to vector<8x256xf32>
    %226 = arith.subf %203, %225 : vector<8x256xf32>
    %227 = arith.mulf %226, %166 : vector<8x256xf32>
    %cst_61 = arith.constant 5.000000e-01 : f32
    %228 = vector.broadcast %cst_61 : f32 to vector<8x256xf32>
    %229 = arith.subf %228, %203 : vector<8x256xf32>
    %230 = arith.mulf %229, %173 : vector<8x256xf32>
    %231 = arith.addf %227, %230 : vector<8x256xf32>
    %cst_62 = arith.constant -5.000000e-01 : f32
    %232 = vector.broadcast %cst_62 : f32 to vector<8x256xf32>
    %233 = arith.subf %203, %232 : vector<8x256xf32>
    %234 = arith.mulf %233, %173 : vector<8x256xf32>
    %cst_63 = arith.constant 0.833333313 : f32
    %235 = vector.broadcast %cst_63 : f32 to vector<8x256xf32>
    %236 = arith.subf %235, %203 : vector<8x256xf32>
    %237 = arith.mulf %236, %180 : vector<8x256xf32>
    %238 = arith.addf %234, %237 : vector<8x256xf32>
    %cst_64 = arith.constant -0.166666672 : f32
    %239 = vector.broadcast %cst_64 : f32 to vector<8x256xf32>
    %240 = arith.subf %203, %239 : vector<8x256xf32>
    %241 = arith.mulf %240, %180 : vector<8x256xf32>
    %cst_65 = arith.constant 1.16666663 : f32
    %242 = vector.broadcast %cst_65 : f32 to vector<8x256xf32>
    %243 = arith.subf %242, %203 : vector<8x256xf32>
    %244 = arith.mulf %243, %187 : vector<8x256xf32>
    %245 = arith.addf %241, %244 : vector<8x256xf32>
    %cst_66 = arith.constant 0.166666672 : f32
    %246 = vector.broadcast %cst_66 : f32 to vector<8x256xf32>
    %247 = arith.subf %203, %246 : vector<8x256xf32>
    %248 = arith.mulf %247, %187 : vector<8x256xf32>
    %cst_67 = arith.constant 1.500000e+00 : f32
    %249 = vector.broadcast %cst_67 : f32 to vector<8x256xf32>
    %250 = arith.subf %249, %203 : vector<8x256xf32>
    %251 = arith.mulf %250, %194 : vector<8x256xf32>
    %252 = arith.addf %248, %251 : vector<8x256xf32>
    %cst_68 = arith.constant 5.000000e-01 : f32
    %253 = vector.broadcast %cst_68 : f32 to vector<8x256xf32>
    %254 = arith.subf %203, %253 : vector<8x256xf32>
    %255 = arith.mulf %254, %194 : vector<8x256xf32>
    %cst_69 = arith.constant 1.83333337 : f32
    %256 = vector.broadcast %cst_69 : f32 to vector<8x256xf32>
    %257 = arith.subf %256, %203 : vector<8x256xf32>
    %258 = arith.mulf %257, %201 : vector<8x256xf32>
    %259 = arith.addf %255, %258 : vector<8x256xf32>
    %cst_70 = arith.constant 0.000000e+00 : f32
    %260 = vector.broadcast %cst_70 : f32 to vector<8x256xf32>
    %261 = arith.subf %260, %5 : vector<8x256xf32>
    %262 = math.exp %261 : vector<8x256xf32>
    %cst_71 = arith.constant 1.000000e+00 : f32
    %263 = vector.broadcast %cst_71 : f32 to vector<8x256xf32>
    %264 = arith.addf %263, %262 : vector<8x256xf32>
    %265 = tpu.reciprocal %264 {approx = true} : vector<8x256xf32> -> vector<8x256xf32>
    %266 = arith.mulf %5, %265 : vector<8x256xf32>
    %cst_72 = arith.constant 0.000000e+00 : f32
    %267 = vector.broadcast %cst_72 : f32 to vector<8x32xf32>
    %c0_73 = arith.constant 0 : index
    %c0_74 = arith.constant 0 : index
    %c0_75 = arith.constant 0 : index
    %268 = vector.load %arg6[%c0_73, %c0_74, %c0_75] : memref<1x32x2304xbf16, #tpu.memory_space<vmem>>, vector<1x32x256xbf16>
    %269 = vector.shape_cast %268 : vector<1x32x256xbf16> to vector<32x256xbf16>
    %270 = arith.truncf %266 : vector<8x256xf32> to vector<8x256xbf16>
    %cst_76 = arith.constant dense<0.000000e+00> : vector<8x32xf32>
    %271 = tpu.matmul %270, %269, %cst_76 {dimension_numbers = #tpu.dot_dimension_numbers<[1], [1], [0], [0], [0, 0, 1, 0], [], []>} : vector<8x256xbf16>, vector<32x256xbf16>, vector<8x32xf32> -> vector<8x32xf32>
    %272 = arith.addf %267, %271 : vector<8x32xf32>
    %c0_77 = arith.constant 0 : index
    %c0_78 = arith.constant 0 : index
    %c256 = arith.constant 256 : index
    %273 = vector.load %arg6[%c0_77, %c0_78, %c256] : memref<1x32x2304xbf16, #tpu.memory_space<vmem>>, vector<1x32x256xbf16>
    %274 = vector.shape_cast %273 : vector<1x32x256xbf16> to vector<32x256xbf16>
    %275 = arith.truncf %210 : vector<8x256xf32> to vector<8x256xbf16>
    %cst_79 = arith.constant dense<0.000000e+00> : vector<8x32xf32>
    %276 = tpu.matmul %275, %274, %cst_79 {dimension_numbers = #tpu.dot_dimension_numbers<[1], [1], [0], [0], [0, 0, 1, 0], [], []>} : vector<8x256xbf16>, vector<32x256xbf16>, vector<8x32xf32> -> vector<8x32xf32>
    %277 = arith.addf %272, %276 : vector<8x32xf32>
    %c0_80 = arith.constant 0 : index
    %c0_81 = arith.constant 0 : index
    %c512 = arith.constant 512 : index
    %278 = vector.load %arg6[%c0_80, %c0_81, %c512] : memref<1x32x2304xbf16, #tpu.memory_space<vmem>>, vector<1x32x256xbf16>
    %279 = vector.shape_cast %278 : vector<1x32x256xbf16> to vector<32x256xbf16>
    %280 = arith.truncf %217 : vector<8x256xf32> to vector<8x256xbf16>
    %cst_82 = arith.constant dense<0.000000e+00> : vector<8x32xf32>
    %281 = tpu.matmul %280, %279, %cst_82 {dimension_numbers = #tpu.dot_dimension_numbers<[1], [1], [0], [0], [0, 0, 1, 0], [], []>} : vector<8x256xbf16>, vector<32x256xbf16>, vector<8x32xf32> -> vector<8x32xf32>
    %282 = arith.addf %277, %281 : vector<8x32xf32>
    %c0_83 = arith.constant 0 : index
    %c0_84 = arith.constant 0 : index
    %c768 = arith.constant 768 : index
    %283 = vector.load %arg6[%c0_83, %c0_84, %c768] : memref<1x32x2304xbf16, #tpu.memory_space<vmem>>, vector<1x32x256xbf16>
    %284 = vector.shape_cast %283 : vector<1x32x256xbf16> to vector<32x256xbf16>
    %285 = arith.truncf %224 : vector<8x256xf32> to vector<8x256xbf16>
    %cst_85 = arith.constant dense<0.000000e+00> : vector<8x32xf32>
    %286 = tpu.matmul %285, %284, %cst_85 {dimension_numbers = #tpu.dot_dimension_numbers<[1], [1], [0], [0], [0, 0, 1, 0], [], []>} : vector<8x256xbf16>, vector<32x256xbf16>, vector<8x32xf32> -> vector<8x32xf32>
    %287 = arith.addf %282, %286 : vector<8x32xf32>
    %c0_86 = arith.constant 0 : index
    %c0_87 = arith.constant 0 : index
    %c1024 = arith.constant 1024 : index
    %288 = vector.load %arg6[%c0_86, %c0_87, %c1024] : memref<1x32x2304xbf16, #tpu.memory_space<vmem>>, vector<1x32x256xbf16>
    %289 = vector.shape_cast %288 : vector<1x32x256xbf16> to vector<32x256xbf16>
    %290 = arith.truncf %231 : vector<8x256xf32> to vector<8x256xbf16>
    %cst_88 = arith.constant dense<0.000000e+00> : vector<8x32xf32>
    %291 = tpu.matmul %290, %289, %cst_88 {dimension_numbers = #tpu.dot_dimension_numbers<[1], [1], [0], [0], [0, 0, 1, 0], [], []>} : vector<8x256xbf16>, vector<32x256xbf16>, vector<8x32xf32> -> vector<8x32xf32>
    %292 = arith.addf %287, %291 : vector<8x32xf32>
    %c0_89 = arith.constant 0 : index
    %c0_90 = arith.constant 0 : index
    %c1280 = arith.constant 1280 : index
    %293 = vector.load %arg6[%c0_89, %c0_90, %c1280] : memref<1x32x2304xbf16, #tpu.memory_space<vmem>>, vector<1x32x256xbf16>
    %294 = vector.shape_cast %293 : vector<1x32x256xbf16> to vector<32x256xbf16>
    %295 = arith.truncf %238 : vector<8x256xf32> to vector<8x256xbf16>
    %cst_91 = arith.constant dense<0.000000e+00> : vector<8x32xf32>
    %296 = tpu.matmul %295, %294, %cst_91 {dimension_numbers = #tpu.dot_dimension_numbers<[1], [1], [0], [0], [0, 0, 1, 0], [], []>} : vector<8x256xbf16>, vector<32x256xbf16>, vector<8x32xf32> -> vector<8x32xf32>
    %297 = arith.addf %292, %296 : vector<8x32xf32>
    %c0_92 = arith.constant 0 : index
    %c0_93 = arith.constant 0 : index
    %c1536 = arith.constant 1536 : index
    %298 = vector.load %arg6[%c0_92, %c0_93, %c1536] : memref<1x32x2304xbf16, #tpu.memory_space<vmem>>, vector<1x32x256xbf16>
    %299 = vector.shape_cast %298 : vector<1x32x256xbf16> to vector<32x256xbf16>
    %300 = arith.truncf %245 : vector<8x256xf32> to vector<8x256xbf16>
    %cst_94 = arith.constant dense<0.000000e+00> : vector<8x32xf32>
    %301 = tpu.matmul %300, %299, %cst_94 {dimension_numbers = #tpu.dot_dimension_numbers<[1], [1], [0], [0], [0, 0, 1, 0], [], []>} : vector<8x256xbf16>, vector<32x256xbf16>, vector<8x32xf32> -> vector<8x32xf32>
    %302 = arith.addf %297, %301 : vector<8x32xf32>
    %c0_95 = arith.constant 0 : index
    %c0_96 = arith.constant 0 : index
    %c1792 = arith.constant 1792 : index
    %303 = vector.load %arg6[%c0_95, %c0_96, %c1792] : memref<1x32x2304xbf16, #tpu.memory_space<vmem>>, vector<1x32x256xbf16>
    %304 = vector.shape_cast %303 : vector<1x32x256xbf16> to vector<32x256xbf16>
    %305 = arith.truncf %252 : vector<8x256xf32> to vector<8x256xbf16>
    %cst_97 = arith.constant dense<0.000000e+00> : vector<8x32xf32>
    %306 = tpu.matmul %305, %304, %cst_97 {dimension_numbers = #tpu.dot_dimension_numbers<[1], [1], [0], [0], [0, 0, 1, 0], [], []>} : vector<8x256xbf16>, vector<32x256xbf16>, vector<8x32xf32> -> vector<8x32xf32>
    %307 = arith.addf %302, %306 : vector<8x32xf32>
    %c0_98 = arith.constant 0 : index
    %c0_99 = arith.constant 0 : index
    %c2048 = arith.constant 2048 : index
    %308 = vector.load %arg6[%c0_98, %c0_99, %c2048] : memref<1x32x2304xbf16, #tpu.memory_space<vmem>>, vector<1x32x256xbf16>
    %309 = vector.shape_cast %308 : vector<1x32x256xbf16> to vector<32x256xbf16>
    %310 = arith.truncf %259 : vector<8x256xf32> to vector<8x256xbf16>
    %cst_100 = arith.constant dense<0.000000e+00> : vector<8x32xf32>
    %311 = tpu.matmul %310, %309, %cst_100 {dimension_numbers = #tpu.dot_dimension_numbers<[1], [1], [0], [0], [0, 0, 1, 0], [], []>} : vector<8x256xbf16>, vector<32x256xbf16>, vector<8x32xf32> -> vector<8x32xf32>
    %312 = arith.addf %307, %311 : vector<8x32xf32>
    %c0_101 = arith.constant 0 : index
    %c0_102 = arith.constant 0 : index
    %313 = vector.load %arg11[%c0_101, %c0_102] : memref<8x32xf32, #tpu.memory_space<vmem>>, vector<8x32xf32>
    %314 = arith.addf %313, %312 : vector<8x32xf32>
    %c0_103 = arith.constant 0 : index
    %c0_104 = arith.constant 0 : index
    %315 = vector.load %arg11[%c0_103, %c0_104] : memref<8x32xf32, #tpu.memory_space<vmem>>, vector<8x32xf32>
    tpu.vector_store %arg11[%c0_103, %c0_104], %314 {strides = array<i32>} : memref<8x32xf32, #tpu.memory_space<vmem>>, vector<8x32xf32>,
    %c11_i32 = arith.constant 11 : i32
    %316 = arith.cmpi eq, %arg0, %c11_i32 : i32
    %317 = arith.extui %316 : i1 to i32
    %c0_i32_105 = arith.constant 0 : i32
    %318 = arith.cmpi ne, %317, %c0_i32_105 : i32
    scf.if %318 {
      %c0_106 = arith.constant 0 : index
      %c0_107 = arith.constant 0 : index
      %319 = vector.load %arg11[%c0_106, %c0_107] : memref<8x32xf32, #tpu.memory_space<vmem>>, vector<8x32xf32>
      %cst_108 = arith.constant 0.000000e+00 : f32
      %320 = vector.broadcast %cst_108 : f32 to vector<8x128xf32>
      %cst_109 = arith.constant -2.200000e+00 : f32
      %321 = vector.broadcast %cst_109 : f32 to vector<8x32xf32>
      %322 = arith.cmpf oge, %319, %321 : vector<8x32xf32>
      %323 = arith.extui %322 : vector<8x32xi1> to vector<8x32xi32>
      %324 = arith.sitofp %323 : vector<8x32xi32> to vector<8x32xf32>
      %cst_110 = arith.constant -1.800000e+00 : f32
      %325 = vector.broadcast %cst_110 : f32 to vector<8x32xf32>
      %326 = arith.cmpf oge, %319, %325 : vector<8x32xf32>
      %327 = arith.extui %326 : vector<8x32xi1> to vector<8x32xi32>
      %328 = arith.sitofp %327 : vector<8x32xi32> to vector<8x32xf32>
      %cst_111 = arith.constant -1.400000e+00 : f32
      %329 = vector.broadcast %cst_111 : f32 to vector<8x32xf32>
      %330 = arith.cmpf oge, %319, %329 : vector<8x32xf32>
      %331 = arith.extui %330 : vector<8x32xi1> to vector<8x32xi32>
      %332 = arith.sitofp %331 : vector<8x32xi32> to vector<8x32xf32>
      %cst_112 = arith.constant -1.000000e+00 : f32
      %333 = vector.broadcast %cst_112 : f32 to vector<8x32xf32>
      %334 = arith.cmpf oge, %319, %333 : vector<8x32xf32>
      %335 = arith.extui %334 : vector<8x32xi1> to vector<8x32xi32>
      %336 = arith.sitofp %335 : vector<8x32xi32> to vector<8x32xf32>
      %cst_113 = arith.constant -6.000000e-01 : f32
      %337 = vector.broadcast %cst_113 : f32 to vector<8x32xf32>
      %338 = arith.cmpf oge, %319, %337 : vector<8x32xf32>
      %339 = arith.extui %338 : vector<8x32xi1> to vector<8x32xi32>
      %340 = arith.sitofp %339 : vector<8x32xi32> to vector<8x32xf32>
      %cst_114 = arith.constant -2.000000e-01 : f32
      %341 = vector.broadcast %cst_114 : f32 to vector<8x32xf32>
      %342 = arith.cmpf oge, %319, %341 : vector<8x32xf32>
      %343 = arith.extui %342 : vector<8x32xi1> to vector<8x32xi32>
      %344 = arith.sitofp %343 : vector<8x32xi32> to vector<8x32xf32>
      %cst_115 = arith.constant 2.000000e-01 : f32
      %345 = vector.broadcast %cst_115 : f32 to vector<8x32xf32>
      %346 = arith.cmpf oge, %319, %345 : vector<8x32xf32>
      %347 = arith.extui %346 : vector<8x32xi1> to vector<8x32xi32>
      %348 = arith.sitofp %347 : vector<8x32xi32> to vector<8x32xf32>
      %cst_116 = arith.constant 6.000000e-01 : f32
      %349 = vector.broadcast %cst_116 : f32 to vector<8x32xf32>
      %350 = arith.cmpf oge, %319, %349 : vector<8x32xf32>
      %351 = arith.extui %350 : vector<8x32xi1> to vector<8x32xi32>
      %352 = arith.sitofp %351 : vector<8x32xi32> to vector<8x32xf32>
      %cst_117 = arith.constant 1.000000e+00 : f32
      %353 = vector.broadcast %cst_117 : f32 to vector<8x32xf32>
      %354 = arith.cmpf oge, %319, %353 : vector<8x32xf32>
      %355 = arith.extui %354 : vector<8x32xi1> to vector<8x32xi32>
      %356 = arith.sitofp %355 : vector<8x32xi32> to vector<8x32xf32>
      %cst_118 = arith.constant 1.400000e+00 : f32
      %357 = vector.broadcast %cst_118 : f32 to vector<8x32xf32>
      %358 = arith.cmpf oge, %319, %357 : vector<8x32xf32>
      %359 = arith.extui %358 : vector<8x32xi1> to vector<8x32xi32>
      %360 = arith.sitofp %359 : vector<8x32xi32> to vector<8x32xf32>
      %cst_119 = arith.constant 1.800000e+00 : f32
      %361 = vector.broadcast %cst_119 : f32 to vector<8x32xf32>
      %362 = arith.cmpf oge, %319, %361 : vector<8x32xf32>
      %363 = arith.extui %362 : vector<8x32xi1> to vector<8x32xi32>
      %364 = arith.sitofp %363 : vector<8x32xi32> to vector<8x32xf32>
      %cst_120 = arith.constant 2.200000e+00 : f32
      %365 = vector.broadcast %cst_120 : f32 to vector<8x32xf32>
      %366 = arith.cmpf oge, %319, %365 : vector<8x32xf32>
      %367 = arith.extui %366 : vector<8x32xi1> to vector<8x32xi32>
      %368 = arith.sitofp %367 : vector<8x32xi32> to vector<8x32xf32>
      %369 = arith.subf %324, %328 : vector<8x32xf32>
      %370 = arith.subf %328, %332 : vector<8x32xf32>
      %371 = arith.subf %332, %336 : vector<8x32xf32>
      %372 = arith.subf %336, %340 : vector<8x32xf32>
      %373 = arith.subf %340, %344 : vector<8x32xf32>
      %374 = arith.subf %344, %348 : vector<8x32xf32>
      %375 = arith.subf %348, %352 : vector<8x32xf32>
      %376 = arith.subf %352, %356 : vector<8x32xf32>
      %377 = arith.subf %356, %360 : vector<8x32xf32>
      %378 = arith.subf %360, %364 : vector<8x32xf32>
      %379 = arith.subf %364, %368 : vector<8x32xf32>
      %cst_121 = arith.constant 2.500000e+00 : f32
      %380 = vector.broadcast %cst_121 : f32 to vector<8x32xf32>
      %381 = arith.mulf %319, %380 : vector<8x32xf32>
      %cst_122 = arith.constant -5.500000e+00 : f32
      %382 = vector.broadcast %cst_122 : f32 to vector<8x32xf32>
      %383 = arith.subf %381, %382 : vector<8x32xf32>
      %384 = arith.mulf %383, %369 : vector<8x32xf32>
      %cst_123 = arith.constant -3.500000e+00 : f32
      %385 = vector.broadcast %cst_123 : f32 to vector<8x32xf32>
      %386 = arith.subf %385, %381 : vector<8x32xf32>
      %387 = arith.mulf %386, %370 : vector<8x32xf32>
      %388 = arith.addf %384, %387 : vector<8x32xf32>
      %cst_124 = arith.constant -4.500000e+00 : f32
      %389 = vector.broadcast %cst_124 : f32 to vector<8x32xf32>
      %390 = arith.subf %381, %389 : vector<8x32xf32>
      %391 = arith.mulf %390, %370 : vector<8x32xf32>
      %cst_125 = arith.constant -2.500000e+00 : f32
      %392 = vector.broadcast %cst_125 : f32 to vector<8x32xf32>
      %393 = arith.subf %392, %381 : vector<8x32xf32>
      %394 = arith.mulf %393, %371 : vector<8x32xf32>
      %395 = arith.addf %391, %394 : vector<8x32xf32>
      %cst_126 = arith.constant -3.500000e+00 : f32
      %396 = vector.broadcast %cst_126 : f32 to vector<8x32xf32>
      %397 = arith.subf %381, %396 : vector<8x32xf32>
      %398 = arith.mulf %397, %371 : vector<8x32xf32>
      %cst_127 = arith.constant -1.500000e+00 : f32
      %399 = vector.broadcast %cst_127 : f32 to vector<8x32xf32>
      %400 = arith.subf %399, %381 : vector<8x32xf32>
      %401 = arith.mulf %400, %372 : vector<8x32xf32>
      %402 = arith.addf %398, %401 : vector<8x32xf32>
      %cst_128 = arith.constant -2.500000e+00 : f32
      %403 = vector.broadcast %cst_128 : f32 to vector<8x32xf32>
      %404 = arith.subf %381, %403 : vector<8x32xf32>
      %405 = arith.mulf %404, %372 : vector<8x32xf32>
      %cst_129 = arith.constant -5.000000e-01 : f32
      %406 = vector.broadcast %cst_129 : f32 to vector<8x32xf32>
      %407 = arith.subf %406, %381 : vector<8x32xf32>
      %408 = arith.mulf %407, %373 : vector<8x32xf32>
      %409 = arith.addf %405, %408 : vector<8x32xf32>
      %cst_130 = arith.constant -1.500000e+00 : f32
      %410 = vector.broadcast %cst_130 : f32 to vector<8x32xf32>
      %411 = arith.subf %381, %410 : vector<8x32xf32>
      %412 = arith.mulf %411, %373 : vector<8x32xf32>
      %cst_131 = arith.constant 5.000000e-01 : f32
      %413 = vector.broadcast %cst_131 : f32 to vector<8x32xf32>
      %414 = arith.subf %413, %381 : vector<8x32xf32>
      %415 = arith.mulf %414, %374 : vector<8x32xf32>
      %416 = arith.addf %412, %415 : vector<8x32xf32>
      %cst_132 = arith.constant -5.000000e-01 : f32
      %417 = vector.broadcast %cst_132 : f32 to vector<8x32xf32>
      %418 = arith.subf %381, %417 : vector<8x32xf32>
      %419 = arith.mulf %418, %374 : vector<8x32xf32>
      %cst_133 = arith.constant 1.500000e+00 : f32
      %420 = vector.broadcast %cst_133 : f32 to vector<8x32xf32>
      %421 = arith.subf %420, %381 : vector<8x32xf32>
      %422 = arith.mulf %421, %375 : vector<8x32xf32>
      %423 = arith.addf %419, %422 : vector<8x32xf32>
      %cst_134 = arith.constant 5.000000e-01 : f32
      %424 = vector.broadcast %cst_134 : f32 to vector<8x32xf32>
      %425 = arith.subf %381, %424 : vector<8x32xf32>
      %426 = arith.mulf %425, %375 : vector<8x32xf32>
      %cst_135 = arith.constant 2.500000e+00 : f32
      %427 = vector.broadcast %cst_135 : f32 to vector<8x32xf32>
      %428 = arith.subf %427, %381 : vector<8x32xf32>
      %429 = arith.mulf %428, %376 : vector<8x32xf32>
      %430 = arith.addf %426, %429 : vector<8x32xf32>
      %cst_136 = arith.constant 1.500000e+00 : f32
      %431 = vector.broadcast %cst_136 : f32 to vector<8x32xf32>
      %432 = arith.subf %381, %431 : vector<8x32xf32>
      %433 = arith.mulf %432, %376 : vector<8x32xf32>
      %cst_137 = arith.constant 3.500000e+00 : f32
      %434 = vector.broadcast %cst_137 : f32 to vector<8x32xf32>
      %435 = arith.subf %434, %381 : vector<8x32xf32>
      %436 = arith.mulf %435, %377 : vector<8x32xf32>
      %437 = arith.addf %433, %436 : vector<8x32xf32>
      %cst_138 = arith.constant 2.500000e+00 : f32
      %438 = vector.broadcast %cst_138 : f32 to vector<8x32xf32>
      %439 = arith.subf %381, %438 : vector<8x32xf32>
      %440 = arith.mulf %439, %377 : vector<8x32xf32>
      %cst_139 = arith.constant 4.500000e+00 : f32
      %441 = vector.broadcast %cst_139 : f32 to vector<8x32xf32>
      %442 = arith.subf %441, %381 : vector<8x32xf32>
      %443 = arith.mulf %442, %378 : vector<8x32xf32>
      %444 = arith.addf %440, %443 : vector<8x32xf32>
      %cst_140 = arith.constant 3.500000e+00 : f32
      %445 = vector.broadcast %cst_140 : f32 to vector<8x32xf32>
      %446 = arith.subf %381, %445 : vector<8x32xf32>
      %447 = arith.mulf %446, %378 : vector<8x32xf32>
      %cst_141 = arith.constant 5.500000e+00 : f32
      %448 = vector.broadcast %cst_141 : f32 to vector<8x32xf32>
      %449 = arith.subf %448, %381 : vector<8x32xf32>
      %450 = arith.mulf %449, %379 : vector<8x32xf32>
      %451 = arith.addf %447, %450 : vector<8x32xf32>
      %cst_142 = arith.constant 1.250000e+00 : f32
      %452 = vector.broadcast %cst_142 : f32 to vector<8x32xf32>
      %453 = arith.mulf %319, %452 : vector<8x32xf32>
      %cst_143 = arith.constant -2.750000e+00 : f32
      %454 = vector.broadcast %cst_143 : f32 to vector<8x32xf32>
      %455 = arith.subf %453, %454 : vector<8x32xf32>
      %456 = arith.mulf %455, %388 : vector<8x32xf32>
      %cst_144 = arith.constant -1.250000e+00 : f32
      %457 = vector.broadcast %cst_144 : f32 to vector<8x32xf32>
      %458 = arith.subf %457, %453 : vector<8x32xf32>
      %459 = arith.mulf %458, %395 : vector<8x32xf32>
      %460 = arith.addf %456, %459 : vector<8x32xf32>
      %cst_145 = arith.constant -2.250000e+00 : f32
      %461 = vector.broadcast %cst_145 : f32 to vector<8x32xf32>
      %462 = arith.subf %453, %461 : vector<8x32xf32>
      %463 = arith.mulf %462, %395 : vector<8x32xf32>
      %cst_146 = arith.constant -7.500000e-01 : f32
      %464 = vector.broadcast %cst_146 : f32 to vector<8x32xf32>
      %465 = arith.subf %464, %453 : vector<8x32xf32>
      %466 = arith.mulf %465, %402 : vector<8x32xf32>
      %467 = arith.addf %463, %466 : vector<8x32xf32>
      %cst_147 = arith.constant -1.750000e+00 : f32
      %468 = vector.broadcast %cst_147 : f32 to vector<8x32xf32>
      %469 = arith.subf %453, %468 : vector<8x32xf32>
      %470 = arith.mulf %469, %402 : vector<8x32xf32>
      %cst_148 = arith.constant -2.500000e-01 : f32
      %471 = vector.broadcast %cst_148 : f32 to vector<8x32xf32>
      %472 = arith.subf %471, %453 : vector<8x32xf32>
      %473 = arith.mulf %472, %409 : vector<8x32xf32>
      %474 = arith.addf %470, %473 : vector<8x32xf32>
      %cst_149 = arith.constant -1.250000e+00 : f32
      %475 = vector.broadcast %cst_149 : f32 to vector<8x32xf32>
      %476 = arith.subf %453, %475 : vector<8x32xf32>
      %477 = arith.mulf %476, %409 : vector<8x32xf32>
      %cst_150 = arith.constant 2.500000e-01 : f32
      %478 = vector.broadcast %cst_150 : f32 to vector<8x32xf32>
      %479 = arith.subf %478, %453 : vector<8x32xf32>
      %480 = arith.mulf %479, %416 : vector<8x32xf32>
      %481 = arith.addf %477, %480 : vector<8x32xf32>
      %cst_151 = arith.constant -7.500000e-01 : f32
      %482 = vector.broadcast %cst_151 : f32 to vector<8x32xf32>
      %483 = arith.subf %453, %482 : vector<8x32xf32>
      %484 = arith.mulf %483, %416 : vector<8x32xf32>
      %cst_152 = arith.constant 7.500000e-01 : f32
      %485 = vector.broadcast %cst_152 : f32 to vector<8x32xf32>
      %486 = arith.subf %485, %453 : vector<8x32xf32>
      %487 = arith.mulf %486, %423 : vector<8x32xf32>
      %488 = arith.addf %484, %487 : vector<8x32xf32>
      %cst_153 = arith.constant -2.500000e-01 : f32
      %489 = vector.broadcast %cst_153 : f32 to vector<8x32xf32>
      %490 = arith.subf %453, %489 : vector<8x32xf32>
      %491 = arith.mulf %490, %423 : vector<8x32xf32>
      %cst_154 = arith.constant 1.250000e+00 : f32
      %492 = vector.broadcast %cst_154 : f32 to vector<8x32xf32>
      %493 = arith.subf %492, %453 : vector<8x32xf32>
      %494 = arith.mulf %493, %430 : vector<8x32xf32>
      %495 = arith.addf %491, %494 : vector<8x32xf32>
      %cst_155 = arith.constant 2.500000e-01 : f32
      %496 = vector.broadcast %cst_155 : f32 to vector<8x32xf32>
      %497 = arith.subf %453, %496 : vector<8x32xf32>
      %498 = arith.mulf %497, %430 : vector<8x32xf32>
      %cst_156 = arith.constant 1.750000e+00 : f32
      %499 = vector.broadcast %cst_156 : f32 to vector<8x32xf32>
      %500 = arith.subf %499, %453 : vector<8x32xf32>
      %501 = arith.mulf %500, %437 : vector<8x32xf32>
      %502 = arith.addf %498, %501 : vector<8x32xf32>
      %cst_157 = arith.constant 7.500000e-01 : f32
      %503 = vector.broadcast %cst_157 : f32 to vector<8x32xf32>
      %504 = arith.subf %453, %503 : vector<8x32xf32>
      %505 = arith.mulf %504, %437 : vector<8x32xf32>
      %cst_158 = arith.constant 2.250000e+00 : f32
      %506 = vector.broadcast %cst_158 : f32 to vector<8x32xf32>
      %507 = arith.subf %506, %453 : vector<8x32xf32>
      %508 = arith.mulf %507, %444 : vector<8x32xf32>
      %509 = arith.addf %505, %508 : vector<8x32xf32>
      %cst_159 = arith.constant 1.250000e+00 : f32
      %510 = vector.broadcast %cst_159 : f32 to vector<8x32xf32>
      %511 = arith.subf %453, %510 : vector<8x32xf32>
      %512 = arith.mulf %511, %444 : vector<8x32xf32>
      %cst_160 = arith.constant 2.750000e+00 : f32
      %513 = vector.broadcast %cst_160 : f32 to vector<8x32xf32>
      %514 = arith.subf %513, %453 : vector<8x32xf32>
      %515 = arith.mulf %514, %451 : vector<8x32xf32>
      %516 = arith.addf %512, %515 : vector<8x32xf32>
      %cst_161 = arith.constant 0.833333313 : f32
      %517 = vector.broadcast %cst_161 : f32 to vector<8x32xf32>
      %518 = arith.mulf %319, %517 : vector<8x32xf32>
      %cst_162 = arith.constant -1.83333337 : f32
      %519 = vector.broadcast %cst_162 : f32 to vector<8x32xf32>
      %520 = arith.subf %518, %519 : vector<8x32xf32>
      %521 = arith.mulf %520, %460 : vector<8x32xf32>
      %cst_163 = arith.constant -5.000000e-01 : f32
      %522 = vector.broadcast %cst_163 : f32 to vector<8x32xf32>
      %523 = arith.subf %522, %518 : vector<8x32xf32>
      %524 = arith.mulf %523, %467 : vector<8x32xf32>
      %525 = arith.addf %521, %524 : vector<8x32xf32>
      %cst_164 = arith.constant -1.500000e+00 : f32
      %526 = vector.broadcast %cst_164 : f32 to vector<8x32xf32>
      %527 = arith.subf %518, %526 : vector<8x32xf32>
      %528 = arith.mulf %527, %467 : vector<8x32xf32>
      %cst_165 = arith.constant -0.166666672 : f32
      %529 = vector.broadcast %cst_165 : f32 to vector<8x32xf32>
      %530 = arith.subf %529, %518 : vector<8x32xf32>
      %531 = arith.mulf %530, %474 : vector<8x32xf32>
      %532 = arith.addf %528, %531 : vector<8x32xf32>
      %cst_166 = arith.constant -1.16666663 : f32
      %533 = vector.broadcast %cst_166 : f32 to vector<8x32xf32>
      %534 = arith.subf %518, %533 : vector<8x32xf32>
      %535 = arith.mulf %534, %474 : vector<8x32xf32>
      %cst_167 = arith.constant 0.166666672 : f32
      %536 = vector.broadcast %cst_167 : f32 to vector<8x32xf32>
      %537 = arith.subf %536, %518 : vector<8x32xf32>
      %538 = arith.mulf %537, %481 : vector<8x32xf32>
      %539 = arith.addf %535, %538 : vector<8x32xf32>
      %cst_168 = arith.constant -0.833333313 : f32
      %540 = vector.broadcast %cst_168 : f32 to vector<8x32xf32>
      %541 = arith.subf %518, %540 : vector<8x32xf32>
      %542 = arith.mulf %541, %481 : vector<8x32xf32>
      %cst_169 = arith.constant 5.000000e-01 : f32
      %543 = vector.broadcast %cst_169 : f32 to vector<8x32xf32>
      %544 = arith.subf %543, %518 : vector<8x32xf32>
      %545 = arith.mulf %544, %488 : vector<8x32xf32>
      %546 = arith.addf %542, %545 : vector<8x32xf32>
      %cst_170 = arith.constant -5.000000e-01 : f32
      %547 = vector.broadcast %cst_170 : f32 to vector<8x32xf32>
      %548 = arith.subf %518, %547 : vector<8x32xf32>
      %549 = arith.mulf %548, %488 : vector<8x32xf32>
      %cst_171 = arith.constant 0.833333313 : f32
      %550 = vector.broadcast %cst_171 : f32 to vector<8x32xf32>
      %551 = arith.subf %550, %518 : vector<8x32xf32>
      %552 = arith.mulf %551, %495 : vector<8x32xf32>
      %553 = arith.addf %549, %552 : vector<8x32xf32>
      %cst_172 = arith.constant -0.166666672 : f32
      %554 = vector.broadcast %cst_172 : f32 to vector<8x32xf32>
      %555 = arith.subf %518, %554 : vector<8x32xf32>
      %556 = arith.mulf %555, %495 : vector<8x32xf32>
      %cst_173 = arith.constant 1.16666663 : f32
      %557 = vector.broadcast %cst_173 : f32 to vector<8x32xf32>
      %558 = arith.subf %557, %518 : vector<8x32xf32>
      %559 = arith.mulf %558, %502 : vector<8x32xf32>
      %560 = arith.addf %556, %559 : vector<8x32xf32>
      %cst_174 = arith.constant 0.166666672 : f32
      %561 = vector.broadcast %cst_174 : f32 to vector<8x32xf32>
      %562 = arith.subf %518, %561 : vector<8x32xf32>
      %563 = arith.mulf %562, %502 : vector<8x32xf32>
      %cst_175 = arith.constant 1.500000e+00 : f32
      %564 = vector.broadcast %cst_175 : f32 to vector<8x32xf32>
      %565 = arith.subf %564, %518 : vector<8x32xf32>
      %566 = arith.mulf %565, %509 : vector<8x32xf32>
      %567 = arith.addf %563, %566 : vector<8x32xf32>
      %cst_176 = arith.constant 5.000000e-01 : f32
      %568 = vector.broadcast %cst_176 : f32 to vector<8x32xf32>
      %569 = arith.subf %518, %568 : vector<8x32xf32>
      %570 = arith.mulf %569, %509 : vector<8x32xf32>
      %cst_177 = arith.constant 1.83333337 : f32
      %571 = vector.broadcast %cst_177 : f32 to vector<8x32xf32>
      %572 = arith.subf %571, %518 : vector<8x32xf32>
      %573 = arith.mulf %572, %516 : vector<8x32xf32>
      %574 = arith.addf %570, %573 : vector<8x32xf32>
      %cst_178 = arith.constant 0.000000e+00 : f32
      %575 = vector.broadcast %cst_178 : f32 to vector<8x32xf32>
      %576 = arith.subf %575, %319 : vector<8x32xf32>
      %577 = math.exp %576 : vector<8x32xf32>
      %cst_179 = arith.constant 1.000000e+00 : f32
      %578 = vector.broadcast %cst_179 : f32 to vector<8x32xf32>
      %579 = arith.addf %578, %577 : vector<8x32xf32>
      %580 = tpu.reciprocal %579 {approx = true} : vector<8x32xf32> -> vector<8x32xf32>
      %581 = arith.mulf %319, %580 : vector<8x32xf32>
      %c0_180 = arith.constant 0 : index
      %c0_181 = arith.constant 0 : index
      %c0_182 = arith.constant 0 : index
      %582 = vector.load %arg7[%c0_180, %c0_181, %c0_182] : memref<9x32x128xf32, #tpu.memory_space<vmem>>, vector<1x32x128xf32>
      %583 = vector.shape_cast %582 : vector<1x32x128xf32> to vector<32x128xf32>
      %cst_183 = arith.constant dense<0.000000e+00> : vector<8x128xf32>
      %584 = tpu.matmul %581, %583, %cst_183 {dimension_numbers = #tpu.dot_dimension_numbers<[1], [0], [0], [1], [0, 0, 1, 1], [], []>} : vector<8x32xf32>, vector<32x128xf32>, vector<8x128xf32> -> vector<8x128xf32>
      %585 = arith.addf %320, %584 : vector<8x128xf32>
      %c1 = arith.constant 1 : index
      %c0_184 = arith.constant 0 : index
      %c0_185 = arith.constant 0 : index
      %586 = vector.load %arg7[%c1, %c0_184, %c0_185] : memref<9x32x128xf32, #tpu.memory_space<vmem>>, vector<1x32x128xf32>
      %587 = vector.shape_cast %586 : vector<1x32x128xf32> to vector<32x128xf32>
      %cst_186 = arith.constant dense<0.000000e+00> : vector<8x128xf32>
      %588 = tpu.matmul %525, %587, %cst_186 {dimension_numbers = #tpu.dot_dimension_numbers<[1], [0], [0], [1], [0, 0, 1, 1], [], []>} : vector<8x32xf32>, vector<32x128xf32>, vector<8x128xf32> -> vector<8x128xf32>
      %589 = arith.addf %585, %588 : vector<8x128xf32>
      %c2 = arith.constant 2 : index
      %c0_187 = arith.constant 0 : index
      %c0_188 = arith.constant 0 : index
      %590 = vector.load %arg7[%c2, %c0_187, %c0_188] : memref<9x32x128xf32, #tpu.memory_space<vmem>>, vector<1x32x128xf32>
      %591 = vector.shape_cast %590 : vector<1x32x128xf32> to vector<32x128xf32>
      %cst_189 = arith.constant dense<0.000000e+00> : vector<8x128xf32>
      %592 = tpu.matmul %532, %591, %cst_189 {dimension_numbers = #tpu.dot_dimension_numbers<[1], [0], [0], [1], [0, 0, 1, 1], [], []>} : vector<8x32xf32>, vector<32x128xf32>, vector<8x128xf32> -> vector<8x128xf32>
      %593 = arith.addf %589, %592 : vector<8x128xf32>
      %c3 = arith.constant 3 : index
      %c0_190 = arith.constant 0 : index
      %c0_191 = arith.constant 0 : index
      %594 = vector.load %arg7[%c3, %c0_190, %c0_191] : memref<9x32x128xf32, #tpu.memory_space<vmem>>, vector<1x32x128xf32>
      %595 = vector.shape_cast %594 : vector<1x32x128xf32> to vector<32x128xf32>
      %cst_192 = arith.constant dense<0.000000e+00> : vector<8x128xf32>
      %596 = tpu.matmul %539, %595, %cst_192 {dimension_numbers = #tpu.dot_dimension_numbers<[1], [0], [0], [1], [0, 0, 1, 1], [], []>} : vector<8x32xf32>, vector<32x128xf32>, vector<8x128xf32> -> vector<8x128xf32>
      %597 = arith.addf %593, %596 : vector<8x128xf32>
      %c4 = arith.constant 4 : index
      %c0_193 = arith.constant 0 : index
      %c0_194 = arith.constant 0 : index
      %598 = vector.load %arg7[%c4, %c0_193, %c0_194] : memref<9x32x128xf32, #tpu.memory_space<vmem>>, vector<1x32x128xf32>
      %599 = vector.shape_cast %598 : vector<1x32x128xf32> to vector<32x128xf32>
      %cst_195 = arith.constant dense<0.000000e+00> : vector<8x128xf32>
      %600 = tpu.matmul %546, %599, %cst_195 {dimension_numbers = #tpu.dot_dimension_numbers<[1], [0], [0], [1], [0, 0, 1, 1], [], []>} : vector<8x32xf32>, vector<32x128xf32>, vector<8x128xf32> -> vector<8x128xf32>
      %601 = arith.addf %597, %600 : vector<8x128xf32>
      %c5 = arith.constant 5 : index
      %c0_196 = arith.constant 0 : index
      %c0_197 = arith.constant 0 : index
      %602 = vector.load %arg7[%c5, %c0_196, %c0_197] : memref<9x32x128xf32, #tpu.memory_space<vmem>>, vector<1x32x128xf32>
      %603 = vector.shape_cast %602 : vector<1x32x128xf32> to vector<32x128xf32>
      %cst_198 = arith.constant dense<0.000000e+00> : vector<8x128xf32>
      %604 = tpu.matmul %553, %603, %cst_198 {dimension_numbers = #tpu.dot_dimension_numbers<[1], [0], [0], [1], [0, 0, 1, 1], [], []>} : vector<8x32xf32>, vector<32x128xf32>, vector<8x128xf32> -> vector<8x128xf32>
      %605 = arith.addf %601, %604 : vector<8x128xf32>
      %c6 = arith.constant 6 : index
      %c0_199 = arith.constant 0 : index
      %c0_200 = arith.constant 0 : index
      %606 = vector.load %arg7[%c6, %c0_199, %c0_200] : memref<9x32x128xf32, #tpu.memory_space<vmem>>, vector<1x32x128xf32>
      %607 = vector.shape_cast %606 : vector<1x32x128xf32> to vector<32x128xf32>
      %cst_201 = arith.constant dense<0.000000e+00> : vector<8x128xf32>
      %608 = tpu.matmul %560, %607, %cst_201 {dimension_numbers = #tpu.dot_dimension_numbers<[1], [0], [0], [1], [0, 0, 1, 1], [], []>} : vector<8x32xf32>, vector<32x128xf32>, vector<8x128xf32> -> vector<8x128xf32>
      %609 = arith.addf %605, %608 : vector<8x128xf32>
      %c7 = arith.constant 7 : index
      %c0_202 = arith.constant 0 : index
      %c0_203 = arith.constant 0 : index
      %610 = vector.load %arg7[%c7, %c0_202, %c0_203] : memref<9x32x128xf32, #tpu.memory_space<vmem>>, vector<1x32x128xf32>
      %611 = vector.shape_cast %610 : vector<1x32x128xf32> to vector<32x128xf32>
      %cst_204 = arith.constant dense<0.000000e+00> : vector<8x128xf32>
      %612 = tpu.matmul %567, %611, %cst_204 {dimension_numbers = #tpu.dot_dimension_numbers<[1], [0], [0], [1], [0, 0, 1, 1], [], []>} : vector<8x32xf32>, vector<32x128xf32>, vector<8x128xf32> -> vector<8x128xf32>
      %613 = arith.addf %609, %612 : vector<8x128xf32>
      %c8 = arith.constant 8 : index
      %c0_205 = arith.constant 0 : index
      %c0_206 = arith.constant 0 : index
      %614 = vector.load %arg7[%c8, %c0_205, %c0_206] : memref<9x32x128xf32, #tpu.memory_space<vmem>>, vector<1x32x128xf32>
      %615 = vector.shape_cast %614 : vector<1x32x128xf32> to vector<32x128xf32>
      %cst_207 = arith.constant dense<0.000000e+00> : vector<8x128xf32>
      %616 = tpu.matmul %574, %615, %cst_207 {dimension_numbers = #tpu.dot_dimension_numbers<[1], [0], [0], [1], [0, 0, 1, 1], [], []>} : vector<8x32xf32>, vector<32x128xf32>, vector<8x128xf32> -> vector<8x128xf32>
      %617 = arith.addf %613, %616 : vector<8x128xf32>
      %618 = tpu.iota {dimensions = array<i32: 1>} : vector<8x128xi32>
      %c10_i32 = arith.constant 10 : i32
      %619 = vector.broadcast %c10_i32 : i32 to vector<8x128xi32>
      %620 = arith.cmpi slt, %618, %619 : vector<8x128xi32>
      %cst_208 = arith.constant -1.000000e+30 : f32
      %621 = vector.broadcast %cst_208 : f32 to vector<8x128xf32>
      %622 = arith.select %620, %617, %621 : vector<8x128xi1>, vector<8x128xf32>
      %cst_209 = arith.constant dense<0xFF800000> : vector<8xf32>
      %623 = vector.multi_reduction <maximumf>, %622, %cst_209 [1] : vector<8x128xf32> to vector<8xf32>
      %624 = vector.shape_cast %623 : vector<8xf32> to vector<8x1xf32>
      %625 = vector.broadcast %624 : vector<8x1xf32> to vector<8x128xf32>
      %626 = arith.subf %622, %625 : vector<8x128xf32>
      %627 = math.exp %626 : vector<8x128xf32>
      %cst_210 = arith.constant dense<0.000000e+00> : vector<8xf32>
      %628 = vector.multi_reduction <add>, %627, %cst_210 [1] : vector<8x128xf32> to vector<8xf32>
      %629 = vector.shape_cast %628 : vector<8xf32> to vector<8x1xf32>
      %630 = vector.broadcast %629 : vector<8x1xf32> to vector<8x128xf32>
      %631 = arith.divf %627, %630 : vector<8x128xf32>
      %c0_211 = arith.constant 0 : index
      %c0_212 = arith.constant 0 : index
      %632 = vector.load %arg8[%c0_211, %c0_212] : memref<8x128xf32, #tpu.memory_space<vmem>>, vector<8x128xf32>
      tpu.vector_store %arg8[%c0_211, %c0_212], %631 {strides = array<i32>} : memref<8x128xf32, #tpu.memory_space<vmem>>, vector<8x128xf32>,
    } else {
    }
    return
  }
  func.func @transform_0(%arg0: i32) -> (i32, i32) {
    %c0_i32 = arith.constant 0 : i32
    %c0_i32_0 = arith.constant 0 : i32
    %c0_i32_1 = arith.constant 0 : i32
    return %c0_i32, %c0_i32_0 : i32, i32
  }
  func.func @transform_1(%arg0: i32) -> (i32, i32, i32) {
    %c0_i32 = arith.constant 0 : i32
    %c0_i32_0 = arith.constant 0 : i32
    %c0_i32_1 = arith.constant 0 : i32
    %c0_i32_2 = arith.constant 0 : i32
    return %c0_i32, %c0_i32_0, %c0_i32_1 : i32, i32, i32
  }
  func.func @transform_2(%arg0: i32) -> (i32, i32) {
    %c0_i32 = arith.constant 0 : i32
    %c0_i32_0 = arith.constant 0 : i32
    %c0_i32_1 = arith.constant 0 : i32
    return %c0_i32, %c0_i32_0 : i32, i32
  }
  func.func @transform_3(%arg0: i32) -> (i32, i32, i32) {
    %c0_i32 = arith.constant 0 : i32
    %c0_i32_0 = arith.constant 0 : i32
    %c0_i32_1 = arith.constant 0 : i32
    %c0_i32_2 = arith.constant 0 : i32
    return %c0_i32, %c0_i32_0, %c0_i32_1 : i32, i32, i32
  }
  func.func @transform_4(%arg0: i32) -> (i32, i32) {
    %c0_i32 = arith.constant 0 : i32
    %c0_i32_0 = arith.constant 0 : i32
    %c0_i32_1 = arith.constant 0 : i32
    return %c0_i32, %c0_i32_0 : i32, i32
  }
  func.func @transform_5(%arg0: i32) -> (i32, i32, i32) {
    %c0_i32 = arith.constant 0 : i32
    %c0_i32_0 = arith.constant 0 : i32
    %c0_i32_1 = arith.constant 0 : i32
    return %arg0, %c0_i32, %c0_i32_0 : i32, i32, i32
  }
  func.func @transform_6(%arg0: i32) -> (i32, i32, i32) {
    %c0_i32 = arith.constant 0 : i32
    %c0_i32_0 = arith.constant 0 : i32
    %c0_i32_1 = arith.constant 0 : i32
    %c0_i32_2 = arith.constant 0 : i32
    return %c0_i32, %c0_i32_0, %c0_i32_1 : i32, i32, i32
  }
  func.func @transform_7(%arg0: i32) -> (i32, i32) {
    %c0_i32 = arith.constant 0 : i32
    %c0_i32_0 = arith.constant 0 : i32
    %c0_i32_1 = arith.constant 0 : i32
    return %c0_i32, %c0_i32_0 : i32, i32
  }
}

</mosaic_0001>

<llo_original>
// kernel: tpu_custom_call.1
$region0: #{tpu_custom_call.1}
  #allocation0 [shape = 'u32[]', space=smem, size = 0x4, offset = 0x4, fixed_abs, tag = 'smem constant byte address 0x4 - core index']
  #allocation1 [shape = 'u32[144,128]{1,0:T(1,128)}', space=vmem, size = 0x12000, scoped, tag = 'internal scratch']
  #allocation2 [shape = 'f32[32,384]{1,0:T(8,128)}', space=vmem, size = 0xc000, scoped, tag = 'scratch operand']
  #allocation3 [shape = 'f32[12,8,256]{2,1,0:T(8,128)}', space=vmem, size = 0x18000, scoped, tag = 'scratch operand']
  #allocation4 [shape = 'f32[8,32]{1,0:T(8,128)}', space=vmem, size = 0x1000, scoped, tag = 'scratch operand']
  %s0 = inlined_call_operand.hbm [shape: f32[24,384], index: 0, kind: input, shape index: {}]
  %s1 = inlined_call_operand.vmem [shape: f32[9,32,24], index: 1, kind: input, shape index: {}]
  %s2 = inlined_call_operand.vmem [shape: f32[32,1], index: 2, kind: input, shape index: {}]
  %s3 = inlined_call_operand.vmem [shape: f32[9,96,32], index: 3, kind: input, shape index: {}]
  %s4 = inlined_call_operand.vmem [shape: f32[96,1], index: 4, kind: input, shape index: {}]
  %s5 = inlined_call_operand.hbm [shape: bf16[12,32,2304], index: 5, kind: input, shape index: {}]
  %s6 = inlined_call_operand.hbm [shape: f32[9,32,128], index: 6, kind: input, shape index: {}]
  %s7 = inlined_call_operand.hbm [shape: f32[8,128], index: 7, kind: output, shape index: {}]
  %s8 = sld [smem:[#allocation0]]
  $region81: #{tpu_custom_call.1} parent=0
    _
  %s10 = ssub.s32 1, %s8
  %s11 = scalar_select 0, %s10, %s8
  $region1: #{tpu_custom_call.1} parent=0
    #allocation5 [shape = 'u8[36864]{0}', space=vmem, size = 0x9000, scoped, tag = 'input window, operand 0, single buffered']
    #allocation6 [shape = 's32[2]{0}', space=sflag, size = 0x8, scoped, tag = 'scoped memory for tpu_custom_call.1']
    #allocation7 [shape = 's32[2]{0}', space=sflag, size = 0x8, scoped, tag = 'scoped memory for tpu_custom_call.1']
    #allocation8 [shape = 'u8[294912]{0}', space=vmem, size = 0x48000, scoped, tag = 'input window, operand 5']
    #allocation9 [shape = 's32[2]{0}', space=sflag, size = 0x8, scoped, tag = 'scoped memory for tpu_custom_call.1']
    #allocation10 [shape = 'u8[147456]{0}', space=vmem, size = 0x24000, scoped, tag = 'input window, operand 6, single buffered']
    #allocation11 [shape = 'u8[4096]{0}', space=vmem, size = 0x1000, scoped, tag = 'output window, operand 0, single buffered']
    %12 = vsyncpa [#allocation6], 0
    %13 = vsyncpa [#allocation9], 0
    %s14 = scalar_lea.sflag [#allocation9], 1
    %15 = vsyncpa %s14, 0
    %16 = vsyncpa [#allocation7], 0
    loop: start=0, step=1, limit=14
    $region2: #{tpu_custom_call.1} parent=1 // loop_pre_header
      _
    $region3: #{tpu_custom_call.1} parent=1 // loop_header
      %s18 = sphi 0, %s22
      %p19 = scmp.ge.s32.totalorder %s18, 14
      %s26 = sphi 0, %s26
      %s28 = sphi 0, %s26
      %s29 = sphi 0, %s28
      %s43 = sphi 0, %s29
      %s47 = sphi 0, %s47
      %s49 = sphi 0, %s47
      %s50 = sphi 0, %s49
      %s64 = sphi 0, %s50
      %s68 = sphi 0, %s68
      %s70 = sphi 0, %s68
      %s71 = sphi 0, %s70
      %s85 = sphi 0, %s71
      %s89 = sphi 0, %s89
      %s91 = sphi 0, %s89
      %s92 = sphi 0, %s91
      %s106 = sphi 0, %s92
      %s110 = sphi 0, %s110
      %s112 = sphi 0, %s110
      %s113 = sphi 0, %s112
      %s127 = sphi 0, %s113
      %s133 = sphi 0, %s135
      %s136 = sphi 0, %s133
      %s137 = sphi 0, %s136
      %s153 = sphi 0, %s137
      %s157 = sphi 0, %s157
      %s159 = sphi 0, %s157
      %s160 = sphi 0, %s159
      %s174 = sphi 0, %s160
      %s178 = sphi 0, %s178
      %s180 = sphi 0, %s178
      %s181 = sphi 0, %s180
      %s195 = sphi 0, %s181
    $region4: #{tpu_custom_call.1} parent=1 // loop_header_branch
      %21 = sbr.rel (%p19) target = $region8
    $region5: #{tpu_custom_call.1} parent=1 // loop_body
      %s23 = ssub.s32 %s18, 1
      %s24 = ssub.s32 %s18, 2
      %s25 = sadd.s32 %s18, 1
      %s27 = sadd.s32 %s26, 1
      %p30 = scmp.eq.s32.totalorder %s18, 11
      %p31 = scmp.ne.s32.totalorder %s26, %s28
      %p32 = scmp.eq.s32.totalorder %s18, 0
      %p33 = por %p31, %p32
      %p34 = scmp.ne.s32.totalorder %s26, %s28
      %p35 = scmp.eq.s32.totalorder %s23, 11
      %p36 = por %p34, %p35
      %p37 = scmp.ne.s32.totalorder %s28, %s29
      %p38 = scmp.eq.s32.totalorder %s23, 0
      %p39 = por %p37, %p38
      %p40 = scmp.ne.s32.totalorder %s28, %s29
      %p41 = scmp.eq.s32.totalorder %s24, 11
      %p42 = por %p40, %p41
      %p44 = scmp.ne.s32.totalorder %s29, %s43
      %p45 = scmp.eq.s32.totalorder %s24, 0
      %p46 = por %p44, %p45
      %s48 = sadd.s32 %s47, 1
      %p51 = scmp.eq.s32.totalorder %s18, 11
      %p52 = scmp.ne.s32.totalorder %s47, %s49
      %p53 = scmp.eq.s32.totalorder %s18, 0
      %p54 = por %p52, %p53
      %p55 = scmp.ne.s32.totalorder %s47, %s49
      %p56 = scmp.eq.s32.totalorder %s23, 11
      %p57 = por %p55, %p56
      %p58 = scmp.ne.s32.totalorder %s49, %s50
      %p59 = scmp.eq.s32.totalorder %s23, 0
      %p60 = por %p58, %p59
      %p61 = scmp.ne.s32.totalorder %s49, %s50
      %p62 = scmp.eq.s32.totalorder %s24, 11
      %p63 = por %p61, %p62
      %p65 = scmp.ne.s32.totalorder %s50, %s64
      %p66 = scmp.eq.s32.totalorder %s24, 0
      %p67 = por %p65, %p66
      %s69 = sadd.s32 %s68, 1
      %p72 = scmp.eq.s32.totalorder %s18, 11
      %p73 = scmp.ne.s32.totalorder %s68, %s70
      %p74 = scmp.eq.s32.totalorder %s18, 0
      %p75 = por %p73, %p74
      %p76 = scmp.ne.s32.totalorder %s68, %s70
      %p77 = scmp.eq.s32.totalorder %s23, 11
      %p78 = por %p76, %p77
      %p79 = scmp.ne.s32.totalorder %s70, %s71
      %p80 = scmp.eq.s32.totalorder %s23, 0
      %p81 = por %p79, %p80
      %p82 = scmp.ne.s32.totalorder %s70, %s71
      %p83 = scmp.eq.s32.totalorder %s24, 11
      %p84 = por %p82, %p83
      %p86 = scmp.ne.s32.totalorder %s71, %s85
      %p87 = scmp.eq.s32.totalorder %s24, 0
      %p88 = por %p86, %p87
      %s90 = sadd.s32 %s89, 1
      %p93 = scmp.eq.s32.totalorder %s18, 11
      %p94 = scmp.ne.s32.totalorder %s89, %s91
      %p95 = scmp.eq.s32.totalorder %s18, 0
      %p96 = por %p94, %p95
      %p97 = scmp.ne.s32.totalorder %s89, %s91
      %p98 = scmp.eq.s32.totalorder %s23, 11
      %p99 = por %p97, %p98
      %p100 = scmp.ne.s32.totalorder %s91, %s92
      %p101 = scmp.eq.s32.totalorder %s23, 0
      %p102 = por %p100, %p101
      %p103 = scmp.ne.s32.totalorder %s91, %s92
      %p104 = scmp.eq.s32.totalorder %s24, 11
      %p105 = por %p103, %p104
      %p107 = scmp.ne.s32.totalorder %s92, %s106
      %p108 = scmp.eq.s32.totalorder %s24, 0
      %p109 = por %p107, %p108
      %s111 = sadd.s32 %s110, 1
      %p114 = scmp.eq.s32.totalorder %s18, 11
      %p115 = scmp.ne.s32.totalorder %s110, %s112
      %p116 = scmp.eq.s32.totalorder %s18, 0
      %p117 = por %p115, %p116
      %p118 = scmp.ne.s32.totalorder %s110, %s112
      %p119 = scmp.eq.s32.totalorder %s23, 11
      %p120 = por %p118, %p119
      %p121 = scmp.ne.s32.totalorder %s112, %s113
      %p122 = scmp.eq.s32.totalorder %s23, 0
      %p123 = por %p121, %p122
      %p124 = scmp.ne.s32.totalorder %s112, %s113
      %p125 = scmp.eq.s32.totalorder %s24, 11
      %p126 = por %p124, %p125
      %p128 = scmp.ne.s32.totalorder %s113, %s127
      %p129 = scmp.eq.s32.totalorder %s24, 0
      %p130 = por %p128, %p129
      %s131 = ssub.s32 %s18, %s25
      %p132 = scmp.eq.s32.totalorder %s131, 0
      %s134 = sadd.s32 %s133, 1
      %s135 = scalar_select %p132, %s133, %s134
      %p138 = pneg %p132
      %p139 = scmp.eq.s32.totalorder %s18, 11
      %p140 = por %p138, %p139
      %p141 = scmp.ne.s32.totalorder %s133, %s136
      %p142 = scmp.eq.s32.totalorder %s18, 0
      %p143 = por %p141, %p142
      %p144 = scmp.ne.s32.totalorder %s133, %s136
      %p145 = scmp.eq.s32.totalorder %s23, 11
      %p146 = por %p144, %p145
      %p147 = scmp.ne.s32.totalorder %s136, %s137
      %p148 = scmp.eq.s32.totalorder %s23, 0
      %p149 = por %p147, %p148
      %p150 = scmp.ne.s32.totalorder %s136, %s137
      %p151 = scmp.eq.s32.totalorder %s24, 11
      %p152 = por %p150, %p151
      %p154 = scmp.ne.s32.totalorder %s137, %s153
      %p155 = scmp.eq.s32.totalorder %s24, 0
      %p156 = por %p154, %p155
      %s158 = sadd.s32 %s157, 1
      %p161 = scmp.eq.s32.totalorder %s18, 11
      %p162 = scmp.ne.s32.totalorder %s157, %s159
      %p163 = scmp.eq.s32.totalorder %s18, 0
      %p164 = por %p162, %p163
      %p165 = scmp.ne.s32.totalorder %s157, %s159
      %p166 = scmp.eq.s32.totalorder %s23, 11
      %p167 = por %p165, %p166
      %p168 = scmp.ne.s32.totalorder %s159, %s160
      %p169 = scmp.eq.s32.totalorder %s23, 0
      %p170 = por %p168, %p169
      %p171 = scmp.ne.s32.totalorder %s159, %s160
      %p172 = scmp.eq.s32.totalorder %s24, 11
      %p173 = por %p171, %p172
      %p175 = scmp.ne.s32.totalorder %s160, %s174
      %p176 = scmp.eq.s32.totalorder %s24, 0
      %p177 = por %p175, %p176
      %s179 = sadd.s32 %s178, 1
      %p182 = scmp.eq.s32.totalorder %s18, 11
      %p183 = scmp.ne.s32.totalorder %s178, %s180
      %p184 = scmp.eq.s32.totalorder %s18, 0
      %p185 = por %p183, %p184
      %p186 = scmp.ne.s32.totalorder %s178, %s180
      %p187 = scmp.eq.s32.totalorder %s23, 11
      %p188 = por %p186, %p187
      %p189 = scmp.ne.s32.totalorder %s180, %s181
      %p190 = scmp.eq.s32.totalorder %s23, 0
      %p191 = por %p189, %p190
      %p192 = scmp.ne.s32.totalorder %s180, %s181
      %p193 = scmp.eq.s32.totalorder %s24, 11
      %p194 = por %p192, %p193
      %p196 = scmp.ne.s32.totalorder %s181, %s195
      %p197 = scmp.eq.s32.totalorder %s24, 0
      %p198 = por %p196, %p197
      %p199 = scmp.le.s32.totalorder 1, %s18
      %p200 = scmp.lt.s32.totalorder %s18, 13
      %p201 = pnand %p199, %p200
      %p202 = pneg %p201
      // Predicated region
      $region9: #{tpu_custom_call.1} parent=5 // pred_check
        _
      $region10: #{tpu_custom_call.1} parent=5 // pred_check_branch
        %204 = sbr.rel (%p201) target = $region12
      $region11: #{tpu_custom_call.1} parent=5 // pred_region
        %s205 = ssub.s32 %s18, 1
        // Predicated region
        $region13: #{tpu_custom_call.1} parent=11 // pred_check
          %p206 = pneg %p39
        $region14: #{tpu_custom_call.1} parent=11 // pred_check_branch
          %208 = sbr.rel (%p206) target = $region16
        $region15: #{tpu_custom_call.1} parent=11 // pred_region
          %s210 = ssub.s32 1152, 1152
          %211 = vsyncadd [#allocation6], %s210
          %s212 = sshll.u32 [#allocation5], 4
          %s213 = int_to_ptr.vmem [resolvable:$true] %s212
          %218 = dma.hbm_to_vmem [thread:$0]  %s0, 1152, %s213, [#allocation6], 384, 384, 24
        $region16: #{tpu_custom_call.1} parent=11 // pred_fallthru
          _
        // Predicated region
        $region17: #{tpu_custom_call.1} parent=11 // pred_check
          %p219 = pneg %p60
        $region18: #{tpu_custom_call.1} parent=11 // pred_check_branch
          %221 = sbr.rel (%p219) target = $region20
        $region19: #{tpu_custom_call.1} parent=11 // pred_region
          _
        $region20: #{tpu_custom_call.1} parent=11 // pred_fallthru
          _
        // Predicated region
        $region21: #{tpu_custom_call.1} parent=11 // pred_check
          %p222 = pneg %p81
        $region22: #{tpu_custom_call.1} parent=11 // pred_check_branch
          %224 = sbr.rel (%p222) target = $region24
        $region23: #{tpu_custom_call.1} parent=11 // pred_region
          _
        $region24: #{tpu_custom_call.1} parent=11 // pred_fallthru
          _
        // Predicated region
        $region25: #{tpu_custom_call.1} parent=11 // pred_check
          %p225 = pneg %p102
        $region26: #{tpu_custom_call.1} parent=11 // pred_check_branch
          %227 = sbr.rel (%p225) target = $region28
        $region27: #{tpu_custom_call.1} parent=11 // pred_region
          _
        $region28: #{tpu_custom_call.1} parent=11 // pred_fallthru
          _
        // Predicated region
        $region29: #{tpu_custom_call.1} parent=11 // pred_check
          %p228 = pneg %p123
        $region30: #{tpu_custom_call.1} parent=11 // pred_check_branch
          %230 = sbr.rel (%p228) target = $region32
        $region31: #{tpu_custom_call.1} parent=11 // pred_region
          _
        $region32: #{tpu_custom_call.1} parent=11 // pred_fallthru
          _
        // Predicated region
        $region33: #{tpu_custom_call.1} parent=11 // pred_check
          %p231 = pneg %p170
        $region34: #{tpu_custom_call.1} parent=11 // pred_check_branch
          %233 = sbr.rel (%p231) target = $region36
        $region35: #{tpu_custom_call.1} parent=11 // pred_region
          %s235 = ssub.s32 4608, 4608
          %236 = vsyncadd [#allocation9], %s235
          %s237 = sshll.u32 [#allocation10], 4
          %s238 = int_to_ptr.vmem [resolvable:$true] %s237
          %243 = dma.hbm_to_vmem [thread:$0]  %s6, 4608, %s238, [#allocation9], 128, 128, 8
        $region36: #{tpu_custom_call.1} parent=11 // pred_fallthru
          _
      $region12: #{tpu_custom_call.1} parent=5 // pred_fallthru
        _
      %p244 = scmp.lt.s32.totalorder %s18, 12
      // Predicated region
      $region37: #{tpu_custom_call.1} parent=5 // pred_check
        %p245 = pneg %p244
      $region38: #{tpu_custom_call.1} parent=5 // pred_check_branch
        %247 = sbr.rel (%p245) target = $region40
      $region39: #{tpu_custom_call.1} parent=5 // pred_region
        // Predicated region
        $region41: #{tpu_custom_call.1} parent=39 // pred_check
          %p248 = pneg %p143
        $region42: #{tpu_custom_call.1} parent=39 // pred_check_branch
          %250 = sbr.rel (%p248) target = $region44
        $region43: #{tpu_custom_call.1} parent=39 // pred_region
          %s251 = sand.u32 %s18, 1
          %s252 = scalar_lea.sflag [#allocation9], %s251
          %s253 = sand.u32 %s133, 1
          %s254 = smul.addr %s253, 288
          %s255 = scalar_lea.vmem [#allocation8], %s254
          %s257 = ssub.s32 4608, 4608
          %258 = vsyncadd %s252, %s257
          %s259 = smul.addr %s18, 72
          %s260 = smul.addr %s259, 64
          %s261 = scalar_lea.hbm %s5, %s260
          %s262 = sshll.u32 %s255, 4
          %s263 = int_to_ptr.vmem [resolvable:$true] %s262
          %268 = dma.hbm_to_vmem [thread:$0]  %s261, 4608, %s263, %s252, 1152, 1152, 72
        $region44: #{tpu_custom_call.1} parent=39 // pred_fallthru
          _
      $region40: #{tpu_custom_call.1} parent=5 // pred_fallthru
        _
      %p269 = scmp.le.s32.totalorder 1, %s18
      %p270 = scmp.lt.s32.totalorder %s18, 13
      %p271 = pnand %p269, %p270
      %p272 = pneg %p271
      // Predicated region
      $region45: #{tpu_custom_call.1} parent=5 // pred_check
        _
      $region46: #{tpu_custom_call.1} parent=5 // pred_check_branch
        %274 = sbr.rel (%p271) target = $region48
      $region47: #{tpu_custom_call.1} parent=5 // pred_region
        %s275 = ssub.s32 %s18, 1
        // Predicated region
        $region49: #{tpu_custom_call.1} parent=47 // pred_check
          %p276 = pneg %p39
        $region50: #{tpu_custom_call.1} parent=47 // pred_check_branch
          %278 = sbr.rel (%p276) target = $region52
        $region51: #{tpu_custom_call.1} parent=47 // pred_region
          %279 = dma.done [#allocation6], 1152
        $region52: #{tpu_custom_call.1} parent=47 // pred_fallthru
          _
        %s280 = sand.u32 %s23, 1
        %s281 = scalar_lea.sflag [#allocation9], %s280
        %s282 = sand.u32 %s136, 1
        %s283 = smul.addr %s282, 288
        %s284 = scalar_lea.vmem [#allocation8], %s283
        // Predicated region
        $region53: #{tpu_custom_call.1} parent=47 // pred_check
          %p285 = pneg %p149
        $region54: #{tpu_custom_call.1} parent=47 // pred_check_branch
          %287 = sbr.rel (%p285) target = $region56
        $region55: #{tpu_custom_call.1} parent=47 // pred_region
          %288 = dma.done %s281, 4608
        $region56: #{tpu_custom_call.1} parent=47 // pred_fallthru
          _
        // Predicated region
        $region57: #{tpu_custom_call.1} parent=47 // pred_check
          %p289 = pneg %p170
        $region58: #{tpu_custom_call.1} parent=47 // pred_check_branch
          %291 = sbr.rel (%p289) target = $region60
        $region59: #{tpu_custom_call.1} parent=47 // pred_region
          %292 = dma.done [#allocation9], 4608
        $region60: #{tpu_custom_call.1} parent=47 // pred_fallthru
          _
        %p293 = pneg %p39
        %p294 = pneg %p36
        %p295 = pneg %p60
        %p296 = pneg %p57
        %p297 = pneg %p81
        %p298 = pneg %p78
        %p299 = pneg %p102
        %p300 = pneg %p99
        %p301 = pneg %p123
        %p302 = pneg %p120
        %s303 = sand.u32 %s23, 1
        %s304 = scalar_lea.sflag [#allocation9], %s303
        %s305 = sand.u32 %s136, 1
        %s306 = smul.addr %s305, 288
        %s307 = scalar_lea.vmem [#allocation8], %s306
        %p308 = pneg %p149
        %p309 = pneg %p146
        %p310 = pneg %p170
        %p311 = pneg %p167
        %p312 = pneg %p191
        %p313 = pneg %p188
        %p315 = scmp.eq.s32.totalorder %s23, 0
        // Predicated region
        $region61: #{tpu_custom_call.1} parent=47 // pred_check
          %p316 = pneg %p315
        $region62: #{tpu_custom_call.1} parent=47 // pred_check_branch
          %318 = sbr.rel (%p316) target = $region64
        $region63: #{tpu_custom_call.1} parent=47 // pred_region
          %v319 = vld [vmem:[%s1] sm:$0xff]
          %v320 = vld [vmem:[%s1 + $0x8] sm:$0xff]
          %v321 = vld [vmem:[%s1 + $0x10] sm:$0xff]
          %v322 = vld [vmem:[%s1 + $0x18] sm:$0xff]
          %v323 = vld [vmem:[#allocation5] sm:$0xff]
          %v324 = vld [vmem:[#allocation5 + $0x8] sm:$0xff]
          %v325 = vld [vmem:[#allocation5 + $0x18] sm:$0xff]
          %v326 = vld [vmem:[#allocation5 + $0x20] sm:$0xff]
          %v327 = vld [vmem:[#allocation5 + $0x30] sm:$0xff]
          %v328 = vld [vmem:[#allocation5 + $0x38] sm:$0xff]
          %s329 = scalar_lea.vmem %s1, 32
          %v330 = vld [vmem:[%s329] sm:$0xff]
          %v331 = vld [vmem:[%s329 + $0x8] sm:$0xff]
          %v332 = vld [vmem:[%s329 + $0x10] sm:$0xff]
          %v333 = vld [vmem:[%s329 + $0x18] sm:$0xff]
          %v334 = vld [vmem:[#allocation5] sm:$0xff]
          %v335 = vld [vmem:[#allocation5 + $0x8] sm:$0xff]
          %v336 = vld [vmem:[#allocation5 + $0x10] sm:$0xff]
          %v337 = vld [vmem:[#allocation5 + $0x18] sm:$0xff]
          %v338 = vld [vmem:[#allocation5 + $0x20] sm:$0xff]
          %v339 = vld [vmem:[#allocation5 + $0x28] sm:$0xff]
          %v340 = vld [vmem:[#allocation5 + $0x30] sm:$0xff]
          %v341 = vld [vmem:[#allocation5 + $0x38] sm:$0xff]
          %v342 = vld [vmem:[#allocation5 + $0x40] sm:$0xff]
          %352 = vrot.lane.b32.xlu0 %v334, 127
          %v353 = vpop.permute.xlu0 %352
          %354 = vrot.lane.b32.xlu0 %v335, 127
          %v355 = vpop.permute.xlu0 %354
          %356 = vrot.lane.b32.xlu0 %v336, 127
          %v357 = vpop.permute.xlu0 %356
          %358 = vrot.lane.b32.xlu0 %v337, 127
          %v359 = vpop.permute.xlu0 %358
          %360 = vrot.lane.b32.xlu0 %v338, 127
          %v361 = vpop.permute.xlu0 %360
          %362 = vrot.lane.b32.xlu0 %v339, 127
          %v363 = vpop.permute.xlu0 %362
          %364 = vrot.lane.b32.xlu0 %v340, 127
          %v365 = vpop.permute.xlu0 %364
          %366 = vrot.lane.b32.xlu0 %v341, 127
          %v367 = vpop.permute.xlu0 %366
          %368 = vrot.lane.b32.xlu0 %v342, 127
          %v369 = vpop.permute.xlu0 %368
          %vm370 = vcmask 1039360
          %v371 = vsel %vm370, %v353, %v355
          %v372 = vsel %vm370, %v355, %v357
          %v373 = vsel %vm370, %v359, %v361
          %v374 = vsel %vm370, %v361, %v363
          %v375 = vsel %vm370, %v365, %v367
          %v376 = vsel %vm370, %v367, %v369
          %vm383 = vcmask 195584
          %v385 = vsel %vm383, %v330, 0
          %v388 = vsel %vm383, %v331, 0
          %v391 = vsel %vm383, %v332, 0
          %v394 = vsel %vm383, %v333, 0
          %396 = vmatprep.subr.mxu0 0.0
          %397 = vmatpush1.msra.mxu0 0.0
          %398 = vmatprep.subr.mxu0 0.0
          %399 = vmatpush1.msra.mxu0 0.0
          %400 = vmatprep.subr.mxu0 0.0
          %401 = vmatpush1.msra.mxu0 0.0
          %402 = vmatprep.subr.mxu0 0.0
          %403 = vmatpush1.msra.mxu0 0.0
          %404 = vmatprep.subr.mxu0 0.0
          %405 = vmatpush1.msra.mxu0 0.0
          %406 = vmatprep.subr.mxu0 0.0
          %407 = vmatpush1.msra.mxu0 0.0
          %408 = vmatprep.subr.mxu0 0.0
          %409 = vmatpush1.msra.mxu0 0.0
          %410 = vmatprep.subr.mxu0 0.0
          %411 = vmatpush1.msra.mxu0 0.0
          %412 = vmatprep.subr.mxu0 0.0
          %413 = vmatpush1.msra.mxu0 0.0
          %414 = vmatprep.subr.mxu0 0.0
          %415 = vmatpush1.msra.mxu0 0.0
          %416 = vmatprep.subr.mxu0 0.0
          %417 = vmatpush1.msra.mxu0 0.0
          %418 = vmatprep.subr.mxu0 0.0
          %419 = vmatpush1.msra.mxu0 0.0
          %420 = vmatprep.subr.mxu0 0.0
          %421 = vmatpush1.msra.mxu0 0.0
          %422 = vmatprep.subr.mxu0 %v376
          %423 = vmatpush1.msra.mxu0 %v375
          %424 = vmatprep.subr.mxu0 %v374
          %425 = vmatpush1.msra.mxu0 %v373
          %426 = vmatprep.subr.mxu0 %v372
          %427 = vmatpush1.msra.mxu0 %v371
          %428 = vmatprep.subr.mxu0 0.0
          %429 = vmatpush2.msra.mxu0 0.0
          %430 = vmatprep.subr.mxu0 0.0
          %431 = vmatpush2.msra.mxu0 0.0
          %432 = vmatprep.subr.mxu0 0.0
          %433 = vmatpush2.msra.mxu0 0.0
          %434 = vmatprep.subr.mxu0 0.0
          %435 = vmatpush2.msra.mxu0 0.0
          %436 = vmatprep.subr.mxu0 0.0
          %437 = vmatpush2.msra.mxu0 0.0
          %438 = vmatprep.subr.mxu0 0.0
          %439 = vmatpush2.msra.mxu0 0.0
          %440 = vmatprep.subr.mxu0 0.0
          %441 = vmatpush2.msra.mxu0 0.0
          %442 = vmatprep.subr.mxu0 0.0
          %443 = vmatpush2.msra.mxu0 0.0
          %444 = vmatprep.subr.mxu0 0.0
          %445 = vmatpush2.msra.mxu0 0.0
          %446 = vmatprep.subr.mxu0 0.0
          %447 = vmatpush2.msra.mxu0 0.0
          %448 = vmatprep.subr.mxu0 0.0
          %449 = vmatpush2.msra.mxu0 0.0
          %450 = vmatprep.subr.mxu0 0.0
          %451 = vmatpush2.msra.mxu0 0.0
          %452 = vmatprep.subr.mxu0 0.0
          %453 = vmatpush2.msra.mxu0 0.0
          %454 = vmatprep.subr.mxu0 0.0
          %455 = vmatpush2.msra.mxu0 0.0
          %456 = vmatprep.subr.mxu0 0.0
          %457 = vmatpush2.msra.mxu0 0.0
          %458 = vmatprep.subr.mxu0 0.0
          %459 = vmatpush2.msra.mxu0 0.0
          %460 = vmatprep.mubr.f32.mxu0 0.0
          %461 = vmatmul.mubr.f32.gmra.mxu0 %v385
          %v462 = vpop.f32.mrf.mxu0
          %v463 = vadd.f32 0.0, %v462
          %v464 = vpop.f32.mrf.mxu0
          %v465 = vadd.f32 0.0, %v464
          %466 = vmatprep.mubr.f32.mxu0 0.0
          %467 = vmatmul.mubr.f32.gmra.mxu0 %v388
          %v468 = vpop.f32.mrf.mxu0
          %v469 = vadd.f32 0.0, %v468
          %v470 = vpop.f32.mrf.mxu0
          %v471 = vadd.f32 0.0, %v470
          %472 = vmatprep.mubr.f32.mxu0 0.0
          %473 = vmatmul.mubr.f32.gmra.mxu0 %v391
          %v474 = vpop.f32.mrf.mxu0
          %v475 = vadd.f32 0.0, %v474
          %v476 = vpop.f32.mrf.mxu0
          %v477 = vadd.f32 0.0, %v476
          %478 = vmatprep.mubr.f32.mxu0 0.0
          %479 = vmatmul.mubr.f32.gmra.mxu0 %v394
          %v480 = vpop.f32.mrf.mxu0
          %v481 = vadd.f32 0.0, %v480
          %v482 = vpop.f32.mrf.mxu0
          %v483 = vadd.f32 0.0, %v482
          %484 = vdwg.mxu0
          %v486 = vsel %vm383, %v319, 0
          %v489 = vsel %vm383, %v320, 0
          %v492 = vsel %vm383, %v321, 0
          %v495 = vsel %vm383, %v322, 0
          %497 = vmatprep.subr.mxu0 0.0
          %498 = vmatpush1.msra.mxu0 0.0
          %499 = vmatprep.subr.mxu0 0.0
          %500 = vmatpush1.msra.mxu0 0.0
          %501 = vmatprep.subr.mxu0 0.0
          %502 = vmatpush1.msra.mxu0 0.0
          %503 = vmatprep.subr.mxu0 0.0
          %504 = vmatpush1.msra.mxu0 0.0
          %505 = vmatprep.subr.mxu0 0.0
          %506 = vmatpush1.msra.mxu0 0.0
          %507 = vmatprep.subr.mxu0 0.0
          %508 = vmatpush1.msra.mxu0 0.0
          %509 = vmatprep.subr.mxu0 0.0
          %510 = vmatpush1.msra.mxu0 0.0
          %511 = vmatprep.subr.mxu0 0.0
          %512 = vmatpush1.msra.mxu0 0.0
          %513 = vmatprep.subr.mxu0 0.0
          %514 = vmatpush1.msra.mxu0 0.0
          %515 = vmatprep.subr.mxu0 0.0
          %516 = vmatpush1.msra.mxu0 0.0
          %517 = vmatprep.subr.mxu0 0.0
          %518 = vmatpush1.msra.mxu0 0.0
          %519 = vmatprep.subr.mxu0 0.0
          %520 = vmatpush1.msra.mxu0 0.0
          %521 = vmatprep.subr.mxu0 0.0
          %522 = vmatpush1.msra.mxu0 0.0
          %523 = vmatprep.subr.mxu0 %v328
          %524 = vmatpush1.msra.mxu0 %v327
          %525 = vmatprep.subr.mxu0 %v326
          %526 = vmatpush1.msra.mxu0 %v325
          %527 = vmatprep.subr.mxu0 %v324
          %528 = vmatpush1.msra.mxu0 %v323
          %529 = vmatprep.subr.mxu0 0.0
          %530 = vmatpush2.msra.mxu0 0.0
          %531 = vmatprep.subr.mxu0 0.0
          %532 = vmatpush2.msra.mxu0 0.0
          %533 = vmatprep.subr.mxu0 0.0
          %534 = vmatpush2.msra.mxu0 0.0
          %535 = vmatprep.subr.mxu0 0.0
          %536 = vmatpush2.msra.mxu0 0.0
          %537 = vmatprep.subr.mxu0 0.0
          %538 = vmatpush2.msra.mxu0 0.0
          %539 = vmatprep.subr.mxu0 0.0
          %540 = vmatpush2.msra.mxu0 0.0
          %541 = vmatprep.subr.mxu0 0.0
          %542 = vmatpush2.msra.mxu0 0.0
          %543 = vmatprep.subr.mxu0 0.0
          %544 = vmatpush2.msra.mxu0 0.0
          %545 = vmatprep.subr.mxu0 0.0
          %546 = vmatpush2.msra.mxu0 0.0
          %547 = vmatprep.subr.mxu0 0.0
          %548 = vmatpush2.msra.mxu0 0.0
          %549 = vmatprep.subr.mxu0 0.0
          %550 = vmatpush2.msra.mxu0 0.0
          %551 = vmatprep.subr.mxu0 0.0
          %552 = vmatpush2.msra.mxu0 0.0
          %553 = vmatprep.subr.mxu0 0.0
          %554 = vmatpush2.msra.mxu0 0.0
          %555 = vmatprep.subr.mxu0 0.0
          %556 = vmatpush2.msra.mxu0 0.0
          %557 = vmatprep.subr.mxu0 0.0
          %558 = vmatpush2.msra.mxu0 0.0
          %559 = vmatprep.subr.mxu0 0.0
          %560 = vmatpush2.msra.mxu0 0.0
          %561 = vmatprep.mubr.f32.mxu0 0.0
          %562 = vmatmul.mubr.f32.gmra.mxu0 %v486
          %v563 = vpop.f32.mrf.mxu0
          %v564 = vadd.f32 %v463, %v563
          %v565 = vpop.f32.mrf.mxu0
          %v566 = vadd.f32 %v465, %v565
          %567 = vmatprep.mubr.f32.mxu0 0.0
          %568 = vmatmul.mubr.f32.gmra.mxu0 %v489
          %v569 = vpop.f32.mrf.mxu0
          %v570 = vadd.f32 %v469, %v569
          %v571 = vpop.f32.mrf.mxu0
          %v572 = vadd.f32 %v471, %v571
          %573 = vmatprep.mubr.f32.mxu0 0.0
          %574 = vmatmul.mubr.f32.gmra.mxu0 %v492
          %v575 = vpop.f32.mrf.mxu0
          %v576 = vadd.f32 %v475, %v575
          %v577 = vpop.f32.mrf.mxu0
          %v578 = vadd.f32 %v477, %v577
          %579 = vmatprep.mubr.f32.mxu0 0.0
          %580 = vmatmul.mubr.f32.gmra.mxu0 %v495
          %v581 = vpop.f32.mrf.mxu0
          %v582 = vadd.f32 %v481, %v581
          %v583 = vpop.f32.mrf.mxu0
          %v584 = vadd.f32 %v483, %v583
          %585 = vdwg.mxu0
          %s586 = scalar_lea.vmem %s1, 64
          %v587 = vld [vmem:[%s586] sm:$0xff]
          %v588 = vld [vmem:[%s586 + $0x8] sm:$0xff]
          %v589 = vld [vmem:[%s586 + $0x10] sm:$0xff]
          %v590 = vld [vmem:[%s586 + $0x18] sm:$0xff]
          %591 = vrot.lane.b32.xlu0 %v334, 126
          %v592 = vpop.permute.xlu0 %591
          %593 = vrot.lane.b32.xlu0 %v335, 126
          %v594 = vpop.permute.xlu0 %593
          %595 = vrot.lane.b32.xlu0 %v336, 126
          %v596 = vpop.permute.xlu0 %595
          %597 = vrot.lane.b32.xlu0 %v337, 126
          %v598 = vpop.permute.xlu0 %597
          %599 = vrot.lane.b32.xlu0 %v338, 126
          %v600 = vpop.permute.xlu0 %599
          %601 = vrot.lane.b32.xlu0 %v339, 126
          %v602 = vpop.permute.xlu0 %601
          %603 = vrot.lane.b32.xlu0 %v340, 126
          %v604 = vpop.permute.xlu0 %603
          %605 = vrot.lane.b32.xlu0 %v341, 126
          %v606 = vpop.permute.xlu0 %605
          %607 = vrot.lane.b32.xlu0 %v342, 126
          %v608 = vpop.permute.xlu0 %607
          %vm609 = vcmask 1031168
          %v610 = vsel %vm609, %v592, %v594
          %v611 = vsel %vm609, %v594, %v596
          %v612 = vsel %vm609, %v598, %v600
          %v613 = vsel %vm609, %v600, %v602
          %v614 = vsel %vm609, %v604, %v606
          %v615 = vsel %vm609, %v606, %v608
          %v623 = vsel %vm383, %v587, 0
          %v626 = vsel %vm383, %v588, 0
          %v629 = vsel %vm383, %v589, 0
          %v632 = vsel %vm383, %v590, 0
          %634 = vmatprep.subr.mxu0 0.0
          %635 = vmatpush1.msra.mxu0 0.0
          %636 = vmatprep.subr.mxu0 0.0
          %637 = vmatpush1.msra.mxu0 0.0
          %638 = vmatprep.subr.mxu0 0.0
          %639 = vmatpush1.msra.mxu0 0.0
          %640 = vmatprep.subr.mxu0 0.0
          %641 = vmatpush1.msra.mxu0 0.0
          %642 = vmatprep.subr.mxu0 0.0
          %643 = vmatpush1.msra.mxu0 0.0
          %644 = vmatprep.subr.mxu0 0.0
          %645 = vmatpush1.msra.mxu0 0.0
          %646 = vmatprep.subr.mxu0 0.0
          %647 = vmatpush1.msra.mxu0 0.0
          %648 = vmatprep.subr.mxu0 0.0
          %649 = vmatpush1.msra.mxu0 0.0
          %650 = vmatprep.subr.mxu0 0.0
          %651 = vmatpush1.msra.mxu0 0.0
          %652 = vmatprep.subr.mxu0 0.0
          %653 = vmatpush1.msra.mxu0 0.0
          %654 = vmatprep.subr.mxu0 0.0
          %655 = vmatpush1.msra.mxu0 0.0
          %656 = vmatprep.subr.mxu0 0.0
          %657 = vmatpush1.msra.mxu0 0.0
          %658 = vmatprep.subr.mxu0 0.0
          %659 = vmatpush1.msra.mxu0 0.0
          %660 = vmatprep.subr.mxu0 %v615
          %661 = vmatpush1.msra.mxu0 %v614
          %662 = vmatprep.subr.mxu0 %v613
          %663 = vmatpush1.msra.mxu0 %v612
          %664 = vmatprep.subr.mxu0 %v611
          %665 = vmatpush1.msra.mxu0 %v610
          %666 = vmatprep.subr.mxu0 0.0
          %667 = vmatpush2.msra.mxu0 0.0
          %668 = vmatprep.subr.mxu0 0.0
          %669 = vmatpush2.msra.mxu0 0.0
          %670 = vmatprep.subr.mxu0 0.0
          %671 = vmatpush2.msra.mxu0 0.0
          %672 = vmatprep.subr.mxu0 0.0
          %673 = vmatpush2.msra.mxu0 0.0
          %674 = vmatprep.subr.mxu0 0.0
          %675 = vmatpush2.msra.mxu0 0.0
          %676 = vmatprep.subr.mxu0 0.0
          %677 = vmatpush2.msra.mxu0 0.0
          %678 = vmatprep.subr.mxu0 0.0
          %679 = vmatpush2.msra.mxu0 0.0
          %680 = vmatprep.subr.mxu0 0.0
          %681 = vmatpush2.msra.mxu0 0.0
          %682 = vmatprep.subr.mxu0 0.0
          %683 = vmatpush2.msra.mxu0 0.0
          %684 = vmatprep.subr.mxu0 0.0
          %685 = vmatpush2.msra.mxu0 0.0
          %686 = vmatprep.subr.mxu0 0.0
          %687 = vmatpush2.msra.mxu0 0.0
          %688 = vmatprep.subr.mxu0 0.0
          %689 = vmatpush2.msra.mxu0 0.0
          %690 = vmatprep.subr.mxu0 0.0
          %691 = vmatpush2.msra.mxu0 0.0
          %692 = vmatprep.subr.mxu0 0.0
          %693 = vmatpush2.msra.mxu0 0.0
          %694 = vmatprep.subr.mxu0 0.0
          %695 = vmatpush2.msra.mxu0 0.0
          %696 = vmatprep.subr.mxu0 0.0
          %697 = vmatpush2.msra.mxu0 0.0
          %698 = vmatprep.mubr.f32.mxu0 0.0
          %699 = vmatmul.mubr.f32.gmra.mxu0 %v623
          %v700 = vpop.f32.mrf.mxu0
          %v701 = vadd.f32 0.0, %v700
          %v702 = vpop.f32.mrf.mxu0
          %v703 = vadd.f32 0.0, %v702
          %704 = vmatprep.mubr.f32.mxu0 0.0
          %705 = vmatmul.mubr.f32.gmra.mxu0 %v626
          %v706 = vpop.f32.mrf.mxu0
          %v707 = vadd.f32 0.0, %v706
          %v708 = vpop.f32.mrf.mxu0
          %v709 = vadd.f32 0.0, %v708
          %710 = vmatprep.mubr.f32.mxu0 0.0
          %711 = vmatmul.mubr.f32.gmra.mxu0 %v629
          %v712 = vpop.f32.mrf.mxu0
          %v713 = vadd.f32 0.0, %v712
          %v714 = vpop.f32.mrf.mxu0
          %v715 = vadd.f32 0.0, %v714
          %716 = vmatprep.mubr.f32.mxu0 0.0
          %717 = vmatmul.mubr.f32.gmra.mxu0 %v632
          %v718 = vpop.f32.mrf.mxu0
          %v719 = vadd.f32 0.0, %v718
          %v720 = vpop.f32.mrf.mxu0
          %v721 = vadd.f32 0.0, %v720
          %722 = vdwg.mxu0
          %v723 = vadd.f32 %v564, %v701
          %v724 = vadd.f32 %v566, %v703
          %v725 = vadd.f32 %v570, %v707
          %v726 = vadd.f32 %v572, %v709
          %v727 = vadd.f32 %v576, %v713
          %v728 = vadd.f32 %v578, %v715
          %v729 = vadd.f32 %v582, %v719
          %v730 = vadd.f32 %v584, %v721
          %s731 = scalar_lea.vmem %s1, 96
          %v732 = vld [vmem:[%s731] sm:$0xff]
          %v733 = vld [vmem:[%s731 + $0x8] sm:$0xff]
          %v734 = vld [vmem:[%s731 + $0x10] sm:$0xff]
          %v735 = vld [vmem:[%s731 + $0x18] sm:$0xff]
          %736 = vrot.lane.b32.xlu0 %v334, 112
          %v737 = vpop.permute.xlu0 %736
          %738 = vrot.lane.b32.xlu0 %v335, 112
          %v739 = vpop.permute.xlu0 %738
          %740 = vrot.lane.b32.xlu0 %v336, 112
          %v741 = vpop.permute.xlu0 %740
          %742 = vrot.lane.b32.xlu0 %v337, 112
          %v743 = vpop.permute.xlu0 %742
          %744 = vrot.lane.b32.xlu0 %v338, 112
          %v745 = vpop.permute.xlu0 %744
          %746 = vrot.lane.b32.xlu0 %v339, 112
          %v747 = vpop.permute.xlu0 %746
          %748 = vrot.lane.b32.xlu0 %v340, 112
          %v749 = vpop.permute.xlu0 %748
          %750 = vrot.lane.b32.xlu0 %v341, 112
          %v751 = vpop.permute.xlu0 %750
          %752 = vrot.lane.b32.xlu0 %v342, 112
          %v753 = vpop.permute.xlu0 %752
          %vm754 = vcmask 916480
          %v755 = vsel %vm754, %v737, %v739
          %v756 = vsel %vm754, %v739, %v741
          %v757 = vsel %vm754, %v743, %v745
          %v758 = vsel %vm754, %v745, %v747
          %v759 = vsel %vm754, %v749, %v751
          %v760 = vsel %vm754, %v751, %v753
          %v768 = vsel %vm383, %v732, 0
          %v771 = vsel %vm383, %v733, 0
          %v774 = vsel %vm383, %v734, 0
          %v777 = vsel %vm383, %v735, 0
          %779 = vmatprep.subr.mxu0 0.0
          %780 = vmatpush1.msra.mxu0 0.0
          %781 = vmatprep.subr.mxu0 0.0
          %782 = vmatpush1.msra.mxu0 0.0
          %783 = vmatprep.subr.mxu0 0.0
          %784 = vmatpush1.msra.mxu0 0.0
          %785 = vmatprep.subr.mxu0 0.0
          %786 = vmatpush1.msra.mxu0 0.0
          %787 = vmatprep.subr.mxu0 0.0
          %788 = vmatpush1.msra.mxu0 0.0
          %789 = vmatprep.subr.mxu0 0.0
          %790 = vmatpush1.msra.mxu0 0.0
          %791 = vmatprep.subr.mxu0 0.0
          %792 = vmatpush1.msra.mxu0 0.0
          %793 = vmatprep.subr.mxu0 0.0
          %794 = vmatpush1.msra.mxu0 0.0
          %795 = vmatprep.subr.mxu0 0.0
          %796 = vmatpush1.msra.mxu0 0.0
          %797 = vmatprep.subr.mxu0 0.0
          %798 = vmatpush1.msra.mxu0 0.0
          %799 = vmatprep.subr.mxu0 0.0
          %800 = vmatpush1.msra.mxu0 0.0
          %801 = vmatprep.subr.mxu0 0.0
          %802 = vmatpush1.msra.mxu0 0.0
          %803 = vmatprep.subr.mxu0 0.0
          %804 = vmatpush1.msra.mxu0 0.0
          %805 = vmatprep.subr.mxu0 %v760
          %806 = vmatpush1.msra.mxu0 %v759
          %807 = vmatprep.subr.mxu0 %v758
          %808 = vmatpush1.msra.mxu0 %v757
          %809 = vmatprep.subr.mxu0 %v756
          %810 = vmatpush1.msra.mxu0 %v755
          %811 = vmatprep.subr.mxu0 0.0
          %812 = vmatpush2.msra.mxu0 0.0
          %813 = vmatprep.subr.mxu0 0.0
          %814 = vmatpush2.msra.mxu0 0.0
          %815 = vmatprep.subr.mxu0 0.0
          %816 = vmatpush2.msra.mxu0 0.0
          %817 = vmatprep.subr.mxu0 0.0
          %818 = vmatpush2.msra.mxu0 0.0
          %819 = vmatprep.subr.mxu0 0.0
          %820 = vmatpush2.msra.mxu0 0.0
          %821 = vmatprep.subr.mxu0 0.0
          %822 = vmatpush2.msra.mxu0 0.0
          %823 = vmatprep.subr.mxu0 0.0
          %824 = vmatpush2.msra.mxu0 0.0
          %825 = vmatprep.subr.mxu0 0.0
          %826 = vmatpush2.msra.mxu0 0.0
          %827 = vmatprep.subr.mxu0 0.0
          %828 = vmatpush2.msra.mxu0 0.0
          %829 = vmatprep.subr.mxu0 0.0
          %830 = vmatpush2.msra.mxu0 0.0
          %831 = vmatprep.subr.mxu0 0.0
          %832 = vmatpush2.msra.mxu0 0.0
          %833 = vmatprep.subr.mxu0 0.0
          %834 = vmatpush2.msra.mxu0 0.0
          %835 = vmatprep.subr.mxu0 0.0
          %836 = vmatpush2.msra.mxu0 0.0
          %837 = vmatprep.subr.mxu0 0.0
          %838 = vmatpush2.msra.mxu0 0.0
          %839 = vmatprep.subr.mxu0 0.0
          %840 = vmatpush2.msra.mxu0 0.0
          %841 = vmatprep.subr.mxu0 0.0
          %842 = vmatpush2.msra.mxu0 0.0
          %843 = vmatprep.mubr.f32.mxu0 0.0
          %844 = vmatmul.mubr.f32.gmra.mxu0 %v768
          %v845 = vpop.f32.mrf.mxu0
          %v846 = vadd.f32 0.0, %v845
          %v847 = vpop.f32.mrf.mxu0
          %v848 = vadd.f32 0.0, %v847
          %849 = vmatprep.mubr.f32.mxu0 0.0
          %850 = vmatmul.mubr.f32.gmra.mxu0 %v771
          %v851 = vpop.f32.mrf.mxu0
          %v852 = vadd.f32 0.0, %v851
          %v853 = vpop.f32.mrf.mxu0
          %v854 = vadd.f32 0.0, %v853
          %855 = vmatprep.mubr.f32.mxu0 0.0
          %856 = vmatmul.mubr.f32.gmra.mxu0 %v774
          %v857 = vpop.f32.mrf.mxu0
          %v858 = vadd.f32 0.0, %v857
          %v859 = vpop.f32.mrf.mxu0
          %v860 = vadd.f32 0.0, %v859
          %861 = vmatprep.mubr.f32.mxu0 0.0
          %862 = vmatmul.mubr.f32.gmra.mxu0 %v777
          %v863 = vpop.f32.mrf.mxu0
          %v864 = vadd.f32 0.0, %v863
          %v865 = vpop.f32.mrf.mxu0
          %v866 = vadd.f32 0.0, %v865
          %867 = vdwg.mxu0
          %v868 = vadd.f32 %v723, %v846
          %v869 = vadd.f32 %v724, %v848
          %v870 = vadd.f32 %v725, %v852
          %v871 = vadd.f32 %v726, %v854
          %v872 = vadd.f32 %v727, %v858
          %v873 = vadd.f32 %v728, %v860
          %v874 = vadd.f32 %v729, %v864
          %v875 = vadd.f32 %v730, %v866
          %s876 = scalar_lea.vmem %s1, 128
          %v877 = vld [vmem:[%s876] sm:$0xff]
          %v878 = vld [vmem:[%s876 + $0x8] sm:$0xff]
          %v879 = vld [vmem:[%s876 + $0x10] sm:$0xff]
          %v880 = vld [vmem:[%s876 + $0x18] sm:$0xff]
          %881 = vrot.lane.b32.xlu0 %v334, 111
          %v882 = vpop.permute.xlu0 %881
          %883 = vrot.lane.b32.xlu0 %v335, 111
          %v884 = vpop.permute.xlu0 %883
          %885 = vrot.lane.b32.xlu0 %v336, 111
          %v886 = vpop.permute.xlu0 %885
          %887 = vrot.lane.b32.xlu0 %v337, 111
          %v888 = vpop.permute.xlu0 %887
          %889 = vrot.lane.b32.xlu0 %v338, 111
          %v890 = vpop.permute.xlu0 %889
          %891 = vrot.lane.b32.xlu0 %v339, 111
          %v892 = vpop.permute.xlu0 %891
          %893 = vrot.lane.b32.xlu0 %v340, 111
          %v894 = vpop.permute.xlu0 %893
          %895 = vrot.lane.b32.xlu0 %v341, 111
          %v896 = vpop.permute.xlu0 %895
          %897 = vrot.lane.b32.xlu0 %v342, 111
          %v898 = vpop.permute.xlu0 %897
          %vm899 = vcmask 908288
          %v900 = vsel %vm899, %v882, %v884
          %v901 = vsel %vm899, %v884, %v886
          %v902 = vsel %vm899, %v888, %v890
          %v903 = vsel %vm899, %v890, %v892
          %v904 = vsel %vm899, %v894, %v896
          %v905 = vsel %vm899, %v896, %v898
          %v913 = vsel %vm383, %v877, 0
          %v916 = vsel %vm383, %v878, 0
          %v919 = vsel %vm383, %v879, 0
          %v922 = vsel %vm383, %v880, 0
          %924 = vmatprep.subr.mxu0 0.0
          %925 = vmatpush1.msra.mxu0 0.0
          %926 = vmatprep.subr.mxu0 0.0
          %927 = vmatpush1.msra.mxu0 0.0
          %928 = vmatprep.subr.mxu0 0.0
          %929 = vmatpush1.msra.mxu0 0.0
          %930 = vmatprep.subr.mxu0 0.0
          %931 = vmatpush1.msra.mxu0 0.0
          %932 = vmatprep.subr.mxu0 0.0
          %933 = vmatpush1.msra.mxu0 0.0
          %934 = vmatprep.subr.mxu0 0.0
          %935 = vmatpush1.msra.mxu0 0.0
          %936 = vmatprep.subr.mxu0 0.0
          %937 = vmatpush1.msra.mxu0 0.0
          %938 = vmatprep.subr.mxu0 0.0
          %939 = vmatpush1.msra.mxu0 0.0
          %940 = vmatprep.subr.mxu0 0.0
          %941 = vmatpush1.msra.mxu0 0.0
          %942 = vmatprep.subr.mxu0 0.0
          %943 = vmatpush1.msra.mxu0 0.0
          %944 = vmatprep.subr.mxu0 0.0
          %945 = vmatpush1.msra.mxu0 0.0
          %946 = vmatprep.subr.mxu0 0.0
          %947 = vmatpush1.msra.mxu0 0.0
          %948 = vmatprep.subr.mxu0 0.0
          %949 = vmatpush1.msra.mxu0 0.0
          %950 = vmatprep.subr.mxu0 %v905
          %951 = vmatpush1.msra.mxu0 %v904
          %952 = vmatprep.subr.mxu0 %v903
          %953 = vmatpush1.msra.mxu0 %v902
          %954 = vmatprep.subr.mxu0 %v901
          %955 = vmatpush1.msra.mxu0 %v900
          %956 = vmatprep.subr.mxu0 0.0
          %957 = vmatpush2.msra.mxu0 0.0
          %958 = vmatprep.subr.mxu0 0.0
          %959 = vmatpush2.msra.mxu0 0.0
          %960 = vmatprep.subr.mxu0 0.0
          %961 = vmatpush2.msra.mxu0 0.0
          %962 = vmatprep.subr.mxu0 0.0
          %963 = vmatpush2.msra.mxu0 0.0
          %964 = vmatprep.subr.mxu0 0.0
          %965 = vmatpush2.msra.mxu0 0.0
          %966 = vmatprep.subr.mxu0 0.0
          %967 = vmatpush2.msra.mxu0 0.0
          %968 = vmatprep.subr.mxu0 0.0
          %969 = vmatpush2.msra.mxu0 0.0
          %970 = vmatprep.subr.mxu0 0.0
          %971 = vmatpush2.msra.mxu0 0.0
          %972 = vmatprep.subr.mxu0 0.0
          %973 = vmatpush2.msra.mxu0 0.0
          %974 = vmatprep.subr.mxu0 0.0
          %975 = vmatpush2.msra.mxu0 0.0
          %976 = vmatprep.subr.mxu0 0.0
          %977 = vmatpush2.msra.mxu0 0.0
          %978 = vmatprep.subr.mxu0 0.0
          %979 = vmatpush2.msra.mxu0 0.0
          %980 = vmatprep.subr.mxu0 0.0
          %981 = vmatpush2.msra.mxu0 0.0
          %982 = vmatprep.subr.mxu0 0.0
          %983 = vmatpush2.msra.mxu0 0.0
          %984 = vmatprep.subr.mxu0 0.0
          %985 = vmatpush2.msra.mxu0 0.0
          %986 = vmatprep.subr.mxu0 0.0
          %987 = vmatpush2.msra.mxu0 0.0
          %988 = vmatprep.mubr.f32.mxu0 0.0
          %989 = vmatmul.mubr.f32.gmra.mxu0 %v913
          %v990 = vpop.f32.mrf.mxu0
          %v991 = vadd.f32 0.0, %v990
          %v992 = vpop.f32.mrf.mxu0
          %v993 = vadd.f32 0.0, %v992
          %994 = vmatprep.mubr.f32.mxu0 0.0
          %995 = vmatmul.mubr.f32.gmra.mxu0 %v916
          %v996 = vpop.f32.mrf.mxu0
          %v997 = vadd.f32 0.0, %v996
          %v998 = vpop.f32.mrf.mxu0
          %v999 = vadd.f32 0.0, %v998
          %1000 = vmatprep.mubr.f32.mxu0 0.0
          %1001 = vmatmul.mubr.f32.gmra.mxu0 %v919
          %v1002 = vpop.f32.mrf.mxu0
          %v1003 = vadd.f32 0.0, %v1002
          %v1004 = vpop.f32.mrf.mxu0
          %v1005 = vadd.f32 0.0, %v1004
          %1006 = vmatprep.mubr.f32.mxu0 0.0
          %1007 = vmatmul.mubr.f32.gmra.mxu0 %v922
          %v1008 = vpop.f32.mrf.mxu0
          %v1009 = vadd.f32 0.0, %v1008
          %v1010 = vpop.f32.mrf.mxu0
          %v1011 = vadd.f32 0.0, %v1010
          %1012 = vdwg.mxu0
          %v1013 = vadd.f32 %v868, %v991
          %v1014 = vadd.f32 %v869, %v993
          %v1015 = vadd.f32 %v870, %v997
          %v1016 = vadd.f32 %v871, %v999
          %v1017 = vadd.f32 %v872, %v1003
          %v1018 = vadd.f32 %v873, %v1005
          %v1019 = vadd.f32 %v874, %v1009
          %v1020 = vadd.f32 %v875, %v1011
          %s1021 = scalar_lea.vmem %s1, 160
          %v1022 = vld [vmem:[%s1021] sm:$0xff]
          %v1023 = vld [vmem:[%s1021 + $0x8] sm:$0xff]
          %v1024 = vld [vmem:[%s1021 + $0x10] sm:$0xff]
          %v1025 = vld [vmem:[%s1021 + $0x18] sm:$0xff]
          %1026 = vrot.lane.b32.xlu0 %v334, 110
          %v1027 = vpop.permute.xlu0 %1026
          %1028 = vrot.lane.b32.xlu0 %v335, 110
          %v1029 = vpop.permute.xlu0 %1028
          %1030 = vrot.lane.b32.xlu0 %v336, 110
          %v1031 = vpop.permute.xlu0 %1030
          %1032 = vrot.lane.b32.xlu0 %v337, 110
          %v1033 = vpop.permute.xlu0 %1032
          %1034 = vrot.lane.b32.xlu0 %v338, 110
          %v1035 = vpop.permute.xlu0 %1034
          %1036 = vrot.lane.b32.xlu0 %v339, 110
          %v1037 = vpop.permute.xlu0 %1036
          %1038 = vrot.lane.b32.xlu0 %v340, 110
          %v1039 = vpop.permute.xlu0 %1038
          %1040 = vrot.lane.b32.xlu0 %v341, 110
          %v1041 = vpop.permute.xlu0 %1040
          %1042 = vrot.lane.b32.xlu0 %v342, 110
          %v1043 = vpop.permute.xlu0 %1042
          %vm1044 = vcmask 900096
          %v1045 = vsel %vm1044, %v1027, %v1029
          %v1046 = vsel %vm1044, %v1029, %v1031
          %v1047 = vsel %vm1044, %v1033, %v1035
          %v1048 = vsel %vm1044, %v1035, %v1037
          %v1049 = vsel %vm1044, %v1039, %v1041
          %v1050 = vsel %vm1044, %v1041, %v1043
          %v1058 = vsel %vm383, %v1022, 0
          %v1061 = vsel %vm383, %v1023, 0
          %v1064 = vsel %vm383, %v1024, 0
          %v1067 = vsel %vm383, %v1025, 0
          %1069 = vmatprep.subr.mxu0 0.0
          %1070 = vmatpush1.msra.mxu0 0.0
          %1071 = vmatprep.subr.mxu0 0.0
          %1072 = vmatpush1.msra.mxu0 0.0
          %1073 = vmatprep.subr.mxu0 0.0
          %1074 = vmatpush1.msra.mxu0 0.0
          %1075 = vmatprep.subr.mxu0 0.0
          %1076 = vmatpush1.msra.mxu0 0.0
          %1077 = vmatprep.subr.mxu0 0.0
          %1078 = vmatpush1.msra.mxu0 0.0
          %1079 = vmatprep.subr.mxu0 0.0
          %1080 = vmatpush1.msra.mxu0 0.0
          %1081 = vmatprep.subr.mxu0 0.0
          %1082 = vmatpush1.msra.mxu0 0.0
          %1083 = vmatprep.subr.mxu0 0.0
          %1084 = vmatpush1.msra.mxu0 0.0
          %1085 = vmatprep.subr.mxu0 0.0
          %1086 = vmatpush1.msra.mxu0 0.0
          %1087 = vmatprep.subr.mxu0 0.0
          %1088 = vmatpush1.msra.mxu0 0.0
          %1089 = vmatprep.subr.mxu0 0.0
          %1090 = vmatpush1.msra.mxu0 0.0
          %1091 = vmatprep.subr.mxu0 0.0
          %1092 = vmatpush1.msra.mxu0 0.0
          %1093 = vmatprep.subr.mxu0 0.0
          %1094 = vmatpush1.msra.mxu0 0.0
          %1095 = vmatprep.subr.mxu0 %v1050
          %1096 = vmatpush1.msra.mxu0 %v1049
          %1097 = vmatprep.subr.mxu0 %v1048
          %1098 = vmatpush1.msra.mxu0 %v1047
          %1099 = vmatprep.subr.mxu0 %v1046
          %1100 = vmatpush1.msra.mxu0 %v1045
          %1101 = vmatprep.subr.mxu0 0.0
          %1102 = vmatpush2.msra.mxu0 0.0
          %1103 = vmatprep.subr.mxu0 0.0
          %1104 = vmatpush2.msra.mxu0 0.0
          %1105 = vmatprep.subr.mxu0 0.0
          %1106 = vmatpush2.msra.mxu0 0.0
          %1107 = vmatprep.subr.mxu0 0.0
          %1108 = vmatpush2.msra.mxu0 0.0
          %1109 = vmatprep.subr.mxu0 0.0
          %1110 = vmatpush2.msra.mxu0 0.0
          %1111 = vmatprep.subr.mxu0 0.0
          %1112 = vmatpush2.msra.mxu0 0.0
          %1113 = vmatprep.subr.mxu0 0.0
          %1114 = vmatpush2.msra.mxu0 0.0
          %1115 = vmatprep.subr.mxu0 0.0
          %1116 = vmatpush2.msra.mxu0 0.0
          %1117 = vmatprep.subr.mxu0 0.0
          %1118 = vmatpush2.msra.mxu0 0.0
          %1119 = vmatprep.subr.mxu0 0.0
          %1120 = vmatpush2.msra.mxu0 0.0
          %1121 = vmatprep.subr.mxu0 0.0
          %1122 = vmatpush2.msra.mxu0 0.0
          %1123 = vmatprep.subr.mxu0 0.0
          %1124 = vmatpush2.msra.mxu0 0.0
          %1125 = vmatprep.subr.mxu0 0.0
          %1126 = vmatpush2.msra.mxu0 0.0
          %1127 = vmatprep.subr.mxu0 0.0
          %1128 = vmatpush2.msra.mxu0 0.0
          %1129 = vmatprep.subr.mxu0 0.0
          %1130 = vmatpush2.msra.mxu0 0.0
          %1131 = vmatprep.subr.mxu0 0.0
          %1132 = vmatpush2.msra.mxu0 0.0
          %1133 = vmatprep.mubr.f32.mxu0 0.0
          %1134 = vmatmul.mubr.f32.gmra.mxu0 %v1058
          %v1135 = vpop.f32.mrf.mxu0
          %v1136 = vadd.f32 0.0, %v1135
          %v1137 = vpop.f32.mrf.mxu0
          %v1138 = vadd.f32 0.0, %v1137
          %1139 = vmatprep.mubr.f32.mxu0 0.0
          %1140 = vmatmul.mubr.f32.gmra.mxu0 %v1061
          %v1141 = vpop.f32.mrf.mxu0
          %v1142 = vadd.f32 0.0, %v1141
          %v1143 = vpop.f32.mrf.mxu0
          %v1144 = vadd.f32 0.0, %v1143
          %1145 = vmatprep.mubr.f32.mxu0 0.0
          %1146 = vmatmul.mubr.f32.gmra.mxu0 %v1064
          %v1147 = vpop.f32.mrf.mxu0
          %v1148 = vadd.f32 0.0, %v1147
          %v1149 = vpop.f32.mrf.mxu0
          %v1150 = vadd.f32 0.0, %v1149
          %1151 = vmatprep.mubr.f32.mxu0 0.0
          %1152 = vmatmul.mubr.f32.gmra.mxu0 %v1067
          %v1153 = vpop.f32.mrf.mxu0
          %v1154 = vadd.f32 0.0, %v1153
          %v1155 = vpop.f32.mrf.mxu0
          %v1156 = vadd.f32 0.0, %v1155
          %1157 = vdwg.mxu0
          %v1158 = vadd.f32 %v1013, %v1136
          %v1159 = vadd.f32 %v1014, %v1138
          %v1160 = vadd.f32 %v1015, %v1142
          %v1161 = vadd.f32 %v1016, %v1144
          %v1162 = vadd.f32 %v1017, %v1148
          %v1163 = vadd.f32 %v1018, %v1150
          %v1164 = vadd.f32 %v1019, %v1154
          %v1165 = vadd.f32 %v1020, %v1156
          %s1166 = scalar_lea.vmem %s1, 192
          %v1167 = vld [vmem:[%s1166] sm:$0xff]
          %v1168 = vld [vmem:[%s1166 + $0x8] sm:$0xff]
          %v1169 = vld [vmem:[%s1166 + $0x10] sm:$0xff]
          %v1170 = vld [vmem:[%s1166 + $0x18] sm:$0xff]
          %1171 = vrot.lane.b32.xlu0 %v334, 96
          %v1172 = vpop.permute.xlu0 %1171
          %1173 = vrot.lane.b32.xlu0 %v335, 96
          %v1174 = vpop.permute.xlu0 %1173
          %1175 = vrot.lane.b32.xlu0 %v336, 96
          %v1176 = vpop.permute.xlu0 %1175
          %1177 = vrot.lane.b32.xlu0 %v337, 96
          %v1178 = vpop.permute.xlu0 %1177
          %1179 = vrot.lane.b32.xlu0 %v338, 96
          %v1180 = vpop.permute.xlu0 %1179
          %1181 = vrot.lane.b32.xlu0 %v339, 96
          %v1182 = vpop.permute.xlu0 %1181
          %1183 = vrot.lane.b32.xlu0 %v340, 96
          %v1184 = vpop.permute.xlu0 %1183
          %1185 = vrot.lane.b32.xlu0 %v341, 96
          %v1186 = vpop.permute.xlu0 %1185
          %1187 = vrot.lane.b32.xlu0 %v342, 96
          %v1188 = vpop.permute.xlu0 %1187
          %vm1189 = vcmask 785408
          %v1190 = vsel %vm1189, %v1172, %v1174
          %v1191 = vsel %vm1189, %v1174, %v1176
          %v1192 = vsel %vm1189, %v1178, %v1180
          %v1193 = vsel %vm1189, %v1180, %v1182
          %v1194 = vsel %vm1189, %v1184, %v1186
          %v1195 = vsel %vm1189, %v1186, %v1188
          %v1203 = vsel %vm383, %v1167, 0
          %v1206 = vsel %vm383, %v1168, 0
          %v1209 = vsel %vm383, %v1169, 0
          %v1212 = vsel %vm383, %v1170, 0
          %1214 = vmatprep.subr.mxu0 0.0
          %1215 = vmatpush1.msra.mxu0 0.0
          %1216 = vmatprep.subr.mxu0 0.0
          %1217 = vmatpush1.msra.mxu0 0.0
          %1218 = vmatprep.subr.mxu0 0.0
          %1219 = vmatpush1.msra.mxu0 0.0
          %1220 = vmatprep.subr.mxu0 0.0
          %1221 = vmatpush1.msra.mxu0 0.0
          %1222 = vmatprep.subr.mxu0 0.0
          %1223 = vmatpush1.msra.mxu0 0.0
          %1224 = vmatprep.subr.mxu0 0.0
          %1225 = vmatpush1.msra.mxu0 0.0
          %1226 = vmatprep.subr.mxu0 0.0
          %1227 = vmatpush1.msra.mxu0 0.0
          %1228 = vmatprep.subr.mxu0 0.0
          %1229 = vmatpush1.msra.mxu0 0.0
          %1230 = vmatprep.subr.mxu0 0.0
          %1231 = vmatpush1.msra.mxu0 0.0
          %1232 = vmatprep.subr.mxu0 0.0
          %1233 = vmatpush1.msra.mxu0 0.0
          %1234 = vmatprep.subr.mxu0 0.0
          %1235 = vmatpush1.msra.mxu0 0.0
          %1236 = vmatprep.subr.mxu0 0.0
          %1237 = vmatpush1.msra.mxu0 0.0
          %1238 = vmatprep.subr.mxu0 0.0
          %1239 = vmatpush1.msra.mxu0 0.0
          %1240 = vmatprep.subr.mxu0 %v1195
          %1241 = vmatpush1.msra.mxu0 %v1194
          %1242 = vmatprep.subr.mxu0 %v1193
          %1243 = vmatpush1.msra.mxu0 %v1192
          %1244 = vmatprep.subr.mxu0 %v1191
          %1245 = vmatpush1.msra.mxu0 %v1190
          %1246 = vmatprep.subr.mxu0 0.0
          %1247 = vmatpush2.msra.mxu0 0.0
          %1248 = vmatprep.subr.mxu0 0.0
          %1249 = vmatpush2.msra.mxu0 0.0
          %1250 = vmatprep.subr.mxu0 0.0
          %1251 = vmatpush2.msra.mxu0 0.0
          %1252 = vmatprep.subr.mxu0 0.0
          %1253 = vmatpush2.msra.mxu0 0.0
          %1254 = vmatprep.subr.mxu0 0.0
          %1255 = vmatpush2.msra.mxu0 0.0
          %1256 = vmatprep.subr.mxu0 0.0
          %1257 = vmatpush2.msra.mxu0 0.0
          %1258 = vmatprep.subr.mxu0 0.0
          %1259 = vmatpush2.msra.mxu0 0.0
          %1260 = vmatprep.subr.mxu0 0.0
          %1261 = vmatpush2.msra.mxu0 0.0
          %1262 = vmatprep.subr.mxu0 0.0
          %1263 = vmatpush2.msra.mxu0 0.0
          %1264 = vmatprep.subr.mxu0 0.0
          %1265 = vmatpush2.msra.mxu0 0.0
          %1266 = vmatprep.subr.mxu0 0.0
          %1267 = vmatpush2.msra.mxu0 0.0
          %1268 = vmatprep.subr.mxu0 0.0
          %1269 = vmatpush2.msra.mxu0 0.0
          %1270 = vmatprep.subr.mxu0 0.0
          %1271 = vmatpush2.msra.mxu0 0.0
          %1272 = vmatprep.subr.mxu0 0.0
          %1273 = vmatpush2.msra.mxu0 0.0
          %1274 = vmatprep.subr.mxu0 0.0
          %1275 = vmatpush2.msra.mxu0 0.0
          %1276 = vmatprep.subr.mxu0 0.0
          %1277 = vmatpush2.msra.mxu0 0.0
          %1278 = vmatprep.mubr.f32.mxu0 0.0
          %1279 = vmatmul.mubr.f32.gmra.mxu0 %v1203
          %v1280 = vpop.f32.mrf.mxu0
          %v1281 = vadd.f32 0.0, %v1280
          %v1282 = vpop.f32.mrf.mxu0
          %v1283 = vadd.f32 0.0, %v1282
          %1284 = vmatprep.mubr.f32.mxu0 0.0
          %1285 = vmatmul.mubr.f32.gmra.mxu0 %v1206
          %v1286 = vpop.f32.mrf.mxu0
          %v1287 = vadd.f32 0.0, %v1286
          %v1288 = vpop.f32.mrf.mxu0
          %v1289 = vadd.f32 0.0, %v1288
          %1290 = vmatprep.mubr.f32.mxu0 0.0
          %1291 = vmatmul.mubr.f32.gmra.mxu0 %v1209
          %v1292 = vpop.f32.mrf.mxu0
          %v1293 = vadd.f32 0.0, %v1292
          %v1294 = vpop.f32.mrf.mxu0
          %v1295 = vadd.f32 0.0, %v1294
          %1296 = vmatprep.mubr.f32.mxu0 0.0
          %1297 = vmatmul.mubr.f32.gmra.mxu0 %v1212
          %v1298 = vpop.f32.mrf.mxu0
          %v1299 = vadd.f32 0.0, %v1298
          %v1300 = vpop.f32.mrf.mxu0
          %v1301 = vadd.f32 0.0, %v1300
          %1302 = vdwg.mxu0
          %v1303 = vadd.f32 %v1158, %v1281
          %v1304 = vadd.f32 %v1159, %v1283
          %v1305 = vadd.f32 %v1160, %v1287
          %v1306 = vadd.f32 %v1161, %v1289
          %v1307 = vadd.f32 %v1162, %v1293
          %v1308 = vadd.f32 %v1163, %v1295
          %v1309 = vadd.f32 %v1164, %v1299
          %v1310 = vadd.f32 %v1165, %v1301
          %s1311 = scalar_lea.vmem %s1, 224
          %v1312 = vld [vmem:[%s1311] sm:$0xff]
          %v1313 = vld [vmem:[%s1311 + $0x8] sm:$0xff]
          %v1314 = vld [vmem:[%s1311 + $0x10] sm:$0xff]
          %v1315 = vld [vmem:[%s1311 + $0x18] sm:$0xff]
          %1316 = vrot.lane.b32.xlu0 %v334, 95
          %v1317 = vpop.permute.xlu0 %1316
          %1318 = vrot.lane.b32.xlu0 %v335, 95
          %v1319 = vpop.permute.xlu0 %1318
          %1320 = vrot.lane.b32.xlu0 %v336, 95
          %v1321 = vpop.permute.xlu0 %1320
          %1322 = vrot.lane.b32.xlu0 %v337, 95
          %v1323 = vpop.permute.xlu0 %1322
          %1324 = vrot.lane.b32.xlu0 %v338, 95
          %v1325 = vpop.permute.xlu0 %1324
          %1326 = vrot.lane.b32.xlu0 %v339, 95
          %v1327 = vpop.permute.xlu0 %1326
          %1328 = vrot.lane.b32.xlu0 %v340, 95
          %v1329 = vpop.permute.xlu0 %1328
          %1330 = vrot.lane.b32.xlu0 %v341, 95
          %v1331 = vpop.permute.xlu0 %1330
          %1332 = vrot.lane.b32.xlu0 %v342, 95
          %v1333 = vpop.permute.xlu0 %1332
          %vm1334 = vcmask 777216
          %v1335 = vsel %vm1334, %v1317, %v1319
          %v1336 = vsel %vm1334, %v1319, %v1321
          %v1337 = vsel %vm1334, %v1323, %v1325
          %v1338 = vsel %vm1334, %v1325, %v1327
          %v1339 = vsel %vm1334, %v1329, %v1331
          %v1340 = vsel %vm1334, %v1331, %v1333
          %v1348 = vsel %vm383, %v1312, 0
          %v1351 = vsel %vm383, %v1313, 0
          %v1354 = vsel %vm383, %v1314, 0
          %v1357 = vsel %vm383, %v1315, 0
          %1359 = vmatprep.subr.mxu0 0.0
          %1360 = vmatpush1.msra.mxu0 0.0
          %1361 = vmatprep.subr.mxu0 0.0
          %1362 = vmatpush1.msra.mxu0 0.0
          %1363 = vmatprep.subr.mxu0 0.0
          %1364 = vmatpush1.msra.mxu0 0.0
          %1365 = vmatprep.subr.mxu0 0.0
          %1366 = vmatpush1.msra.mxu0 0.0
          %1367 = vmatprep.subr.mxu0 0.0
          %1368 = vmatpush1.msra.mxu0 0.0
          %1369 = vmatprep.subr.mxu0 0.0
          %1370 = vmatpush1.msra.mxu0 0.0
          %1371 = vmatprep.subr.mxu0 0.0
          %1372 = vmatpush1.msra.mxu0 0.0
          %1373 = vmatprep.subr.mxu0 0.0
          %1374 = vmatpush1.msra.mxu0 0.0
          %1375 = vmatprep.subr.mxu0 0.0
          %1376 = vmatpush1.msra.mxu0 0.0
          %1377 = vmatprep.subr.mxu0 0.0
          %1378 = vmatpush1.msra.mxu0 0.0
          %1379 = vmatprep.subr.mxu0 0.0
          %1380 = vmatpush1.msra.mxu0 0.0
          %1381 = vmatprep.subr.mxu0 0.0
          %1382 = vmatpush1.msra.mxu0 0.0
          %1383 = vmatprep.subr.mxu0 0.0
          %1384 = vmatpush1.msra.mxu0 0.0
          %1385 = vmatprep.subr.mxu0 %v1340
          %1386 = vmatpush1.msra.mxu0 %v1339
          %1387 = vmatprep.subr.mxu0 %v1338
          %1388 = vmatpush1.msra.mxu0 %v1337
          %1389 = vmatprep.subr.mxu0 %v1336
          %1390 = vmatpush1.msra.mxu0 %v1335
          %1391 = vmatprep.subr.mxu0 0.0
          %1392 = vmatpush2.msra.mxu0 0.0
          %1393 = vmatprep.subr.mxu0 0.0
          %1394 = vmatpush2.msra.mxu0 0.0
          %1395 = vmatprep.subr.mxu0 0.0
          %1396 = vmatpush2.msra.mxu0 0.0
          %1397 = vmatprep.subr.mxu0 0.0
          %1398 = vmatpush2.msra.mxu0 0.0
          %1399 = vmatprep.subr.mxu0 0.0
          %1400 = vmatpush2.msra.mxu0 0.0
          %1401 = vmatprep.subr.mxu0 0.0
          %1402 = vmatpush2.msra.mxu0 0.0
          %1403 = vmatprep.subr.mxu0 0.0
          %1404 = vmatpush2.msra.mxu0 0.0
          %1405 = vmatprep.subr.mxu0 0.0
          %1406 = vmatpush2.msra.mxu0 0.0
          %1407 = vmatprep.subr.mxu0 0.0
          %1408 = vmatpush2.msra.mxu0 0.0
          %1409 = vmatprep.subr.mxu0 0.0
          %1410 = vmatpush2.msra.mxu0 0.0
          %1411 = vmatprep.subr.mxu0 0.0
          %1412 = vmatpush2.msra.mxu0 0.0
          %1413 = vmatprep.subr.mxu0 0.0
          %1414 = vmatpush2.msra.mxu0 0.0
          %1415 = vmatprep.subr.mxu0 0.0
          %1416 = vmatpush2.msra.mxu0 0.0
          %1417 = vmatprep.subr.mxu0 0.0
          %1418 = vmatpush2.msra.mxu0 0.0
          %1419 = vmatprep.subr.mxu0 0.0
          %1420 = vmatpush2.msra.mxu0 0.0
          %1421 = vmatprep.subr.mxu0 0.0
          %1422 = vmatpush2.msra.mxu0 0.0
          %1423 = vmatprep.mubr.f32.mxu0 0.0
          %1424 = vmatmul.mubr.f32.gmra.mxu0 %v1348
          %v1425 = vpop.f32.mrf.mxu0
          %v1426 = vadd.f32 0.0, %v1425
          %v1427 = vpop.f32.mrf.mxu0
          %v1428 = vadd.f32 0.0, %v1427
          %1429 = vmatprep.mubr.f32.mxu0 0.0
          %1430 = vmatmul.mubr.f32.gmra.mxu0 %v1351
          %v1431 = vpop.f32.mrf.mxu0
          %v1432 = vadd.f32 0.0, %v1431
          %v1433 = vpop.f32.mrf.mxu0
          %v1434 = vadd.f32 0.0, %v1433
          %1435 = vmatprep.mubr.f32.mxu0 0.0
          %1436 = vmatmul.mubr.f32.gmra.mxu0 %v1354
          %v1437 = vpop.f32.mrf.mxu0
          %v1438 = vadd.f32 0.0, %v1437
          %v1439 = vpop.f32.mrf.mxu0
          %v1440 = vadd.f32 0.0, %v1439
          %1441 = vmatprep.mubr.f32.mxu0 0.0
          %1442 = vmatmul.mubr.f32.gmra.mxu0 %v1357
          %v1443 = vpop.f32.mrf.mxu0
          %v1444 = vadd.f32 0.0, %v1443
          %v1445 = vpop.f32.mrf.mxu0
          %v1446 = vadd.f32 0.0, %v1445
          %1447 = vdwg.mxu0
          %v1448 = vadd.f32 %v1303, %v1426
          %v1449 = vadd.f32 %v1304, %v1428
          %v1450 = vadd.f32 %v1305, %v1432
          %v1451 = vadd.f32 %v1306, %v1434
          %v1452 = vadd.f32 %v1307, %v1438
          %v1453 = vadd.f32 %v1308, %v1440
          %v1454 = vadd.f32 %v1309, %v1444
          %v1455 = vadd.f32 %v1310, %v1446
          %s1456 = scalar_lea.vmem %s1, 256
          %v1457 = vld [vmem:[%s1456] sm:$0xff]
          %v1458 = vld [vmem:[%s1456 + $0x8] sm:$0xff]
          %v1459 = vld [vmem:[%s1456 + $0x10] sm:$0xff]
          %v1460 = vld [vmem:[%s1456 + $0x18] sm:$0xff]
          %1461 = vrot.lane.b32.xlu0 %v334, 94
          %v1462 = vpop.permute.xlu0 %1461
          %1463 = vrot.lane.b32.xlu0 %v335, 94
          %v1464 = vpop.permute.xlu0 %1463
          %1465 = vrot.lane.b32.xlu0 %v336, 94
          %v1466 = vpop.permute.xlu0 %1465
          %1467 = vrot.lane.b32.xlu0 %v337, 94
          %v1468 = vpop.permute.xlu0 %1467
          %1469 = vrot.lane.b32.xlu0 %v338, 94
          %v1470 = vpop.permute.xlu0 %1469
          %1471 = vrot.lane.b32.xlu0 %v339, 94
          %v1472 = vpop.permute.xlu0 %1471
          %1473 = vrot.lane.b32.xlu0 %v340, 94
          %v1474 = vpop.permute.xlu0 %1473
          %1475 = vrot.lane.b32.xlu0 %v341, 94
          %v1476 = vpop.permute.xlu0 %1475
          %1477 = vrot.lane.b32.xlu0 %v342, 94
          %v1478 = vpop.permute.xlu0 %1477
          %vm1479 = vcmask 769024
          %v1480 = vsel %vm1479, %v1462, %v1464
          %v1481 = vsel %vm1479, %v1464, %v1466
          %v1482 = vsel %vm1479, %v1468, %v1470
          %v1483 = vsel %vm1479, %v1470, %v1472
          %v1484 = vsel %vm1479, %v1474, %v1476
          %v1485 = vsel %vm1479, %v1476, %v1478
          %v1493 = vsel %vm383, %v1457, 0
          %v1496 = vsel %vm383, %v1458, 0
          %v1499 = vsel %vm383, %v1459, 0
          %v1502 = vsel %vm383, %v1460, 0
          %1504 = vmatprep.subr.mxu0 0.0
          %1505 = vmatpush1.msra.mxu0 0.0
          %1506 = vmatprep.subr.mxu0 0.0
          %1507 = vmatpush1.msra.mxu0 0.0
          %1508 = vmatprep.subr.mxu0 0.0
          %1509 = vmatpush1.msra.mxu0 0.0
          %1510 = vmatprep.subr.mxu0 0.0
          %1511 = vmatpush1.msra.mxu0 0.0
          %1512 = vmatprep.subr.mxu0 0.0
          %1513 = vmatpush1.msra.mxu0 0.0
          %1514 = vmatprep.subr.mxu0 0.0
          %1515 = vmatpush1.msra.mxu0 0.0
          %1516 = vmatprep.subr.mxu0 0.0
          %1517 = vmatpush1.msra.mxu0 0.0
          %1518 = vmatprep.subr.mxu0 0.0
          %1519 = vmatpush1.msra.mxu0 0.0
          %1520 = vmatprep.subr.mxu0 0.0
          %1521 = vmatpush1.msra.mxu0 0.0
          %1522 = vmatprep.subr.mxu0 0.0
          %1523 = vmatpush1.msra.mxu0 0.0
          %1524 = vmatprep.subr.mxu0 0.0
          %1525 = vmatpush1.msra.mxu0 0.0
          %1526 = vmatprep.subr.mxu0 0.0
          %1527 = vmatpush1.msra.mxu0 0.0
          %1528 = vmatprep.subr.mxu0 0.0
          %1529 = vmatpush1.msra.mxu0 0.0
          %1530 = vmatprep.subr.mxu0 %v1485
          %1531 = vmatpush1.msra.mxu0 %v1484
          %1532 = vmatprep.subr.mxu0 %v1483
          %1533 = vmatpush1.msra.mxu0 %v1482
          %1534 = vmatprep.subr.mxu0 %v1481
          %1535 = vmatpush1.msra.mxu0 %v1480
          %1536 = vmatprep.subr.mxu0 0.0
          %1537 = vmatpush2.msra.mxu0 0.0
          %1538 = vmatprep.subr.mxu0 0.0
          %1539 = vmatpush2.msra.mxu0 0.0
          %1540 = vmatprep.subr.mxu0 0.0
          %1541 = vmatpush2.msra.mxu0 0.0
          %1542 = vmatprep.subr.mxu0 0.0
          %1543 = vmatpush2.msra.mxu0 0.0
          %1544 = vmatprep.subr.mxu0 0.0
          %1545 = vmatpush2.msra.mxu0 0.0
          %1546 = vmatprep.subr.mxu0 0.0
          %1547 = vmatpush2.msra.mxu0 0.0
          %1548 = vmatprep.subr.mxu0 0.0
          %1549 = vmatpush2.msra.mxu0 0.0
          %1550 = vmatprep.subr.mxu0 0.0
          %1551 = vmatpush2.msra.mxu0 0.0
          %1552 = vmatprep.subr.mxu0 0.0
          %1553 = vmatpush2.msra.mxu0 0.0
          %1554 = vmatprep.subr.mxu0 0.0
          %1555 = vmatpush2.msra.mxu0 0.0
          %1556 = vmatprep.subr.mxu0 0.0
          %1557 = vmatpush2.msra.mxu0 0.0
          %1558 = vmatprep.subr.mxu0 0.0
          %1559 = vmatpush2.msra.mxu0 0.0
          %1560 = vmatprep.subr.mxu0 0.0
          %1561 = vmatpush2.msra.mxu0 0.0
          %1562 = vmatprep.subr.mxu0 0.0
          %1563 = vmatpush2.msra.mxu0 0.0
          %1564 = vmatprep.subr.mxu0 0.0
          %1565 = vmatpush2.msra.mxu0 0.0
          %1566 = vmatprep.subr.mxu0 0.0
          %1567 = vmatpush2.msra.mxu0 0.0
          %1568 = vmatprep.mubr.f32.mxu0 0.0
          %1569 = vmatmul.mubr.f32.gmra.mxu0 %v1493
          %v1570 = vpop.f32.mrf.mxu0
          %v1571 = vadd.f32 0.0, %v1570
          %v1572 = vpop.f32.mrf.mxu0
          %v1573 = vadd.f32 0.0, %v1572
          %1574 = vmatprep.mubr.f32.mxu0 0.0
          %1575 = vmatmul.mubr.f32.gmra.mxu0 %v1496
          %v1576 = vpop.f32.mrf.mxu0
          %v1577 = vadd.f32 0.0, %v1576
          %v1578 = vpop.f32.mrf.mxu0
          %v1579 = vadd.f32 0.0, %v1578
          %1580 = vmatprep.mubr.f32.mxu0 0.0
          %1581 = vmatmul.mubr.f32.gmra.mxu0 %v1499
          %v1582 = vpop.f32.mrf.mxu0
          %v1583 = vadd.f32 0.0, %v1582
          %v1584 = vpop.f32.mrf.mxu0
          %v1585 = vadd.f32 0.0, %v1584
          %1586 = vmatprep.mubr.f32.mxu0 0.0
          %1587 = vmatmul.mubr.f32.gmra.mxu0 %v1502
          %v1588 = vpop.f32.mrf.mxu0
          %v1589 = vadd.f32 0.0, %v1588
          %v1590 = vpop.f32.mrf.mxu0
          %v1591 = vadd.f32 0.0, %v1590
          %1592 = vdwg.mxu0
          %v1593 = vadd.f32 %v1448, %v1571
          %v1594 = vadd.f32 %v1449, %v1573
          %v1595 = vadd.f32 %v1450, %v1577
          %v1596 = vadd.f32 %v1451, %v1579
          %v1597 = vadd.f32 %v1452, %v1583
          %v1598 = vadd.f32 %v1453, %v1585
          %v1599 = vadd.f32 %v1454, %v1589
          %v1600 = vadd.f32 %v1455, %v1591
          %v1601 = vld [vmem:[%s2] sm:$0xff]
          %v1602 = vld [vmem:[%s2 + $0x8] sm:$0xff]
          %v1603 = vld [vmem:[%s2 + $0x10] sm:$0xff]
          %v1604 = vld [vmem:[%s2 + $0x18] sm:$0xff]
          %1606 = vset.pattern.permute.xlu0 0
          %1607 = vperm.xlu0 %1606, %v1601
          %v1608 = vpop.permute.xlu0 %1607
          %1611 = vset.pattern.permute.xlu0 0
          %1612 = vperm.xlu0 %1611, %v1602
          %v1613 = vpop.permute.xlu0 %1612
          %1616 = vset.pattern.permute.xlu0 0
          %1617 = vperm.xlu0 %1616, %v1603
          %v1618 = vpop.permute.xlu0 %1617
          %1621 = vset.pattern.permute.xlu0 0
          %1622 = vperm.xlu0 %1621, %v1604
          %v1623 = vpop.permute.xlu0 %1622
          %v1625 = vadd.f32 %v1593, %v1608
          %v1626 = vadd.f32 %v1594, %v1608
          %v1627 = vadd.f32 %v1595, %v1613
          %v1628 = vadd.f32 %v1596, %v1613
          %v1629 = vadd.f32 %v1597, %v1618
          %v1630 = vadd.f32 %v1598, %v1618
          %v1631 = vadd.f32 %v1599, %v1623
          %v1632 = vadd.f32 %v1600, %v1623
          %v1633 = vmax.f32 %v1625, 0.0
          %v1634 = vmax.f32 %v1626, 0.0
          %v1635 = vmax.f32 %v1627, 0.0
          %v1636 = vmax.f32 %v1628, 0.0
          %v1637 = vmax.f32 %v1629, 0.0
          %v1638 = vmax.f32 %v1630, 0.0
          %v1639 = vmax.f32 %v1631, 0.0
          %v1640 = vmax.f32 %v1632, 0.0
          %1641 = vst [vmem:[#allocation2] sm:$0xff] %v1633
          %1642 = vst [vmem:[#allocation2 + $0x8] sm:$0xff] %v1634
          %1643 = vst [vmem:[#allocation2 + $0x18] sm:$0xff] %v1635
          %1644 = vst [vmem:[#allocation2 + $0x20] sm:$0xff] %v1636
          %1645 = vst [vmem:[#allocation2 + $0x30] sm:$0xff] %v1637
          %1646 = vst [vmem:[#allocation2 + $0x38] sm:$0xff] %v1638
          %1647 = vst [vmem:[#allocation2 + $0x48] sm:$0xff] %v1639
          %1648 = vst [vmem:[#allocation2 + $0x50] sm:$0xff] %v1640
          %1649 = vst [vmem:[#allocation2 + $0x10] sm:$0xff] 0.0
          %1650 = vst [vmem:[#allocation2 + $0x28] sm:$0xff] 0.0
          %1651 = vst [vmem:[#allocation2 + $0x40] sm:$0xff] 0.0
          %1652 = vst [vmem:[#allocation2 + $0x58] sm:$0xff] 0.0
          %v1653 = vld [vmem:[%s3] sm:$0xff]
          %v1654 = vld [vmem:[%s3 + $0x8] sm:$0xff]
          %v1655 = vld [vmem:[%s3 + $0x10] sm:$0xff]
          %v1656 = vld [vmem:[%s3 + $0x18] sm:$0xff]
          %v1657 = vld [vmem:[%s3 + $0x20] sm:$0xff]
          %v1658 = vld [vmem:[%s3 + $0x28] sm:$0xff]
          %v1659 = vld [vmem:[%s3 + $0x30] sm:$0xff]
          %v1660 = vld [vmem:[%s3 + $0x38] sm:$0xff]
          %v1661 = vld [vmem:[%s3 + $0x40] sm:$0xff]
          %v1662 = vld [vmem:[%s3 + $0x48] sm:$0xff]
          %v1663 = vld [vmem:[%s3 + $0x50] sm:$0xff]
          %v1664 = vld [vmem:[%s3 + $0x58] sm:$0xff]
          %v1665 = vld [vmem:[#allocation2] sm:$0xff]
          %v1666 = vld [vmem:[#allocation2 + $0x8] sm:$0xff]
          %v1667 = vld [vmem:[#allocation2 + $0x18] sm:$0xff]
          %v1668 = vld [vmem:[#allocation2 + $0x20] sm:$0xff]
          %v1669 = vld [vmem:[#allocation2 + $0x30] sm:$0xff]
          %v1670 = vld [vmem:[#allocation2 + $0x38] sm:$0xff]
          %v1671 = vld [vmem:[#allocation2 + $0x48] sm:$0xff]
          %v1672 = vld [vmem:[#allocation2 + $0x50] sm:$0xff]
          %s1673 = scalar_lea.vmem %s3, 96
          %v1674 = vld [vmem:[%s1673] sm:$0xff]
          %v1675 = vld [vmem:[%s1673 + $0x8] sm:$0xff]
          %v1676 = vld [vmem:[%s1673 + $0x10] sm:$0xff]
          %v1677 = vld [vmem:[%s1673 + $0x18] sm:$0xff]
          %v1678 = vld [vmem:[%s1673 + $0x20] sm:$0xff]
          %v1679 = vld [vmem:[%s1673 + $0x28] sm:$0xff]
          %v1680 = vld [vmem:[%s1673 + $0x30] sm:$0xff]
          %v1681 = vld [vmem:[%s1673 + $0x38] sm:$0xff]
          %v1682 = vld [vmem:[%s1673 + $0x40] sm:$0xff]
          %v1683 = vld [vmem:[%s1673 + $0x48] sm:$0xff]
          %v1684 = vld [vmem:[%s1673 + $0x50] sm:$0xff]
          %v1685 = vld [vmem:[%s1673 + $0x58] sm:$0xff]
          %v1686 = vld [vmem:[#allocation2] sm:$0xff]
          %v1687 = vld [vmem:[#allocation2 + $0x8] sm:$0xff]
          %v1688 = vld [vmem:[#allocation2 + $0x10] sm:$0xff]
          %v1689 = vld [vmem:[#allocation2 + $0x18] sm:$0xff]
          %v1690 = vld [vmem:[#allocation2 + $0x20] sm:$0xff]
          %v1691 = vld [vmem:[#allocation2 + $0x28] sm:$0xff]
          %v1692 = vld [vmem:[#allocation2 + $0x30] sm:$0xff]
          %v1693 = vld [vmem:[#allocation2 + $0x38] sm:$0xff]
          %v1694 = vld [vmem:[#allocation2 + $0x40] sm:$0xff]
          %v1695 = vld [vmem:[#allocation2 + $0x48] sm:$0xff]
          %v1696 = vld [vmem:[#allocation2 + $0x50] sm:$0xff]
          %v1697 = vld [vmem:[#allocation2 + $0x58] sm:$0xff]
          %1710 = vrot.lane.b32.xlu0 %v1686, 127
          %v1711 = vpop.permute.xlu0 %1710
          %1712 = vrot.lane.b32.xlu0 %v1687, 127
          %v1713 = vpop.permute.xlu0 %1712
          %1714 = vrot.lane.b32.xlu0 %v1688, 127
          %v1715 = vpop.permute.xlu0 %1714
          %1716 = vrot.lane.b32.xlu0 %v1689, 127
          %v1717 = vpop.permute.xlu0 %1716
          %1718 = vrot.lane.b32.xlu0 %v1690, 127
          %v1719 = vpop.permute.xlu0 %1718
          %1720 = vrot.lane.b32.xlu0 %v1691, 127
          %v1721 = vpop.permute.xlu0 %1720
          %1722 = vrot.lane.b32.xlu0 %v1692, 127
          %v1723 = vpop.permute.xlu0 %1722
          %1724 = vrot.lane.b32.xlu0 %v1693, 127
          %v1725 = vpop.permute.xlu0 %1724
          %1726 = vrot.lane.b32.xlu0 %v1694, 127
          %v1727 = vpop.permute.xlu0 %1726
          %1728 = vrot.lane.b32.xlu0 %v1695, 127
          %v1729 = vpop.permute.xlu0 %1728
          %1730 = vrot.lane.b32.xlu0 %v1696, 127
          %v1731 = vpop.permute.xlu0 %1730
          %1732 = vrot.lane.b32.xlu0 %v1697, 127
          %v1733 = vpop.permute.xlu0 %1732
          %v1734 = vsel %vm370, %v1711, %v1713
          %v1735 = vsel %vm370, %v1713, %v1715
          %v1736 = vsel %vm370, %v1717, %v1719
          %v1737 = vsel %vm370, %v1719, %v1721
          %v1738 = vsel %vm370, %v1723, %v1725
          %v1739 = vsel %vm370, %v1725, %v1727
          %v1740 = vsel %vm370, %v1729, %v1731
          %v1741 = vsel %vm370, %v1731, %v1733
          %vm1750 = vcmask 261120
          %v1752 = vsel %vm1750, %v1674, 0
          %v1755 = vsel %vm1750, %v1675, 0
          %v1758 = vsel %vm1750, %v1676, 0
          %v1761 = vsel %vm1750, %v1677, 0
          %v1764 = vsel %vm1750, %v1678, 0
          %v1767 = vsel %vm1750, %v1679, 0
          %v1770 = vsel %vm1750, %v1680, 0
          %v1773 = vsel %vm1750, %v1681, 0
          %v1776 = vsel %vm1750, %v1682, 0
          %v1779 = vsel %vm1750, %v1683, 0
          %v1782 = vsel %vm1750, %v1684, 0
          %v1785 = vsel %vm1750, %v1685, 0
          %1787 = vmatprep.subr.mxu0 0.0
          %1788 = vmatpush1.msra.mxu0 0.0
          %1789 = vmatprep.subr.mxu0 0.0
          %1790 = vmatpush1.msra.mxu0 0.0
          %1791 = vmatprep.subr.mxu0 0.0
          %1792 = vmatpush1.msra.mxu0 0.0
          %1793 = vmatprep.subr.mxu0 0.0
          %1794 = vmatpush1.msra.mxu0 0.0
          %1795 = vmatprep.subr.mxu0 0.0
          %1796 = vmatpush1.msra.mxu0 0.0
          %1797 = vmatprep.subr.mxu0 0.0
          %1798 = vmatpush1.msra.mxu0 0.0
          %1799 = vmatprep.subr.mxu0 0.0
          %1800 = vmatpush1.msra.mxu0 0.0
          %1801 = vmatprep.subr.mxu0 0.0
          %1802 = vmatpush1.msra.mxu0 0.0
          %1803 = vmatprep.subr.mxu0 0.0
          %1804 = vmatpush1.msra.mxu0 0.0
          %1805 = vmatprep.subr.mxu0 0.0
          %1806 = vmatpush1.msra.mxu0 0.0
          %1807 = vmatprep.subr.mxu0 0.0
          %1808 = vmatpush1.msra.mxu0 0.0
          %1809 = vmatprep.subr.mxu0 0.0
          %1810 = vmatpush1.msra.mxu0 0.0
          %1811 = vmatprep.subr.mxu0 %v1741
          %1812 = vmatpush1.msra.mxu0 %v1740
          %1813 = vmatprep.subr.mxu0 %v1739
          %1814 = vmatpush1.msra.mxu0 %v1738
          %1815 = vmatprep.subr.mxu0 %v1737
          %1816 = vmatpush1.msra.mxu0 %v1736
          %1817 = vmatprep.subr.mxu0 %v1735
          %1818 = vmatpush1.msra.mxu0 %v1734
          %1819 = vmatprep.subr.mxu0 0.0
          %1820 = vmatpush2.msra.mxu0 0.0
          %1821 = vmatprep.subr.mxu0 0.0
          %1822 = vmatpush2.msra.mxu0 0.0
          %1823 = vmatprep.subr.mxu0 0.0
          %1824 = vmatpush2.msra.mxu0 0.0
          %1825 = vmatprep.subr.mxu0 0.0
          %1826 = vmatpush2.msra.mxu0 0.0
          %1827 = vmatprep.subr.mxu0 0.0
          %1828 = vmatpush2.msra.mxu0 0.0
          %1829 = vmatprep.subr.mxu0 0.0
          %1830 = vmatpush2.msra.mxu0 0.0
          %1831 = vmatprep.subr.mxu0 0.0
          %1832 = vmatpush2.msra.mxu0 0.0
          %1833 = vmatprep.subr.mxu0 0.0
          %1834 = vmatpush2.msra.mxu0 0.0
          %1835 = vmatprep.subr.mxu0 0.0
          %1836 = vmatpush2.msra.mxu0 0.0
          %1837 = vmatprep.subr.mxu0 0.0
          %1838 = vmatpush2.msra.mxu0 0.0
          %1839 = vmatprep.subr.mxu0 0.0
          %1840 = vmatpush2.msra.mxu0 0.0
          %1841 = vmatprep.subr.mxu0 0.0
          %1842 = vmatpush2.msra.mxu0 0.0
          %1843 = vmatprep.subr.mxu0 0.0
          %1844 = vmatpush2.msra.mxu0 0.0
          %1845 = vmatprep.subr.mxu0 0.0
          %1846 = vmatpush2.msra.mxu0 0.0
          %1847 = vmatprep.subr.mxu0 0.0
          %1848 = vmatpush2.msra.mxu0 0.0
          %1849 = vmatprep.subr.mxu0 0.0
          %1850 = vmatpush2.msra.mxu0 0.0
          %1851 = vmatprep.mubr.f32.mxu0 0.0
          %1852 = vmatmul.mubr.f32.gmra.mxu0 %v1752
          %v1853 = vpop.f32.mrf.mxu0
          %v1854 = vadd.f32 0.0, %v1853
          %v1855 = vpop.f32.mrf.mxu0
          %v1856 = vadd.f32 0.0, %v1855
          %1857 = vmatprep.mubr.f32.mxu0 0.0
          %1858 = vmatmul.mubr.f32.gmra.mxu0 %v1755
          %v1859 = vpop.f32.mrf.mxu0
          %v1860 = vadd.f32 0.0, %v1859
          %v1861 = vpop.f32.mrf.mxu0
          %v1862 = vadd.f32 0.0, %v1861
          %1863 = vmatprep.mubr.f32.mxu0 0.0
          %1864 = vmatmul.mubr.f32.gmra.mxu0 %v1758
          %v1865 = vpop.f32.mrf.mxu0
          %v1866 = vadd.f32 0.0, %v1865
          %v1867 = vpop.f32.mrf.mxu0
          %v1868 = vadd.f32 0.0, %v1867
          %1869 = vmatprep.mubr.f32.mxu0 0.0
          %1870 = vmatmul.mubr.f32.gmra.mxu0 %v1761
          %v1871 = vpop.f32.mrf.mxu0
          %v1872 = vadd.f32 0.0, %v1871
          %v1873 = vpop.f32.mrf.mxu0
          %v1874 = vadd.f32 0.0, %v1873
          %1875 = vmatprep.mubr.f32.mxu0 0.0
          %1876 = vmatmul.mubr.f32.gmra.mxu0 %v1764
          %v1877 = vpop.f32.mrf.mxu0
          %v1878 = vadd.f32 0.0, %v1877
          %v1879 = vpop.f32.mrf.mxu0
          %v1880 = vadd.f32 0.0, %v1879
          %1881 = vmatprep.mubr.f32.mxu0 0.0
          %1882 = vmatmul.mubr.f32.gmra.mxu0 %v1767
          %v1883 = vpop.f32.mrf.mxu0
          %v1884 = vadd.f32 0.0, %v1883
          %v1885 = vpop.f32.mrf.mxu0
          %v1886 = vadd.f32 0.0, %v1885
          %1887 = vmatprep.mubr.f32.mxu0 0.0
          %1888 = vmatmul.mubr.f32.gmra.mxu0 %v1770
          %v1889 = vpop.f32.mrf.mxu0
          %v1890 = vadd.f32 0.0, %v1889
          %v1891 = vpop.f32.mrf.mxu0
          %v1892 = vadd.f32 0.0, %v1891
          %1893 = vmatprep.mubr.f32.mxu0 0.0
          %1894 = vmatmul.mubr.f32.gmra.mxu0 %v1773
          %v1895 = vpop.f32.mrf.mxu0
          %v1896 = vadd.f32 0.0, %v1895
          %v1897 = vpop.f32.mrf.mxu0
          %v1898 = vadd.f32 0.0, %v1897
          %1899 = vmatprep.mubr.f32.mxu0 0.0
          %1900 = vmatmul.mubr.f32.gmra.mxu0 %v1776
          %v1901 = vpop.f32.mrf.mxu0
          %v1902 = vadd.f32 0.0, %v1901
          %v1903 = vpop.f32.mrf.mxu0
          %v1904 = vadd.f32 0.0, %v1903
          %1905 = vmatprep.mubr.f32.mxu0 0.0
          %1906 = vmatmul.mubr.f32.gmra.mxu0 %v1779
          %v1907 = vpop.f32.mrf.mxu0
          %v1908 = vadd.f32 0.0, %v1907
          %v1909 = vpop.f32.mrf.mxu0
          %v1910 = vadd.f32 0.0, %v1909
          %1911 = vmatprep.mubr.f32.mxu0 0.0
          %1912 = vmatmul.mubr.f32.gmra.mxu0 %v1782
          %v1913 = vpop.f32.mrf.mxu0
          %v1914 = vadd.f32 0.0, %v1913
          %v1915 = vpop.f32.mrf.mxu0
          %v1916 = vadd.f32 0.0, %v1915
          %1917 = vmatprep.mubr.f32.mxu0 0.0
          %1918 = vmatmul.mubr.f32.gmra.mxu0 %v1785
          %v1919 = vpop.f32.mrf.mxu0
          %v1920 = vadd.f32 0.0, %v1919
          %v1921 = vpop.f32.mrf.mxu0
          %v1922 = vadd.f32 0.0, %v1921
          %1923 = vdwg.mxu0
          %v1925 = vsel %vm1750, %v1653, 0
          %v1928 = vsel %vm1750, %v1654, 0
          %v1931 = vsel %vm1750, %v1655, 0
          %v1934 = vsel %vm1750, %v1656, 0
          %v1937 = vsel %vm1750, %v1657, 0
          %v1940 = vsel %vm1750, %v1658, 0
          %v1943 = vsel %vm1750, %v1659, 0
          %v1946 = vsel %vm1750, %v1660, 0
          %v1949 = vsel %vm1750, %v1661, 0
          %v1952 = vsel %vm1750, %v1662, 0
          %v1955 = vsel %vm1750, %v1663, 0
          %v1958 = vsel %vm1750, %v1664, 0
          %1960 = vmatprep.subr.mxu0 0.0
          %1961 = vmatpush1.msra.mxu0 0.0
          %1962 = vmatprep.subr.mxu0 0.0
          %1963 = vmatpush1.msra.mxu0 0.0
          %1964 = vmatprep.subr.mxu0 0.0
          %1965 = vmatpush1.msra.mxu0 0.0
          %1966 = vmatprep.subr.mxu0 0.0
          %1967 = vmatpush1.msra.mxu0 0.0
          %1968 = vmatprep.subr.mxu0 0.0
          %1969 = vmatpush1.msra.mxu0 0.0
          %1970 = vmatprep.subr.mxu0 0.0
          %1971 = vmatpush1.msra.mxu0 0.0
          %1972 = vmatprep.subr.mxu0 0.0
          %1973 = vmatpush1.msra.mxu0 0.0
          %1974 = vmatprep.subr.mxu0 0.0
          %1975 = vmatpush1.msra.mxu0 0.0
          %1976 = vmatprep.subr.mxu0 0.0
          %1977 = vmatpush1.msra.mxu0 0.0
          %1978 = vmatprep.subr.mxu0 0.0
          %1979 = vmatpush1.msra.mxu0 0.0
          %1980 = vmatprep.subr.mxu0 0.0
          %1981 = vmatpush1.msra.mxu0 0.0
          %1982 = vmatprep.subr.mxu0 0.0
          %1983 = vmatpush1.msra.mxu0 0.0
          %1984 = vmatprep.subr.mxu0 %v1672
          %1985 = vmatpush1.msra.mxu0 %v1671
          %1986 = vmatprep.subr.mxu0 %v1670
          %1987 = vmatpush1.msra.mxu0 %v1669
          %1988 = vmatprep.subr.mxu0 %v1668
          %1989 = vmatpush1.msra.mxu0 %v1667
          %1990 = vmatprep.subr.mxu0 %v1666
          %1991 = vmatpush1.msra.mxu0 %v1665
          %1992 = vmatprep.subr.mxu0 0.0
          %1993 = vmatpush2.msra.mxu0 0.0
          %1994 = vmatprep.subr.mxu0 0.0
          %1995 = vmatpush2.msra.mxu0 0.0
          %1996 = vmatprep.subr.mxu0 0.0
          %1997 = vmatpush2.msra.mxu0 0.0
          %1998 = vmatprep.subr.mxu0 0.0
          %1999 = vmatpush2.msra.mxu0 0.0
          %2000 = vmatprep.subr.mxu0 0.0
          %2001 = vmatpush2.msra.mxu0 0.0
          %2002 = vmatprep.subr.mxu0 0.0
          %2003 = vmatpush2.msra.mxu0 0.0
          %2004 = vmatprep.subr.mxu0 0.0
          %2005 = vmatpush2.msra.mxu0 0.0
          %2006 = vmatprep.subr.mxu0 0.0
          %2007 = vmatpush2.msra.mxu0 0.0
          %2008 = vmatprep.subr.mxu0 0.0
          %2009 = vmatpush2.msra.mxu0 0.0
          %2010 = vmatprep.subr.mxu0 0.0
          %2011 = vmatpush2.msra.mxu0 0.0
          %2012 = vmatprep.subr.mxu0 0.0
          %2013 = vmatpush2.msra.mxu0 0.0
          %2014 = vmatprep.subr.mxu0 0.0
          %2015 = vmatpush2.msra.mxu0 0.0
          %2016 = vmatprep.subr.mxu0 0.0
          %2017 = vmatpush2.msra.mxu0 0.0
          %2018 = vmatprep.subr.mxu0 0.0
          %2019 = vmatpush2.msra.mxu0 0.0
          %2020 = vmatprep.subr.mxu0 0.0
          %2021 = vmatpush2.msra.mxu0 0.0
          %2022 = vmatprep.subr.mxu0 0.0
          %2023 = vmatpush2.msra.mxu0 0.0
          %2024 = vmatprep.mubr.f32.mxu0 0.0
          %2025 = vmatmul.mubr.f32.gmra.mxu0 %v1925
          %v2026 = vpop.f32.mrf.mxu0
          %v2027 = vadd.f32 %v1854, %v2026
          %v2028 = vpop.f32.mrf.mxu0
          %v2029 = vadd.f32 %v1856, %v2028
          %2030 = vmatprep.mubr.f32.mxu0 0.0
          %2031 = vmatmul.mubr.f32.gmra.mxu0 %v1928
          %v2032 = vpop.f32.mrf.mxu0
          %v2033 = vadd.f32 %v1860, %v2032
          %v2034 = vpop.f32.mrf.mxu0
          %v2035 = vadd.f32 %v1862, %v2034
          %2036 = vmatprep.mubr.f32.mxu0 0.0
          %2037 = vmatmul.mubr.f32.gmra.mxu0 %v1931
          %v2038 = vpop.f32.mrf.mxu0
          %v2039 = vadd.f32 %v1866, %v2038
          %v2040 = vpop.f32.mrf.mxu0
          %v2041 = vadd.f32 %v1868, %v2040
          %2042 = vmatprep.mubr.f32.mxu0 0.0
          %2043 = vmatmul.mubr.f32.gmra.mxu0 %v1934
          %v2044 = vpop.f32.mrf.mxu0
          %v2045 = vadd.f32 %v1872, %v2044
          %v2046 = vpop.f32.mrf.mxu0
          %v2047 = vadd.f32 %v1874, %v2046
          %2048 = vmatprep.mubr.f32.mxu0 0.0
          %2049 = vmatmul.mubr.f32.gmra.mxu0 %v1937
          %v2050 = vpop.f32.mrf.mxu0
          %v2051 = vadd.f32 %v1878, %v2050
          %v2052 = vpop.f32.mrf.mxu0
          %v2053 = vadd.f32 %v1880, %v2052
          %2054 = vmatprep.mubr.f32.mxu0 0.0
          %2055 = vmatmul.mubr.f32.gmra.mxu0 %v1940
          %v2056 = vpop.f32.mrf.mxu0
          %v2057 = vadd.f32 %v1884, %v2056
          %v2058 = vpop.f32.mrf.mxu0
          %v2059 = vadd.f32 %v1886, %v2058
          %2060 = vmatprep.mubr.f32.mxu0 0.0
          %2061 = vmatmul.mubr.f32.gmra.mxu0 %v1943
          %v2062 = vpop.f32.mrf.mxu0
          %v2063 = vadd.f32 %v1890, %v2062
          %v2064 = vpop.f32.mrf.mxu0
          %v2065 = vadd.f32 %v1892, %v2064
          %2066 = vmatprep.mubr.f32.mxu0 0.0
          %2067 = vmatmul.mubr.f32.gmra.mxu0 %v1946
          %v2068 = vpop.f32.mrf.mxu0
          %v2069 = vadd.f32 %v1896, %v2068
          %v2070 = vpop.f32.mrf.mxu0
          %v2071 = vadd.f32 %v1898, %v2070
          %2072 = vmatprep.mubr.f32.mxu0 0.0
          %2073 = vmatmul.mubr.f32.gmra.mxu0 %v1949
          %v2074 = vpop.f32.mrf.mxu0
          %v2075 = vadd.f32 %v1902, %v2074
          %v2076 = vpop.f32.mrf.mxu0
          %v2077 = vadd.f32 %v1904, %v2076
          %2078 = vmatprep.mubr.f32.mxu0 0.0
          %2079 = vmatmul.mubr.f32.gmra.mxu0 %v1952
          %v2080 = vpop.f32.mrf.mxu0
          %v2081 = vadd.f32 %v1908, %v2080
          %v2082 = vpop.f32.mrf.mxu0
          %v2083 = vadd.f32 %v1910, %v2082
          %2084 = vmatprep.mubr.f32.mxu0 0.0
          %2085 = vmatmul.mubr.f32.gmra.mxu0 %v1955
          %v2086 = vpop.f32.mrf.mxu0
          %v2087 = vadd.f32 %v1914, %v2086
          %v2088 = vpop.f32.mrf.mxu0
          %v2089 = vadd.f32 %v1916, %v2088
          %2090 = vmatprep.mubr.f32.mxu0 0.0
          %2091 = vmatmul.mubr.f32.gmra.mxu0 %v1958
          %v2092 = vpop.f32.mrf.mxu0
          %v2093 = vadd.f32 %v1920, %v2092
          %v2094 = vpop.f32.mrf.mxu0
          %v2095 = vadd.f32 %v1922, %v2094
          %2096 = vdwg.mxu0
          %s2097 = scalar_lea.vmem %s3, 192
          %v2098 = vld [vmem:[%s2097] sm:$0xff]
          %v2099 = vld [vmem:[%s2097 + $0x8] sm:$0xff]
          %v2100 = vld [vmem:[%s2097 + $0x10] sm:$0xff]
          %v2101 = vld [vmem:[%s2097 + $0x18] sm:$0xff]
          %v2102 = vld [vmem:[%s2097 + $0x20] sm:$0xff]
          %v2103 = vld [vmem:[%s2097 + $0x28] sm:$0xff]
          %v2104 = vld [vmem:[%s2097 + $0x30] sm:$0xff]
          %v2105 = vld [vmem:[%s2097 + $0x38] sm:$0xff]
          %v2106 = vld [vmem:[%s2097 + $0x40] sm:$0xff]
          %v2107 = vld [vmem:[%s2097 + $0x48] sm:$0xff]
          %v2108 = vld [vmem:[%s2097 + $0x50] sm:$0xff]
          %v2109 = vld [vmem:[%s2097 + $0x58] sm:$0xff]
          %2110 = vrot.lane.b32.xlu0 %v1686, 126
          %v2111 = vpop.permute.xlu0 %2110
          %2112 = vrot.lane.b32.xlu0 %v1687, 126
          %v2113 = vpop.permute.xlu0 %2112
          %2114 = vrot.lane.b32.xlu0 %v1688, 126
          %v2115 = vpop.permute.xlu0 %2114
          %2116 = vrot.lane.b32.xlu0 %v1689, 126
          %v2117 = vpop.permute.xlu0 %2116
          %2118 = vrot.lane.b32.xlu0 %v1690, 126
          %v2119 = vpop.permute.xlu0 %2118
          %2120 = vrot.lane.b32.xlu0 %v1691, 126
          %v2121 = vpop.permute.xlu0 %2120
          %2122 = vrot.lane.b32.xlu0 %v1692, 126
          %v2123 = vpop.permute.xlu0 %2122
          %2124 = vrot.lane.b32.xlu0 %v1693, 126
          %v2125 = vpop.permute.xlu0 %2124
          %2126 = vrot.lane.b32.xlu0 %v1694, 126
          %v2127 = vpop.permute.xlu0 %2126
          %2128 = vrot.lane.b32.xlu0 %v1695, 126
          %v2129 = vpop.permute.xlu0 %2128
          %2130 = vrot.lane.b32.xlu0 %v1696, 126
          %v2131 = vpop.permute.xlu0 %2130
          %2132 = vrot.lane.b32.xlu0 %v1697, 126
          %v2133 = vpop.permute.xlu0 %2132
          %v2134 = vsel %vm609, %v2111, %v2113
          %v2135 = vsel %vm609, %v2113, %v2115
          %v2136 = vsel %vm609, %v2117, %v2119
          %v2137 = vsel %vm609, %v2119, %v2121
          %v2138 = vsel %vm609, %v2123, %v2125
          %v2139 = vsel %vm609, %v2125, %v2127
          %v2140 = vsel %vm609, %v2129, %v2131
          %v2141 = vsel %vm609, %v2131, %v2133
          %v2151 = vsel %vm1750, %v2098, 0
          %v2154 = vsel %vm1750, %v2099, 0
          %v2157 = vsel %vm1750, %v2100, 0
          %v2160 = vsel %vm1750, %v2101, 0
          %v2163 = vsel %vm1750, %v2102, 0
          %v2166 = vsel %vm1750, %v2103, 0
          %v2169 = vsel %vm1750, %v2104, 0
          %v2172 = vsel %vm1750, %v2105, 0
          %v2175 = vsel %vm1750, %v2106, 0
          %v2178 = vsel %vm1750, %v2107, 0
          %v2181 = vsel %vm1750, %v2108, 0
          %v2184 = vsel %vm1750, %v2109, 0
          %2186 = vmatprep.subr.mxu0 0.0
          %2187 = vmatpush1.msra.mxu0 0.0
          %2188 = vmatprep.subr.mxu0 0.0
          %2189 = vmatpush1.msra.mxu0 0.0
          %2190 = vmatprep.subr.mxu0 0.0
          %2191 = vmatpush1.msra.mxu0 0.0
          %2192 = vmatprep.subr.mxu0 0.0
          %2193 = vmatpush1.msra.mxu0 0.0
          %2194 = vmatprep.subr.mxu0 0.0
          %2195 = vmatpush1.msra.mxu0 0.0
          %2196 = vmatprep.subr.mxu0 0.0
          %2197 = vmatpush1.msra.mxu0 0.0
          %2198 = vmatprep.subr.mxu0 0.0
          %2199 = vmatpush1.msra.mxu0 0.0
          %2200 = vmatprep.subr.mxu0 0.0
          %2201 = vmatpush1.msra.mxu0 0.0
          %2202 = vmatprep.subr.mxu0 0.0
          %2203 = vmatpush1.msra.mxu0 0.0
          %2204 = vmatprep.subr.mxu0 0.0
          %2205 = vmatpush1.msra.mxu0 0.0
          %2206 = vmatprep.subr.mxu0 0.0
          %2207 = vmatpush1.msra.mxu0 0.0
          %2208 = vmatprep.subr.mxu0 0.0
          %2209 = vmatpush1.msra.mxu0 0.0
          %2210 = vmatprep.subr.mxu0 %v2141
          %2211 = vmatpush1.msra.mxu0 %v2140
          %2212 = vmatprep.subr.mxu0 %v2139
          %2213 = vmatpush1.msra.mxu0 %v2138
          %2214 = vmatprep.subr.mxu0 %v2137
          %2215 = vmatpush1.msra.mxu0 %v2136
          %2216 = vmatprep.subr.mxu0 %v2135
          %2217 = vmatpush1.msra.mxu0 %v2134
          %2218 = vmatprep.subr.mxu0 0.0
          %2219 = vmatpush2.msra.mxu0 0.0
          %2220 = vmatprep.subr.mxu0 0.0
          %2221 = vmatpush2.msra.mxu0 0.0
          %2222 = vmatprep.subr.mxu0 0.0
          %2223 = vmatpush2.msra.mxu0 0.0
          %2224 = vmatprep.subr.mxu0 0.0
          %2225 = vmatpush2.msra.mxu0 0.0
          %2226 = vmatprep.subr.mxu0 0.0
          %2227 = vmatpush2.msra.mxu0 0.0
          %2228 = vmatprep.subr.mxu0 0.0
          %2229 = vmatpush2.msra.mxu0 0.0
          %2230 = vmatprep.subr.mxu0 0.0
          %2231 = vmatpush2.msra.mxu0 0.0
          %2232 = vmatprep.subr.mxu0 0.0
          %2233 = vmatpush2.msra.mxu0 0.0
          %2234 = vmatprep.subr.mxu0 0.0
          %2235 = vmatpush2.msra.mxu0 0.0
          %2236 = vmatprep.subr.mxu0 0.0
          %2237 = vmatpush2.msra.mxu0 0.0
          %2238 = vmatprep.subr.mxu0 0.0
          %2239 = vmatpush2.msra.mxu0 0.0
          %2240 = vmatprep.subr.mxu0 0.0
          %2241 = vmatpush2.msra.mxu0 0.0
          %2242 = vmatprep.subr.mxu0 0.0
          %2243 = vmatpush2.msra.mxu0 0.0
          %2244 = vmatprep.subr.mxu0 0.0
          %2245 = vmatpush2.msra.mxu0 0.0
          %2246 = vmatprep.subr.mxu0 0.0
          %2247 = vmatpush2.msra.mxu0 0.0
          %2248 = vmatprep.subr.mxu0 0.0
          %2249 = vmatpush2.msra.mxu0 0.0
          %2250 = vmatprep.mubr.f32.mxu0 0.0
          %2251 = vmatmul.mubr.f32.gmra.mxu0 %v2151
          %v2252 = vpop.f32.mrf.mxu0
          %v2253 = vadd.f32 0.0, %v2252
          %v2254 = vpop.f32.mrf.mxu0
          %v2255 = vadd.f32 0.0, %v2254
          %2256 = vmatprep.mubr.f32.mxu0 0.0
          %2257 = vmatmul.mubr.f32.gmra.mxu0 %v2154
          %v2258 = vpop.f32.mrf.mxu0
          %v2259 = vadd.f32 0.0, %v2258
          %v2260 = vpop.f32.mrf.mxu0
          %v2261 = vadd.f32 0.0, %v2260
          %2262 = vmatprep.mubr.f32.mxu0 0.0
          %2263 = vmatmul.mubr.f32.gmra.mxu0 %v2157
          %v2264 = vpop.f32.mrf.mxu0
          %v2265 = vadd.f32 0.0, %v2264
          %v2266 = vpop.f32.mrf.mxu0
          %v2267 = vadd.f32 0.0, %v2266
          %2268 = vmatprep.mubr.f32.mxu0 0.0
          %2269 = vmatmul.mubr.f32.gmra.mxu0 %v2160
          %v2270 = vpop.f32.mrf.mxu0
          %v2271 = vadd.f32 0.0, %v2270
          %v2272 = vpop.f32.mrf.mxu0
          %v2273 = vadd.f32 0.0, %v2272
          %2274 = vmatprep.mubr.f32.mxu0 0.0
          %2275 = vmatmul.mubr.f32.gmra.mxu0 %v2163
          %v2276 = vpop.f32.mrf.mxu0
          %v2277 = vadd.f32 0.0, %v2276
          %v2278 = vpop.f32.mrf.mxu0
          %v2279 = vadd.f32 0.0, %v2278
          %2280 = vmatprep.mubr.f32.mxu0 0.0
          %2281 = vmatmul.mubr.f32.gmra.mxu0 %v2166
          %v2282 = vpop.f32.mrf.mxu0
          %v2283 = vadd.f32 0.0, %v2282
          %v2284 = vpop.f32.mrf.mxu0
          %v2285 = vadd.f32 0.0, %v2284
          %2286 = vmatprep.mubr.f32.mxu0 0.0
          %2287 = vmatmul.mubr.f32.gmra.mxu0 %v2169
          %v2288 = vpop.f32.mrf.mxu0
          %v2289 = vadd.f32 0.0, %v2288
          %v2290 = vpop.f32.mrf.mxu0
          %v2291 = vadd.f32 0.0, %v2290
          %2292 = vmatprep.mubr.f32.mxu0 0.0
          %2293 = vmatmul.mubr.f32.gmra.mxu0 %v2172
          %v2294 = vpop.f32.mrf.mxu0
          %v2295 = vadd.f32 0.0, %v2294
          %v2296 = vpop.f32.mrf.mxu0
          %v2297 = vadd.f32 0.0, %v2296
          %2298 = vmatprep.mubr.f32.mxu0 0.0
          %2299 = vmatmul.mubr.f32.gmra.mxu0 %v2175
          %v2300 = vpop.f32.mrf.mxu0
          %v2301 = vadd.f32 0.0, %v2300
          %v2302 = vpop.f32.mrf.mxu0
          %v2303 = vadd.f32 0.0, %v2302
          %2304 = vmatprep.mubr.f32.mxu0 0.0
          %2305 = vmatmul.mubr.f32.gmra.mxu0 %v2178
          %v2306 = vpop.f32.mrf.mxu0
          %v2307 = vadd.f32 0.0, %v2306
          %v2308 = vpop.f32.mrf.mxu0
          %v2309 = vadd.f32 0.0, %v2308
          %2310 = vmatprep.mubr.f32.mxu0 0.0
          %2311 = vmatmul.mubr.f32.gmra.mxu0 %v2181
          %v2312 = vpop.f32.mrf.mxu0
          %v2313 = vadd.f32 0.0, %v2312
          %v2314 = vpop.f32.mrf.mxu0
          %v2315 = vadd.f32 0.0, %v2314
          %2316 = vmatprep.mubr.f32.mxu0 0.0
          %2317 = vmatmul.mubr.f32.gmra.mxu0 %v2184
          %v2318 = vpop.f32.mrf.mxu0
          %v2319 = vadd.f32 0.0, %v2318
          %v2320 = vpop.f32.mrf.mxu0
          %v2321 = vadd.f32 0.0, %v2320
          %2322 = vdwg.mxu0
          %v2323 = vadd.f32 %v2027, %v2253
          %v2324 = vadd.f32 %v2029, %v2255
          %v2325 = vadd.f32 %v2033, %v2259
          %v2326 = vadd.f32 %v2035, %v2261
          %v2327 = vadd.f32 %v2039, %v2265
          %v2328 = vadd.f32 %v2041, %v2267
          %v2329 = vadd.f32 %v2045, %v2271
          %v2330 = vadd.f32 %v2047, %v2273
          %v2331 = vadd.f32 %v2051, %v2277
          %v2332 = vadd.f32 %v2053, %v2279
          %v2333 = vadd.f32 %v2057, %v2283
          %v2334 = vadd.f32 %v2059, %v2285
          %v2335 = vadd.f32 %v2063, %v2289
          %v2336 = vadd.f32 %v2065, %v2291
          %v2337 = vadd.f32 %v2069, %v2295
          %v2338 = vadd.f32 %v2071, %v2297
          %v2339 = vadd.f32 %v2075, %v2301
          %v2340 = vadd.f32 %v2077, %v2303
          %v2341 = vadd.f32 %v2081, %v2307
          %v2342 = vadd.f32 %v2083, %v2309
          %v2343 = vadd.f32 %v2087, %v2313
          %v2344 = vadd.f32 %v2089, %v2315
          %v2345 = vadd.f32 %v2093, %v2319
          %v2346 = vadd.f32 %v2095, %v2321
          %s2347 = scalar_lea.vmem %s3, 288
          %v2348 = vld [vmem:[%s2347] sm:$0xff]
          %v2349 = vld [vmem:[%s2347 + $0x8] sm:$0xff]
          %v2350 = vld [vmem:[%s2347 + $0x10] sm:$0xff]
          %v2351 = vld [vmem:[%s2347 + $0x18] sm:$0xff]
          %v2352 = vld [vmem:[%s2347 + $0x20] sm:$0xff]
          %v2353 = vld [vmem:[%s2347 + $0x28] sm:$0xff]
          %v2354 = vld [vmem:[%s2347 + $0x30] sm:$0xff]
          %v2355 = vld [vmem:[%s2347 + $0x38] sm:$0xff]
          %v2356 = vld [vmem:[%s2347 + $0x40] sm:$0xff]
          %v2357 = vld [vmem:[%s2347 + $0x48] sm:$0xff]
          %v2358 = vld [vmem:[%s2347 + $0x50] sm:$0xff]
          %v2359 = vld [vmem:[%s2347 + $0x58] sm:$0xff]
          %2360 = vrot.lane.b32.xlu0 %v1686, 112
          %v2361 = vpop.permute.xlu0 %2360
          %2362 = vrot.lane.b32.xlu0 %v1687, 112
          %v2363 = vpop.permute.xlu0 %2362
          %2364 = vrot.lane.b32.xlu0 %v1688, 112
          %v2365 = vpop.permute.xlu0 %2364
          %2366 = vrot.lane.b32.xlu0 %v1689, 112
          %v2367 = vpop.permute.xlu0 %2366
          %2368 = vrot.lane.b32.xlu0 %v1690, 112
          %v2369 = vpop.permute.xlu0 %2368
          %2370 = vrot.lane.b32.xlu0 %v1691, 112
          %v2371 = vpop.permute.xlu0 %2370
          %2372 = vrot.lane.b32.xlu0 %v1692, 112
          %v2373 = vpop.permute.xlu0 %2372
          %2374 = vrot.lane.b32.xlu0 %v1693, 112
          %v2375 = vpop.permute.xlu0 %2374
          %2376 = vrot.lane.b32.xlu0 %v1694, 112
          %v2377 = vpop.permute.xlu0 %2376
          %2378 = vrot.lane.b32.xlu0 %v1695, 112
          %v2379 = vpop.permute.xlu0 %2378
          %2380 = vrot.lane.b32.xlu0 %v1696, 112
          %v2381 = vpop.permute.xlu0 %2380
          %2382 = vrot.lane.b32.xlu0 %v1697, 112
          %v2383 = vpop.permute.xlu0 %2382
          %v2384 = vsel %vm754, %v2361, %v2363
          %v2385 = vsel %vm754, %v2363, %v2365
          %v2386 = vsel %vm754, %v2367, %v2369
          %v2387 = vsel %vm754, %v2369, %v2371
          %v2388 = vsel %vm754, %v2373, %v2375
          %v2389 = vsel %vm754, %v2375, %v2377
          %v2390 = vsel %vm754, %v2379, %v2381
          %v2391 = vsel %vm754, %v2381, %v2383
          %v2401 = vsel %vm1750, %v2348, 0
          %v2404 = vsel %vm1750, %v2349, 0
          %v2407 = vsel %vm1750, %v2350, 0
          %v2410 = vsel %vm1750, %v2351, 0
          %v2413 = vsel %vm1750, %v2352, 0
          %v2416 = vsel %vm1750, %v2353, 0
          %v2419 = vsel %vm1750, %v2354, 0
          %v2422 = vsel %vm1750, %v2355, 0
          %v2425 = vsel %vm1750, %v2356, 0
          %v2428 = vsel %vm1750, %v2357, 0
          %v2431 = vsel %vm1750, %v2358, 0
          %v2434 = vsel %vm1750, %v2359, 0
          %2436 = vmatprep.subr.mxu0 0.0
          %2437 = vmatpush1.msra.mxu0 0.0
          %2438 = vmatprep.subr.mxu0 0.0
          %2439 = vmatpush1.msra.mxu0 0.0
          %2440 = vmatprep.subr.mxu0 0.0
          %2441 = vmatpush1.msra.mxu0 0.0
          %2442 = vmatprep.subr.mxu0 0.0
          %2443 = vmatpush1.msra.mxu0 0.0
          %2444 = vmatprep.subr.mxu0 0.0
          %2445 = vmatpush1.msra.mxu0 0.0
          %2446 = vmatprep.subr.mxu0 0.0
          %2447 = vmatpush1.msra.mxu0 0.0
          %2448 = vmatprep.subr.mxu0 0.0
          %2449 = vmatpush1.msra.mxu0 0.0
          %2450 = vmatprep.subr.mxu0 0.0
          %2451 = vmatpush1.msra.mxu0 0.0
          %2452 = vmatprep.subr.mxu0 0.0
          %2453 = vmatpush1.msra.mxu0 0.0
          %2454 = vmatprep.subr.mxu0 0.0
          %2455 = vmatpush1.msra.mxu0 0.0
          %2456 = vmatprep.subr.mxu0 0.0
          %2457 = vmatpush1.msra.mxu0 0.0
          %2458 = vmatprep.subr.mxu0 0.0
          %2459 = vmatpush1.msra.mxu0 0.0
          %2460 = vmatprep.subr.mxu0 %v2391
          %2461 = vmatpush1.msra.mxu0 %v2390
          %2462 = vmatprep.subr.mxu0 %v2389
          %2463 = vmatpush1.msra.mxu0 %v2388
          %2464 = vmatprep.subr.mxu0 %v2387
          %2465 = vmatpush1.msra.mxu0 %v2386
          %2466 = vmatprep.subr.mxu0 %v2385
          %2467 = vmatpush1.msra.mxu0 %v2384
          %2468 = vmatprep.subr.mxu0 0.0
          %2469 = vmatpush2.msra.mxu0 0.0
          %2470 = vmatprep.subr.mxu0 0.0
          %2471 = vmatpush2.msra.mxu0 0.0
          %2472 = vmatprep.subr.mxu0 0.0
          %2473 = vmatpush2.msra.mxu0 0.0
          %2474 = vmatprep.subr.mxu0 0.0
          %2475 = vmatpush2.msra.mxu0 0.0
          %2476 = vmatprep.subr.mxu0 0.0
          %2477 = vmatpush2.msra.mxu0 0.0
          %2478 = vmatprep.subr.mxu0 0.0
          %2479 = vmatpush2.msra.mxu0 0.0
          %2480 = vmatprep.subr.mxu0 0.0
          %2481 = vmatpush2.msra.mxu0 0.0
          %2482 = vmatprep.subr.mxu0 0.0
          %2483 = vmatpush2.msra.mxu0 0.0
          %2484 = vmatprep.subr.mxu0 0.0
          %2485 = vmatpush2.msra.mxu0 0.0
          %2486 = vmatprep.subr.mxu0 0.0
          %2487 = vmatpush2.msra.mxu0 0.0
          %2488 = vmatprep.subr.mxu0 0.0
          %2489 = vmatpush2.msra.mxu0 0.0
          %2490 = vmatprep.subr.mxu0 0.0
          %2491 = vmatpush2.msra.mxu0 0.0
          %2492 = vmatprep.subr.mxu0 0.0
          %2493 = vmatpush2.msra.mxu0 0.0
          %2494 = vmatprep.subr.mxu0 0.0
          %2495 = vmatpush2.msra.mxu0 0.0
          %2496 = vmatprep.subr.mxu0 0.0
          %2497 = vmatpush2.msra.mxu0 0.0
          %2498 = vmatprep.subr.mxu0 0.0
          %2499 = vmatpush2.msra.mxu0 0.0
          %2500 = vmatprep.mubr.f32.mxu0 0.0
          %2501 = vmatmul.mubr.f32.gmra.mxu0 %v2401
          %v2502 = vpop.f32.mrf.mxu0
          %v2503 = vadd.f32 0.0, %v2502
          %v2504 = vpop.f32.mrf.mxu0
          %v2505 = vadd.f32 0.0, %v2504
          %2506 = vmatprep.mubr.f32.mxu0 0.0
          %2507 = vmatmul.mubr.f32.gmra.mxu0 %v2404
          %v2508 = vpop.f32.mrf.mxu0
          %v2509 = vadd.f32 0.0, %v2508
          %v2510 = vpop.f32.mrf.mxu0
          %v2511 = vadd.f32 0.0, %v2510
          %2512 = vmatprep.mubr.f32.mxu0 0.0
          %2513 = vmatmul.mubr.f32.gmra.mxu0 %v2407
          %v2514 = vpop.f32.mrf.mxu0
          %v2515 = vadd.f32 0.0, %v2514
          %v2516 = vpop.f32.mrf.mxu0
          %v2517 = vadd.f32 0.0, %v2516
          %2518 = vmatprep.mubr.f32.mxu0 0.0
          %2519 = vmatmul.mubr.f32.gmra.mxu0 %v2410
          %v2520 = vpop.f32.mrf.mxu0
          %v2521 = vadd.f32 0.0, %v2520
          %v2522 = vpop.f32.mrf.mxu0
          %v2523 = vadd.f32 0.0, %v2522
          %2524 = vmatprep.mubr.f32.mxu0 0.0
          %2525 = vmatmul.mubr.f32.gmra.mxu0 %v2413
          %v2526 = vpop.f32.mrf.mxu0
          %v2527 = vadd.f32 0.0, %v2526
          %v2528 = vpop.f32.mrf.mxu0
          %v2529 = vadd.f32 0.0, %v2528
          %2530 = vmatprep.mubr.f32.mxu0 0.0
          %2531 = vmatmul.mubr.f32.gmra.mxu0 %v2416
          %v2532 = vpop.f32.mrf.mxu0
          %v2533 = vadd.f32 0.0, %v2532
          %v2534 = vpop.f32.mrf.mxu0
          %v2535 = vadd.f32 0.0, %v2534
          %2536 = vmatprep.mubr.f32.mxu0 0.0
          %2537 = vmatmul.mubr.f32.gmra.mxu0 %v2419
          %v2538 = vpop.f32.mrf.mxu0
          %v2539 = vadd.f32 0.0, %v2538
          %v2540 = vpop.f32.mrf.mxu0
          %v2541 = vadd.f32 0.0, %v2540
          %2542 = vmatprep.mubr.f32.mxu0 0.0
          %2543 = vmatmul.mubr.f32.gmra.mxu0 %v2422
          %v2544 = vpop.f32.mrf.mxu0
          %v2545 = vadd.f32 0.0, %v2544
          %v2546 = vpop.f32.mrf.mxu0
          %v2547 = vadd.f32 0.0, %v2546
          %2548 = vmatprep.mubr.f32.mxu0 0.0
          %2549 = vmatmul.mubr.f32.gmra.mxu0 %v2425
          %v2550 = vpop.f32.mrf.mxu0
          %v2551 = vadd.f32 0.0, %v2550
          %v2552 = vpop.f32.mrf.mxu0
          %v2553 = vadd.f32 0.0, %v2552
          %2554 = vmatprep.mubr.f32.mxu0 0.0
          %2555 = vmatmul.mubr.f32.gmra.mxu0 %v2428
          %v2556 = vpop.f32.mrf.mxu0
          %v2557 = vadd.f32 0.0, %v2556
          %v2558 = vpop.f32.mrf.mxu0
          %v2559 = vadd.f32 0.0, %v2558
          %2560 = vmatprep.mubr.f32.mxu0 0.0
          %2561 = vmatmul.mubr.f32.gmra.mxu0 %v2431
          %v2562 = vpop.f32.mrf.mxu0
          %v2563 = vadd.f32 0.0, %v2562
          %v2564 = vpop.f32.mrf.mxu0
          %v2565 = vadd.f32 0.0, %v2564
          %2566 = vmatprep.mubr.f32.mxu0 0.0
          %2567 = vmatmul.mubr.f32.gmra.mxu0 %v2434
          %v2568 = vpop.f32.mrf.mxu0
          %v2569 = vadd.f32 0.0, %v2568
          %v2570 = vpop.f32.mrf.mxu0
          %v2571 = vadd.f32 0.0, %v2570
          %2572 = vdwg.mxu0
          %v2573 = vadd.f32 %v2323, %v2503
          %v2574 = vadd.f32 %v2324, %v2505
          %v2575 = vadd.f32 %v2325, %v2509
          %v2576 = vadd.f32 %v2326, %v2511
          %v2577 = vadd.f32 %v2327, %v2515
          %v2578 = vadd.f32 %v2328, %v2517
          %v2579 = vadd.f32 %v2329, %v2521
          %v2580 = vadd.f32 %v2330, %v2523
          %v2581 = vadd.f32 %v2331, %v2527
          %v2582 = vadd.f32 %v2332, %v2529
          %v2583 = vadd.f32 %v2333, %v2533
          %v2584 = vadd.f32 %v2334, %v2535
          %v2585 = vadd.f32 %v2335, %v2539
          %v2586 = vadd.f32 %v2336, %v2541
          %v2587 = vadd.f32 %v2337, %v2545
          %v2588 = vadd.f32 %v2338, %v2547
          %v2589 = vadd.f32 %v2339, %v2551
          %v2590 = vadd.f32 %v2340, %v2553
          %v2591 = vadd.f32 %v2341, %v2557
          %v2592 = vadd.f32 %v2342, %v2559
          %v2593 = vadd.f32 %v2343, %v2563
          %v2594 = vadd.f32 %v2344, %v2565
          %v2595 = vadd.f32 %v2345, %v2569
          %v2596 = vadd.f32 %v2346, %v2571
          %s2597 = scalar_lea.vmem %s3, 384
          %v2598 = vld [vmem:[%s2597] sm:$0xff]
          %v2599 = vld [vmem:[%s2597 + $0x8] sm:$0xff]
          %v2600 = vld [vmem:[%s2597 + $0x10] sm:$0xff]
          %v2601 = vld [vmem:[%s2597 + $0x18] sm:$0xff]
          %v2602 = vld [vmem:[%s2597 + $0x20] sm:$0xff]
          %v2603 = vld [vmem:[%s2597 + $0x28] sm:$0xff]
          %v2604 = vld [vmem:[%s2597 + $0x30] sm:$0xff]
          %v2605 = vld [vmem:[%s2597 + $0x38] sm:$0xff]
          %v2606 = vld [vmem:[%s2597 + $0x40] sm:$0xff]
          %v2607 = vld [vmem:[%s2597 + $0x48] sm:$0xff]
          %v2608 = vld [vmem:[%s2597 + $0x50] sm:$0xff]
          %v2609 = vld [vmem:[%s2597 + $0x58] sm:$0xff]
          %2610 = vrot.lane.b32.xlu0 %v1686, 111
          %v2611 = vpop.permute.xlu0 %2610
          %2612 = vrot.lane.b32.xlu0 %v1687, 111
          %v2613 = vpop.permute.xlu0 %2612
          %2614 = vrot.lane.b32.xlu0 %v1688, 111
          %v2615 = vpop.permute.xlu0 %2614
          %2616 = vrot.lane.b32.xlu0 %v1689, 111
          %v2617 = vpop.permute.xlu0 %2616
          %2618 = vrot.lane.b32.xlu0 %v1690, 111
          %v2619 = vpop.permute.xlu0 %2618
          %2620 = vrot.lane.b32.xlu0 %v1691, 111
          %v2621 = vpop.permute.xlu0 %2620
          %2622 = vrot.lane.b32.xlu0 %v1692, 111
          %v2623 = vpop.permute.xlu0 %2622
          %2624 = vrot.lane.b32.xlu0 %v1693, 111
          %v2625 = vpop.permute.xlu0 %2624
          %2626 = vrot.lane.b32.xlu0 %v1694, 111
          %v2627 = vpop.permute.xlu0 %2626
          %2628 = vrot.lane.b32.xlu0 %v1695, 111
          %v2629 = vpop.permute.xlu0 %2628
          %2630 = vrot.lane.b32.xlu0 %v1696, 111
          %v2631 = vpop.permute.xlu0 %2630
          %2632 = vrot.lane.b32.xlu0 %v1697, 111
          %v2633 = vpop.permute.xlu0 %2632
          %v2634 = vsel %vm899, %v2611, %v2613
          %v2635 = vsel %vm899, %v2613, %v2615
          %v2636 = vsel %vm899, %v2617, %v2619
          %v2637 = vsel %vm899, %v2619, %v2621
          %v2638 = vsel %vm899, %v2623, %v2625
          %v2639 = vsel %vm899, %v2625, %v2627
          %v2640 = vsel %vm899, %v2629, %v2631
          %v2641 = vsel %vm899, %v2631, %v2633
          %v2651 = vsel %vm1750, %v2598, 0
          %v2654 = vsel %vm1750, %v2599, 0
          %v2657 = vsel %vm1750, %v2600, 0
          %v2660 = vsel %vm1750, %v2601, 0
          %v2663 = vsel %vm1750, %v2602, 0
          %v2666 = vsel %vm1750, %v2603, 0
          %v2669 = vsel %vm1750, %v2604, 0
          %v2672 = vsel %vm1750, %v2605, 0
          %v2675 = vsel %vm1750, %v2606, 0
          %v2678 = vsel %vm1750, %v2607, 0
          %v2681 = vsel %vm1750, %v2608, 0
          %v2684 = vsel %vm1750, %v2609, 0
          %2686 = vmatprep.subr.mxu0 0.0
          %2687 = vmatpush1.msra.mxu0 0.0
          %2688 = vmatprep.subr.mxu0 0.0
          %2689 = vmatpush1.msra.mxu0 0.0
          %2690 = vmatprep.subr.mxu0 0.0
          %2691 = vmatpush1.msra.mxu0 0.0
          %2692 = vmatprep.subr.mxu0 0.0
          %2693 = vmatpush1.msra.mxu0 0.0
          %2694 = vmatprep.subr.mxu0 0.0
          %2695 = vmatpush1.msra.mxu0 0.0
          %2696 = vmatprep.subr.mxu0 0.0
          %2697 = vmatpush1.msra.mxu0 0.0
          %2698 = vmatprep.subr.mxu0 0.0
          %2699 = vmatpush1.msra.mxu0 0.0
          %2700 = vmatprep.subr.mxu0 0.0
          %2701 = vmatpush1.msra.mxu0 0.0
          %2702 = vmatprep.subr.mxu0 0.0
          %2703 = vmatpush1.msra.mxu0 0.0
          %2704 = vmatprep.subr.mxu0 0.0
          %2705 = vmatpush1.msra.mxu0 0.0
          %2706 = vmatprep.subr.mxu0 0.0
          %2707 = vmatpush1.msra.mxu0 0.0
          %2708 = vmatprep.subr.mxu0 0.0
          %2709 = vmatpush1.msra.mxu0 0.0
          %2710 = vmatprep.subr.mxu0 %v2641
          %2711 = vmatpush1.msra.mxu0 %v2640
          %2712 = vmatprep.subr.mxu0 %v2639
          %2713 = vmatpush1.msra.mxu0 %v2638
          %2714 = vmatprep.subr.mxu0 %v2637
          %2715 = vmatpush1.msra.mxu0 %v2636
          %2716 = vmatprep.subr.mxu0 %v2635
          %2717 = vmatpush1.msra.mxu0 %v2634
          %2718 = vmatprep.subr.mxu0 0.0
          %2719 = vmatpush2.msra.mxu0 0.0
          %2720 = vmatprep.subr.mxu0 0.0
          %2721 = vmatpush2.msra.mxu0 0.0
          %2722 = vmatprep.subr.mxu0 0.0
          %2723 = vmatpush2.msra.mxu0 0.0
          %2724 = vmatprep.subr.mxu0 0.0
          %2725 = vmatpush2.msra.mxu0 0.0
          %2726 = vmatprep.subr.mxu0 0.0
          %2727 = vmatpush2.msra.mxu0 0.0
          %2728 = vmatprep.subr.mxu0 0.0
          %2729 = vmatpush2.msra.mxu0 0.0
          %2730 = vmatprep.subr.mxu0 0.0
          %2731 = vmatpush2.msra.mxu0 0.0
          %2732 = vmatprep.subr.mxu0 0.0
          %2733 = vmatpush2.msra.mxu0 0.0
          %2734 = vmatprep.subr.mxu0 0.0
          %2735 = vmatpush2.msra.mxu0 0.0
          %2736 = vmatprep.subr.mxu0 0.0
          %2737 = vmatpush2.msra.mxu0 0.0
          %2738 = vmatprep.subr.mxu0 0.0
          %2739 = vmatpush2.msra.mxu0 0.0
          %2740 = vmatprep.subr.mxu0 0.0
          %2741 = vmatpush2.msra.mxu0 0.0
          %2742 = vmatprep.subr.mxu0 0.0
          %2743 = vmatpush2.msra.mxu0 0.0
          %2744 = vmatprep.subr.mxu0 0.0
          %2745 = vmatpush2.msra.mxu0 0.0
          %2746 = vmatprep.subr.mxu0 0.0
          %2747 = vmatpush2.msra.mxu0 0.0
          %2748 = vmatprep.subr.mxu0 0.0
          %2749 = vmatpush2.msra.mxu0 0.0
          %2750 = vmatprep.mubr.f32.mxu0 0.0
          %2751 = vmatmul.mubr.f32.gmra.mxu0 %v2651
          %v2752 = vpop.f32.mrf.mxu0
          %v2753 = vadd.f32 0.0, %v2752
          %v2754 = vpop.f32.mrf.mxu0
          %v2755 = vadd.f32 0.0, %v2754
          %2756 = vmatprep.mubr.f32.mxu0 0.0
          %2757 = vmatmul.mubr.f32.gmra.mxu0 %v2654
          %v2758 = vpop.f32.mrf.mxu0
          %v2759 = vadd.f32 0.0, %v2758
          %v2760 = vpop.f32.mrf.mxu0
          %v2761 = vadd.f32 0.0, %v2760
          %2762 = vmatprep.mubr.f32.mxu0 0.0
          %2763 = vmatmul.mubr.f32.gmra.mxu0 %v2657
          %v2764 = vpop.f32.mrf.mxu0
          %v2765 = vadd.f32 0.0, %v2764
          %v2766 = vpop.f32.mrf.mxu0
          %v2767 = vadd.f32 0.0, %v2766
          %2768 = vmatprep.mubr.f32.mxu0 0.0
          %2769 = vmatmul.mubr.f32.gmra.mxu0 %v2660
          %v2770 = vpop.f32.mrf.mxu0
          %v2771 = vadd.f32 0.0, %v2770
          %v2772 = vpop.f32.mrf.mxu0
          %v2773 = vadd.f32 0.0, %v2772
          %2774 = vmatprep.mubr.f32.mxu0 0.0
          %2775 = vmatmul.mubr.f32.gmra.mxu0 %v2663
          %v2776 = vpop.f32.mrf.mxu0
          %v2777 = vadd.f32 0.0, %v2776
          %v2778 = vpop.f32.mrf.mxu0
          %v2779 = vadd.f32 0.0, %v2778
          %2780 = vmatprep.mubr.f32.mxu0 0.0
          %2781 = vmatmul.mubr.f32.gmra.mxu0 %v2666
          %v2782 = vpop.f32.mrf.mxu0
          %v2783 = vadd.f32 0.0, %v2782
          %v2784 = vpop.f32.mrf.mxu0
          %v2785 = vadd.f32 0.0, %v2784
          %2786 = vmatprep.mubr.f32.mxu0 0.0
          %2787 = vmatmul.mubr.f32.gmra.mxu0 %v2669
          %v2788 = vpop.f32.mrf.mxu0
          %v2789 = vadd.f32 0.0, %v2788
          %v2790 = vpop.f32.mrf.mxu0
          %v2791 = vadd.f32 0.0, %v2790
          %2792 = vmatprep.mubr.f32.mxu0 0.0
          %2793 = vmatmul.mubr.f32.gmra.mxu0 %v2672
          %v2794 = vpop.f32.mrf.mxu0
          %v2795 = vadd.f32 0.0, %v2794
          %v2796 = vpop.f32.mrf.mxu0
          %v2797 = vadd.f32 0.0, %v2796
          %2798 = vmatprep.mubr.f32.mxu0 0.0
          %2799 = vmatmul.mubr.f32.gmra.mxu0 %v2675
          %v2800 = vpop.f32.mrf.mxu0
          %v2801 = vadd.f32 0.0, %v2800
          %v2802 = vpop.f32.mrf.mxu0
          %v2803 = vadd.f32 0.0, %v2802
          %2804 = vmatprep.mubr.f32.mxu0 0.0
          %2805 = vmatmul.mubr.f32.gmra.mxu0 %v2678
          %v2806 = vpop.f32.mrf.mxu0
          %v2807 = vadd.f32 0.0, %v2806
          %v2808 = vpop.f32.mrf.mxu0
          %v2809 = vadd.f32 0.0, %v2808
          %2810 = vmatprep.mubr.f32.mxu0 0.0
          %2811 = vmatmul.mubr.f32.gmra.mxu0 %v2681
          %v2812 = vpop.f32.mrf.mxu0
          %v2813 = vadd.f32 0.0, %v2812
          %v2814 = vpop.f32.mrf.mxu0
          %v2815 = vadd.f32 0.0, %v2814
          %2816 = vmatprep.mubr.f32.mxu0 0.0
          %2817 = vmatmul.mubr.f32.gmra.mxu0 %v2684
          %v2818 = vpop.f32.mrf.mxu0
          %v2819 = vadd.f32 0.0, %v2818
          %v2820 = vpop.f32.mrf.mxu0
          %v2821 = vadd.f32 0.0, %v2820
          %2822 = vdwg.mxu0
          %v2823 = vadd.f32 %v2573, %v2753
          %v2824 = vadd.f32 %v2574, %v2755
          %v2825 = vadd.f32 %v2575, %v2759
          %v2826 = vadd.f32 %v2576, %v2761
          %v2827 = vadd.f32 %v2577, %v2765
          %v2828 = vadd.f32 %v2578, %v2767
          %v2829 = vadd.f32 %v2579, %v2771
          %v2830 = vadd.f32 %v2580, %v2773
          %v2831 = vadd.f32 %v2581, %v2777
          %v2832 = vadd.f32 %v2582, %v2779
          %v2833 = vadd.f32 %v2583, %v2783
          %v2834 = vadd.f32 %v2584, %v2785
          %v2835 = vadd.f32 %v2585, %v2789
          %v2836 = vadd.f32 %v2586, %v2791
          %v2837 = vadd.f32 %v2587, %v2795
          %v2838 = vadd.f32 %v2588, %v2797
          %v2839 = vadd.f32 %v2589, %v2801
          %v2840 = vadd.f32 %v2590, %v2803
          %v2841 = vadd.f32 %v2591, %v2807
          %v2842 = vadd.f32 %v2592, %v2809
          %v2843 = vadd.f32 %v2593, %v2813
          %v2844 = vadd.f32 %v2594, %v2815
          %v2845 = vadd.f32 %v2595, %v2819
          %v2846 = vadd.f32 %v2596, %v2821
          %s2847 = scalar_lea.vmem %s3, 480
          %v2848 = vld [vmem:[%s2847] sm:$0xff]
          %v2849 = vld [vmem:[%s2847 + $0x8] sm:$0xff]
          %v2850 = vld [vmem:[%s2847 + $0x10] sm:$0xff]
          %v2851 = vld [vmem:[%s2847 + $0x18] sm:$0xff]
          %v2852 = vld [vmem:[%s2847 + $0x20] sm:$0xff]
          %v2853 = vld [vmem:[%s2847 + $0x28] sm:$0xff]
          %v2854 = vld [vmem:[%s2847 + $0x30] sm:$0xff]
          %v2855 = vld [vmem:[%s2847 + $0x38] sm:$0xff]
          %v2856 = vld [vmem:[%s2847 + $0x40] sm:$0xff]
          %v2857 = vld [vmem:[%s2847 + $0x48] sm:$0xff]
          %v2858 = vld [vmem:[%s2847 + $0x50] sm:$0xff]
          %v2859 = vld [vmem:[%s2847 + $0x58] sm:$0xff]
          %2860 = vrot.lane.b32.xlu0 %v1686, 110
          %v2861 = vpop.permute.xlu0 %2860
          %2862 = vrot.lane.b32.xlu0 %v1687, 110
          %v2863 = vpop.permute.xlu0 %2862
          %2864 = vrot.lane.b32.xlu0 %v1688, 110
          %v2865 = vpop.permute.xlu0 %2864
          %2866 = vrot.lane.b32.xlu0 %v1689, 110
          %v2867 = vpop.permute.xlu0 %2866
          %2868 = vrot.lane.b32.xlu0 %v1690, 110
          %v2869 = vpop.permute.xlu0 %2868
          %2870 = vrot.lane.b32.xlu0 %v1691, 110
          %v2871 = vpop.permute.xlu0 %2870
          %2872 = vrot.lane.b32.xlu0 %v1692, 110
          %v2873 = vpop.permute.xlu0 %2872
          %2874 = vrot.lane.b32.xlu0 %v1693, 110
          %v2875 = vpop.permute.xlu0 %2874
          %2876 = vrot.lane.b32.xlu0 %v1694, 110
          %v2877 = vpop.permute.xlu0 %2876
          %2878 = vrot.lane.b32.xlu0 %v1695, 110
          %v2879 = vpop.permute.xlu0 %2878
          %2880 = vrot.lane.b32.xlu0 %v1696, 110
          %v2881 = vpop.permute.xlu0 %2880
          %2882 = vrot.lane.b32.xlu0 %v1697, 110
          %v2883 = vpop.permute.xlu0 %2882
          %v2884 = vsel %vm1044, %v2861, %v2863
          %v2885 = vsel %vm1044, %v2863, %v2865
          %v2886 = vsel %vm1044, %v2867, %v2869
          %v2887 = vsel %vm1044, %v2869, %v2871
          %v2888 = vsel %vm1044, %v2873, %v2875
          %v2889 = vsel %vm1044, %v2875, %v2877
          %v2890 = vsel %vm1044, %v2879, %v2881
          %v2891 = vsel %vm1044, %v2881, %v2883
          %v2901 = vsel %vm1750, %v2848, 0
          %v2904 = vsel %vm1750, %v2849, 0
          %v2907 = vsel %vm1750, %v2850, 0
          %v2910 = vsel %vm1750, %v2851, 0
          %v2913 = vsel %vm1750, %v2852, 0
          %v2916 = vsel %vm1750, %v2853, 0
          %v2919 = vsel %vm1750, %v2854, 0
          %v2922 = vsel %vm1750, %v2855, 0
          %v2925 = vsel %vm1750, %v2856, 0
          %v2928 = vsel %vm1750, %v2857, 0
          %v2931 = vsel %vm1750, %v2858, 0
          %v2934 = vsel %vm1750, %v2859, 0
          %2936 = vmatprep.subr.mxu0 0.0
          %2937 = vmatpush1.msra.mxu0 0.0
          %2938 = vmatprep.subr.mxu0 0.0
          %2939 = vmatpush1.msra.mxu0 0.0
          %2940 = vmatprep.subr.mxu0 0.0
          %2941 = vmatpush1.msra.mxu0 0.0
          %2942 = vmatprep.subr.mxu0 0.0
          %2943 = vmatpush1.msra.mxu0 0.0
          %2944 = vmatprep.subr.mxu0 0.0
          %2945 = vmatpush1.msra.mxu0 0.0
          %2946 = vmatprep.subr.mxu0 0.0
          %2947 = vmatpush1.msra.mxu0 0.0
          %2948 = vmatprep.subr.mxu0 0.0
          %2949 = vmatpush1.msra.mxu0 0.0
          %2950 = vmatprep.subr.mxu0 0.0
          %2951 = vmatpush1.msra.mxu0 0.0
          %2952 = vmatprep.subr.mxu0 0.0
          %2953 = vmatpush1.msra.mxu0 0.0
          %2954 = vmatprep.subr.mxu0 0.0
          %2955 = vmatpush1.msra.mxu0 0.0
          %2956 = vmatprep.subr.mxu0 0.0
          %2957 = vmatpush1.msra.mxu0 0.0
          %2958 = vmatprep.subr.mxu0 0.0
          %2959 = vmatpush1.msra.mxu0 0.0
          %2960 = vmatprep.subr.mxu0 %v2891
          %2961 = vmatpush1.msra.mxu0 %v2890
          %2962 = vmatprep.subr.mxu0 %v2889
          %2963 = vmatpush1.msra.mxu0 %v2888
          %2964 = vmatprep.subr.mxu0 %v2887
          %2965 = vmatpush1.msra.mxu0 %v2886
          %2966 = vmatprep.subr.mxu0 %v2885
          %2967 = vmatpush1.msra.mxu0 %v2884
          %2968 = vmatprep.subr.mxu0 0.0
          %2969 = vmatpush2.msra.mxu0 0.0
          %2970 = vmatprep.subr.mxu0 0.0
          %2971 = vmatpush2.msra.mxu0 0.0
          %2972 = vmatprep.subr.mxu0 0.0
          %2973 = vmatpush2.msra.mxu0 0.0
          %2974 = vmatprep.subr.mxu0 0.0
          %2975 = vmatpush2.msra.mxu0 0.0
          %2976 = vmatprep.subr.mxu0 0.0
          %2977 = vmatpush2.msra.mxu0 0.0
          %2978 = vmatprep.subr.mxu0 0.0
          %2979 = vmatpush2.msra.mxu0 0.0
          %2980 = vmatprep.subr.mxu0 0.0
          %2981 = vmatpush2.msra.mxu0 0.0
          %2982 = vmatprep.subr.mxu0 0.0
          %2983 = vmatpush2.msra.mxu0 0.0
          %2984 = vmatprep.subr.mxu0 0.0
          %2985 = vmatpush2.msra.mxu0 0.0
          %2986 = vmatprep.subr.mxu0 0.0
          %2987 = vmatpush2.msra.mxu0 0.0
          %2988 = vmatprep.subr.mxu0 0.0
          %2989 = vmatpush2.msra.mxu0 0.0
          %2990 = vmatprep.subr.mxu0 0.0
          %2991 = vmatpush2.msra.mxu0 0.0
          %2992 = vmatprep.subr.mxu0 0.0
          %2993 = vmatpush2.msra.mxu0 0.0
          %2994 = vmatprep.subr.mxu0 0.0
          %2995 = vmatpush2.msra.mxu0 0.0
          %2996 = vmatprep.subr.mxu0 0.0
          %2997 = vmatpush2.msra.mxu0 0.0
          %2998 = vmatprep.subr.mxu0 0.0
          %2999 = vmatpush2.msra.mxu0 0.0
          %3000 = vmatprep.mubr.f32.mxu0 0.0
          %3001 = vmatmul.mubr.f32.gmra.mxu0 %v2901
          %v3002 = vpop.f32.mrf.mxu0
          %v3003 = vadd.f32 0.0, %v3002
          %v3004 = vpop.f32.mrf.mxu0
          %v3005 = vadd.f32 0.0, %v3004
          %3006 = vmatprep.mubr.f32.mxu0 0.0
          %3007 = vmatmul.mubr.f32.gmra.mxu0 %v2904
          %v3008 = vpop.f32.mrf.mxu0
          %v3009 = vadd.f32 0.0, %v3008
          %v3010 = vpop.f32.mrf.mxu0
          %v3011 = vadd.f32 0.0, %v3010
          %3012 = vmatprep.mubr.f32.mxu0 0.0
          %3013 = vmatmul.mubr.f32.gmra.mxu0 %v2907
          %v3014 = vpop.f32.mrf.mxu0
          %v3015 = vadd.f32 0.0, %v3014
          %v3016 = vpop.f32.mrf.mxu0
          %v3017 = vadd.f32 0.0, %v3016
          %3018 = vmatprep.mubr.f32.mxu0 0.0
          %3019 = vmatmul.mubr.f32.gmra.mxu0 %v2910
          %v3020 = vpop.f32.mrf.mxu0
          %v3021 = vadd.f32 0.0, %v3020
          %v3022 = vpop.f32.mrf.mxu0
          %v3023 = vadd.f32 0.0, %v3022
          %3024 = vmatprep.mubr.f32.mxu0 0.0
          %3025 = vmatmul.mubr.f32.gmra.mxu0 %v2913
          %v3026 = vpop.f32.mrf.mxu0
          %v3027 = vadd.f32 0.0, %v3026
          %v3028 = vpop.f32.mrf.mxu0
          %v3029 = vadd.f32 0.0, %v3028
          %3030 = vmatprep.mubr.f32.mxu0 0.0
          %3031 = vmatmul.mubr.f32.gmra.mxu0 %v2916
          %v3032 = vpop.f32.mrf.mxu0
          %v3033 = vadd.f32 0.0, %v3032
          %v3034 = vpop.f32.mrf.mxu0
          %v3035 = vadd.f32 0.0, %v3034
          %3036 = vmatprep.mubr.f32.mxu0 0.0
          %3037 = vmatmul.mubr.f32.gmra.mxu0 %v2919
          %v3038 = vpop.f32.mrf.mxu0
          %v3039 = vadd.f32 0.0, %v3038
          %v3040 = vpop.f32.mrf.mxu0
          %v3041 = vadd.f32 0.0, %v3040
          %3042 = vmatprep.mubr.f32.mxu0 0.0
          %3043 = vmatmul.mubr.f32.gmra.mxu0 %v2922
          %v3044 = vpop.f32.mrf.mxu0
          %v3045 = vadd.f32 0.0, %v3044
          %v3046 = vpop.f32.mrf.mxu0
          %v3047 = vadd.f32 0.0, %v3046
          %3048 = vmatprep.mubr.f32.mxu0 0.0
          %3049 = vmatmul.mubr.f32.gmra.mxu0 %v2925
          %v3050 = vpop.f32.mrf.mxu0
          %v3051 = vadd.f32 0.0, %v3050
          %v3052 = vpop.f32.mrf.mxu0
          %v3053 = vadd.f32 0.0, %v3052
          %3054 = vmatprep.mubr.f32.mxu0 0.0
          %3055 = vmatmul.mubr.f32.gmra.mxu0 %v2928
          %v3056 = vpop.f32.mrf.mxu0
          %v3057 = vadd.f32 0.0, %v3056
          %v3058 = vpop.f32.mrf.mxu0
          %v3059 = vadd.f32 0.0, %v3058
          %3060 = vmatprep.mubr.f32.mxu0 0.0
          %3061 = vmatmul.mubr.f32.gmra.mxu0 %v2931
          %v3062 = vpop.f32.mrf.mxu0
          %v3063 = vadd.f32 0.0, %v3062
          %v3064 = vpop.f32.mrf.mxu0
          %v3065 = vadd.f32 0.0, %v3064
          %3066 = vmatprep.mubr.f32.mxu0 0.0
          %3067 = vmatmul.mubr.f32.gmra.mxu0 %v2934
          %v3068 = vpop.f32.mrf.mxu0
          %v3069 = vadd.f32 0.0, %v3068
          %v3070 = vpop.f32.mrf.mxu0
          %v3071 = vadd.f32 0.0, %v3070
          %3072 = vdwg.mxu0
          %v3073 = vadd.f32 %v2823, %v3003
          %v3074 = vadd.f32 %v2824, %v3005
          %v3075 = vadd.f32 %v2825, %v3009
          %v3076 = vadd.f32 %v2826, %v3011
          %v3077 = vadd.f32 %v2827, %v3015
          %v3078 = vadd.f32 %v2828, %v3017
          %v3079 = vadd.f32 %v2829, %v3021
          %v3080 = vadd.f32 %v2830, %v3023
          %v3081 = vadd.f32 %v2831, %v3027
          %v3082 = vadd.f32 %v2832, %v3029
          %v3083 = vadd.f32 %v2833, %v3033
          %v3084 = vadd.f32 %v2834, %v3035
          %v3085 = vadd.f32 %v2835, %v3039
          %v3086 = vadd.f32 %v2836, %v3041
          %v3087 = vadd.f32 %v2837, %v3045
          %v3088 = vadd.f32 %v2838, %v3047
          %v3089 = vadd.f32 %v2839, %v3051
          %v3090 = vadd.f32 %v2840, %v3053
          %v3091 = vadd.f32 %v2841, %v3057
          %v3092 = vadd.f32 %v2842, %v3059
          %v3093 = vadd.f32 %v2843, %v3063
          %v3094 = vadd.f32 %v2844, %v3065
          %v3095 = vadd.f32 %v2845, %v3069
          %v3096 = vadd.f32 %v2846, %v3071
          %s3097 = scalar_lea.vmem %s3, 576
          %v3098 = vld [vmem:[%s3097] sm:$0xff]
          %v3099 = vld [vmem:[%s3097 + $0x8] sm:$0xff]
          %v3100 = vld [vmem:[%s3097 + $0x10] sm:$0xff]
          %v3101 = vld [vmem:[%s3097 + $0x18] sm:$0xff]
          %v3102 = vld [vmem:[%s3097 + $0x20] sm:$0xff]
          %v3103 = vld [vmem:[%s3097 + $0x28] sm:$0xff]
          %v3104 = vld [vmem:[%s3097 + $0x30] sm:$0xff]
          %v3105 = vld [vmem:[%s3097 + $0x38] sm:$0xff]
          %v3106 = vld [vmem:[%s3097 + $0x40] sm:$0xff]
          %v3107 = vld [vmem:[%s3097 + $0x48] sm:$0xff]
          %v3108 = vld [vmem:[%s3097 + $0x50] sm:$0xff]
          %v3109 = vld [vmem:[%s3097 + $0x58] sm:$0xff]
          %3110 = vrot.lane.b32.xlu0 %v1686, 96
          %v3111 = vpop.permute.xlu0 %3110
          %3112 = vrot.lane.b32.xlu0 %v1687, 96
          %v3113 = vpop.permute.xlu0 %3112
          %3114 = vrot.lane.b32.xlu0 %v1688, 96
          %v3115 = vpop.permute.xlu0 %3114
          %3116 = vrot.lane.b32.xlu0 %v1689, 96
          %v3117 = vpop.permute.xlu0 %3116
          %3118 = vrot.lane.b32.xlu0 %v1690, 96
          %v3119 = vpop.permute.xlu0 %3118
          %3120 = vrot.lane.b32.xlu0 %v1691, 96
          %v3121 = vpop.permute.xlu0 %3120
          %3122 = vrot.lane.b32.xlu0 %v1692, 96
          %v3123 = vpop.permute.xlu0 %3122
          %3124 = vrot.lane.b32.xlu0 %v1693, 96
          %v3125 = vpop.permute.xlu0 %3124
          %3126 = vrot.lane.b32.xlu0 %v1694, 96
          %v3127 = vpop.permute.xlu0 %3126
          %3128 = vrot.lane.b32.xlu0 %v1695, 96
          %v3129 = vpop.permute.xlu0 %3128
          %3130 = vrot.lane.b32.xlu0 %v1696, 96
          %v3131 = vpop.permute.xlu0 %3130
          %3132 = vrot.lane.b32.xlu0 %v1697, 96
          %v3133 = vpop.permute.xlu0 %3132
          %v3134 = vsel %vm1189, %v3111, %v3113
          %v3135 = vsel %vm1189, %v3113, %v3115
          %v3136 = vsel %vm1189, %v3117, %v3119
          %v3137 = vsel %vm1189, %v3119, %v3121
          %v3138 = vsel %vm1189, %v3123, %v3125
          %v3139 = vsel %vm1189, %v3125, %v3127
          %v3140 = vsel %vm1189, %v3129, %v3131
          %v3141 = vsel %vm1189, %v3131, %v3133
          %v3151 = vsel %vm1750, %v3098, 0
          %v3154 = vsel %vm1750, %v3099, 0
          %v3157 = vsel %vm1750, %v3100, 0
          %v3160 = vsel %vm1750, %v3101, 0
          %v3163 = vsel %vm1750, %v3102, 0
          %v3166 = vsel %vm1750, %v3103, 0
          %v3169 = vsel %vm1750, %v3104, 0
          %v3172 = vsel %vm1750, %v3105, 0
          %v3175 = vsel %vm1750, %v3106, 0
          %v3178 = vsel %vm1750, %v3107, 0
          %v3181 = vsel %vm1750, %v3108, 0
          %v3184 = vsel %vm1750, %v3109, 0
          %3186 = vmatprep.subr.mxu0 0.0
          %3187 = vmatpush1.msra.mxu0 0.0
          %3188 = vmatprep.subr.mxu0 0.0
          %3189 = vmatpush1.msra.mxu0 0.0
          %3190 = vmatprep.subr.mxu0 0.0
          %3191 = vmatpush1.msra.mxu0 0.0
          %3192 = vmatprep.subr.mxu0 0.0
          %3193 = vmatpush1.msra.mxu0 0.0
          %3194 = vmatprep.subr.mxu0 0.0
          %3195 = vmatpush1.msra.mxu0 0.0
          %3196 = vmatprep.subr.mxu0 0.0
          %3197 = vmatpush1.msra.mxu0 0.0
          %3198 = vmatprep.subr.mxu0 0.0
          %3199 = vmatpush1.msra.mxu0 0.0
          %3200 = vmatprep.subr.mxu0 0.0
          %3201 = vmatpush1.msra.mxu0 0.0
          %3202 = vmatprep.subr.mxu0 0.0
          %3203 = vmatpush1.msra.mxu0 0.0
          %3204 = vmatprep.subr.mxu0 0.0
          %3205 = vmatpush1.msra.mxu0 0.0
          %3206 = vmatprep.subr.mxu0 0.0
          %3207 = vmatpush1.msra.mxu0 0.0
          %3208 = vmatprep.subr.mxu0 0.0
          %3209 = vmatpush1.msra.mxu0 0.0
          %3210 = vmatprep.subr.mxu0 %v3141
          %3211 = vmatpush1.msra.mxu0 %v3140
          %3212 = vmatprep.subr.mxu0 %v3139
          %3213 = vmatpush1.msra.mxu0 %v3138
          %3214 = vmatprep.subr.mxu0 %v3137
          %3215 = vmatpush1.msra.mxu0 %v3136
          %3216 = vmatprep.subr.mxu0 %v3135
          %3217 = vmatpush1.msra.mxu0 %v3134
          %3218 = vmatprep.subr.mxu0 0.0
          %3219 = vmatpush2.msra.mxu0 0.0
          %3220 = vmatprep.subr.mxu0 0.0
          %3221 = vmatpush2.msra.mxu0 0.0
          %3222 = vmatprep.subr.mxu0 0.0
          %3223 = vmatpush2.msra.mxu0 0.0
          %3224 = vmatprep.subr.mxu0 0.0
          %3225 = vmatpush2.msra.mxu0 0.0
          %3226 = vmatprep.subr.mxu0 0.0
          %3227 = vmatpush2.msra.mxu0 0.0
          %3228 = vmatprep.subr.mxu0 0.0
          %3229 = vmatpush2.msra.mxu0 0.0
          %3230 = vmatprep.subr.mxu0 0.0
          %3231 = vmatpush2.msra.mxu0 0.0
          %3232 = vmatprep.subr.mxu0 0.0
          %3233 = vmatpush2.msra.mxu0 0.0
          %3234 = vmatprep.subr.mxu0 0.0
          %3235 = vmatpush2.msra.mxu0 0.0
          %3236 = vmatprep.subr.mxu0 0.0
          %3237 = vmatpush2.msra.mxu0 0.0
          %3238 = vmatprep.subr.mxu0 0.0
          %3239 = vmatpush2.msra.mxu0 0.0
          %3240 = vmatprep.subr.mxu0 0.0
          %3241 = vmatpush2.msra.mxu0 0.0
          %3242 = vmatprep.subr.mxu0 0.0
          %3243 = vmatpush2.msra.mxu0 0.0
          %3244 = vmatprep.subr.mxu0 0.0
          %3245 = vmatpush2.msra.mxu0 0.0
          %3246 = vmatprep.subr.mxu0 0.0
          %3247 = vmatpush2.msra.mxu0 0.0
          %3248 = vmatprep.subr.mxu0 0.0
          %3249 = vmatpush2.msra.mxu0 0.0
          %3250 = vmatprep.mubr.f32.mxu0 0.0
          %3251 = vmatmul.mubr.f32.gmra.mxu0 %v3151
          %v3252 = vpop.f32.mrf.mxu0
          %v3253 = vadd.f32 0.0, %v3252
          %v3254 = vpop.f32.mrf.mxu0
          %v3255 = vadd.f32 0.0, %v3254
          %3256 = vmatprep.mubr.f32.mxu0 0.0
          %3257 = vmatmul.mubr.f32.gmra.mxu0 %v3154
          %v3258 = vpop.f32.mrf.mxu0
          %v3259 = vadd.f32 0.0, %v3258
          %v3260 = vpop.f32.mrf.mxu0
          %v3261 = vadd.f32 0.0, %v3260
          %3262 = vmatprep.mubr.f32.mxu0 0.0
          %3263 = vmatmul.mubr.f32.gmra.mxu0 %v3157
          %v3264 = vpop.f32.mrf.mxu0
          %v3265 = vadd.f32 0.0, %v3264
          %v3266 = vpop.f32.mrf.mxu0
          %v3267 = vadd.f32 0.0, %v3266
          %3268 = vmatprep.mubr.f32.mxu0 0.0
          %3269 = vmatmul.mubr.f32.gmra.mxu0 %v3160
          %v3270 = vpop.f32.mrf.mxu0
          %v3271 = vadd.f32 0.0, %v3270
          %v3272 = vpop.f32.mrf.mxu0
          %v3273 = vadd.f32 0.0, %v3272
          %3274 = vmatprep.mubr.f32.mxu0 0.0
          %3275 = vmatmul.mubr.f32.gmra.mxu0 %v3163
          %v3276 = vpop.f32.mrf.mxu0
          %v3277 = vadd.f32 0.0, %v3276
          %v3278 = vpop.f32.mrf.mxu0
          %v3279 = vadd.f32 0.0, %v3278
          %3280 = vmatprep.mubr.f32.mxu0 0.0
          %3281 = vmatmul.mubr.f32.gmra.mxu0 %v3166
          %v3282 = vpop.f32.mrf.mxu0
          %v3283 = vadd.f32 0.0, %v3282
          %v3284 = vpop.f32.mrf.mxu0
          %v3285 = vadd.f32 0.0, %v3284
          %3286 = vmatprep.mubr.f32.mxu0 0.0
          %3287 = vmatmul.mubr.f32.gmra.mxu0 %v3169
          %v3288 = vpop.f32.mrf.mxu0
          %v3289 = vadd.f32 0.0, %v3288
          %v3290 = vpop.f32.mrf.mxu0
          %v3291 = vadd.f32 0.0, %v3290
          %3292 = vmatprep.mubr.f32.mxu0 0.0
          %3293 = vmatmul.mubr.f32.gmra.mxu0 %v3172
          %v3294 = vpop.f32.mrf.mxu0
          %v3295 = vadd.f32 0.0, %v3294
          %v3296 = vpop.f32.mrf.mxu0
          %v3297 = vadd.f32 0.0, %v3296
          %3298 = vmatprep.mubr.f32.mxu0 0.0
          %3299 = vmatmul.mubr.f32.gmra.mxu0 %v3175
          %v3300 = vpop.f32.mrf.mxu0
          %v3301 = vadd.f32 0.0, %v3300
          %v3302 = vpop.f32.mrf.mxu0
          %v3303 = vadd.f32 0.0, %v3302
          %3304 = vmatprep.mubr.f32.mxu0 0.0
          %3305 = vmatmul.mubr.f32.gmra.mxu0 %v3178
          %v3306 = vpop.f32.mrf.mxu0
          %v3307 = vadd.f32 0.0, %v3306
          %v3308 = vpop.f32.mrf.mxu0
          %v3309 = vadd.f32 0.0, %v3308
          %3310 = vmatprep.mubr.f32.mxu0 0.0
          %3311 = vmatmul.mubr.f32.gmra.mxu0 %v3181
          %v3312 = vpop.f32.mrf.mxu0
          %v3313 = vadd.f32 0.0, %v3312
          %v3314 = vpop.f32.mrf.mxu0
          %v3315 = vadd.f32 0.0, %v3314
          %3316 = vmatprep.mubr.f32.mxu0 0.0
          %3317 = vmatmul.mubr.f32.gmra.mxu0 %v3184
          %v3318 = vpop.f32.mrf.mxu0
          %v3319 = vadd.f32 0.0, %v3318
          %v3320 = vpop.f32.mrf.mxu0
          %v3321 = vadd.f32 0.0, %v3320
          %3322 = vdwg.mxu0
          %v3323 = vadd.f32 %v3073, %v3253
          %v3324 = vadd.f32 %v3074, %v3255
          %v3325 = vadd.f32 %v3075, %v3259
          %v3326 = vadd.f32 %v3076, %v3261
          %v3327 = vadd.f32 %v3077, %v3265
          %v3328 = vadd.f32 %v3078, %v3267
          %v3329 = vadd.f32 %v3079, %v3271
          %v3330 = vadd.f32 %v3080, %v3273
          %v3331 = vadd.f32 %v3081, %v3277
          %v3332 = vadd.f32 %v3082, %v3279
          %v3333 = vadd.f32 %v3083, %v3283
          %v3334 = vadd.f32 %v3084, %v3285
          %v3335 = vadd.f32 %v3085, %v3289
          %v3336 = vadd.f32 %v3086, %v3291
          %v3337 = vadd.f32 %v3087, %v3295
          %v3338 = vadd.f32 %v3088, %v3297
          %v3339 = vadd.f32 %v3089, %v3301
          %v3340 = vadd.f32 %v3090, %v3303
          %v3341 = vadd.f32 %v3091, %v3307
          %v3342 = vadd.f32 %v3092, %v3309
          %v3343 = vadd.f32 %v3093, %v3313
          %v3344 = vadd.f32 %v3094, %v3315
          %v3345 = vadd.f32 %v3095, %v3319
          %v3346 = vadd.f32 %v3096, %v3321
          %s3347 = scalar_lea.vmem %s3, 672
          %v3348 = vld [vmem:[%s3347] sm:$0xff]
          %v3349 = vld [vmem:[%s3347 + $0x8] sm:$0xff]
          %v3350 = vld [vmem:[%s3347 + $0x10] sm:$0xff]
          %v3351 = vld [vmem:[%s3347 + $0x18] sm:$0xff]
          %v3352 = vld [vmem:[%s3347 + $0x20] sm:$0xff]
          %v3353 = vld [vmem:[%s3347 + $0x28] sm:$0xff]
          %v3354 = vld [vmem:[%s3347 + $0x30] sm:$0xff]
          %v3355 = vld [vmem:[%s3347 + $0x38] sm:$0xff]
          %v3356 = vld [vmem:[%s3347 + $0x40] sm:$0xff]
          %v3357 = vld [vmem:[%s3347 + $0x48] sm:$0xff]
          %v3358 = vld [vmem:[%s3347 + $0x50] sm:$0xff]
          %v3359 = vld [vmem:[%s3347 + $0x58] sm:$0xff]
          %3360 = vrot.lane.b32.xlu0 %v1686, 95
          %v3361 = vpop.permute.xlu0 %3360
          %3362 = vrot.lane.b32.xlu0 %v1687, 95
          %v3363 = vpop.permute.xlu0 %3362
          %3364 = vrot.lane.b32.xlu0 %v1688, 95
          %v3365 = vpop.permute.xlu0 %3364
          %3366 = vrot.lane.b32.xlu0 %v1689, 95
          %v3367 = vpop.permute.xlu0 %3366
          %3368 = vrot.lane.b32.xlu0 %v1690, 95
          %v3369 = vpop.permute.xlu0 %3368
          %3370 = vrot.lane.b32.xlu0 %v1691, 95
          %v3371 = vpop.permute.xlu0 %3370
          %3372 = vrot.lane.b32.xlu0 %v1692, 95
          %v3373 = vpop.permute.xlu0 %3372
          %3374 = vrot.lane.b32.xlu0 %v1693, 95
          %v3375 = vpop.permute.xlu0 %3374
          %3376 = vrot.lane.b32.xlu0 %v1694, 95
          %v3377 = vpop.permute.xlu0 %3376
          %3378 = vrot.lane.b32.xlu0 %v1695, 95
          %v3379 = vpop.permute.xlu0 %3378
          %3380 = vrot.lane.b32.xlu0 %v1696, 95
          %v3381 = vpop.permute.xlu0 %3380
          %3382 = vrot.lane.b32.xlu0 %v1697, 95
          %v3383 = vpop.permute.xlu0 %3382
          %v3384 = vsel %vm1334, %v3361, %v3363
          %v3385 = vsel %vm1334, %v3363, %v3365
          %v3386 = vsel %vm1334, %v3367, %v3369
          %v3387 = vsel %vm1334, %v3369, %v3371
          %v3388 = vsel %vm1334, %v3373, %v3375
          %v3389 = vsel %vm1334, %v3375, %v3377
          %v3390 = vsel %vm1334, %v3379, %v3381
          %v3391 = vsel %vm1334, %v3381, %v3383
          %v3401 = vsel %vm1750, %v3348, 0
          %v3404 = vsel %vm1750, %v3349, 0
          %v3407 = vsel %vm1750, %v3350, 0
          %v3410 = vsel %vm1750, %v3351, 0
          %v3413 = vsel %vm1750, %v3352, 0
          %v3416 = vsel %vm1750, %v3353, 0
          %v3419 = vsel %vm1750, %v3354, 0
          %v3422 = vsel %vm1750, %v3355, 0
          %v3425 = vsel %vm1750, %v3356, 0
          %v3428 = vsel %vm1750, %v3357, 0
          %v3431 = vsel %vm1750, %v3358, 0
          %v3434 = vsel %vm1750, %v3359, 0
          %3436 = vmatprep.subr.mxu0 0.0
          %3437 = vmatpush1.msra.mxu0 0.0
          %3438 = vmatprep.subr.mxu0 0.0
          %3439 = vmatpush1.msra.mxu0 0.0
          %3440 = vmatprep.subr.mxu0 0.0
          %3441 = vmatpush1.msra.mxu0 0.0
          %3442 = vmatprep.subr.mxu0 0.0
          %3443 = vmatpush1.msra.mxu0 0.0
          %3444 = vmatprep.subr.mxu0 0.0
          %3445 = vmatpush1.msra.mxu0 0.0
          %3446 = vmatprep.subr.mxu0 0.0
          %3447 = vmatpush1.msra.mxu0 0.0
          %3448 = vmatprep.subr.mxu0 0.0
          %3449 = vmatpush1.msra.mxu0 0.0
          %3450 = vmatprep.subr.mxu0 0.0
          %3451 = vmatpush1.msra.mxu0 0.0
          %3452 = vmatprep.subr.mxu0 0.0
          %3453 = vmatpush1.msra.mxu0 0.0
          %3454 = vmatprep.subr.mxu0 0.0
          %3455 = vmatpush1.msra.mxu0 0.0
          %3456 = vmatprep.subr.mxu0 0.0
          %3457 = vmatpush1.msra.mxu0 0.0
          %3458 = vmatprep.subr.mxu0 0.0
          %3459 = vmatpush1.msra.mxu0 0.0
          %3460 = vmatprep.subr.mxu0 %v3391
          %3461 = vmatpush1.msra.mxu0 %v3390
          %3462 = vmatprep.subr.mxu0 %v3389
          %3463 = vmatpush1.msra.mxu0 %v3388
          %3464 = vmatprep.subr.mxu0 %v3387
          %3465 = vmatpush1.msra.mxu0 %v3386
          %3466 = vmatprep.subr.mxu0 %v3385
          %3467 = vmatpush1.msra.mxu0 %v3384
          %3468 = vmatprep.subr.mxu0 0.0
          %3469 = vmatpush2.msra.mxu0 0.0
          %3470 = vmatprep.subr.mxu0 0.0
          %3471 = vmatpush2.msra.mxu0 0.0
          %3472 = vmatprep.subr.mxu0 0.0
          %3473 = vmatpush2.msra.mxu0 0.0
          %3474 = vmatprep.subr.mxu0 0.0
          %3475 = vmatpush2.msra.mxu0 0.0
          %3476 = vmatprep.subr.mxu0 0.0
          %3477 = vmatpush2.msra.mxu0 0.0
          %3478 = vmatprep.subr.mxu0 0.0
          %3479 = vmatpush2.msra.mxu0 0.0
          %3480 = vmatprep.subr.mxu0 0.0
          %3481 = vmatpush2.msra.mxu0 0.0
          %3482 = vmatprep.subr.mxu0 0.0
          %3483 = vmatpush2.msra.mxu0 0.0
          %3484 = vmatprep.subr.mxu0 0.0
          %3485 = vmatpush2.msra.mxu0 0.0
          %3486 = vmatprep.subr.mxu0 0.0
          %3487 = vmatpush2.msra.mxu0 0.0
          %3488 = vmatprep.subr.mxu0 0.0
          %3489 = vmatpush2.msra.mxu0 0.0
          %3490 = vmatprep.subr.mxu0 0.0
          %3491 = vmatpush2.msra.mxu0 0.0
          %3492 = vmatprep.subr.mxu0 0.0
          %3493 = vmatpush2.msra.mxu0 0.0
          %3494 = vmatprep.subr.mxu0 0.0
          %3495 = vmatpush2.msra.mxu0 0.0
          %3496 = vmatprep.subr.mxu0 0.0
          %3497 = vmatpush2.msra.mxu0 0.0
          %3498 = vmatprep.subr.mxu0 0.0
          %3499 = vmatpush2.msra.mxu0 0.0
          %3500 = vmatprep.mubr.f32.mxu0 0.0
          %3501 = vmatmul.mubr.f32.gmra.mxu0 %v3401
          %v3502 = vpop.f32.mrf.mxu0
          %v3503 = vadd.f32 0.0, %v3502
          %v3504 = vpop.f32.mrf.mxu0
          %v3505 = vadd.f32 0.0, %v3504
          %3506 = vmatprep.mubr.f32.mxu0 0.0
          %3507 = vmatmul.mubr.f32.gmra.mxu0 %v3404
          %v3508 = vpop.f32.mrf.mxu0
          %v3509 = vadd.f32 0.0, %v3508
          %v3510 = vpop.f32.mrf.mxu0
          %v3511 = vadd.f32 0.0, %v3510
          %3512 = vmatprep.mubr.f32.mxu0 0.0
          %3513 = vmatmul.mubr.f32.gmra.mxu0 %v3407
          %v3514 = vpop.f32.mrf.mxu0
          %v3515 = vadd.f32 0.0, %v3514
          %v3516 = vpop.f32.mrf.mxu0
          %v3517 = vadd.f32 0.0, %v3516
          %3518 = vmatprep.mubr.f32.mxu0 0.0
          %3519 = vmatmul.mubr.f32.gmra.mxu0 %v3410
          %v3520 = vpop.f32.mrf.mxu0
          %v3521 = vadd.f32 0.0, %v3520
          %v3522 = vpop.f32.mrf.mxu0
          %v3523 = vadd.f32 0.0, %v3522
          %3524 = vmatprep.mubr.f32.mxu0 0.0
          %3525 = vmatmul.mubr.f32.gmra.mxu0 %v3413
          %v3526 = vpop.f32.mrf.mxu0
          %v3527 = vadd.f32 0.0, %v3526
          %v3528 = vpop.f32.mrf.mxu0
          %v3529 = vadd.f32 0.0, %v3528
          %3530 = vmatprep.mubr.f32.mxu0 0.0
          %3531 = vmatmul.mubr.f32.gmra.mxu0 %v3416
          %v3532 = vpop.f32.mrf.mxu0
          %v3533 = vadd.f32 0.0, %v3532
          %v3534 = vpop.f32.mrf.mxu0
          %v3535 = vadd.f32 0.0, %v3534
          %3536 = vmatprep.mubr.f32.mxu0 0.0
          %3537 = vmatmul.mubr.f32.gmra.mxu0 %v3419
          %v3538 = vpop.f32.mrf.mxu0
          %v3539 = vadd.f32 0.0, %v3538
          %v3540 = vpop.f32.mrf.mxu0
          %v3541 = vadd.f32 0.0, %v3540
          %3542 = vmatprep.mubr.f32.mxu0 0.0
          %3543 = vmatmul.mubr.f32.gmra.mxu0 %v3422
          %v3544 = vpop.f32.mrf.mxu0
          %v3545 = vadd.f32 0.0, %v3544
          %v3546 = vpop.f32.mrf.mxu0
          %v3547 = vadd.f32 0.0, %v3546
          %3548 = vmatprep.mubr.f32.mxu0 0.0
          %3549 = vmatmul.mubr.f32.gmra.mxu0 %v3425
          %v3550 = vpop.f32.mrf.mxu0
          %v3551 = vadd.f32 0.0, %v3550
          %v3552 = vpop.f32.mrf.mxu0
          %v3553 = vadd.f32 0.0, %v3552
          %3554 = vmatprep.mubr.f32.mxu0 0.0
          %3555 = vmatmul.mubr.f32.gmra.mxu0 %v3428
          %v3556 = vpop.f32.mrf.mxu0
          %v3557 = vadd.f32 0.0, %v3556
          %v3558 = vpop.f32.mrf.mxu0
          %v3559 = vadd.f32 0.0, %v3558
          %3560 = vmatprep.mubr.f32.mxu0 0.0
          %3561 = vmatmul.mubr.f32.gmra.mxu0 %v3431
          %v3562 = vpop.f32.mrf.mxu0
          %v3563 = vadd.f32 0.0, %v3562
          %v3564 = vpop.f32.mrf.mxu0
          %v3565 = vadd.f32 0.0, %v3564
          %3566 = vmatprep.mubr.f32.mxu0 0.0
          %3567 = vmatmul.mubr.f32.gmra.mxu0 %v3434
          %v3568 = vpop.f32.mrf.mxu0
          %v3569 = vadd.f32 0.0, %v3568
          %v3570 = vpop.f32.mrf.mxu0
          %v3571 = vadd.f32 0.0, %v3570
          %3572 = vdwg.mxu0
          %v3573 = vadd.f32 %v3323, %v3503
          %v3574 = vadd.f32 %v3324, %v3505
          %v3575 = vadd.f32 %v3325, %v3509
          %v3576 = vadd.f32 %v3326, %v3511
          %v3577 = vadd.f32 %v3327, %v3515
          %v3578 = vadd.f32 %v3328, %v3517
          %v3579 = vadd.f32 %v3329, %v3521
          %v3580 = vadd.f32 %v3330, %v3523
          %v3581 = vadd.f32 %v3331, %v3527
          %v3582 = vadd.f32 %v3332, %v3529
          %v3583 = vadd.f32 %v3333, %v3533
          %v3584 = vadd.f32 %v3334, %v3535
          %v3585 = vadd.f32 %v3335, %v3539
          %v3586 = vadd.f32 %v3336, %v3541
          %v3587 = vadd.f32 %v3337, %v3545
          %v3588 = vadd.f32 %v3338, %v3547
          %v3589 = vadd.f32 %v3339, %v3551
          %v3590 = vadd.f32 %v3340, %v3553
          %v3591 = vadd.f32 %v3341, %v3557
          %v3592 = vadd.f32 %v3342, %v3559
          %v3593 = vadd.f32 %v3343, %v3563
          %v3594 = vadd.f32 %v3344, %v3565
          %v3595 = vadd.f32 %v3345, %v3569
          %v3596 = vadd.f32 %v3346, %v3571
          %s3597 = scalar_lea.vmem %s3, 768
          %v3598 = vld [vmem:[%s3597] sm:$0xff]
          %v3599 = vld [vmem:[%s3597 + $0x8] sm:$0xff]
          %v3600 = vld [vmem:[%s3597 + $0x10] sm:$0xff]
          %v3601 = vld [vmem:[%s3597 + $0x18] sm:$0xff]
          %v3602 = vld [vmem:[%s3597 + $0x20] sm:$0xff]
          %v3603 = vld [vmem:[%s3597 + $0x28] sm:$0xff]
          %v3604 = vld [vmem:[%s3597 + $0x30] sm:$0xff]
          %v3605 = vld [vmem:[%s3597 + $0x38] sm:$0xff]
          %v3606 = vld [vmem:[%s3597 + $0x40] sm:$0xff]
          %v3607 = vld [vmem:[%s3597 + $0x48] sm:$0xff]
          %v3608 = vld [vmem:[%s3597 + $0x50] sm:$0xff]
          %v3609 = vld [vmem:[%s3597 + $0x58] sm:$0xff]
          %3610 = vrot.lane.b32.xlu0 %v1686, 94
          %v3611 = vpop.permute.xlu0 %3610
          %3612 = vrot.lane.b32.xlu0 %v1687, 94
          %v3613 = vpop.permute.xlu0 %3612
          %3614 = vrot.lane.b32.xlu0 %v1688, 94
          %v3615 = vpop.permute.xlu0 %3614
          %3616 = vrot.lane.b32.xlu0 %v1689, 94
          %v3617 = vpop.permute.xlu0 %3616
          %3618 = vrot.lane.b32.xlu0 %v1690, 94
          %v3619 = vpop.permute.xlu0 %3618
          %3620 = vrot.lane.b32.xlu0 %v1691, 94
          %v3621 = vpop.permute.xlu0 %3620
          %3622 = vrot.lane.b32.xlu0 %v1692, 94
          %v3623 = vpop.permute.xlu0 %3622
          %3624 = vrot.lane.b32.xlu0 %v1693, 94
          %v3625 = vpop.permute.xlu0 %3624
          %3626 = vrot.lane.b32.xlu0 %v1694, 94
          %v3627 = vpop.permute.xlu0 %3626
          %3628 = vrot.lane.b32.xlu0 %v1695, 94
          %v3629 = vpop.permute.xlu0 %3628
          %3630 = vrot.lane.b32.xlu0 %v1696, 94
          %v3631 = vpop.permute.xlu0 %3630
          %3632 = vrot.lane.b32.xlu0 %v1697, 94
          %v3633 = vpop.permute.xlu0 %3632
          %v3634 = vsel %vm1479, %v3611, %v3613
          %v3635 = vsel %vm1479, %v3613, %v3615
          %v3636 = vsel %vm1479, %v3617, %v3619
          %v3637 = vsel %vm1479, %v3619, %v3621
          %v3638 = vsel %vm1479, %v3623, %v3625
          %v3639 = vsel %vm1479, %v3625, %v3627
          %v3640 = vsel %vm1479, %v3629, %v3631
          %v3641 = vsel %vm1479, %v3631, %v3633
          %v3651 = vsel %vm1750, %v3598, 0
          %v3654 = vsel %vm1750, %v3599, 0
          %v3657 = vsel %vm1750, %v3600, 0
          %v3660 = vsel %vm1750, %v3601, 0
          %v3663 = vsel %vm1750, %v3602, 0
          %v3666 = vsel %vm1750, %v3603, 0
          %v3669 = vsel %vm1750, %v3604, 0
          %v3672 = vsel %vm1750, %v3605, 0
          %v3675 = vsel %vm1750, %v3606, 0
          %v3678 = vsel %vm1750, %v3607, 0
          %v3681 = vsel %vm1750, %v3608, 0
          %v3684 = vsel %vm1750, %v3609, 0
          %3686 = vmatprep.subr.mxu0 0.0
          %3687 = vmatpush1.msra.mxu0 0.0
          %3688 = vmatprep.subr.mxu0 0.0
          %3689 = vmatpush1.msra.mxu0 0.0
          %3690 = vmatprep.subr.mxu0 0.0
          %3691 = vmatpush1.msra.mxu0 0.0
          %3692 = vmatprep.subr.mxu0 0.0
          %3693 = vmatpush1.msra.mxu0 0.0
          %3694 = vmatprep.subr.mxu0 0.0
          %3695 = vmatpush1.msra.mxu0 0.0
          %3696 = vmatprep.subr.mxu0 0.0
          %3697 = vmatpush1.msra.mxu0 0.0
          %3698 = vmatprep.subr.mxu0 0.0
          %3699 = vmatpush1.msra.mxu0 0.0
          %3700 = vmatprep.subr.mxu0 0.0
          %3701 = vmatpush1.msra.mxu0 0.0
          %3702 = vmatprep.subr.mxu0 0.0
          %3703 = vmatpush1.msra.mxu0 0.0
          %3704 = vmatprep.subr.mxu0 0.0
          %3705 = vmatpush1.msra.mxu0 0.0
          %3706 = vmatprep.subr.mxu0 0.0
          %3707 = vmatpush1.msra.mxu0 0.0
          %3708 = vmatprep.subr.mxu0 0.0
          %3709 = vmatpush1.msra.mxu0 0.0
          %3710 = vmatprep.subr.mxu0 %v3641
          %3711 = vmatpush1.msra.mxu0 %v3640
          %3712 = vmatprep.subr.mxu0 %v3639
          %3713 = vmatpush1.msra.mxu0 %v3638
          %3714 = vmatprep.subr.mxu0 %v3637
          %3715 = vmatpush1.msra.mxu0 %v3636
          %3716 = vmatprep.subr.mxu0 %v3635
          %3717 = vmatpush1.msra.mxu0 %v3634
          %3718 = vmatprep.subr.mxu0 0.0
          %3719 = vmatpush2.msra.mxu0 0.0
          %3720 = vmatprep.subr.mxu0 0.0
          %3721 = vmatpush2.msra.mxu0 0.0
          %3722 = vmatprep.subr.mxu0 0.0
          %3723 = vmatpush2.msra.mxu0 0.0
          %3724 = vmatprep.subr.mxu0 0.0
          %3725 = vmatpush2.msra.mxu0 0.0
          %3726 = vmatprep.subr.mxu0 0.0
          %3727 = vmatpush2.msra.mxu0 0.0
          %3728 = vmatprep.subr.mxu0 0.0
          %3729 = vmatpush2.msra.mxu0 0.0
          %3730 = vmatprep.subr.mxu0 0.0
          %3731 = vmatpush2.msra.mxu0 0.0
          %3732 = vmatprep.subr.mxu0 0.0
          %3733 = vmatpush2.msra.mxu0 0.0
          %3734 = vmatprep.subr.mxu0 0.0
          %3735 = vmatpush2.msra.mxu0 0.0
          %3736 = vmatprep.subr.mxu0 0.0
          %3737 = vmatpush2.msra.mxu0 0.0
          %3738 = vmatprep.subr.mxu0 0.0
          %3739 = vmatpush2.msra.mxu0 0.0
          %3740 = vmatprep.subr.mxu0 0.0
          %3741 = vmatpush2.msra.mxu0 0.0
          %3742 = vmatprep.subr.mxu0 0.0
          %3743 = vmatpush2.msra.mxu0 0.0
          %3744 = vmatprep.subr.mxu0 0.0
          %3745 = vmatpush2.msra.mxu0 0.0
          %3746 = vmatprep.subr.mxu0 0.0
          %3747 = vmatpush2.msra.mxu0 0.0
          %3748 = vmatprep.subr.mxu0 0.0
          %3749 = vmatpush2.msra.mxu0 0.0
          %3750 = vmatprep.mubr.f32.mxu0 0.0
          %3751 = vmatmul.mubr.f32.gmra.mxu0 %v3651
          %v3752 = vpop.f32.mrf.mxu0
          %v3753 = vadd.f32 0.0, %v3752
          %v3754 = vpop.f32.mrf.mxu0
          %v3755 = vadd.f32 0.0, %v3754
          %3756 = vmatprep.mubr.f32.mxu0 0.0
          %3757 = vmatmul.mubr.f32.gmra.mxu0 %v3654
          %v3758 = vpop.f32.mrf.mxu0
          %v3759 = vadd.f32 0.0, %v3758
          %v3760 = vpop.f32.mrf.mxu0
          %v3761 = vadd.f32 0.0, %v3760
          %3762 = vmatprep.mubr.f32.mxu0 0.0
          %3763 = vmatmul.mubr.f32.gmra.mxu0 %v3657
          %v3764 = vpop.f32.mrf.mxu0
          %v3765 = vadd.f32 0.0, %v3764
          %v3766 = vpop.f32.mrf.mxu0
          %v3767 = vadd.f32 0.0, %v3766
          %3768 = vmatprep.mubr.f32.mxu0 0.0
          %3769 = vmatmul.mubr.f32.gmra.mxu0 %v3660
          %v3770 = vpop.f32.mrf.mxu0
          %v3771 = vadd.f32 0.0, %v3770
          %v3772 = vpop.f32.mrf.mxu0
          %v3773 = vadd.f32 0.0, %v3772
          %3774 = vmatprep.mubr.f32.mxu0 0.0
          %3775 = vmatmul.mubr.f32.gmra.mxu0 %v3663
          %v3776 = vpop.f32.mrf.mxu0
          %v3777 = vadd.f32 0.0, %v3776
          %v3778 = vpop.f32.mrf.mxu0
          %v3779 = vadd.f32 0.0, %v3778
          %3780 = vmatprep.mubr.f32.mxu0 0.0
          %3781 = vmatmul.mubr.f32.gmra.mxu0 %v3666
          %v3782 = vpop.f32.mrf.mxu0
          %v3783 = vadd.f32 0.0, %v3782
          %v3784 = vpop.f32.mrf.mxu0
          %v3785 = vadd.f32 0.0, %v3784
          %3786 = vmatprep.mubr.f32.mxu0 0.0
          %3787 = vmatmul.mubr.f32.gmra.mxu0 %v3669
          %v3788 = vpop.f32.mrf.mxu0
          %v3789 = vadd.f32 0.0, %v3788
          %v3790 = vpop.f32.mrf.mxu0
          %v3791 = vadd.f32 0.0, %v3790
          %3792 = vmatprep.mubr.f32.mxu0 0.0
          %3793 = vmatmul.mubr.f32.gmra.mxu0 %v3672
          %v3794 = vpop.f32.mrf.mxu0
          %v3795 = vadd.f32 0.0, %v3794
          %v3796 = vpop.f32.mrf.mxu0
          %v3797 = vadd.f32 0.0, %v3796
          %3798 = vmatprep.mubr.f32.mxu0 0.0
          %3799 = vmatmul.mubr.f32.gmra.mxu0 %v3675
          %v3800 = vpop.f32.mrf.mxu0
          %v3801 = vadd.f32 0.0, %v3800
          %v3802 = vpop.f32.mrf.mxu0
          %v3803 = vadd.f32 0.0, %v3802
          %3804 = vmatprep.mubr.f32.mxu0 0.0
          %3805 = vmatmul.mubr.f32.gmra.mxu0 %v3678
          %v3806 = vpop.f32.mrf.mxu0
          %v3807 = vadd.f32 0.0, %v3806
          %v3808 = vpop.f32.mrf.mxu0
          %v3809 = vadd.f32 0.0, %v3808
          %3810 = vmatprep.mubr.f32.mxu0 0.0
          %3811 = vmatmul.mubr.f32.gmra.mxu0 %v3681
          %v3812 = vpop.f32.mrf.mxu0
          %v3813 = vadd.f32 0.0, %v3812
          %v3814 = vpop.f32.mrf.mxu0
          %v3815 = vadd.f32 0.0, %v3814
          %3816 = vmatprep.mubr.f32.mxu0 0.0
          %3817 = vmatmul.mubr.f32.gmra.mxu0 %v3684
          %v3818 = vpop.f32.mrf.mxu0
          %v3819 = vadd.f32 0.0, %v3818
          %v3820 = vpop.f32.mrf.mxu0
          %v3821 = vadd.f32 0.0, %v3820
          %3822 = vdwg.mxu0
          %v3823 = vadd.f32 %v3573, %v3753
          %v3824 = vadd.f32 %v3574, %v3755
          %v3825 = vadd.f32 %v3575, %v3759
          %v3826 = vadd.f32 %v3576, %v3761
          %v3827 = vadd.f32 %v3577, %v3765
          %v3828 = vadd.f32 %v3578, %v3767
          %v3829 = vadd.f32 %v3579, %v3771
          %v3830 = vadd.f32 %v3580, %v3773
          %v3831 = vadd.f32 %v3581, %v3777
          %v3832 = vadd.f32 %v3582, %v3779
          %v3833 = vadd.f32 %v3583, %v3783
          %v3834 = vadd.f32 %v3584, %v3785
          %v3835 = vadd.f32 %v3585, %v3789
          %v3836 = vadd.f32 %v3586, %v3791
          %v3837 = vadd.f32 %v3587, %v3795
          %v3838 = vadd.f32 %v3588, %v3797
          %v3839 = vadd.f32 %v3589, %v3801
          %v3840 = vadd.f32 %v3590, %v3803
          %v3841 = vadd.f32 %v3591, %v3807
          %v3842 = vadd.f32 %v3592, %v3809
          %v3843 = vadd.f32 %v3593, %v3813
          %v3844 = vadd.f32 %v3594, %v3815
          %v3845 = vadd.f32 %v3595, %v3819
          %v3846 = vadd.f32 %v3596, %v3821
          %v3847 = vld [vmem:[%s4] sm:$0xff]
          %v3848 = vld [vmem:[%s4 + $0x8] sm:$0xff]
          %v3849 = vld [vmem:[%s4 + $0x10] sm:$0xff]
          %v3850 = vld [vmem:[%s4 + $0x18] sm:$0xff]
          %v3851 = vld [vmem:[%s4 + $0x20] sm:$0xff]
          %v3852 = vld [vmem:[%s4 + $0x28] sm:$0xff]
          %v3853 = vld [vmem:[%s4 + $0x30] sm:$0xff]
          %v3854 = vld [vmem:[%s4 + $0x38] sm:$0xff]
          %v3855 = vld [vmem:[%s4 + $0x40] sm:$0xff]
          %v3856 = vld [vmem:[%s4 + $0x48] sm:$0xff]
          %v3857 = vld [vmem:[%s4 + $0x50] sm:$0xff]
          %v3858 = vld [vmem:[%s4 + $0x58] sm:$0xff]
          %3860 = vset.pattern.permute.xlu0 0
          %3861 = vperm.xlu0 %3860, %v3847
          %v3862 = vpop.permute.xlu0 %3861
          %3865 = vset.pattern.permute.xlu0 0
          %3866 = vperm.xlu0 %3865, %v3848
          %v3867 = vpop.permute.xlu0 %3866
          %3870 = vset.pattern.permute.xlu0 0
          %3871 = vperm.xlu0 %3870, %v3849
          %v3872 = vpop.permute.xlu0 %3871
          %3875 = vset.pattern.permute.xlu0 0
          %3876 = vperm.xlu0 %3875, %v3850
          %v3877 = vpop.permute.xlu0 %3876
          %3880 = vset.pattern.permute.xlu0 0
          %3881 = vperm.xlu0 %3880, %v3851
          %v3882 = vpop.permute.xlu0 %3881
          %3885 = vset.pattern.permute.xlu0 0
          %3886 = vperm.xlu0 %3885, %v3852
          %v3887 = vpop.permute.xlu0 %3886
          %3890 = vset.pattern.permute.xlu0 0
          %3891 = vperm.xlu0 %3890, %v3853
          %v3892 = vpop.permute.xlu0 %3891
          %3895 = vset.pattern.permute.xlu0 0
          %3896 = vperm.xlu0 %3895, %v3854
          %v3897 = vpop.permute.xlu0 %3896
          %3900 = vset.pattern.permute.xlu0 0
          %3901 = vperm.xlu0 %3900, %v3855
          %v3902 = vpop.permute.xlu0 %3901
          %3905 = vset.pattern.permute.xlu0 0
          %3906 = vperm.xlu0 %3905, %v3856
          %v3907 = vpop.permute.xlu0 %3906
          %3910 = vset.pattern.permute.xlu0 0
          %3911 = vperm.xlu0 %3910, %v3857
          %v3912 = vpop.permute.xlu0 %3911
          %3915 = vset.pattern.permute.xlu0 0
          %3916 = vperm.xlu0 %3915, %v3858
          %v3917 = vpop.permute.xlu0 %3916
          %v3919 = vadd.f32 %v3823, %v3862
          %v3920 = vadd.f32 %v3824, %v3862
          %v3921 = vadd.f32 %v3825, %v3867
          %v3922 = vadd.f32 %v3826, %v3867
          %v3923 = vadd.f32 %v3827, %v3872
          %v3924 = vadd.f32 %v3828, %v3872
          %v3925 = vadd.f32 %v3829, %v3877
          %v3926 = vadd.f32 %v3830, %v3877
          %v3927 = vadd.f32 %v3831, %v3882
          %v3928 = vadd.f32 %v3832, %v3882
          %v3929 = vadd.f32 %v3833, %v3887
          %v3930 = vadd.f32 %v3834, %v3887
          %v3931 = vadd.f32 %v3835, %v3892
          %v3932 = vadd.f32 %v3836, %v3892
          %v3933 = vadd.f32 %v3837, %v3897
          %v3934 = vadd.f32 %v3838, %v3897
          %v3935 = vadd.f32 %v3839, %v3902
          %v3936 = vadd.f32 %v3840, %v3902
          %v3937 = vadd.f32 %v3841, %v3907
          %v3938 = vadd.f32 %v3842, %v3907
          %v3939 = vadd.f32 %v3843, %v3912
          %v3940 = vadd.f32 %v3844, %v3912
          %v3941 = vadd.f32 %v3845, %v3917
          %v3942 = vadd.f32 %v3846, %v3917
          %v3943 = vmax.f32 %v3919, 0.0
          %v3944 = vmax.f32 %v3920, 0.0
          %v3945 = vmax.f32 %v3921, 0.0
          %v3946 = vmax.f32 %v3922, 0.0
          %v3947 = vmax.f32 %v3923, 0.0
          %v3948 = vmax.f32 %v3924, 0.0
          %v3949 = vmax.f32 %v3925, 0.0
          %v3950 = vmax.f32 %v3926, 0.0
          %v3951 = vmax.f32 %v3927, 0.0
          %v3952 = vmax.f32 %v3928, 0.0
          %v3953 = vmax.f32 %v3929, 0.0
          %v3954 = vmax.f32 %v3930, 0.0
          %v3955 = vmax.f32 %v3931, 0.0
          %v3956 = vmax.f32 %v3932, 0.0
          %v3957 = vmax.f32 %v3933, 0.0
          %v3958 = vmax.f32 %v3934, 0.0
          %v3959 = vmax.f32 %v3935, 0.0
          %v3960 = vmax.f32 %v3936, 0.0
          %v3961 = vmax.f32 %v3937, 0.0
          %v3962 = vmax.f32 %v3938, 0.0
          %v3963 = vmax.f32 %v3939, 0.0
          %v3964 = vmax.f32 %v3940, 0.0
          %v3965 = vmax.f32 %v3941, 0.0
          %v3966 = vmax.f32 %v3942, 0.0
          %3967 = vst [vmem:[#allocation3] sm:$0xff] %v3943
          %3968 = vst [vmem:[#allocation3 + $0x8] sm:$0xff] %v3944
          %s3969 = scalar_lea.vmem [#allocation3], 16
          %3970 = vst [vmem:[%s3969] sm:$0xff] %v3945
          %3971 = vst [vmem:[%s3969 + $0x8] sm:$0xff] %v3946
          %s3972 = scalar_lea.vmem [#allocation3], 32
          %3973 = vst [vmem:[%s3972] sm:$0xff] %v3947
          %3974 = vst [vmem:[%s3972 + $0x8] sm:$0xff] %v3948
          %s3975 = scalar_lea.vmem [#allocation3], 48
          %3976 = vst [vmem:[%s3975] sm:$0xff] %v3949
          %3977 = vst [vmem:[%s3975 + $0x8] sm:$0xff] %v3950
          %s3978 = scalar_lea.vmem [#allocation3], 64
          %3979 = vst [vmem:[%s3978] sm:$0xff] %v3951
          %3980 = vst [vmem:[%s3978 + $0x8] sm:$0xff] %v3952
          %s3981 = scalar_lea.vmem [#allocation3], 80
          %3982 = vst [vmem:[%s3981] sm:$0xff] %v3953
          %3983 = vst [vmem:[%s3981 + $0x8] sm:$0xff] %v3954
          %s3984 = scalar_lea.vmem [#allocation3], 96
          %3985 = vst [vmem:[%s3984] sm:$0xff] %v3955
          %3986 = vst [vmem:[%s3984 + $0x8] sm:$0xff] %v3956
          %s3987 = scalar_lea.vmem [#allocation3], 112
          %3988 = vst [vmem:[%s3987] sm:$0xff] %v3957
          %3989 = vst [vmem:[%s3987 + $0x8] sm:$0xff] %v3958
          %s3990 = scalar_lea.vmem [#allocation3], 128
          %3991 = vst [vmem:[%s3990] sm:$0xff] %v3959
          %3992 = vst [vmem:[%s3990 + $0x8] sm:$0xff] %v3960
          %s3993 = scalar_lea.vmem [#allocation3], 144
          %3994 = vst [vmem:[%s3993] sm:$0xff] %v3961
          %3995 = vst [vmem:[%s3993 + $0x8] sm:$0xff] %v3962
          %s3996 = scalar_lea.vmem [#allocation3], 160
          %3997 = vst [vmem:[%s3996] sm:$0xff] %v3963
          %3998 = vst [vmem:[%s3996 + $0x8] sm:$0xff] %v3964
          %s3999 = scalar_lea.vmem [#allocation3], 176
          %4000 = vst [vmem:[%s3999] sm:$0xff] %v3965
          %4001 = vst [vmem:[%s3999 + $0x8] sm:$0xff] %v3966
          %4002 = vst.msk [vmem:[#allocation4] sm:$0xff] %vm1750, 0.0
        $region64: #{tpu_custom_call.1} parent=47 // pred_fallthru
          _
        %s4003 = smul.u32 %s23, 2
        %s4004 = smul.addr %s4003, 8
        %s4005 = scalar_lea.vmem [#allocation3], %s4004
        %v4006 = vld [vmem:[%s4005] sm:$0xff]
        %v4007 = vld [vmem:[%s4005 + $0x8] sm:$0xff]
        %vm4008 = vcmp.ge.f32.partialorder %v4006, -2.2
        %vm4009 = vcmp.ge.f32.partialorder %v4007, -2.2
        %v4010 = vsel %vm4008, 1, 0
        %v4011 = vsel %vm4009, 1, 0
        %v4012 = vcvt.s32.f32 %v4010
        %v4013 = vcvt.s32.f32 %v4011
        %vm4014 = vcmp.ge.f32.partialorder %v4006, -1.8
        %vm4015 = vcmp.ge.f32.partialorder %v4007, -1.8
        %v4016 = vsel %vm4014, 1, 0
        %v4017 = vsel %vm4015, 1, 0
        %v4018 = vcvt.s32.f32 %v4016
        %v4019 = vcvt.s32.f32 %v4017
        %vm4020 = vcmp.ge.f32.partialorder %v4006, -1.4
        %vm4021 = vcmp.ge.f32.partialorder %v4007, -1.4
        %v4022 = vsel %vm4020, 1, 0
        %v4023 = vsel %vm4021, 1, 0
        %v4024 = vcvt.s32.f32 %v4022
        %v4025 = vcvt.s32.f32 %v4023
        %vm4026 = vcmp.ge.f32.partialorder %v4006, -1.0
        %vm4027 = vcmp.ge.f32.partialorder %v4007, -1.0
        %v4028 = vsel %vm4026, 1, 0
        %v4029 = vsel %vm4027, 1, 0
        %v4030 = vcvt.s32.f32 %v4028
        %v4031 = vcvt.s32.f32 %v4029
        %vm4032 = vcmp.ge.f32.partialorder %v4006, -0.6
        %vm4033 = vcmp.ge.f32.partialorder %v4007, -0.6
        %v4034 = vsel %vm4032, 1, 0
        %v4035 = vsel %vm4033, 1, 0
        %v4036 = vcvt.s32.f32 %v4034
        %v4037 = vcvt.s32.f32 %v4035
        %vm4038 = vcmp.ge.f32.partialorder %v4006, -0.2
        %vm4039 = vcmp.ge.f32.partialorder %v4007, -0.2
        %v4040 = vsel %vm4038, 1, 0
        %v4041 = vsel %vm4039, 1, 0
        %v4042 = vcvt.s32.f32 %v4040
        %v4043 = vcvt.s32.f32 %v4041
        %vm4044 = vcmp.ge.f32.partialorder %v4006, 0.2
        %vm4045 = vcmp.ge.f32.partialorder %v4007, 0.2
        %v4046 = vsel %vm4044, 1, 0
        %v4047 = vsel %vm4045, 1, 0
        %v4048 = vcvt.s32.f32 %v4046
        %v4049 = vcvt.s32.f32 %v4047
        %vm4050 = vcmp.ge.f32.partialorder %v4006, 0.6
        %vm4051 = vcmp.ge.f32.partialorder %v4007, 0.6
        %v4052 = vsel %vm4050, 1, 0
        %v4053 = vsel %vm4051, 1, 0
        %v4054 = vcvt.s32.f32 %v4052
        %v4055 = vcvt.s32.f32 %v4053
        %vm4056 = vcmp.ge.f32.partialorder %v4006, 1.0
        %vm4057 = vcmp.ge.f32.partialorder %v4007, 1.0
        %v4058 = vsel %vm4056, 1, 0
        %v4059 = vsel %vm4057, 1, 0
        %v4060 = vcvt.s32.f32 %v4058
        %v4061 = vcvt.s32.f32 %v4059
        %vm4062 = vcmp.ge.f32.partialorder %v4006, 1.4
        %vm4063 = vcmp.ge.f32.partialorder %v4007, 1.4
        %v4064 = vsel %vm4062, 1, 0
        %v4065 = vsel %vm4063, 1, 0
        %v4066 = vcvt.s32.f32 %v4064
        %v4067 = vcvt.s32.f32 %v4065
        %vm4068 = vcmp.ge.f32.partialorder %v4006, 1.8
        %vm4069 = vcmp.ge.f32.partialorder %v4007, 1.8
        %v4070 = vsel %vm4068, 1, 0
        %v4071 = vsel %vm4069, 1, 0
        %v4072 = vcvt.s32.f32 %v4070
        %v4073 = vcvt.s32.f32 %v4071
        %vm4074 = vcmp.ge.f32.partialorder %v4006, 2.2
        %vm4075 = vcmp.ge.f32.partialorder %v4007, 2.2
        %v4076 = vsel %vm4074, 1, 0
        %v4077 = vsel %vm4075, 1, 0
        %v4078 = vcvt.s32.f32 %v4076
        %v4079 = vcvt.s32.f32 %v4077
        %v4080 = vsub.f32 %v4012, %v4018
        %v4081 = vsub.f32 %v4013, %v4019
        %v4082 = vsub.f32 %v4018, %v4024
        %v4083 = vsub.f32 %v4019, %v4025
        %v4084 = vsub.f32 %v4024, %v4030
        %v4085 = vsub.f32 %v4025, %v4031
        %v4086 = vsub.f32 %v4030, %v4036
        %v4087 = vsub.f32 %v4031, %v4037
        %v4088 = vsub.f32 %v4036, %v4042
        %v4089 = vsub.f32 %v4037, %v4043
        %v4090 = vsub.f32 %v4042, %v4048
        %v4091 = vsub.f32 %v4043, %v4049
        %v4092 = vsub.f32 %v4048, %v4054
        %v4093 = vsub.f32 %v4049, %v4055
        %v4094 = vsub.f32 %v4054, %v4060
        %v4095 = vsub.f32 %v4055, %v4061
        %v4096 = vsub.f32 %v4060, %v4066
        %v4097 = vsub.f32 %v4061, %v4067
        %v4098 = vsub.f32 %v4066, %v4072
        %v4099 = vsub.f32 %v4067, %v4073
        %v4100 = vsub.f32 %v4072, %v4078
        %v4101 = vsub.f32 %v4073, %v4079
        %v4102 = vmul.f32 %v4006, 2.5
        %v4103 = vmul.f32 %v4007, 2.5
        %v4104 = vsub.f32 %v4102, -5.5
        %v4105 = vsub.f32 %v4103, -5.5
        %v4106 = vmul.f32 %v4104, %v4080
        %v4107 = vmul.f32 %v4105, %v4081
        %v4108 = vsub.f32 -3.5, %v4102
        %v4109 = vsub.f32 -3.5, %v4103
        %v4110 = vmul.f32 %v4108, %v4082
        %v4111 = vmul.f32 %v4109, %v4083
        %v4112 = vadd.f32 %v4106, %v4110
        %v4113 = vadd.f32 %v4107, %v4111
        %v4114 = vsub.f32 %v4102, -4.5
        %v4115 = vsub.f32 %v4103, -4.5
        %v4116 = vmul.f32 %v4114, %v4082
        %v4117 = vmul.f32 %v4115, %v4083
        %v4118 = vsub.f32 -2.5, %v4102
        %v4119 = vsub.f32 -2.5, %v4103
        %v4120 = vmul.f32 %v4118, %v4084
        %v4121 = vmul.f32 %v4119, %v4085
        %v4122 = vadd.f32 %v4116, %v4120
        %v4123 = vadd.f32 %v4117, %v4121
        %v4124 = vsub.f32 %v4102, -3.5
        %v4125 = vsub.f32 %v4103, -3.5
        %v4126 = vmul.f32 %v4124, %v4084
        %v4127 = vmul.f32 %v4125, %v4085
        %v4128 = vsub.f32 -1.5, %v4102
        %v4129 = vsub.f32 -1.5, %v4103
        %v4130 = vmul.f32 %v4128, %v4086
        %v4131 = vmul.f32 %v4129, %v4087
        %v4132 = vadd.f32 %v4126, %v4130
        %v4133 = vadd.f32 %v4127, %v4131
        %v4134 = vsub.f32 %v4102, -2.5
        %v4135 = vsub.f32 %v4103, -2.5
        %v4136 = vmul.f32 %v4134, %v4086
        %v4137 = vmul.f32 %v4135, %v4087
        %v4138 = vsub.f32 -0.5, %v4102
        %v4139 = vsub.f32 -0.5, %v4103
        %v4140 = vmul.f32 %v4138, %v4088
        %v4141 = vmul.f32 %v4139, %v4089
        %v4142 = vadd.f32 %v4136, %v4140
        %v4143 = vadd.f32 %v4137, %v4141
        %v4144 = vsub.f32 %v4102, -1.5
        %v4145 = vsub.f32 %v4103, -1.5
        %v4146 = vmul.f32 %v4144, %v4088
        %v4147 = vmul.f32 %v4145, %v4089
        %v4148 = vsub.f32 0.5, %v4102
        %v4149 = vsub.f32 0.5, %v4103
        %v4150 = vmul.f32 %v4148, %v4090
        %v4151 = vmul.f32 %v4149, %v4091
        %v4152 = vadd.f32 %v4146, %v4150
        %v4153 = vadd.f32 %v4147, %v4151
        %v4154 = vsub.f32 %v4102, -0.5
        %v4155 = vsub.f32 %v4103, -0.5
        %v4156 = vmul.f32 %v4154, %v4090
        %v4157 = vmul.f32 %v4155, %v4091
        %v4158 = vsub.f32 1.5, %v4102
        %v4159 = vsub.f32 1.5, %v4103
        %v4160 = vmul.f32 %v4158, %v4092
        %v4161 = vmul.f32 %v4159, %v4093
        %v4162 = vadd.f32 %v4156, %v4160
        %v4163 = vadd.f32 %v4157, %v4161
        %v4164 = vsub.f32 %v4102, 0.5
        %v4165 = vsub.f32 %v4103, 0.5
        %v4166 = vmul.f32 %v4164, %v4092
        %v4167 = vmul.f32 %v4165, %v4093
        %v4168 = vsub.f32 2.5, %v4102
        %v4169 = vsub.f32 2.5, %v4103
        %v4170 = vmul.f32 %v4168, %v4094
        %v4171 = vmul.f32 %v4169, %v4095
        %v4172 = vadd.f32 %v4166, %v4170
        %v4173 = vadd.f32 %v4167, %v4171
        %v4174 = vsub.f32 %v4102, 1.5
        %v4175 = vsub.f32 %v4103, 1.5
        %v4176 = vmul.f32 %v4174, %v4094
        %v4177 = vmul.f32 %v4175, %v4095
        %v4178 = vsub.f32 3.5, %v4102
        %v4179 = vsub.f32 3.5, %v4103
        %v4180 = vmul.f32 %v4178, %v4096
        %v4181 = vmul.f32 %v4179, %v4097
        %v4182 = vadd.f32 %v4176, %v4180
        %v4183 = vadd.f32 %v4177, %v4181
        %v4184 = vsub.f32 %v4102, 2.5
        %v4185 = vsub.f32 %v4103, 2.5
        %v4186 = vmul.f32 %v4184, %v4096
        %v4187 = vmul.f32 %v4185, %v4097
        %v4188 = vsub.f32 4.5, %v4102
        %v4189 = vsub.f32 4.5, %v4103
        %v4190 = vmul.f32 %v4188, %v4098
        %v4191 = vmul.f32 %v4189, %v4099
        %v4192 = vadd.f32 %v4186, %v4190
        %v4193 = vadd.f32 %v4187, %v4191
        %v4194 = vsub.f32 %v4102, 3.5
        %v4195 = vsub.f32 %v4103, 3.5
        %v4196 = vmul.f32 %v4194, %v4098
        %v4197 = vmul.f32 %v4195, %v4099
        %v4198 = vsub.f32 5.5, %v4102
        %v4199 = vsub.f32 5.5, %v4103
        %v4200 = vmul.f32 %v4198, %v4100
        %v4201 = vmul.f32 %v4199, %v4101
        %v4202 = vadd.f32 %v4196, %v4200
        %v4203 = vadd.f32 %v4197, %v4201
        %v4204 = vmul.f32 %v4006, 1.25
        %v4205 = vmul.f32 %v4007, 1.25
        %v4206 = vsub.f32 %v4204, -2.75
        %v4207 = vsub.f32 %v4205, -2.75
        %v4208 = vmul.f32 %v4206, %v4112
        %v4209 = vmul.f32 %v4207, %v4113
        %v4210 = vsub.f32 -1.25, %v4204
        %v4211 = vsub.f32 -1.25, %v4205
        %v4212 = vmul.f32 %v4210, %v4122
        %v4213 = vmul.f32 %v4211, %v4123
        %v4214 = vadd.f32 %v4208, %v4212
        %v4215 = vadd.f32 %v4209, %v4213
        %v4216 = vsub.f32 %v4204, -2.25
        %v4217 = vsub.f32 %v4205, -2.25
        %v4218 = vmul.f32 %v4216, %v4122
        %v4219 = vmul.f32 %v4217, %v4123
        %v4220 = vsub.f32 -0.75, %v4204
        %v4221 = vsub.f32 -0.75, %v4205
        %v4222 = vmul.f32 %v4220, %v4132
        %v4223 = vmul.f32 %v4221, %v4133
        %v4224 = vadd.f32 %v4218, %v4222
        %v4225 = vadd.f32 %v4219, %v4223
        %v4226 = vsub.f32 %v4204, -1.75
        %v4227 = vsub.f32 %v4205, -1.75
        %v4228 = vmul.f32 %v4226, %v4132
        %v4229 = vmul.f32 %v4227, %v4133
        %v4230 = vsub.f32 -0.25, %v4204
        %v4231 = vsub.f32 -0.25, %v4205
        %v4232 = vmul.f32 %v4230, %v4142
        %v4233 = vmul.f32 %v4231, %v4143
        %v4234 = vadd.f32 %v4228, %v4232
        %v4235 = vadd.f32 %v4229, %v4233
        %v4236 = vsub.f32 %v4204, -1.25
        %v4237 = vsub.f32 %v4205, -1.25
        %v4238 = vmul.f32 %v4236, %v4142
        %v4239 = vmul.f32 %v4237, %v4143
        %v4240 = vsub.f32 0.25, %v4204
        %v4241 = vsub.f32 0.25, %v4205
        %v4242 = vmul.f32 %v4240, %v4152
        %v4243 = vmul.f32 %v4241, %v4153
        %v4244 = vadd.f32 %v4238, %v4242
        %v4245 = vadd.f32 %v4239, %v4243
        %v4246 = vsub.f32 %v4204, -0.75
        %v4247 = vsub.f32 %v4205, -0.75
        %v4248 = vmul.f32 %v4246, %v4152
        %v4249 = vmul.f32 %v4247, %v4153
        %v4250 = vsub.f32 0.75, %v4204
        %v4251 = vsub.f32 0.75, %v4205
        %v4252 = vmul.f32 %v4250, %v4162
        %v4253 = vmul.f32 %v4251, %v4163
        %v4254 = vadd.f32 %v4248, %v4252
        %v4255 = vadd.f32 %v4249, %v4253
        %v4256 = vsub.f32 %v4204, -0.25
        %v4257 = vsub.f32 %v4205, -0.25
        %v4258 = vmul.f32 %v4256, %v4162
        %v4259 = vmul.f32 %v4257, %v4163
        %v4260 = vsub.f32 1.25, %v4204
        %v4261 = vsub.f32 1.25, %v4205
        %v4262 = vmul.f32 %v4260, %v4172
        %v4263 = vmul.f32 %v4261, %v4173
        %v4264 = vadd.f32 %v4258, %v4262
        %v4265 = vadd.f32 %v4259, %v4263
        %v4266 = vsub.f32 %v4204, 0.25
        %v4267 = vsub.f32 %v4205, 0.25
        %v4268 = vmul.f32 %v4266, %v4172
        %v4269 = vmul.f32 %v4267, %v4173
        %v4270 = vsub.f32 1.75, %v4204
        %v4271 = vsub.f32 1.75, %v4205
        %v4272 = vmul.f32 %v4270, %v4182
        %v4273 = vmul.f32 %v4271, %v4183
        %v4274 = vadd.f32 %v4268, %v4272
        %v4275 = vadd.f32 %v4269, %v4273
        %v4276 = vsub.f32 %v4204, 0.75
        %v4277 = vsub.f32 %v4205, 0.75
        %v4278 = vmul.f32 %v4276, %v4182
        %v4279 = vmul.f32 %v4277, %v4183
        %v4280 = vsub.f32 2.25, %v4204
        %v4281 = vsub.f32 2.25, %v4205
        %v4282 = vmul.f32 %v4280, %v4192
        %v4283 = vmul.f32 %v4281, %v4193
        %v4284 = vadd.f32 %v4278, %v4282
        %v4285 = vadd.f32 %v4279, %v4283
        %v4286 = vsub.f32 %v4204, 1.25
        %v4287 = vsub.f32 %v4205, 1.25
        %v4288 = vmul.f32 %v4286, %v4192
        %v4289 = vmul.f32 %v4287, %v4193
        %v4290 = vsub.f32 2.75, %v4204
        %v4291 = vsub.f32 2.75, %v4205
        %v4292 = vmul.f32 %v4290, %v4202
        %v4293 = vmul.f32 %v4291, %v4203
        %v4294 = vadd.f32 %v4288, %v4292
        %v4295 = vadd.f32 %v4289, %v4293
        %v4296 = vmul.f32 %v4006, 0.8333333
        %v4297 = vmul.f32 %v4007, 0.8333333
        %v4298 = vsub.f32 %v4296, -1.8333334
        %v4299 = vsub.f32 %v4297, -1.8333334
        %v4300 = vmul.f32 %v4298, %v4214
        %v4301 = vmul.f32 %v4299, %v4215
        %v4302 = vsub.f32 -0.5, %v4296
        %v4303 = vsub.f32 -0.5, %v4297
        %v4304 = vmul.f32 %v4302, %v4224
        %v4305 = vmul.f32 %v4303, %v4225
        %v4306 = vadd.f32 %v4300, %v4304
        %v4307 = vadd.f32 %v4301, %v4305
        %v4308 = vsub.f32 %v4296, -1.5
        %v4309 = vsub.f32 %v4297, -1.5
        %v4310 = vmul.f32 %v4308, %v4224
        %v4311 = vmul.f32 %v4309, %v4225
        %v4312 = vsub.f32 -0.16666667, %v4296
        %v4313 = vsub.f32 -0.16666667, %v4297
        %v4314 = vmul.f32 %v4312, %v4234
        %v4315 = vmul.f32 %v4313, %v4235
        %v4316 = vadd.f32 %v4310, %v4314
        %v4317 = vadd.f32 %v4311, %v4315
        %v4318 = vsub.f32 %v4296, -1.1666666
        %v4319 = vsub.f32 %v4297, -1.1666666
        %v4320 = vmul.f32 %v4318, %v4234
        %v4321 = vmul.f32 %v4319, %v4235
        %v4322 = vsub.f32 0.16666667, %v4296
        %v4323 = vsub.f32 0.16666667, %v4297
        %v4324 = vmul.f32 %v4322, %v4244
        %v4325 = vmul.f32 %v4323, %v4245
        %v4326 = vadd.f32 %v4320, %v4324
        %v4327 = vadd.f32 %v4321, %v4325
        %v4328 = vsub.f32 %v4296, -0.8333333
        %v4329 = vsub.f32 %v4297, -0.8333333
        %v4330 = vmul.f32 %v4328, %v4244
        %v4331 = vmul.f32 %v4329, %v4245
        %v4332 = vsub.f32 0.5, %v4296
        %v4333 = vsub.f32 0.5, %v4297
        %v4334 = vmul.f32 %v4332, %v4254
        %v4335 = vmul.f32 %v4333, %v4255
        %v4336 = vadd.f32 %v4330, %v4334
        %v4337 = vadd.f32 %v4331, %v4335
        %v4338 = vsub.f32 %v4296, -0.5
        %v4339 = vsub.f32 %v4297, -0.5
        %v4340 = vmul.f32 %v4338, %v4254
        %v4341 = vmul.f32 %v4339, %v4255
        %v4342 = vsub.f32 0.8333333, %v4296
        %v4343 = vsub.f32 0.8333333, %v4297
        %v4344 = vmul.f32 %v4342, %v4264
        %v4345 = vmul.f32 %v4343, %v4265
        %v4346 = vadd.f32 %v4340, %v4344
        %v4347 = vadd.f32 %v4341, %v4345
        %v4348 = vsub.f32 %v4296, -0.16666667
        %v4349 = vsub.f32 %v4297, -0.16666667
        %v4350 = vmul.f32 %v4348, %v4264
        %v4351 = vmul.f32 %v4349, %v4265
        %v4352 = vsub.f32 1.1666666, %v4296
        %v4353 = vsub.f32 1.1666666, %v4297
        %v4354 = vmul.f32 %v4352, %v4274
        %v4355 = vmul.f32 %v4353, %v4275
        %v4356 = vadd.f32 %v4350, %v4354
        %v4357 = vadd.f32 %v4351, %v4355
        %v4358 = vsub.f32 %v4296, 0.16666667
        %v4359 = vsub.f32 %v4297, 0.16666667
        %v4360 = vmul.f32 %v4358, %v4274
        %v4361 = vmul.f32 %v4359, %v4275
        %v4362 = vsub.f32 1.5, %v4296
        %v4363 = vsub.f32 1.5, %v4297
        %v4364 = vmul.f32 %v4362, %v4284
        %v4365 = vmul.f32 %v4363, %v4285
        %v4366 = vadd.f32 %v4360, %v4364
        %v4367 = vadd.f32 %v4361, %v4365
        %v4368 = vsub.f32 %v4296, 0.5
        %v4369 = vsub.f32 %v4297, 0.5
        %v4370 = vmul.f32 %v4368, %v4284
        %v4371 = vmul.f32 %v4369, %v4285
        %v4372 = vsub.f32 1.8333334, %v4296
        %v4373 = vsub.f32 1.8333334, %v4297
        %v4374 = vmul.f32 %v4372, %v4294
        %v4375 = vmul.f32 %v4373, %v4295
        %v4376 = vadd.f32 %v4370, %v4374
        %v4377 = vadd.f32 %v4371, %v4375
        %v4378 = vsub.f32 0.0, %v4006
        %v4379 = vsub.f32 0.0, %v4007
        %v4380 = vmul.f32 %v4378, 1.442695
        %v4381 = vpow.pop %v4380
        %v4382 = vmul.f32 %v4379, 1.442695
        %v4383 = vpow.pop %v4382
        %v4384 = vadd.f32 %v4381, 1.0
        %v4385 = vadd.f32 %v4383, 1.0
        %v4386 = vrcp.pop %v4384
        %v4387 = vrcp.pop %v4385
        %v4388 = vmul.f32 %v4006, %v4386
        %v4389 = vmul.f32 %v4007, %v4387
        %v4390 = vld [vmem:[%s284] sm:$0xff]
        %v4391 = vld [vmem:[%s284 + $0x48] sm:$0xff]
        %v4392 = vld [vmem:[%s284 + $0x90] sm:$0xff]
        %v4393 = vld [vmem:[%s284 + $0xd8] sm:$0xff]
        %v4394 = vpack.c.bf16 %v4388, %v4388
        %v4395 = vpack.c.bf16 %v4389, %v4389
        %v4396 = vld [vmem:[%s284 + $0x8] sm:$0xff]
        %v4397 = vld [vmem:[%s284 + $0x50] sm:$0xff]
        %v4398 = vld [vmem:[%s284 + $0x98] sm:$0xff]
        %v4399 = vld [vmem:[%s284 + $0xe0] sm:$0xff]
        %v4400 = vpack.c.bf16 %v4306, %v4306
        %v4401 = vpack.c.bf16 %v4307, %v4307
        %v4406 = vunpack.c.l.b16 %v4396
        %v4407 = vunpack.c.h.b16 %v4396
        %v4408 = vunpack.c.l.b16 %v4397
        %v4409 = vunpack.c.h.b16 %v4397
        %v4410 = vunpack.c.l.b16 %v4398
        %v4411 = vunpack.c.h.b16 %v4398
        %v4412 = vunpack.c.l.b16 %v4399
        %v4413 = vunpack.c.h.b16 %v4399
        %v4414 = vpack.c.b16 %v4408, %v4406
        %v4415 = vpack.c.b16 %v4409, %v4407
        %v4416 = vpack.c.b16 %v4412, %v4410
        %v4417 = vpack.c.b16 %v4413, %v4411
        %4422 = vmatprep.subr.bf16.mxu0 0
        %4423 = vmatpush1.bf16.xpose.msra.mxu0 0
        %4424 = vmatprep.subr.bf16.mxu0 0
        %4425 = vmatpush1.bf16.xpose.msra.mxu0 0
        %4426 = vmatprep.subr.bf16.mxu0 0
        %4427 = vmatpush1.bf16.xpose.msra.mxu0 0
        %4428 = vmatprep.subr.bf16.mxu0 0
        %4429 = vmatpush1.bf16.xpose.msra.mxu0 0
        %4430 = vmatprep.subr.bf16.mxu0 0
        %4431 = vmatpush1.bf16.xpose.msra.mxu0 0
        %4432 = vmatprep.subr.bf16.mxu0 0
        %4433 = vmatpush1.bf16.xpose.msra.mxu0 0
        %4434 = vmatprep.subr.bf16.mxu0 %v4417
        %4435 = vmatpush1.bf16.xpose.msra.mxu0 %v4416
        %4436 = vmatprep.subr.bf16.mxu0 %v4415
        %4437 = vmatpush1.bf16.xpose.msra.mxu0 %v4414
        %4438 = vmatprep.subr.bf16.mxu0 0
        %4439 = vmatpush2.bf16.xpose.msra.mxu0 0
        %4440 = vmatprep.subr.bf16.mxu0 0
        %4441 = vmatpush2.bf16.xpose.msra.mxu0 0
        %4442 = vmatprep.subr.bf16.mxu0 0
        %4443 = vmatpush2.bf16.xpose.msra.mxu0 0
        %4444 = vmatprep.subr.bf16.mxu0 0
        %4445 = vmatpush2.bf16.xpose.msra.mxu0 0
        %4446 = vmatprep.subr.bf16.mxu0 0
        %4447 = vmatpush2.bf16.xpose.msra.mxu0 0
        %4448 = vmatprep.subr.bf16.mxu0 0
        %4449 = vmatpush2.bf16.xpose.msra.mxu0 0
        %4450 = vmatprep.subr.bf16.mxu0 0
        %4451 = vmatpush2.bf16.xpose.msra.mxu0 0
        %4452 = vmatprep.subr.bf16.mxu0 0
        %4453 = vmatpush2.bf16.xpose.msra.mxu0 0
        %4454 = vmatprep.mubr.bf16.mxu0 %v4401
        %4455 = vmatmul.mubr.bf16.gmra.mxu0 %v4400
        %v4456 = vpop.f32.mrf.mxu0
        %v4457 = vadd.f32 0.0, %v4456
        %v4458 = vpop.f32.mrf.mxu0
        %v4459 = vpop.f32.mrf.mxu0
        %v4460 = vpop.f32.mrf.mxu0
        %4461 = vdwg.mxu0
        %v4466 = vunpack.c.l.b16 %v4390
        %v4467 = vunpack.c.h.b16 %v4390
        %v4468 = vunpack.c.l.b16 %v4391
        %v4469 = vunpack.c.h.b16 %v4391
        %v4470 = vunpack.c.l.b16 %v4392
        %v4471 = vunpack.c.h.b16 %v4392
        %v4472 = vunpack.c.l.b16 %v4393
        %v4473 = vunpack.c.h.b16 %v4393
        %v4474 = vpack.c.b16 %v4468, %v4466
        %v4475 = vpack.c.b16 %v4469, %v4467
        %v4476 = vpack.c.b16 %v4472, %v4470
        %v4477 = vpack.c.b16 %v4473, %v4471
        %4482 = vmatprep.subr.bf16.mxu0 0
        %4483 = vmatpush1.bf16.xpose.msra.mxu0 0
        %4484 = vmatprep.subr.bf16.mxu0 0
        %4485 = vmatpush1.bf16.xpose.msra.mxu0 0
        %4486 = vmatprep.subr.bf16.mxu0 0
        %4487 = vmatpush1.bf16.xpose.msra.mxu0 0
        %4488 = vmatprep.subr.bf16.mxu0 0
        %4489 = vmatpush1.bf16.xpose.msra.mxu0 0
        %4490 = vmatprep.subr.bf16.mxu0 0
        %4491 = vmatpush1.bf16.xpose.msra.mxu0 0
        %4492 = vmatprep.subr.bf16.mxu0 0
        %4493 = vmatpush1.bf16.xpose.msra.mxu0 0
        %4494 = vmatprep.subr.bf16.mxu0 %v4477
        %4495 = vmatpush1.bf16.xpose.msra.mxu0 %v4476
        %4496 = vmatprep.subr.bf16.mxu0 %v4475
        %4497 = vmatpush1.bf16.xpose.msra.mxu0 %v4474
        %4498 = vmatprep.subr.bf16.mxu0 0
        %4499 = vmatpush2.bf16.xpose.msra.mxu0 0
        %4500 = vmatprep.subr.bf16.mxu0 0
        %4501 = vmatpush2.bf16.xpose.msra.mxu0 0
        %4502 = vmatprep.subr.bf16.mxu0 0
        %4503 = vmatpush2.bf16.xpose.msra.mxu0 0
        %4504 = vmatprep.subr.bf16.mxu0 0
        %4505 = vmatpush2.bf16.xpose.msra.mxu0 0
        %4506 = vmatprep.subr.bf16.mxu0 0
        %4507 = vmatpush2.bf16.xpose.msra.mxu0 0
        %4508 = vmatprep.subr.bf16.mxu0 0
        %4509 = vmatpush2.bf16.xpose.msra.mxu0 0
        %4510 = vmatprep.subr.bf16.mxu0 0
        %4511 = vmatpush2.bf16.xpose.msra.mxu0 0
        %4512 = vmatprep.subr.bf16.mxu0 0
        %4513 = vmatpush2.bf16.xpose.msra.mxu0 0
        %4514 = vmatprep.mubr.bf16.mxu0 %v4395
        %4515 = vmatmul.mubr.bf16.gmra.mxu0 %v4394
        %v4516 = vpop.f32.mrf.mxu0
        %v4517 = vadd.f32 %v4457, %v4516
        %v4518 = vpop.f32.mrf.mxu0
        %v4519 = vpop.f32.mrf.mxu0
        %v4520 = vpop.f32.mrf.mxu0
        %4521 = vdwg.mxu0
        %v4522 = vld [vmem:[%s284 + $0x10] sm:$0xff]
        %v4523 = vld [vmem:[%s284 + $0x58] sm:$0xff]
        %v4524 = vld [vmem:[%s284 + $0xa0] sm:$0xff]
        %v4525 = vld [vmem:[%s284 + $0xe8] sm:$0xff]
        %v4526 = vpack.c.bf16 %v4316, %v4316
        %v4527 = vpack.c.bf16 %v4317, %v4317
        %v4532 = vunpack.c.l.b16 %v4522
        %v4533 = vunpack.c.h.b16 %v4522
        %v4534 = vunpack.c.l.b16 %v4523
        %v4535 = vunpack.c.h.b16 %v4523
        %v4536 = vunpack.c.l.b16 %v4524
        %v4537 = vunpack.c.h.b16 %v4524
        %v4538 = vunpack.c.l.b16 %v4525
        %v4539 = vunpack.c.h.b16 %v4525
        %v4540 = vpack.c.b16 %v4534, %v4532
        %v4541 = vpack.c.b16 %v4535, %v4533
        %v4542 = vpack.c.b16 %v4538, %v4536
        %v4543 = vpack.c.b16 %v4539, %v4537
        %4548 = vmatprep.subr.bf16.mxu0 0
        %4549 = vmatpush1.bf16.xpose.msra.mxu0 0
        %4550 = vmatprep.subr.bf16.mxu0 0
        %4551 = vmatpush1.bf16.xpose.msra.mxu0 0
        %4552 = vmatprep.subr.bf16.mxu0 0
        %4553 = vmatpush1.bf16.xpose.msra.mxu0 0
        %4554 = vmatprep.subr.bf16.mxu0 0
        %4555 = vmatpush1.bf16.xpose.msra.mxu0 0
        %4556 = vmatprep.subr.bf16.mxu0 0
        %4557 = vmatpush1.bf16.xpose.msra.mxu0 0
        %4558 = vmatprep.subr.bf16.mxu0 0
        %4559 = vmatpush1.bf16.xpose.msra.mxu0 0
        %4560 = vmatprep.subr.bf16.mxu0 %v4543
        %4561 = vmatpush1.bf16.xpose.msra.mxu0 %v4542
        %4562 = vmatprep.subr.bf16.mxu0 %v4541
        %4563 = vmatpush1.bf16.xpose.msra.mxu0 %v4540
        %4564 = vmatprep.subr.bf16.mxu0 0
        %4565 = vmatpush2.bf16.xpose.msra.mxu0 0
        %4566 = vmatprep.subr.bf16.mxu0 0
        %4567 = vmatpush2.bf16.xpose.msra.mxu0 0
        %4568 = vmatprep.subr.bf16.mxu0 0
        %4569 = vmatpush2.bf16.xpose.msra.mxu0 0
        %4570 = vmatprep.subr.bf16.mxu0 0
        %4571 = vmatpush2.bf16.xpose.msra.mxu0 0
        %4572 = vmatprep.subr.bf16.mxu0 0
        %4573 = vmatpush2.bf16.xpose.msra.mxu0 0
        %4574 = vmatprep.subr.bf16.mxu0 0
        %4575 = vmatpush2.bf16.xpose.msra.mxu0 0
        %4576 = vmatprep.subr.bf16.mxu0 0
        %4577 = vmatpush2.bf16.xpose.msra.mxu0 0
        %4578 = vmatprep.subr.bf16.mxu0 0
        %4579 = vmatpush2.bf16.xpose.msra.mxu0 0
        %4580 = vmatprep.mubr.bf16.mxu0 %v4527
        %4581 = vmatmul.mubr.bf16.gmra.mxu0 %v4526
        %v4582 = vpop.f32.mrf.mxu0
        %v4583 = vadd.f32 0.0, %v4582
        %v4584 = vpop.f32.mrf.mxu0
        %v4585 = vpop.f32.mrf.mxu0
        %v4586 = vpop.f32.mrf.mxu0
        %4587 = vdwg.mxu0
        %v4588 = vadd.f32 %v4517, %v4583
        %v4589 = vld [vmem:[%s284 + $0x18] sm:$0xff]
        %v4590 = vld [vmem:[%s284 + $0x60] sm:$0xff]
        %v4591 = vld [vmem:[%s284 + $0xa8] sm:$0xff]
        %v4592 = vld [vmem:[%s284 + $0xf0] sm:$0xff]
        %v4593 = vpack.c.bf16 %v4326, %v4326
        %v4594 = vpack.c.bf16 %v4327, %v4327
        %v4599 = vunpack.c.l.b16 %v4589
        %v4600 = vunpack.c.h.b16 %v4589
        %v4601 = vunpack.c.l.b16 %v4590
        %v4602 = vunpack.c.h.b16 %v4590
        %v4603 = vunpack.c.l.b16 %v4591
        %v4604 = vunpack.c.h.b16 %v4591
        %v4605 = vunpack.c.l.b16 %v4592
        %v4606 = vunpack.c.h.b16 %v4592
        %v4607 = vpack.c.b16 %v4601, %v4599
        %v4608 = vpack.c.b16 %v4602, %v4600
        %v4609 = vpack.c.b16 %v4605, %v4603
        %v4610 = vpack.c.b16 %v4606, %v4604
        %4615 = vmatprep.subr.bf16.mxu0 0
        %4616 = vmatpush1.bf16.xpose.msra.mxu0 0
        %4617 = vmatprep.subr.bf16.mxu0 0
        %4618 = vmatpush1.bf16.xpose.msra.mxu0 0
        %4619 = vmatprep.subr.bf16.mxu0 0
        %4620 = vmatpush1.bf16.xpose.msra.mxu0 0
        %4621 = vmatprep.subr.bf16.mxu0 0
        %4622 = vmatpush1.bf16.xpose.msra.mxu0 0
        %4623 = vmatprep.subr.bf16.mxu0 0
        %4624 = vmatpush1.bf16.xpose.msra.mxu0 0
        %4625 = vmatprep.subr.bf16.mxu0 0
        %4626 = vmatpush1.bf16.xpose.msra.mxu0 0
        %4627 = vmatprep.subr.bf16.mxu0 %v4610
        %4628 = vmatpush1.bf16.xpose.msra.mxu0 %v4609
        %4629 = vmatprep.subr.bf16.mxu0 %v4608
        %4630 = vmatpush1.bf16.xpose.msra.mxu0 %v4607
        %4631 = vmatprep.subr.bf16.mxu0 0
        %4632 = vmatpush2.bf16.xpose.msra.mxu0 0
        %4633 = vmatprep.subr.bf16.mxu0 0
        %4634 = vmatpush2.bf16.xpose.msra.mxu0 0
        %4635 = vmatprep.subr.bf16.mxu0 0
        %4636 = vmatpush2.bf16.xpose.msra.mxu0 0
        %4637 = vmatprep.subr.bf16.mxu0 0
        %4638 = vmatpush2.bf16.xpose.msra.mxu0 0
        %4639 = vmatprep.subr.bf16.mxu0 0
        %4640 = vmatpush2.bf16.xpose.msra.mxu0 0
        %4641 = vmatprep.subr.bf16.mxu0 0
        %4642 = vmatpush2.bf16.xpose.msra.mxu0 0
        %4643 = vmatprep.subr.bf16.mxu0 0
        %4644 = vmatpush2.bf16.xpose.msra.mxu0 0
        %4645 = vmatprep.subr.bf16.mxu0 0
        %4646 = vmatpush2.bf16.xpose.msra.mxu0 0
        %4647 = vmatprep.mubr.bf16.mxu0 %v4594
        %4648 = vmatmul.mubr.bf16.gmra.mxu0 %v4593
        %v4649 = vpop.f32.mrf.mxu0
        %v4650 = vadd.f32 0.0, %v4649
        %v4651 = vpop.f32.mrf.mxu0
        %v4652 = vpop.f32.mrf.mxu0
        %v4653 = vpop.f32.mrf.mxu0
        %4654 = vdwg.mxu0
        %v4655 = vadd.f32 %v4588, %v4650
        %v4656 = vld [vmem:[%s284 + $0x20] sm:$0xff]
        %v4657 = vld [vmem:[%s284 + $0x68] sm:$0xff]
        %v4658 = vld [vmem:[%s284 + $0xb0] sm:$0xff]
        %v4659 = vld [vmem:[%s284 + $0xf8] sm:$0xff]
        %v4660 = vpack.c.bf16 %v4336, %v4336
        %v4661 = vpack.c.bf16 %v4337, %v4337
        %v4666 = vunpack.c.l.b16 %v4656
        %v4667 = vunpack.c.h.b16 %v4656
        %v4668 = vunpack.c.l.b16 %v4657
        %v4669 = vunpack.c.h.b16 %v4657
        %v4670 = vunpack.c.l.b16 %v4658
        %v4671 = vunpack.c.h.b16 %v4658
        %v4672 = vunpack.c.l.b16 %v4659
        %v4673 = vunpack.c.h.b16 %v4659
        %v4674 = vpack.c.b16 %v4668, %v4666
        %v4675 = vpack.c.b16 %v4669, %v4667
        %v4676 = vpack.c.b16 %v4672, %v4670
        %v4677 = vpack.c.b16 %v4673, %v4671
        %4682 = vmatprep.subr.bf16.mxu0 0
        %4683 = vmatpush1.bf16.xpose.msra.mxu0 0
        %4684 = vmatprep.subr.bf16.mxu0 0
        %4685 = vmatpush1.bf16.xpose.msra.mxu0 0
        %4686 = vmatprep.subr.bf16.mxu0 0
        %4687 = vmatpush1.bf16.xpose.msra.mxu0 0
        %4688 = vmatprep.subr.bf16.mxu0 0
        %4689 = vmatpush1.bf16.xpose.msra.mxu0 0
        %4690 = vmatprep.subr.bf16.mxu0 0
        %4691 = vmatpush1.bf16.xpose.msra.mxu0 0
        %4692 = vmatprep.subr.bf16.mxu0 0
        %4693 = vmatpush1.bf16.xpose.msra.mxu0 0
        %4694 = vmatprep.subr.bf16.mxu0 %v4677
        %4695 = vmatpush1.bf16.xpose.msra.mxu0 %v4676
        %4696 = vmatprep.subr.bf16.mxu0 %v4675
        %4697 = vmatpush1.bf16.xpose.msra.mxu0 %v4674
        %4698 = vmatprep.subr.bf16.mxu0 0
        %4699 = vmatpush2.bf16.xpose.msra.mxu0 0
        %4700 = vmatprep.subr.bf16.mxu0 0
        %4701 = vmatpush2.bf16.xpose.msra.mxu0 0
        %4702 = vmatprep.subr.bf16.mxu0 0
        %4703 = vmatpush2.bf16.xpose.msra.mxu0 0
        %4704 = vmatprep.subr.bf16.mxu0 0
        %4705 = vmatpush2.bf16.xpose.msra.mxu0 0
        %4706 = vmatprep.subr.bf16.mxu0 0
        %4707 = vmatpush2.bf16.xpose.msra.mxu0 0
        %4708 = vmatprep.subr.bf16.mxu0 0
        %4709 = vmatpush2.bf16.xpose.msra.mxu0 0
        %4710 = vmatprep.subr.bf16.mxu0 0
        %4711 = vmatpush2.bf16.xpose.msra.mxu0 0
        %4712 = vmatprep.subr.bf16.mxu0 0
        %4713 = vmatpush2.bf16.xpose.msra.mxu0 0
        %4714 = vmatprep.mubr.bf16.mxu0 %v4661
        %4715 = vmatmul.mubr.bf16.gmra.mxu0 %v4660
        %v4716 = vpop.f32.mrf.mxu0
        %v4717 = vadd.f32 0.0, %v4716
        %v4718 = vpop.f32.mrf.mxu0
        %v4719 = vpop.f32.mrf.mxu0
        %v4720 = vpop.f32.mrf.mxu0
        %4721 = vdwg.mxu0
        %v4722 = vadd.f32 %v4655, %v4717
        %v4723 = vld [vmem:[%s284 + $0x28] sm:$0xff]
        %v4724 = vld [vmem:[%s284 + $0x70] sm:$0xff]
        %v4725 = vld [vmem:[%s284 + $0xb8] sm:$0xff]
        %v4726 = vld [vmem:[%s284 + $0x100] sm:$0xff]
        %v4727 = vpack.c.bf16 %v4346, %v4346
        %v4728 = vpack.c.bf16 %v4347, %v4347
        %v4733 = vunpack.c.l.b16 %v4723
        %v4734 = vunpack.c.h.b16 %v4723
        %v4735 = vunpack.c.l.b16 %v4724
        %v4736 = vunpack.c.h.b16 %v4724
        %v4737 = vunpack.c.l.b16 %v4725
        %v4738 = vunpack.c.h.b16 %v4725
        %v4739 = vunpack.c.l.b16 %v4726
        %v4740 = vunpack.c.h.b16 %v4726
        %v4741 = vpack.c.b16 %v4735, %v4733
        %v4742 = vpack.c.b16 %v4736, %v4734
        %v4743 = vpack.c.b16 %v4739, %v4737
        %v4744 = vpack.c.b16 %v4740, %v4738
        %4749 = vmatprep.subr.bf16.mxu0 0
        %4750 = vmatpush1.bf16.xpose.msra.mxu0 0
        %4751 = vmatprep.subr.bf16.mxu0 0
        %4752 = vmatpush1.bf16.xpose.msra.mxu0 0
        %4753 = vmatprep.subr.bf16.mxu0 0
        %4754 = vmatpush1.bf16.xpose.msra.mxu0 0
        %4755 = vmatprep.subr.bf16.mxu0 0
        %4756 = vmatpush1.bf16.xpose.msra.mxu0 0
        %4757 = vmatprep.subr.bf16.mxu0 0
        %4758 = vmatpush1.bf16.xpose.msra.mxu0 0
        %4759 = vmatprep.subr.bf16.mxu0 0
        %4760 = vmatpush1.bf16.xpose.msra.mxu0 0
        %4761 = vmatprep.subr.bf16.mxu0 %v4744
        %4762 = vmatpush1.bf16.xpose.msra.mxu0 %v4743
        %4763 = vmatprep.subr.bf16.mxu0 %v4742
        %4764 = vmatpush1.bf16.xpose.msra.mxu0 %v4741
        %4765 = vmatprep.subr.bf16.mxu0 0
        %4766 = vmatpush2.bf16.xpose.msra.mxu0 0
        %4767 = vmatprep.subr.bf16.mxu0 0
        %4768 = vmatpush2.bf16.xpose.msra.mxu0 0
        %4769 = vmatprep.subr.bf16.mxu0 0
        %4770 = vmatpush2.bf16.xpose.msra.mxu0 0
        %4771 = vmatprep.subr.bf16.mxu0 0
        %4772 = vmatpush2.bf16.xpose.msra.mxu0 0
        %4773 = vmatprep.subr.bf16.mxu0 0
        %4774 = vmatpush2.bf16.xpose.msra.mxu0 0
        %4775 = vmatprep.subr.bf16.mxu0 0
        %4776 = vmatpush2.bf16.xpose.msra.mxu0 0
        %4777 = vmatprep.subr.bf16.mxu0 0
        %4778 = vmatpush2.bf16.xpose.msra.mxu0 0
        %4779 = vmatprep.subr.bf16.mxu0 0
        %4780 = vmatpush2.bf16.xpose.msra.mxu0 0
        %4781 = vmatprep.mubr.bf16.mxu0 %v4728
        %4782 = vmatmul.mubr.bf16.gmra.mxu0 %v4727
        %v4783 = vpop.f32.mrf.mxu0
        %v4784 = vadd.f32 0.0, %v4783
        %v4785 = vpop.f32.mrf.mxu0
        %v4786 = vpop.f32.mrf.mxu0
        %v4787 = vpop.f32.mrf.mxu0
        %4788 = vdwg.mxu0
        %v4789 = vadd.f32 %v4722, %v4784
        %v4790 = vld [vmem:[%s284 + $0x30] sm:$0xff]
        %v4791 = vld [vmem:[%s284 + $0x78] sm:$0xff]
        %v4792 = vld [vmem:[%s284 + $0xc0] sm:$0xff]
        %v4793 = vld [vmem:[%s284 + $0x108] sm:$0xff]
        %v4794 = vpack.c.bf16 %v4356, %v4356
        %v4795 = vpack.c.bf16 %v4357, %v4357
        %v4800 = vunpack.c.l.b16 %v4790
        %v4801 = vunpack.c.h.b16 %v4790
        %v4802 = vunpack.c.l.b16 %v4791
        %v4803 = vunpack.c.h.b16 %v4791
        %v4804 = vunpack.c.l.b16 %v4792
        %v4805 = vunpack.c.h.b16 %v4792
        %v4806 = vunpack.c.l.b16 %v4793
        %v4807 = vunpack.c.h.b16 %v4793
        %v4808 = vpack.c.b16 %v4802, %v4800
        %v4809 = vpack.c.b16 %v4803, %v4801
        %v4810 = vpack.c.b16 %v4806, %v4804
        %v4811 = vpack.c.b16 %v4807, %v4805
        %4816 = vmatprep.subr.bf16.mxu0 0
        %4817 = vmatpush1.bf16.xpose.msra.mxu0 0
        %4818 = vmatprep.subr.bf16.mxu0 0
        %4819 = vmatpush1.bf16.xpose.msra.mxu0 0
        %4820 = vmatprep.subr.bf16.mxu0 0
        %4821 = vmatpush1.bf16.xpose.msra.mxu0 0
        %4822 = vmatprep.subr.bf16.mxu0 0
        %4823 = vmatpush1.bf16.xpose.msra.mxu0 0
        %4824 = vmatprep.subr.bf16.mxu0 0
        %4825 = vmatpush1.bf16.xpose.msra.mxu0 0
        %4826 = vmatprep.subr.bf16.mxu0 0
        %4827 = vmatpush1.bf16.xpose.msra.mxu0 0
        %4828 = vmatprep.subr.bf16.mxu0 %v4811
        %4829 = vmatpush1.bf16.xpose.msra.mxu0 %v4810
        %4830 = vmatprep.subr.bf16.mxu0 %v4809
        %4831 = vmatpush1.bf16.xpose.msra.mxu0 %v4808
        %4832 = vmatprep.subr.bf16.mxu0 0
        %4833 = vmatpush2.bf16.xpose.msra.mxu0 0
        %4834 = vmatprep.subr.bf16.mxu0 0
        %4835 = vmatpush2.bf16.xpose.msra.mxu0 0
        %4836 = vmatprep.subr.bf16.mxu0 0
        %4837 = vmatpush2.bf16.xpose.msra.mxu0 0
        %4838 = vmatprep.subr.bf16.mxu0 0
        %4839 = vmatpush2.bf16.xpose.msra.mxu0 0
        %4840 = vmatprep.subr.bf16.mxu0 0
        %4841 = vmatpush2.bf16.xpose.msra.mxu0 0
        %4842 = vmatprep.subr.bf16.mxu0 0
        %4843 = vmatpush2.bf16.xpose.msra.mxu0 0
        %4844 = vmatprep.subr.bf16.mxu0 0
        %4845 = vmatpush2.bf16.xpose.msra.mxu0 0
        %4846 = vmatprep.subr.bf16.mxu0 0
        %4847 = vmatpush2.bf16.xpose.msra.mxu0 0
        %4848 = vmatprep.mubr.bf16.mxu0 %v4795
        %4849 = vmatmul.mubr.bf16.gmra.mxu0 %v4794
        %v4850 = vpop.f32.mrf.mxu0
        %v4851 = vadd.f32 0.0, %v4850
        %v4852 = vpop.f32.mrf.mxu0
        %v4853 = vpop.f32.mrf.mxu0
        %v4854 = vpop.f32.mrf.mxu0
        %4855 = vdwg.mxu0
        %v4856 = vadd.f32 %v4789, %v4851
        %v4857 = vld [vmem:[%s284 + $0x38] sm:$0xff]
        %v4858 = vld [vmem:[%s284 + $0x80] sm:$0xff]
        %v4859 = vld [vmem:[%s284 + $0xc8] sm:$0xff]
        %v4860 = vld [vmem:[%s284 + $0x110] sm:$0xff]
        %v4861 = vpack.c.bf16 %v4366, %v4366
        %v4862 = vpack.c.bf16 %v4367, %v4367
        %v4867 = vunpack.c.l.b16 %v4857
        %v4868 = vunpack.c.h.b16 %v4857
        %v4869 = vunpack.c.l.b16 %v4858
        %v4870 = vunpack.c.h.b16 %v4858
        %v4871 = vunpack.c.l.b16 %v4859
        %v4872 = vunpack.c.h.b16 %v4859
        %v4873 = vunpack.c.l.b16 %v4860
        %v4874 = vunpack.c.h.b16 %v4860
        %v4875 = vpack.c.b16 %v4869, %v4867
        %v4876 = vpack.c.b16 %v4870, %v4868
        %v4877 = vpack.c.b16 %v4873, %v4871
        %v4878 = vpack.c.b16 %v4874, %v4872
        %4883 = vmatprep.subr.bf16.mxu0 0
        %4884 = vmatpush1.bf16.xpose.msra.mxu0 0
        %4885 = vmatprep.subr.bf16.mxu0 0
        %4886 = vmatpush1.bf16.xpose.msra.mxu0 0
        %4887 = vmatprep.subr.bf16.mxu0 0
        %4888 = vmatpush1.bf16.xpose.msra.mxu0 0
        %4889 = vmatprep.subr.bf16.mxu0 0
        %4890 = vmatpush1.bf16.xpose.msra.mxu0 0
        %4891 = vmatprep.subr.bf16.mxu0 0
        %4892 = vmatpush1.bf16.xpose.msra.mxu0 0
        %4893 = vmatprep.subr.bf16.mxu0 0
        %4894 = vmatpush1.bf16.xpose.msra.mxu0 0
        %4895 = vmatprep.subr.bf16.mxu0 %v4878
        %4896 = vmatpush1.bf16.xpose.msra.mxu0 %v4877
        %4897 = vmatprep.subr.bf16.mxu0 %v4876
        %4898 = vmatpush1.bf16.xpose.msra.mxu0 %v4875
        %4899 = vmatprep.subr.bf16.mxu0 0
        %4900 = vmatpush2.bf16.xpose.msra.mxu0 0
        %4901 = vmatprep.subr.bf16.mxu0 0
        %4902 = vmatpush2.bf16.xpose.msra.mxu0 0
        %4903 = vmatprep.subr.bf16.mxu0 0
        %4904 = vmatpush2.bf16.xpose.msra.mxu0 0
        %4905 = vmatprep.subr.bf16.mxu0 0
        %4906 = vmatpush2.bf16.xpose.msra.mxu0 0
        %4907 = vmatprep.subr.bf16.mxu0 0
        %4908 = vmatpush2.bf16.xpose.msra.mxu0 0
        %4909 = vmatprep.subr.bf16.mxu0 0
        %4910 = vmatpush2.bf16.xpose.msra.mxu0 0
        %4911 = vmatprep.subr.bf16.mxu0 0
        %4912 = vmatpush2.bf16.xpose.msra.mxu0 0
        %4913 = vmatprep.subr.bf16.mxu0 0
        %4914 = vmatpush2.bf16.xpose.msra.mxu0 0
        %4915 = vmatprep.mubr.bf16.mxu0 %v4862
        %4916 = vmatmul.mubr.bf16.gmra.mxu0 %v4861
        %v4917 = vpop.f32.mrf.mxu0
        %v4918 = vadd.f32 0.0, %v4917
        %v4919 = vpop.f32.mrf.mxu0
        %v4920 = vpop.f32.mrf.mxu0
        %v4921 = vpop.f32.mrf.mxu0
        %4922 = vdwg.mxu0
        %v4923 = vadd.f32 %v4856, %v4918
        %v4924 = vld [vmem:[%s284 + $0x40] sm:$0xff]
        %v4925 = vld [vmem:[%s284 + $0x88] sm:$0xff]
        %v4926 = vld [vmem:[%s284 + $0xd0] sm:$0xff]
        %v4927 = vld [vmem:[%s284 + $0x118] sm:$0xff]
        %v4928 = vpack.c.bf16 %v4376, %v4376
        %v4929 = vpack.c.bf16 %v4377, %v4377
        %v4934 = vunpack.c.l.b16 %v4924
        %v4935 = vunpack.c.h.b16 %v4924
        %v4936 = vunpack.c.l.b16 %v4925
        %v4937 = vunpack.c.h.b16 %v4925
        %v4938 = vunpack.c.l.b16 %v4926
        %v4939 = vunpack.c.h.b16 %v4926
        %v4940 = vunpack.c.l.b16 %v4927
        %v4941 = vunpack.c.h.b16 %v4927
        %v4942 = vpack.c.b16 %v4936, %v4934
        %v4943 = vpack.c.b16 %v4937, %v4935
        %v4944 = vpack.c.b16 %v4940, %v4938
        %v4945 = vpack.c.b16 %v4941, %v4939
        %4950 = vmatprep.subr.bf16.mxu0 0
        %4951 = vmatpush1.bf16.xpose.msra.mxu0 0
        %4952 = vmatprep.subr.bf16.mxu0 0
        %4953 = vmatpush1.bf16.xpose.msra.mxu0 0
        %4954 = vmatprep.subr.bf16.mxu0 0
        %4955 = vmatpush1.bf16.xpose.msra.mxu0 0
        %4956 = vmatprep.subr.bf16.mxu0 0
        %4957 = vmatpush1.bf16.xpose.msra.mxu0 0
        %4958 = vmatprep.subr.bf16.mxu0 0
        %4959 = vmatpush1.bf16.xpose.msra.mxu0 0
        %4960 = vmatprep.subr.bf16.mxu0 0
        %4961 = vmatpush1.bf16.xpose.msra.mxu0 0
        %4962 = vmatprep.subr.bf16.mxu0 %v4945
        %4963 = vmatpush1.bf16.xpose.msra.mxu0 %v4944
        %4964 = vmatprep.subr.bf16.mxu0 %v4943
        %4965 = vmatpush1.bf16.xpose.msra.mxu0 %v4942
        %4966 = vmatprep.subr.bf16.mxu0 0
        %4967 = vmatpush2.bf16.xpose.msra.mxu0 0
        %4968 = vmatprep.subr.bf16.mxu0 0
        %4969 = vmatpush2.bf16.xpose.msra.mxu0 0
        %4970 = vmatprep.subr.bf16.mxu0 0
        %4971 = vmatpush2.bf16.xpose.msra.mxu0 0
        %4972 = vmatprep.subr.bf16.mxu0 0
        %4973 = vmatpush2.bf16.xpose.msra.mxu0 0
        %4974 = vmatprep.subr.bf16.mxu0 0
        %4975 = vmatpush2.bf16.xpose.msra.mxu0 0
        %4976 = vmatprep.subr.bf16.mxu0 0
        %4977 = vmatpush2.bf16.xpose.msra.mxu0 0
        %4978 = vmatprep.subr.bf16.mxu0 0
        %4979 = vmatpush2.bf16.xpose.msra.mxu0 0
        %4980 = vmatprep.subr.bf16.mxu0 0
        %4981 = vmatpush2.bf16.xpose.msra.mxu0 0
        %4982 = vmatprep.mubr.bf16.mxu0 %v4929
        %4983 = vmatmul.mubr.bf16.gmra.mxu0 %v4928
        %v4984 = vpop.f32.mrf.mxu0
        %v4985 = vadd.f32 0.0, %v4984
        %v4986 = vpop.f32.mrf.mxu0
        %v4987 = vpop.f32.mrf.mxu0
        %v4988 = vpop.f32.mrf.mxu0
        %4989 = vdwg.mxu0
        %v4990 = vadd.f32 %v4923, %v4985
        %v4991 = vld [vmem:[#allocation4] sm:$0xff]
        %v4992 = vadd.f32 %v4991, %v4990
        %vm4993 = vcmask 261120
        %4994 = vst.msk [vmem:[#allocation4] sm:$0xff] %vm4993, %v4992
        %p4995 = scmp.eq.s32.totalorder %s23, 11
        // Predicated region
        $region65: #{tpu_custom_call.1} parent=47 // pred_check
          %p4996 = pneg %p4995
        $region66: #{tpu_custom_call.1} parent=47 // pred_check_branch
          %4998 = sbr.rel (%p4996) target = $region68
        $region67: #{tpu_custom_call.1} parent=47 // pred_region
          %v4999 = vld [vmem:[#allocation4] sm:$0xff]
          %vm5000 = vcmp.ge.f32.partialorder %v4999, -2.2
          %v5001 = vsel %vm5000, 1, 0
          %v5002 = vcvt.s32.f32 %v5001
          %vm5003 = vcmp.ge.f32.partialorder %v4999, -1.8
          %v5004 = vsel %vm5003, 1, 0
          %v5005 = vcvt.s32.f32 %v5004
          %vm5006 = vcmp.ge.f32.partialorder %v4999, -1.4
          %v5007 = vsel %vm5006, 1, 0
          %v5008 = vcvt.s32.f32 %v5007
          %vm5009 = vcmp.ge.f32.partialorder %v4999, -1.0
          %v5010 = vsel %vm5009, 1, 0
          %v5011 = vcvt.s32.f32 %v5010
          %vm5012 = vcmp.ge.f32.partialorder %v4999, -0.6
          %v5013 = vsel %vm5012, 1, 0
          %v5014 = vcvt.s32.f32 %v5013
          %vm5015 = vcmp.ge.f32.partialorder %v4999, -0.2
          %v5016 = vsel %vm5015, 1, 0
          %v5017 = vcvt.s32.f32 %v5016
          %vm5018 = vcmp.ge.f32.partialorder %v4999, 0.2
          %v5019 = vsel %vm5018, 1, 0
          %v5020 = vcvt.s32.f32 %v5019
          %vm5021 = vcmp.ge.f32.partialorder %v4999, 0.6
          %v5022 = vsel %vm5021, 1, 0
          %v5023 = vcvt.s32.f32 %v5022
          %vm5024 = vcmp.ge.f32.partialorder %v4999, 1.0
          %v5025 = vsel %vm5024, 1, 0
          %v5026 = vcvt.s32.f32 %v5025
          %vm5027 = vcmp.ge.f32.partialorder %v4999, 1.4
          %v5028 = vsel %vm5027, 1, 0
          %v5029 = vcvt.s32.f32 %v5028
          %vm5030 = vcmp.ge.f32.partialorder %v4999, 1.8
          %v5031 = vsel %vm5030, 1, 0
          %v5032 = vcvt.s32.f32 %v5031
          %vm5033 = vcmp.ge.f32.partialorder %v4999, 2.2
          %v5034 = vsel %vm5033, 1, 0
          %v5035 = vcvt.s32.f32 %v5034
          %v5036 = vsub.f32 %v5002, %v5005
          %v5037 = vsub.f32 %v5005, %v5008
          %v5038 = vsub.f32 %v5008, %v5011
          %v5039 = vsub.f32 %v5011, %v5014
          %v5040 = vsub.f32 %v5014, %v5017
          %v5041 = vsub.f32 %v5017, %v5020
          %v5042 = vsub.f32 %v5020, %v5023
          %v5043 = vsub.f32 %v5023, %v5026
          %v5044 = vsub.f32 %v5026, %v5029
          %v5045 = vsub.f32 %v5029, %v5032
          %v5046 = vsub.f32 %v5032, %v5035
          %v5047 = vmul.f32 %v4999, 2.5
          %v5048 = vsub.f32 %v5047, -5.5
          %v5049 = vmul.f32 %v5048, %v5036
          %v5050 = vsub.f32 -3.5, %v5047
          %v5051 = vmul.f32 %v5050, %v5037
          %v5052 = vadd.f32 %v5049, %v5051
          %v5053 = vsub.f32 %v5047, -4.5
          %v5054 = vmul.f32 %v5053, %v5037
          %v5055 = vsub.f32 -2.5, %v5047
          %v5056 = vmul.f32 %v5055, %v5038
          %v5057 = vadd.f32 %v5054, %v5056
          %v5058 = vsub.f32 %v5047, -3.5
          %v5059 = vmul.f32 %v5058, %v5038
          %v5060 = vsub.f32 -1.5, %v5047
          %v5061 = vmul.f32 %v5060, %v5039
          %v5062 = vadd.f32 %v5059, %v5061
          %v5063 = vsub.f32 %v5047, -2.5
          %v5064 = vmul.f32 %v5063, %v5039
          %v5065 = vsub.f32 -0.5, %v5047
          %v5066 = vmul.f32 %v5065, %v5040
          %v5067 = vadd.f32 %v5064, %v5066
          %v5068 = vsub.f32 %v5047, -1.5
          %v5069 = vmul.f32 %v5068, %v5040
          %v5070 = vsub.f32 0.5, %v5047
          %v5071 = vmul.f32 %v5070, %v5041
          %v5072 = vadd.f32 %v5069, %v5071
          %v5073 = vsub.f32 %v5047, -0.5
          %v5074 = vmul.f32 %v5073, %v5041
          %v5075 = vsub.f32 1.5, %v5047
          %v5076 = vmul.f32 %v5075, %v5042
          %v5077 = vadd.f32 %v5074, %v5076
          %v5078 = vsub.f32 %v5047, 0.5
          %v5079 = vmul.f32 %v5078, %v5042
          %v5080 = vsub.f32 2.5, %v5047
          %v5081 = vmul.f32 %v5080, %v5043
          %v5082 = vadd.f32 %v5079, %v5081
          %v5083 = vsub.f32 %v5047, 1.5
          %v5084 = vmul.f32 %v5083, %v5043
          %v5085 = vsub.f32 3.5, %v5047
          %v5086 = vmul.f32 %v5085, %v5044
          %v5087 = vadd.f32 %v5084, %v5086
          %v5088 = vsub.f32 %v5047, 2.5
          %v5089 = vmul.f32 %v5088, %v5044
          %v5090 = vsub.f32 4.5, %v5047
          %v5091 = vmul.f32 %v5090, %v5045
          %v5092 = vadd.f32 %v5089, %v5091
          %v5093 = vsub.f32 %v5047, 3.5
          %v5094 = vmul.f32 %v5093, %v5045
          %v5095 = vsub.f32 5.5, %v5047
          %v5096 = vmul.f32 %v5095, %v5046
          %v5097 = vadd.f32 %v5094, %v5096
          %v5098 = vmul.f32 %v4999, 1.25
          %v5099 = vsub.f32 %v5098, -2.75
          %v5100 = vmul.f32 %v5099, %v5052
          %v5101 = vsub.f32 -1.25, %v5098
          %v5102 = vmul.f32 %v5101, %v5057
          %v5103 = vadd.f32 %v5100, %v5102
          %v5104 = vsub.f32 %v5098, -2.25
          %v5105 = vmul.f32 %v5104, %v5057
          %v5106 = vsub.f32 -0.75, %v5098
          %v5107 = vmul.f32 %v5106, %v5062
          %v5108 = vadd.f32 %v5105, %v5107
          %v5109 = vsub.f32 %v5098, -1.75
          %v5110 = vmul.f32 %v5109, %v5062
          %v5111 = vsub.f32 -0.25, %v5098
          %v5112 = vmul.f32 %v5111, %v5067
          %v5113 = vadd.f32 %v5110, %v5112
          %v5114 = vsub.f32 %v5098, -1.25
          %v5115 = vmul.f32 %v5114, %v5067
          %v5116 = vsub.f32 0.25, %v5098
          %v5117 = vmul.f32 %v5116, %v5072
          %v5118 = vadd.f32 %v5115, %v5117
          %v5119 = vsub.f32 %v5098, -0.75
          %v5120 = vmul.f32 %v5119, %v5072
          %v5121 = vsub.f32 0.75, %v5098
          %v5122 = vmul.f32 %v5121, %v5077
          %v5123 = vadd.f32 %v5120, %v5122
          %v5124 = vsub.f32 %v5098, -0.25
          %v5125 = vmul.f32 %v5124, %v5077
          %v5126 = vsub.f32 1.25, %v5098
          %v5127 = vmul.f32 %v5126, %v5082
          %v5128 = vadd.f32 %v5125, %v5127
          %v5129 = vsub.f32 %v5098, 0.25
          %v5130 = vmul.f32 %v5129, %v5082
          %v5131 = vsub.f32 1.75, %v5098
          %v5132 = vmul.f32 %v5131, %v5087
          %v5133 = vadd.f32 %v5130, %v5132
          %v5134 = vsub.f32 %v5098, 0.75
          %v5135 = vmul.f32 %v5134, %v5087
          %v5136 = vsub.f32 2.25, %v5098
          %v5137 = vmul.f32 %v5136, %v5092
          %v5138 = vadd.f32 %v5135, %v5137
          %v5139 = vsub.f32 %v5098, 1.25
          %v5140 = vmul.f32 %v5139, %v5092
          %v5141 = vsub.f32 2.75, %v5098
          %v5142 = vmul.f32 %v5141, %v5097
          %v5143 = vadd.f32 %v5140, %v5142
          %v5144 = vmul.f32 %v4999, 0.8333333
          %v5145 = vsub.f32 %v5144, -1.8333334
          %v5146 = vmul.f32 %v5145, %v5103
          %v5147 = vsub.f32 -0.5, %v5144
          %v5148 = vmul.f32 %v5147, %v5108
          %v5149 = vadd.f32 %v5146, %v5148
          %v5150 = vsub.f32 %v5144, -1.5
          %v5151 = vmul.f32 %v5150, %v5108
          %v5152 = vsub.f32 -0.16666667, %v5144
          %v5153 = vmul.f32 %v5152, %v5113
          %v5154 = vadd.f32 %v5151, %v5153
          %v5155 = vsub.f32 %v5144, -1.1666666
          %v5156 = vmul.f32 %v5155, %v5113
          %v5157 = vsub.f32 0.16666667, %v5144
          %v5158 = vmul.f32 %v5157, %v5118
          %v5159 = vadd.f32 %v5156, %v5158
          %v5160 = vsub.f32 %v5144, -0.8333333
          %v5161 = vmul.f32 %v5160, %v5118
          %v5162 = vsub.f32 0.5, %v5144
          %v5163 = vmul.f32 %v5162, %v5123
          %v5164 = vadd.f32 %v5161, %v5163
          %v5165 = vsub.f32 %v5144, -0.5
          %v5166 = vmul.f32 %v5165, %v5123
          %v5167 = vsub.f32 0.8333333, %v5144
          %v5168 = vmul.f32 %v5167, %v5128
          %v5169 = vadd.f32 %v5166, %v5168
          %v5170 = vsub.f32 %v5144, -0.16666667
          %v5171 = vmul.f32 %v5170, %v5128
          %v5172 = vsub.f32 1.1666666, %v5144
          %v5173 = vmul.f32 %v5172, %v5133
          %v5174 = vadd.f32 %v5171, %v5173
          %v5175 = vsub.f32 %v5144, 0.16666667
          %v5176 = vmul.f32 %v5175, %v5133
          %v5177 = vsub.f32 1.5, %v5144
          %v5178 = vmul.f32 %v5177, %v5138
          %v5179 = vadd.f32 %v5176, %v5178
          %v5180 = vsub.f32 %v5144, 0.5
          %v5181 = vmul.f32 %v5180, %v5138
          %v5182 = vsub.f32 1.8333334, %v5144
          %v5183 = vmul.f32 %v5182, %v5143
          %v5184 = vadd.f32 %v5181, %v5183
          %v5185 = vsub.f32 0.0, %v4999
          %v5186 = vmul.f32 %v5185, 1.442695
          %v5187 = vpow.pop %v5186
          %v5188 = vadd.f32 %v5187, 1.0
          %v5189 = vrcp.pop %v5188
          %v5190 = vmul.f32 %v4999, %v5189
          %v5191 = vld [vmem:[#allocation10] sm:$0xff]
          %v5192 = vld [vmem:[#allocation10 + $0x8] sm:$0xff]
          %v5193 = vld [vmem:[#allocation10 + $0x10] sm:$0xff]
          %v5194 = vld [vmem:[#allocation10 + $0x18] sm:$0xff]
          %s5195 = scalar_lea.vmem [#allocation10], 32
          %v5196 = vld [vmem:[%s5195] sm:$0xff]
          %v5197 = vld [vmem:[%s5195 + $0x8] sm:$0xff]
          %v5198 = vld [vmem:[%s5195 + $0x10] sm:$0xff]
          %v5199 = vld [vmem:[%s5195 + $0x18] sm:$0xff]
          %v5201 = vsel %vm4993, %v5149, 0
          %5203 = vmatprep.subr.mxu0 0.0
          %5204 = vmatpush1.msra.mxu0 0.0
          %5205 = vmatprep.subr.mxu0 0.0
          %5206 = vmatpush1.msra.mxu0 0.0
          %5207 = vmatprep.subr.mxu0 0.0
          %5208 = vmatpush1.msra.mxu0 0.0
          %5209 = vmatprep.subr.mxu0 0.0
          %5210 = vmatpush1.msra.mxu0 0.0
          %5211 = vmatprep.subr.mxu0 0.0
          %5212 = vmatpush1.msra.mxu0 0.0
          %5213 = vmatprep.subr.mxu0 0.0
          %5214 = vmatpush1.msra.mxu0 0.0
          %5215 = vmatprep.subr.mxu0 0.0
          %5216 = vmatpush1.msra.mxu0 0.0
          %5217 = vmatprep.subr.mxu0 0.0
          %5218 = vmatpush1.msra.mxu0 0.0
          %5219 = vmatprep.subr.mxu0 0.0
          %5220 = vmatpush1.msra.mxu0 0.0
          %5221 = vmatprep.subr.mxu0 0.0
          %5222 = vmatpush1.msra.mxu0 0.0
          %5223 = vmatprep.subr.mxu0 0.0
          %5224 = vmatpush1.msra.mxu0 0.0
          %5225 = vmatprep.subr.mxu0 0.0
          %5226 = vmatpush1.msra.mxu0 0.0
          %5227 = vmatprep.subr.mxu0 0.0
          %5228 = vmatpush1.msra.mxu0 %v5199
          %5229 = vmatprep.subr.mxu0 0.0
          %5230 = vmatpush1.msra.mxu0 %v5198
          %5231 = vmatprep.subr.mxu0 0.0
          %5232 = vmatpush1.msra.mxu0 %v5197
          %5233 = vmatprep.subr.mxu0 0.0
          %5234 = vmatpush1.msra.mxu0 %v5196
          %5235 = vmatprep.subr.mxu0 0.0
          %5236 = vmatpush2.msra.mxu0 0.0
          %5237 = vmatprep.subr.mxu0 0.0
          %5238 = vmatpush2.msra.mxu0 0.0
          %5239 = vmatprep.subr.mxu0 0.0
          %5240 = vmatpush2.msra.mxu0 0.0
          %5241 = vmatprep.subr.mxu0 0.0
          %5242 = vmatpush2.msra.mxu0 0.0
          %5243 = vmatprep.subr.mxu0 0.0
          %5244 = vmatpush2.msra.mxu0 0.0
          %5245 = vmatprep.subr.mxu0 0.0
          %5246 = vmatpush2.msra.mxu0 0.0
          %5247 = vmatprep.subr.mxu0 0.0
          %5248 = vmatpush2.msra.mxu0 0.0
          %5249 = vmatprep.subr.mxu0 0.0
          %5250 = vmatpush2.msra.mxu0 0.0
          %5251 = vmatprep.subr.mxu0 0.0
          %5252 = vmatpush2.msra.mxu0 0.0
          %5253 = vmatprep.subr.mxu0 0.0
          %5254 = vmatpush2.msra.mxu0 0.0
          %5255 = vmatprep.subr.mxu0 0.0
          %5256 = vmatpush2.msra.mxu0 0.0
          %5257 = vmatprep.subr.mxu0 0.0
          %5258 = vmatpush2.msra.mxu0 0.0
          %5259 = vmatprep.subr.mxu0 0.0
          %5260 = vmatpush2.msra.mxu0 0.0
          %5261 = vmatprep.subr.mxu0 0.0
          %5262 = vmatpush2.msra.mxu0 0.0
          %5263 = vmatprep.subr.mxu0 0.0
          %5264 = vmatpush2.msra.mxu0 0.0
          %5265 = vmatprep.subr.mxu0 0.0
          %5266 = vmatpush2.msra.mxu0 0.0
          %5267 = vmatprep.mubr.f32.mxu0 0.0
          %5268 = vmatmul.mubr.f32.gmra.mxu0 %v5201
          %v5269 = vpop.f32.mrf.mxu0
          %v5270 = vadd.f32 0.0, %v5269
          %v5271 = vpop.f32.mrf.mxu0
          %5272 = vdwg.mxu0
          %v5274 = vsel %vm4993, %v5190, 0
          %5276 = vmatprep.subr.mxu0 0.0
          %5277 = vmatpush1.msra.mxu0 0.0
          %5278 = vmatprep.subr.mxu0 0.0
          %5279 = vmatpush1.msra.mxu0 0.0
          %5280 = vmatprep.subr.mxu0 0.0
          %5281 = vmatpush1.msra.mxu0 0.0
          %5282 = vmatprep.subr.mxu0 0.0
          %5283 = vmatpush1.msra.mxu0 0.0
          %5284 = vmatprep.subr.mxu0 0.0
          %5285 = vmatpush1.msra.mxu0 0.0
          %5286 = vmatprep.subr.mxu0 0.0
          %5287 = vmatpush1.msra.mxu0 0.0
          %5288 = vmatprep.subr.mxu0 0.0
          %5289 = vmatpush1.msra.mxu0 0.0
          %5290 = vmatprep.subr.mxu0 0.0
          %5291 = vmatpush1.msra.mxu0 0.0
          %5292 = vmatprep.subr.mxu0 0.0
          %5293 = vmatpush1.msra.mxu0 0.0
          %5294 = vmatprep.subr.mxu0 0.0
          %5295 = vmatpush1.msra.mxu0 0.0
          %5296 = vmatprep.subr.mxu0 0.0
          %5297 = vmatpush1.msra.mxu0 0.0
          %5298 = vmatprep.subr.mxu0 0.0
          %5299 = vmatpush1.msra.mxu0 0.0
          %5300 = vmatprep.subr.mxu0 0.0
          %5301 = vmatpush1.msra.mxu0 %v5194
          %5302 = vmatprep.subr.mxu0 0.0
          %5303 = vmatpush1.msra.mxu0 %v5193
          %5304 = vmatprep.subr.mxu0 0.0
          %5305 = vmatpush1.msra.mxu0 %v5192
          %5306 = vmatprep.subr.mxu0 0.0
          %5307 = vmatpush1.msra.mxu0 %v5191
          %5308 = vmatprep.subr.mxu0 0.0
          %5309 = vmatpush2.msra.mxu0 0.0
          %5310 = vmatprep.subr.mxu0 0.0
          %5311 = vmatpush2.msra.mxu0 0.0
          %5312 = vmatprep.subr.mxu0 0.0
          %5313 = vmatpush2.msra.mxu0 0.0
          %5314 = vmatprep.subr.mxu0 0.0
          %5315 = vmatpush2.msra.mxu0 0.0
          %5316 = vmatprep.subr.mxu0 0.0
          %5317 = vmatpush2.msra.mxu0 0.0
          %5318 = vmatprep.subr.mxu0 0.0
          %5319 = vmatpush2.msra.mxu0 0.0
          %5320 = vmatprep.subr.mxu0 0.0
          %5321 = vmatpush2.msra.mxu0 0.0
          %5322 = vmatprep.subr.mxu0 0.0
          %5323 = vmatpush2.msra.mxu0 0.0
          %5324 = vmatprep.subr.mxu0 0.0
          %5325 = vmatpush2.msra.mxu0 0.0
          %5326 = vmatprep.subr.mxu0 0.0
          %5327 = vmatpush2.msra.mxu0 0.0
          %5328 = vmatprep.subr.mxu0 0.0
          %5329 = vmatpush2.msra.mxu0 0.0
          %5330 = vmatprep.subr.mxu0 0.0
          %5331 = vmatpush2.msra.mxu0 0.0
          %5332 = vmatprep.subr.mxu0 0.0
          %5333 = vmatpush2.msra.mxu0 0.0
          %5334 = vmatprep.subr.mxu0 0.0
          %5335 = vmatpush2.msra.mxu0 0.0
          %5336 = vmatprep.subr.mxu0 0.0
          %5337 = vmatpush2.msra.mxu0 0.0
          %5338 = vmatprep.subr.mxu0 0.0
          %5339 = vmatpush2.msra.mxu0 0.0
          %5340 = vmatprep.mubr.f32.mxu0 0.0
          %5341 = vmatmul.mubr.f32.gmra.mxu0 %v5274
          %v5342 = vpop.f32.mrf.mxu0
          %v5343 = vadd.f32 %v5270, %v5342
          %v5344 = vpop.f32.mrf.mxu0
          %5345 = vdwg.mxu0
          %s5346 = scalar_lea.vmem [#allocation10], 64
          %v5347 = vld [vmem:[%s5346] sm:$0xff]
          %v5348 = vld [vmem:[%s5346 + $0x8] sm:$0xff]
          %v5349 = vld [vmem:[%s5346 + $0x10] sm:$0xff]
          %v5350 = vld [vmem:[%s5346 + $0x18] sm:$0xff]
          %v5352 = vsel %vm4993, %v5154, 0
          %5354 = vmatprep.subr.mxu0 0.0
          %5355 = vmatpush1.msra.mxu0 0.0
          %5356 = vmatprep.subr.mxu0 0.0
          %5357 = vmatpush1.msra.mxu0 0.0
          %5358 = vmatprep.subr.mxu0 0.0
          %5359 = vmatpush1.msra.mxu0 0.0
          %5360 = vmatprep.subr.mxu0 0.0
          %5361 = vmatpush1.msra.mxu0 0.0
          %5362 = vmatprep.subr.mxu0 0.0
          %5363 = vmatpush1.msra.mxu0 0.0
          %5364 = vmatprep.subr.mxu0 0.0
          %5365 = vmatpush1.msra.mxu0 0.0
          %5366 = vmatprep.subr.mxu0 0.0
          %5367 = vmatpush1.msra.mxu0 0.0
          %5368 = vmatprep.subr.mxu0 0.0
          %5369 = vmatpush1.msra.mxu0 0.0
          %5370 = vmatprep.subr.mxu0 0.0
          %5371 = vmatpush1.msra.mxu0 0.0
          %5372 = vmatprep.subr.mxu0 0.0
          %5373 = vmatpush1.msra.mxu0 0.0
          %5374 = vmatprep.subr.mxu0 0.0
          %5375 = vmatpush1.msra.mxu0 0.0
          %5376 = vmatprep.subr.mxu0 0.0
          %5377 = vmatpush1.msra.mxu0 0.0
          %5378 = vmatprep.subr.mxu0 0.0
          %5379 = vmatpush1.msra.mxu0 %v5350
          %5380 = vmatprep.subr.mxu0 0.0
          %5381 = vmatpush1.msra.mxu0 %v5349
          %5382 = vmatprep.subr.mxu0 0.0
          %5383 = vmatpush1.msra.mxu0 %v5348
          %5384 = vmatprep.subr.mxu0 0.0
          %5385 = vmatpush1.msra.mxu0 %v5347
          %5386 = vmatprep.subr.mxu0 0.0
          %5387 = vmatpush2.msra.mxu0 0.0
          %5388 = vmatprep.subr.mxu0 0.0
          %5389 = vmatpush2.msra.mxu0 0.0
          %5390 = vmatprep.subr.mxu0 0.0
          %5391 = vmatpush2.msra.mxu0 0.0
          %5392 = vmatprep.subr.mxu0 0.0
          %5393 = vmatpush2.msra.mxu0 0.0
          %5394 = vmatprep.subr.mxu0 0.0
          %5395 = vmatpush2.msra.mxu0 0.0
          %5396 = vmatprep.subr.mxu0 0.0
          %5397 = vmatpush2.msra.mxu0 0.0
          %5398 = vmatprep.subr.mxu0 0.0
          %5399 = vmatpush2.msra.mxu0 0.0
          %5400 = vmatprep.subr.mxu0 0.0
          %5401 = vmatpush2.msra.mxu0 0.0
          %5402 = vmatprep.subr.mxu0 0.0
          %5403 = vmatpush2.msra.mxu0 0.0
          %5404 = vmatprep.subr.mxu0 0.0
          %5405 = vmatpush2.msra.mxu0 0.0
          %5406 = vmatprep.subr.mxu0 0.0
          %5407 = vmatpush2.msra.mxu0 0.0
          %5408 = vmatprep.subr.mxu0 0.0
          %5409 = vmatpush2.msra.mxu0 0.0
          %5410 = vmatprep.subr.mxu0 0.0
          %5411 = vmatpush2.msra.mxu0 0.0
          %5412 = vmatprep.subr.mxu0 0.0
          %5413 = vmatpush2.msra.mxu0 0.0
          %5414 = vmatprep.subr.mxu0 0.0
          %5415 = vmatpush2.msra.mxu0 0.0
          %5416 = vmatprep.subr.mxu0 0.0
          %5417 = vmatpush2.msra.mxu0 0.0
          %5418 = vmatprep.mubr.f32.mxu0 0.0
          %5419 = vmatmul.mubr.f32.gmra.mxu0 %v5352
          %v5420 = vpop.f32.mrf.mxu0
          %v5421 = vadd.f32 0.0, %v5420
          %v5422 = vpop.f32.mrf.mxu0
          %5423 = vdwg.mxu0
          %v5424 = vadd.f32 %v5343, %v5421
          %s5425 = scalar_lea.vmem [#allocation10], 96
          %v5426 = vld [vmem:[%s5425] sm:$0xff]
          %v5427 = vld [vmem:[%s5425 + $0x8] sm:$0xff]
          %v5428 = vld [vmem:[%s5425 + $0x10] sm:$0xff]
          %v5429 = vld [vmem:[%s5425 + $0x18] sm:$0xff]
          %v5431 = vsel %vm4993, %v5159, 0
          %5433 = vmatprep.subr.mxu0 0.0
          %5434 = vmatpush1.msra.mxu0 0.0
          %5435 = vmatprep.subr.mxu0 0.0
          %5436 = vmatpush1.msra.mxu0 0.0
          %5437 = vmatprep.subr.mxu0 0.0
          %5438 = vmatpush1.msra.mxu0 0.0
          %5439 = vmatprep.subr.mxu0 0.0
          %5440 = vmatpush1.msra.mxu0 0.0
          %5441 = vmatprep.subr.mxu0 0.0
          %5442 = vmatpush1.msra.mxu0 0.0
          %5443 = vmatprep.subr.mxu0 0.0
          %5444 = vmatpush1.msra.mxu0 0.0
          %5445 = vmatprep.subr.mxu0 0.0
          %5446 = vmatpush1.msra.mxu0 0.0
          %5447 = vmatprep.subr.mxu0 0.0
          %5448 = vmatpush1.msra.mxu0 0.0
          %5449 = vmatprep.subr.mxu0 0.0
          %5450 = vmatpush1.msra.mxu0 0.0
          %5451 = vmatprep.subr.mxu0 0.0
          %5452 = vmatpush1.msra.mxu0 0.0
          %5453 = vmatprep.subr.mxu0 0.0
          %5454 = vmatpush1.msra.mxu0 0.0
          %5455 = vmatprep.subr.mxu0 0.0
          %5456 = vmatpush1.msra.mxu0 0.0
          %5457 = vmatprep.subr.mxu0 0.0
          %5458 = vmatpush1.msra.mxu0 %v5429
          %5459 = vmatprep.subr.mxu0 0.0
          %5460 = vmatpush1.msra.mxu0 %v5428
          %5461 = vmatprep.subr.mxu0 0.0
          %5462 = vmatpush1.msra.mxu0 %v5427
          %5463 = vmatprep.subr.mxu0 0.0
          %5464 = vmatpush1.msra.mxu0 %v5426
          %5465 = vmatprep.subr.mxu0 0.0
          %5466 = vmatpush2.msra.mxu0 0.0
          %5467 = vmatprep.subr.mxu0 0.0
          %5468 = vmatpush2.msra.mxu0 0.0
          %5469 = vmatprep.subr.mxu0 0.0
          %5470 = vmatpush2.msra.mxu0 0.0
          %5471 = vmatprep.subr.mxu0 0.0
          %5472 = vmatpush2.msra.mxu0 0.0
          %5473 = vmatprep.subr.mxu0 0.0
          %5474 = vmatpush2.msra.mxu0 0.0
          %5475 = vmatprep.subr.mxu0 0.0
          %5476 = vmatpush2.msra.mxu0 0.0
          %5477 = vmatprep.subr.mxu0 0.0
          %5478 = vmatpush2.msra.mxu0 0.0
          %5479 = vmatprep.subr.mxu0 0.0
          %5480 = vmatpush2.msra.mxu0 0.0
          %5481 = vmatprep.subr.mxu0 0.0
          %5482 = vmatpush2.msra.mxu0 0.0
          %5483 = vmatprep.subr.mxu0 0.0
          %5484 = vmatpush2.msra.mxu0 0.0
          %5485 = vmatprep.subr.mxu0 0.0
          %5486 = vmatpush2.msra.mxu0 0.0
          %5487 = vmatprep.subr.mxu0 0.0
          %5488 = vmatpush2.msra.mxu0 0.0
          %5489 = vmatprep.subr.mxu0 0.0
          %5490 = vmatpush2.msra.mxu0 0.0
          %5491 = vmatprep.subr.mxu0 0.0
          %5492 = vmatpush2.msra.mxu0 0.0
          %5493 = vmatprep.subr.mxu0 0.0
          %5494 = vmatpush2.msra.mxu0 0.0
          %5495 = vmatprep.subr.mxu0 0.0
          %5496 = vmatpush2.msra.mxu0 0.0
          %5497 = vmatprep.mubr.f32.mxu0 0.0
          %5498 = vmatmul.mubr.f32.gmra.mxu0 %v5431
          %v5499 = vpop.f32.mrf.mxu0
          %v5500 = vadd.f32 0.0, %v5499
          %v5501 = vpop.f32.mrf.mxu0
          %5502 = vdwg.mxu0
          %v5503 = vadd.f32 %v5424, %v5500
          %s5504 = scalar_lea.vmem [#allocation10], 128
          %v5505 = vld [vmem:[%s5504] sm:$0xff]
          %v5506 = vld [vmem:[%s5504 + $0x8] sm:$0xff]
          %v5507 = vld [vmem:[%s5504 + $0x10] sm:$0xff]
          %v5508 = vld [vmem:[%s5504 + $0x18] sm:$0xff]
          %v5510 = vsel %vm4993, %v5164, 0
          %5512 = vmatprep.subr.mxu0 0.0
          %5513 = vmatpush1.msra.mxu0 0.0
          %5514 = vmatprep.subr.mxu0 0.0
          %5515 = vmatpush1.msra.mxu0 0.0
          %5516 = vmatprep.subr.mxu0 0.0
          %5517 = vmatpush1.msra.mxu0 0.0
          %5518 = vmatprep.subr.mxu0 0.0
          %5519 = vmatpush1.msra.mxu0 0.0
          %5520 = vmatprep.subr.mxu0 0.0
          %5521 = vmatpush1.msra.mxu0 0.0
          %5522 = vmatprep.subr.mxu0 0.0
          %5523 = vmatpush1.msra.mxu0 0.0
          %5524 = vmatprep.subr.mxu0 0.0
          %5525 = vmatpush1.msra.mxu0 0.0
          %5526 = vmatprep.subr.mxu0 0.0
          %5527 = vmatpush1.msra.mxu0 0.0
          %5528 = vmatprep.subr.mxu0 0.0
          %5529 = vmatpush1.msra.mxu0 0.0
          %5530 = vmatprep.subr.mxu0 0.0
          %5531 = vmatpush1.msra.mxu0 0.0
          %5532 = vmatprep.subr.mxu0 0.0
          %5533 = vmatpush1.msra.mxu0 0.0
          %5534 = vmatprep.subr.mxu0 0.0
          %5535 = vmatpush1.msra.mxu0 0.0
          %5536 = vmatprep.subr.mxu0 0.0
          %5537 = vmatpush1.msra.mxu0 %v5508
          %5538 = vmatprep.subr.mxu0 0.0
          %5539 = vmatpush1.msra.mxu0 %v5507
          %5540 = vmatprep.subr.mxu0 0.0
          %5541 = vmatpush1.msra.mxu0 %v5506
          %5542 = vmatprep.subr.mxu0 0.0
          %5543 = vmatpush1.msra.mxu0 %v5505
          %5544 = vmatprep.subr.mxu0 0.0
          %5545 = vmatpush2.msra.mxu0 0.0
          %5546 = vmatprep.subr.mxu0 0.0
          %5547 = vmatpush2.msra.mxu0 0.0
          %5548 = vmatprep.subr.mxu0 0.0
          %5549 = vmatpush2.msra.mxu0 0.0
          %5550 = vmatprep.subr.mxu0 0.0
          %5551 = vmatpush2.msra.mxu0 0.0
          %5552 = vmatprep.subr.mxu0 0.0
          %5553 = vmatpush2.msra.mxu0 0.0
          %5554 = vmatprep.subr.mxu0 0.0
          %5555 = vmatpush2.msra.mxu0 0.0
          %5556 = vmatprep.subr.mxu0 0.0
          %5557 = vmatpush2.msra.mxu0 0.0
          %5558 = vmatprep.subr.mxu0 0.0
          %5559 = vmatpush2.msra.mxu0 0.0
          %5560 = vmatprep.subr.mxu0 0.0
          %5561 = vmatpush2.msra.mxu0 0.0
          %5562 = vmatprep.subr.mxu0 0.0
          %5563 = vmatpush2.msra.mxu0 0.0
          %5564 = vmatprep.subr.mxu0 0.0
          %5565 = vmatpush2.msra.mxu0 0.0
          %5566 = vmatprep.subr.mxu0 0.0
          %5567 = vmatpush2.msra.mxu0 0.0
          %5568 = vmatprep.subr.mxu0 0.0
          %5569 = vmatpush2.msra.mxu0 0.0
          %5570 = vmatprep.subr.mxu0 0.0
          %5571 = vmatpush2.msra.mxu0 0.0
          %5572 = vmatprep.subr.mxu0 0.0
          %5573 = vmatpush2.msra.mxu0 0.0
          %5574 = vmatprep.subr.mxu0 0.0
          %5575 = vmatpush2.msra.mxu0 0.0
          %5576 = vmatprep.mubr.f32.mxu0 0.0
          %5577 = vmatmul.mubr.f32.gmra.mxu0 %v5510
          %v5578 = vpop.f32.mrf.mxu0
          %v5579 = vadd.f32 0.0, %v5578
          %v5580 = vpop.f32.mrf.mxu0
          %5581 = vdwg.mxu0
          %v5582 = vadd.f32 %v5503, %v5579
          %s5583 = scalar_lea.vmem [#allocation10], 160
          %v5584 = vld [vmem:[%s5583] sm:$0xff]
          %v5585 = vld [vmem:[%s5583 + $0x8] sm:$0xff]
          %v5586 = vld [vmem:[%s5583 + $0x10] sm:$0xff]
          %v5587 = vld [vmem:[%s5583 + $0x18] sm:$0xff]
          %v5589 = vsel %vm4993, %v5169, 0
          %5591 = vmatprep.subr.mxu0 0.0
          %5592 = vmatpush1.msra.mxu0 0.0
          %5593 = vmatprep.subr.mxu0 0.0
          %5594 = vmatpush1.msra.mxu0 0.0
          %5595 = vmatprep.subr.mxu0 0.0
          %5596 = vmatpush1.msra.mxu0 0.0
          %5597 = vmatprep.subr.mxu0 0.0
          %5598 = vmatpush1.msra.mxu0 0.0
          %5599 = vmatprep.subr.mxu0 0.0
          %5600 = vmatpush1.msra.mxu0 0.0
          %5601 = vmatprep.subr.mxu0 0.0
          %5602 = vmatpush1.msra.mxu0 0.0
          %5603 = vmatprep.subr.mxu0 0.0
          %5604 = vmatpush1.msra.mxu0 0.0
          %5605 = vmatprep.subr.mxu0 0.0
          %5606 = vmatpush1.msra.mxu0 0.0
          %5607 = vmatprep.subr.mxu0 0.0
          %5608 = vmatpush1.msra.mxu0 0.0
          %5609 = vmatprep.subr.mxu0 0.0
          %5610 = vmatpush1.msra.mxu0 0.0
          %5611 = vmatprep.subr.mxu0 0.0
          %5612 = vmatpush1.msra.mxu0 0.0
          %5613 = vmatprep.subr.mxu0 0.0
          %5614 = vmatpush1.msra.mxu0 0.0
          %5615 = vmatprep.subr.mxu0 0.0
          %5616 = vmatpush1.msra.mxu0 %v5587
          %5617 = vmatprep.subr.mxu0 0.0
          %5618 = vmatpush1.msra.mxu0 %v5586
          %5619 = vmatprep.subr.mxu0 0.0
          %5620 = vmatpush1.msra.mxu0 %v5585
          %5621 = vmatprep.subr.mxu0 0.0
          %5622 = vmatpush1.msra.mxu0 %v5584
          %5623 = vmatprep.subr.mxu0 0.0
          %5624 = vmatpush2.msra.mxu0 0.0
          %5625 = vmatprep.subr.mxu0 0.0
          %5626 = vmatpush2.msra.mxu0 0.0
          %5627 = vmatprep.subr.mxu0 0.0
          %5628 = vmatpush2.msra.mxu0 0.0
          %5629 = vmatprep.subr.mxu0 0.0
          %5630 = vmatpush2.msra.mxu0 0.0
          %5631 = vmatprep.subr.mxu0 0.0
          %5632 = vmatpush2.msra.mxu0 0.0
          %5633 = vmatprep.subr.mxu0 0.0
          %5634 = vmatpush2.msra.mxu0 0.0
          %5635 = vmatprep.subr.mxu0 0.0
          %5636 = vmatpush2.msra.mxu0 0.0
          %5637 = vmatprep.subr.mxu0 0.0
          %5638 = vmatpush2.msra.mxu0 0.0
          %5639 = vmatprep.subr.mxu0 0.0
          %5640 = vmatpush2.msra.mxu0 0.0
          %5641 = vmatprep.subr.mxu0 0.0
          %5642 = vmatpush2.msra.mxu0 0.0
          %5643 = vmatprep.subr.mxu0 0.0
          %5644 = vmatpush2.msra.mxu0 0.0
          %5645 = vmatprep.subr.mxu0 0.0
          %5646 = vmatpush2.msra.mxu0 0.0
          %5647 = vmatprep.subr.mxu0 0.0
          %5648 = vmatpush2.msra.mxu0 0.0
          %5649 = vmatprep.subr.mxu0 0.0
          %5650 = vmatpush2.msra.mxu0 0.0
          %5651 = vmatprep.subr.mxu0 0.0
          %5652 = vmatpush2.msra.mxu0 0.0
          %5653 = vmatprep.subr.mxu0 0.0
          %5654 = vmatpush2.msra.mxu0 0.0
          %5655 = vmatprep.mubr.f32.mxu0 0.0
          %5656 = vmatmul.mubr.f32.gmra.mxu0 %v5589
          %v5657 = vpop.f32.mrf.mxu0
          %v5658 = vadd.f32 0.0, %v5657
          %v5659 = vpop.f32.mrf.mxu0
          %5660 = vdwg.mxu0
          %v5661 = vadd.f32 %v5582, %v5658
          %s5662 = scalar_lea.vmem [#allocation10], 192
          %v5663 = vld [vmem:[%s5662] sm:$0xff]
          %v5664 = vld [vmem:[%s5662 + $0x8] sm:$0xff]
          %v5665 = vld [vmem:[%s5662 + $0x10] sm:$0xff]
          %v5666 = vld [vmem:[%s5662 + $0x18] sm:$0xff]
          %v5668 = vsel %vm4993, %v5174, 0
          %5670 = vmatprep.subr.mxu0 0.0
          %5671 = vmatpush1.msra.mxu0 0.0
          %5672 = vmatprep.subr.mxu0 0.0
          %5673 = vmatpush1.msra.mxu0 0.0
          %5674 = vmatprep.subr.mxu0 0.0
          %5675 = vmatpush1.msra.mxu0 0.0
          %5676 = vmatprep.subr.mxu0 0.0
          %5677 = vmatpush1.msra.mxu0 0.0
          %5678 = vmatprep.subr.mxu0 0.0
          %5679 = vmatpush1.msra.mxu0 0.0
          %5680 = vmatprep.subr.mxu0 0.0
          %5681 = vmatpush1.msra.mxu0 0.0
          %5682 = vmatprep.subr.mxu0 0.0
          %5683 = vmatpush1.msra.mxu0 0.0
          %5684 = vmatprep.subr.mxu0 0.0
          %5685 = vmatpush1.msra.mxu0 0.0
          %5686 = vmatprep.subr.mxu0 0.0
          %5687 = vmatpush1.msra.mxu0 0.0
          %5688 = vmatprep.subr.mxu0 0.0
          %5689 = vmatpush1.msra.mxu0 0.0
          %5690 = vmatprep.subr.mxu0 0.0
          %5691 = vmatpush1.msra.mxu0 0.0
          %5692 = vmatprep.subr.mxu0 0.0
          %5693 = vmatpush1.msra.mxu0 0.0
          %5694 = vmatprep.subr.mxu0 0.0
          %5695 = vmatpush1.msra.mxu0 %v5666
          %5696 = vmatprep.subr.mxu0 0.0
          %5697 = vmatpush1.msra.mxu0 %v5665
          %5698 = vmatprep.subr.mxu0 0.0
          %5699 = vmatpush1.msra.mxu0 %v5664
          %5700 = vmatprep.subr.mxu0 0.0
          %5701 = vmatpush1.msra.mxu0 %v5663
          %5702 = vmatprep.subr.mxu0 0.0
          %5703 = vmatpush2.msra.mxu0 0.0
          %5704 = vmatprep.subr.mxu0 0.0
          %5705 = vmatpush2.msra.mxu0 0.0
          %5706 = vmatprep.subr.mxu0 0.0
          %5707 = vmatpush2.msra.mxu0 0.0
          %5708 = vmatprep.subr.mxu0 0.0
          %5709 = vmatpush2.msra.mxu0 0.0
          %5710 = vmatprep.subr.mxu0 0.0
          %5711 = vmatpush2.msra.mxu0 0.0
          %5712 = vmatprep.subr.mxu0 0.0
          %5713 = vmatpush2.msra.mxu0 0.0
          %5714 = vmatprep.subr.mxu0 0.0
          %5715 = vmatpush2.msra.mxu0 0.0
          %5716 = vmatprep.subr.mxu0 0.0
          %5717 = vmatpush2.msra.mxu0 0.0
          %5718 = vmatprep.subr.mxu0 0.0
          %5719 = vmatpush2.msra.mxu0 0.0
          %5720 = vmatprep.subr.mxu0 0.0
          %5721 = vmatpush2.msra.mxu0 0.0
          %5722 = vmatprep.subr.mxu0 0.0
          %5723 = vmatpush2.msra.mxu0 0.0
          %5724 = vmatprep.subr.mxu0 0.0
          %5725 = vmatpush2.msra.mxu0 0.0
          %5726 = vmatprep.subr.mxu0 0.0
          %5727 = vmatpush2.msra.mxu0 0.0
          %5728 = vmatprep.subr.mxu0 0.0
          %5729 = vmatpush2.msra.mxu0 0.0
          %5730 = vmatprep.subr.mxu0 0.0
          %5731 = vmatpush2.msra.mxu0 0.0
          %5732 = vmatprep.subr.mxu0 0.0
          %5733 = vmatpush2.msra.mxu0 0.0
          %5734 = vmatprep.mubr.f32.mxu0 0.0
          %5735 = vmatmul.mubr.f32.gmra.mxu0 %v5668
          %v5736 = vpop.f32.mrf.mxu0
          %v5737 = vadd.f32 0.0, %v5736
          %v5738 = vpop.f32.mrf.mxu0
          %5739 = vdwg.mxu0
          %v5740 = vadd.f32 %v5661, %v5737
          %s5741 = scalar_lea.vmem [#allocation10], 224
          %v5742 = vld [vmem:[%s5741] sm:$0xff]
          %v5743 = vld [vmem:[%s5741 + $0x8] sm:$0xff]
          %v5744 = vld [vmem:[%s5741 + $0x10] sm:$0xff]
          %v5745 = vld [vmem:[%s5741 + $0x18] sm:$0xff]
          %v5747 = vsel %vm4993, %v5179, 0
          %5749 = vmatprep.subr.mxu0 0.0
          %5750 = vmatpush1.msra.mxu0 0.0
          %5751 = vmatprep.subr.mxu0 0.0
          %5752 = vmatpush1.msra.mxu0 0.0
          %5753 = vmatprep.subr.mxu0 0.0
          %5754 = vmatpush1.msra.mxu0 0.0
          %5755 = vmatprep.subr.mxu0 0.0
          %5756 = vmatpush1.msra.mxu0 0.0
          %5757 = vmatprep.subr.mxu0 0.0
          %5758 = vmatpush1.msra.mxu0 0.0
          %5759 = vmatprep.subr.mxu0 0.0
          %5760 = vmatpush1.msra.mxu0 0.0
          %5761 = vmatprep.subr.mxu0 0.0
          %5762 = vmatpush1.msra.mxu0 0.0
          %5763 = vmatprep.subr.mxu0 0.0
          %5764 = vmatpush1.msra.mxu0 0.0
          %5765 = vmatprep.subr.mxu0 0.0
          %5766 = vmatpush1.msra.mxu0 0.0
          %5767 = vmatprep.subr.mxu0 0.0
          %5768 = vmatpush1.msra.mxu0 0.0
          %5769 = vmatprep.subr.mxu0 0.0
          %5770 = vmatpush1.msra.mxu0 0.0
          %5771 = vmatprep.subr.mxu0 0.0
          %5772 = vmatpush1.msra.mxu0 0.0
          %5773 = vmatprep.subr.mxu0 0.0
          %5774 = vmatpush1.msra.mxu0 %v5745
          %5775 = vmatprep.subr.mxu0 0.0
          %5776 = vmatpush1.msra.mxu0 %v5744
          %5777 = vmatprep.subr.mxu0 0.0
          %5778 = vmatpush1.msra.mxu0 %v5743
          %5779 = vmatprep.subr.mxu0 0.0
          %5780 = vmatpush1.msra.mxu0 %v5742
          %5781 = vmatprep.subr.mxu0 0.0
          %5782 = vmatpush2.msra.mxu0 0.0
          %5783 = vmatprep.subr.mxu0 0.0
          %5784 = vmatpush2.msra.mxu0 0.0
          %5785 = vmatprep.subr.mxu0 0.0
          %5786 = vmatpush2.msra.mxu0 0.0
          %5787 = vmatprep.subr.mxu0 0.0
          %5788 = vmatpush2.msra.mxu0 0.0
          %5789 = vmatprep.subr.mxu0 0.0
          %5790 = vmatpush2.msra.mxu0 0.0
          %5791 = vmatprep.subr.mxu0 0.0
          %5792 = vmatpush2.msra.mxu0 0.0
          %5793 = vmatprep.subr.mxu0 0.0
          %5794 = vmatpush2.msra.mxu0 0.0
          %5795 = vmatprep.subr.mxu0 0.0
          %5796 = vmatpush2.msra.mxu0 0.0
          %5797 = vmatprep.subr.mxu0 0.0
          %5798 = vmatpush2.msra.mxu0 0.0
          %5799 = vmatprep.subr.mxu0 0.0
          %5800 = vmatpush2.msra.mxu0 0.0
          %5801 = vmatprep.subr.mxu0 0.0
          %5802 = vmatpush2.msra.mxu0 0.0
          %5803 = vmatprep.subr.mxu0 0.0
          %5804 = vmatpush2.msra.mxu0 0.0
          %5805 = vmatprep.subr.mxu0 0.0
          %5806 = vmatpush2.msra.mxu0 0.0
          %5807 = vmatprep.subr.mxu0 0.0
          %5808 = vmatpush2.msra.mxu0 0.0
          %5809 = vmatprep.subr.mxu0 0.0
          %5810 = vmatpush2.msra.mxu0 0.0
          %5811 = vmatprep.subr.mxu0 0.0
          %5812 = vmatpush2.msra.mxu0 0.0
          %5813 = vmatprep.mubr.f32.mxu0 0.0
          %5814 = vmatmul.mubr.f32.gmra.mxu0 %v5747
          %v5815 = vpop.f32.mrf.mxu0
          %v5816 = vadd.f32 0.0, %v5815
          %v5817 = vpop.f32.mrf.mxu0
          %5818 = vdwg.mxu0
          %v5819 = vadd.f32 %v5740, %v5816
          %s5820 = scalar_lea.vmem [#allocation10], 256
          %v5821 = vld [vmem:[%s5820] sm:$0xff]
          %v5822 = vld [vmem:[%s5820 + $0x8] sm:$0xff]
          %v5823 = vld [vmem:[%s5820 + $0x10] sm:$0xff]
          %v5824 = vld [vmem:[%s5820 + $0x18] sm:$0xff]
          %v5826 = vsel %vm4993, %v5184, 0
          %5828 = vmatprep.subr.mxu0 0.0
          %5829 = vmatpush1.msra.mxu0 0.0
          %5830 = vmatprep.subr.mxu0 0.0
          %5831 = vmatpush1.msra.mxu0 0.0
          %5832 = vmatprep.subr.mxu0 0.0
          %5833 = vmatpush1.msra.mxu0 0.0
          %5834 = vmatprep.subr.mxu0 0.0
          %5835 = vmatpush1.msra.mxu0 0.0
          %5836 = vmatprep.subr.mxu0 0.0
          %5837 = vmatpush1.msra.mxu0 0.0
          %5838 = vmatprep.subr.mxu0 0.0
          %5839 = vmatpush1.msra.mxu0 0.0
          %5840 = vmatprep.subr.mxu0 0.0
          %5841 = vmatpush1.msra.mxu0 0.0
          %5842 = vmatprep.subr.mxu0 0.0
          %5843 = vmatpush1.msra.mxu0 0.0
          %5844 = vmatprep.subr.mxu0 0.0
          %5845 = vmatpush1.msra.mxu0 0.0
          %5846 = vmatprep.subr.mxu0 0.0
          %5847 = vmatpush1.msra.mxu0 0.0
          %5848 = vmatprep.subr.mxu0 0.0
          %5849 = vmatpush1.msra.mxu0 0.0
          %5850 = vmatprep.subr.mxu0 0.0
          %5851 = vmatpush1.msra.mxu0 0.0
          %5852 = vmatprep.subr.mxu0 0.0
          %5853 = vmatpush1.msra.mxu0 %v5824
          %5854 = vmatprep.subr.mxu0 0.0
          %5855 = vmatpush1.msra.mxu0 %v5823
          %5856 = vmatprep.subr.mxu0 0.0
          %5857 = vmatpush1.msra.mxu0 %v5822
          %5858 = vmatprep.subr.mxu0 0.0
          %5859 = vmatpush1.msra.mxu0 %v5821
          %5860 = vmatprep.subr.mxu0 0.0
          %5861 = vmatpush2.msra.mxu0 0.0
          %5862 = vmatprep.subr.mxu0 0.0
          %5863 = vmatpush2.msra.mxu0 0.0
          %5864 = vmatprep.subr.mxu0 0.0
          %5865 = vmatpush2.msra.mxu0 0.0
          %5866 = vmatprep.subr.mxu0 0.0
          %5867 = vmatpush2.msra.mxu0 0.0
          %5868 = vmatprep.subr.mxu0 0.0
          %5869 = vmatpush2.msra.mxu0 0.0
          %5870 = vmatprep.subr.mxu0 0.0
          %5871 = vmatpush2.msra.mxu0 0.0
          %5872 = vmatprep.subr.mxu0 0.0
          %5873 = vmatpush2.msra.mxu0 0.0
          %5874 = vmatprep.subr.mxu0 0.0
          %5875 = vmatpush2.msra.mxu0 0.0
          %5876 = vmatprep.subr.mxu0 0.0
          %5877 = vmatpush2.msra.mxu0 0.0
          %5878 = vmatprep.subr.mxu0 0.0
          %5879 = vmatpush2.msra.mxu0 0.0
          %5880 = vmatprep.subr.mxu0 0.0
          %5881 = vmatpush2.msra.mxu0 0.0
          %5882 = vmatprep.subr.mxu0 0.0
          %5883 = vmatpush2.msra.mxu0 0.0
          %5884 = vmatprep.subr.mxu0 0.0
          %5885 = vmatpush2.msra.mxu0 0.0
          %5886 = vmatprep.subr.mxu0 0.0
          %5887 = vmatpush2.msra.mxu0 0.0
          %5888 = vmatprep.subr.mxu0 0.0
          %5889 = vmatpush2.msra.mxu0 0.0
          %5890 = vmatprep.subr.mxu0 0.0
          %5891 = vmatpush2.msra.mxu0 0.0
          %5892 = vmatprep.mubr.f32.mxu0 0.0
          %5893 = vmatmul.mubr.f32.gmra.mxu0 %v5826
          %v5894 = vpop.f32.mrf.mxu0
          %v5895 = vadd.f32 0.0, %v5894
          %v5896 = vpop.f32.mrf.mxu0
          %5897 = vdwg.mxu0
          %v5898 = vadd.f32 %v5819, %v5895
          %v5899 = vlaneseq
          %v5900 = vand.u32 %v5899, 127
          %vm5901 = vcmp.lt.s32.totalorder %v5900, 10
          %v5902 = vsel %vm5901, %v5898, -1e+30
          %5903 = vmax.xlane.f32.xlu0 %v5902
          %v5904 = vpop.xlane.xlu0 %5903
          %v5905 = vsub.f32 %v5902, %v5904
          %v5906 = vmul.f32 %v5905, 1.442695
          %v5907 = vpow.pop %v5906
          %5908 = vadd.xlane.f32.xlu0 %v5907
          %v5909 = vpop.xlane.xlu0 %5908
          %v5910 = vrcp.pop %v5909
          %v5911 = vmul.f32 %v5907, %v5910
          %5912 = vst [vmem:[#allocation11] sm:$0xff] %v5911
        $region68: #{tpu_custom_call.1} parent=47 // pred_fallthru
          _
        // Predicated region
        $region69: #{tpu_custom_call.1} parent=47 // pred_check
          %p5913 = pneg %p188
        $region70: #{tpu_custom_call.1} parent=47 // pred_check_branch
          %5915 = sbr.rel (%p5913) target = $region72
        $region71: #{tpu_custom_call.1} parent=47 // pred_region
          %s5917 = ssub.s32 128, 128
          %5918 = vsyncadd [#allocation7], %s5917
          %s5920 = sshll.u32 [#allocation11], 4
          %s5921 = int_to_ptr.vmem [resolvable:$true] %s5920
          %5923 = dma.vmem_to_hbm [thread:$0]  %s5921, 128, %s7, [#allocation7]
        $region72: #{tpu_custom_call.1} parent=47 // pred_fallthru
          _
        // Predicated region
        $region73: #{tpu_custom_call.1} parent=47 // pred_check
          %p5924 = pneg %p188
        $region74: #{tpu_custom_call.1} parent=47 // pred_check_branch
          %5926 = sbr.rel (%p5924) target = $region76
        $region75: #{tpu_custom_call.1} parent=47 // pred_region
          %5927 = dma.done [#allocation7], 128
        $region76: #{tpu_custom_call.1} parent=47 // pred_fallthru
          _
      $region48: #{tpu_custom_call.1} parent=5 // pred_fallthru
        _
      %p5928 = scmp.le.s32.totalorder 2, %s18
      // Predicated region
      $region77: #{tpu_custom_call.1} parent=5 // pred_check
        %p5929 = pneg %p5928
      $region78: #{tpu_custom_call.1} parent=5 // pred_check_branch
        %5931 = sbr.rel (%p5929) target = $region80
      $region79: #{tpu_custom_call.1} parent=5 // pred_region
        %s5932 = ssub.s32 %s18, 2
      $region80: #{tpu_custom_call.1} parent=5 // pred_fallthru
        _
    $region6: #{tpu_custom_call.1} parent=1 // loop_footer
      %s22 = sadd.s32 1, %s18
    $region7: #{tpu_custom_call.1} parent=1 // loop_footer_branch
      %17 = sbr.rel target = $region3
    $region8: #{tpu_custom_call.1} parent=1 // loop_exit
      _
    %5933 = vsyncpa [#allocation6], 1
    %s5934 = scalar_lea.sflag [#allocation6], 1
    %5935 = vsyncpa %s5934, 1
    %5936 = vsyncpa [#allocation9], 1
    %s5937 = scalar_lea.sflag [#allocation9], 1
    %5938 = vsyncpa %s5937, 1
    %5939 = vsyncpa [#allocation7], 1
    %s5940 = scalar_lea.sflag [#allocation7], 1
    %5941 = vsyncpa %s5940, 1

</llo_original>
